<compile_context>
chip_gen: v5e
topology: v5e:2x2
jax: 0.10.0
libtpu: 0.0.40
codegen_flags: <defaults>
</compile_context>

<pallas_src>
import jax
import jax.numpy as jnp
from jax.experimental import pallas as pl
from jax.experimental.pallas import tpu as pltpu

N_BATCH = 2
H_IN, W_IN, C_IN = 28, 28, 1
C1, C2, C3 = 32, 64, 64
N_CLASSES = 10

GRID_W = 26              # fixed row width of the flattened spatial grid
H1, W1 = 26, 26          # conv1 output (valid)
H2, W2 = 24, 24          # conv2 output (valid)
H3, W3 = 22, 22          # conv3 output (valid)
P3 = H3 * W3             # 484
FEAT = C3 * P3           # 30976

K1 = 16                  # conv1 im2col K: 9 taps padded to 16
R3 = 576                 # rows of h3  (>= 22*26 = 572, multiple of 8)
R2 = 632                 # rows of h2  (>= R3 + 2*26 + 2 = 630, multiple of 8)
R1 = 688                 # rows of h1  (>= R2 + 2*26 + 2 = 686, multiple of 8)


def fused_forward_kernel(p1_ref, w1_ref, b1_ref, w2_ref, b2_ref, w3_ref, b3_ref,
                         wl_ref, bl_ref, o_ref):
    """conv1+ReLU -> conv2+ReLU -> conv3+ReLU -> (flatten+linear), one image."""
    # ---- conv1: pre-built patches, one MXU matmul (688,16)@(16,32) ----
    h1 = jnp.dot(p1_ref[...], w1_ref[...], preferred_element_type=jnp.float32)
    h1 = jnp.maximum(h1 + b1_ref[...], 0.0)                       # (688, 32) f32

    # ---- conv2: 3 accumulated K=96 matmuls (one per kh); taps are row shifts ----
    acc2 = None
    for kh in range(3):
        base = kh * GRID_W
        pat = jnp.concatenate(
            [h1[base + kw: base + kw + R2, :] for kw in range(3)], axis=-1)   # (632, 96)
        part = jnp.dot(pat.astype(jnp.bfloat16), w2_ref[kh],
                       preferred_element_type=jnp.float32)
        acc2 = part if acc2 is None else acc2 + part
    h2 = jnp.maximum(acc2 + b2_ref[...], 0.0)                     # (632, 64) f32

    # ---- conv3: 3 accumulated K=192 matmuls ----
    acc3 = None
    for kh in range(3):
        base = kh * GRID_W
        pat = jnp.concatenate(
            [h2[base + kw: base + kw + R3, :] for kw in range(3)], axis=-1)   # (576, 192)
        part = jnp.dot(pat.astype(jnp.bfloat16), w3_ref[kh],
                       preferred_element_type=jnp.float32)
        acc3 = part if acc3 is None else acc3 + part
    h3 = jnp.maximum(acc3 + b3_ref[...], 0.0)                     # (576, 64) f32

    # ---- linear: weight is pre-padded/permuted to (10, 576, 64) with zeros at
    #      every invalid grid position, so no crop / flatten relayout is needed.
    #      Reduce the row (sublane) axis first (VALU adds), then 10 lane reduces.
    prod = wl_ref[...] * h3[None, :, :]                           # (10, 576, 64)
    logits = jnp.sum(jnp.sum(prod, axis=1), axis=1)               # (10,)
    o_ref[...] = logits[None, :] + bl_ref[...]                    # (1, 10)


def image_classifier_forward_impl(x_nchw, params):
    x2d = x_nchw[:, 0, :, :].astype(jnp.float32)                  # (N, 28, 28)
    n = x2d.shape[0]

    # conv1 im2col in XLA (trivial ~22 KB/image DMA), K padded 9->16, bf16.
    taps = [x2d[:, kh:kh + H1, kw:kw + W1] for kh in range(3) for kw in range(3)]
    p1 = jnp.stack(taps, axis=-1).reshape(n, H1 * W1, 9)          # (N, 676, 9)
    p1 = jnp.pad(p1, ((0, 0), (0, R1 - H1 * W1), (0, K1 - 9)))    # (N, 688, 16)
    p1 = p1.astype(jnp.bfloat16)

    out = pl.pallas_call(
        fused_forward_kernel,
        out_shape=jax.ShapeDtypeStruct((n, 1, N_CLASSES), jnp.float32),
        grid=(n,),
        in_specs=[
            pl.BlockSpec((None, R1, K1), lambda i: (i, 0, 0)),          # patches
            pl.BlockSpec((K1, C1), lambda i: (0, 0)),                   # w1 (16,32)
            pl.BlockSpec((1, C1), lambda i: (0, 0)),
            pl.BlockSpec((3, 3 * C1, C2), lambda i: (0, 0, 0)),         # w2 (3,96,64)
            pl.BlockSpec((1, C2), lambda i: (0, 0)),
            pl.BlockSpec((3, 3 * C2, C3), lambda i: (0, 0, 0)),         # w3 (3,192,64)
            pl.BlockSpec((1, C3), lambda i: (0, 0)),
            pl.BlockSpec((N_CLASSES, R3, C3), lambda i: (0, 0, 0)),     # wl (10,576,64)
            pl.BlockSpec((1, N_CLASSES), lambda i: (0, 0)),
        ],
        out_specs=pl.BlockSpec((None, 1, N_CLASSES), lambda i: (i, 0, 0)),
        compiler_params=pltpu.CompilerParams(
            dimension_semantics=("parallel",),
            vmem_limit_bytes=32 * 1024 * 1024),
    )(p1, params["w1f"], params["b1"], params["w2f"], params["b2"],
      params["w3f"], params["b3"], params["wl_full"], params["bl"])
    return out.reshape(n, N_CLASSES)


image_classifier_forward = jax.jit(image_classifier_forward_impl)


def init_params(key):
    """Deterministic synthetic parameters (PyTorch-shaped) + kernel-ready forms."""
    ks = jax.random.split(key, 8)
    w1 = jax.random.normal(ks[0], (C1, C_IN, 3, 3), jnp.float32) * 0.1    # OIHW
    w2 = jax.random.normal(ks[1], (C2, C1, 3, 3), jnp.float32) * 0.05
    w3 = jax.random.normal(ks[2], (C3, C2, 3, 3), jnp.float32) * 0.05
    b1 = jax.random.normal(ks[3], (C1,), jnp.float32) * 0.01
    b2 = jax.random.normal(ks[4], (C2,), jnp.float32) * 0.01
    b3 = jax.random.normal(ks[5], (C3,), jnp.float32) * 0.01
    wl = jax.random.normal(ks[6], (N_CLASSES, FEAT), jnp.float32) * 0.01  # torch Linear
    bl = jax.random.normal(ks[7], (N_CLASSES,), jnp.float32) * 0.01

    # conv1: row index = kh*3 + kw (single input channel), padded 9 -> 16, bf16.
    w1f = jnp.transpose(w1, (2, 3, 1, 0)).reshape(9, C1)
    w1f = jnp.pad(w1f, ((0, K1 - 9), (0, 0))).astype(jnp.bfloat16)

    # conv2/conv3: one (3*Cin, Cout) slab per kh; row index = kw*Cin + ci, bf16.
    def per_kh(w_oihw):
        o = w_oihw.shape[0]
        return jnp.transpose(w_oihw, (2, 3, 1, 0)).reshape(3, -1, o).astype(jnp.bfloat16)

    # linear: nn.Flatten index c*484 + (h*22 + w) -> grid row r = h*26 + w,
    # zero weight at padded columns (w >= 22) and padded rows (r >= 572).
    wl_hw = wl.reshape(N_CLASSES, C3, H3, W3).transpose(0, 2, 3, 1)       # (10,22,22,64)
    wl_full = jnp.pad(wl_hw, ((0, 0), (0, 0), (0, GRID_W - W3), (0, 0)))  # (10,22,26,64)
    wl_full = wl_full.reshape(N_CLASSES, H3 * GRID_W, C3)                 # (10,572,64)
    wl_full = jnp.pad(wl_full, ((0, 0), (0, R3 - H3 * GRID_W), (0, 0)))   # (10,576,64)

    params = dict(
        w1f=w1f, b1=b1.reshape(1, C1),
        w2f=per_kh(w2), b2=b2.reshape(1, C2),
        w3f=per_kh(w3), b3=b3.reshape(1, C3),
        wl_full=wl_full, bl=bl.reshape(1, N_CLASSES),
    )
    torch_params = dict(w1=w1, b1=b1, w2=w2, b2=b2, w3=w3, b3=b3, wl=wl, bl=bl)
    return params, torch_params


def torch_reference(x_nchw, tp):
    """Pure-JAX replica of the PyTorch module (NCHW / OIHW / CHW flatten)."""
    h = x_nchw.astype(jnp.float32)
    for w, b in ((tp["w1"], tp["b1"]), (tp["w2"], tp["b2"]), (tp["w3"], tp["b3"])):
        h = jax.lax.conv_general_dilated(
            h, w, window_strides=(1, 1), padding="VALID",
            dimension_numbers=("NCHW", "OIHW", "NCHW"),
            precision=jax.lax.Precision.HIGHEST)
        h = jnp.maximum(h + b[None, :, None, None], 0.0)
    feat = h.reshape(h.shape[0], -1)                 # CHW flatten, like nn.Flatten
    return jnp.dot(feat, tp["wl"].T, precision=jax.lax.Precision.HIGHEST) + tp["bl"][None, :]


if __name__ == "__main__":
    key = jax.random.PRNGKey(0)
    k_params, k_x = jax.random.split(key)
    params, torch_params = init_params(k_params)
    x = jax.random.normal(k_x, (N_BATCH, C_IN, H_IN, W_IN), jnp.float32)  # NCHW

    logits = image_classifier_forward(x, params)
    jax.block_until_ready(logits)

    assert logits.shape == (N_BATCH, N_CLASSES)
    assert bool(jnp.all(jnp.isfinite(logits)))

    ref = torch_reference(x, torch_params)
    assert bool(jnp.allclose(logits, ref, atol=1e-2, rtol=1e-2)), (
        f"max abs diff {float(jnp.max(jnp.abs(logits - ref)))}")
    print("KERNEL_OK")
</pallas_src>

<mosaic_0001>
module attributes {stable_mosaic.version = 11 : i64} {
  func.func @fused_forward_kernel(%arg0: i32, %arg1: memref<1x688x16xbf16, #tpu.memory_space<vmem>>, %arg2: memref<16x32xbf16, #tpu.memory_space<vmem>>, %arg3: memref<1x32xf32, #tpu.memory_space<vmem>>, %arg4: memref<3x96x64xbf16, #tpu.memory_space<vmem>>, %arg5: memref<1x64xf32, #tpu.memory_space<vmem>>, %arg6: memref<3x192x64xbf16, #tpu.memory_space<vmem>>, %arg7: memref<1x64xf32, #tpu.memory_space<vmem>>, %arg8: memref<10x576x64xf32, #tpu.memory_space<vmem>>, %arg9: memref<1x10xf32, #tpu.memory_space<vmem>>, %arg10: memref<1x1x10xf32, #tpu.memory_space<vmem>>) attributes {dimension_semantics = [#tpu.dimension_semantics<parallel>], iteration_bounds = array<i64: 2>, scalar_prefetch = 0 : i64, scratch_operands = 0 : i64, tpu.core_type = #tpu.core_type<tc>, window_params = [{transform_indices = @transform_0, window_bounds = array<i64: 1, 688, 16>}, {pipeline_mode = #tpu.pipeline_mode<synchronous>, transform_indices = @transform_1, window_bounds = array<i64: 16, 32>}, {pipeline_mode = #tpu.pipeline_mode<synchronous>, transform_indices = @transform_2, window_bounds = array<i64: 1, 32>}, {pipeline_mode = #tpu.pipeline_mode<synchronous>, transform_indices = @transform_3, window_bounds = array<i64: 3, 96, 64>}, {pipeline_mode = #tpu.pipeline_mode<synchronous>, transform_indices = @transform_4, window_bounds = array<i64: 1, 64>}, {pipeline_mode = #tpu.pipeline_mode<synchronous>, transform_indices = @transform_5, window_bounds = array<i64: 3, 192, 64>}, {pipeline_mode = #tpu.pipeline_mode<synchronous>, transform_indices = @transform_6, window_bounds = array<i64: 1, 64>}, {pipeline_mode = #tpu.pipeline_mode<synchronous>, transform_indices = @transform_7, window_bounds = array<i64: 10, 576, 64>}, {pipeline_mode = #tpu.pipeline_mode<synchronous>, transform_indices = @transform_8, window_bounds = array<i64: 1, 10>}, {transform_indices = @transform_9, window_bounds = array<i64: 1, 1, 10>}]} {
    %c0 = arith.constant 0 : index
    %c0_0 = arith.constant 0 : index
    %c0_1 = arith.constant 0 : index
    %0 = vector.load %arg1[%c0, %c0_0, %c0_1] : memref<1x688x16xbf16, #tpu.memory_space<vmem>>, vector<1x688x16xbf16>
    %1 = vector.shape_cast %0 : vector<1x688x16xbf16> to vector<688x16xbf16>
    %c0_2 = arith.constant 0 : index
    %c0_3 = arith.constant 0 : index
    %2 = vector.load %arg2[%c0_2, %c0_3] : memref<16x32xbf16, #tpu.memory_space<vmem>>, vector<16x32xbf16>
    %cst = arith.constant dense<0.000000e+00> : vector<688x32xf32>
    %3 = tpu.matmul %1, %2, %cst {dimension_numbers = #tpu.dot_dimension_numbers<[1], [0], [0], [1], [0, 0, 1, 1], [], []>} : vector<688x16xbf16>, vector<16x32xbf16>, vector<688x32xf32> -> vector<688x32xf32>
    %c0_4 = arith.constant 0 : index
    %c0_5 = arith.constant 0 : index
    %4 = vector.load %arg3[%c0_4, %c0_5] : memref<1x32xf32, #tpu.memory_space<vmem>>, vector<1x32xf32>
    %5 = vector.broadcast %4 : vector<1x32xf32> to vector<688x32xf32>
    %6 = arith.addf %3, %5 : vector<688x32xf32>
    %cst_6 = arith.constant 0.000000e+00 : f32
    %7 = vector.broadcast %cst_6 : f32 to vector<688x32xf32>
    %8 = arith.maximumf %6, %7 : vector<688x32xf32>
    %9 = vector.extract_strided_slice %8 {offsets = [0, 0], sizes = [632, 32], strides = [1, 1]} : vector<688x32xf32> to vector<632x32xf32>
    %10 = vector.extract_strided_slice %8 {offsets = [1, 0], sizes = [632, 32], strides = [1, 1]} : vector<688x32xf32> to vector<632x32xf32>
    %11 = vector.extract_strided_slice %8 {offsets = [2, 0], sizes = [632, 32], strides = [1, 1]} : vector<688x32xf32> to vector<632x32xf32>
    %12 = tpu.concatenate %9, %10, %11 in 1 : vector<632x32xf32>, vector<632x32xf32>, vector<632x32xf32> -> vector<632x96xf32>
    %13 = arith.truncf %12 : vector<632x96xf32> to vector<632x96xbf16>
    %c0_7 = arith.constant 0 : index
    %c0_8 = arith.constant 0 : index
    %c0_9 = arith.constant 0 : index
    %14 = vector.load %arg4[%c0_7, %c0_8, %c0_9] : memref<3x96x64xbf16, #tpu.memory_space<vmem>>, vector<1x96x64xbf16>
    %15 = vector.shape_cast %14 : vector<1x96x64xbf16> to vector<96x64xbf16>
    %cst_10 = arith.constant dense<0.000000e+00> : vector<632x64xf32>
    %16 = tpu.matmul %13, %15, %cst_10 {dimension_numbers = #tpu.dot_dimension_numbers<[1], [0], [0], [1], [0, 0, 1, 1], [], []>} : vector<632x96xbf16>, vector<96x64xbf16>, vector<632x64xf32> -> vector<632x64xf32>
    %17 = vector.extract_strided_slice %8 {offsets = [26, 0], sizes = [632, 32], strides = [1, 1]} : vector<688x32xf32> to vector<632x32xf32>
    %18 = vector.extract_strided_slice %8 {offsets = [27, 0], sizes = [632, 32], strides = [1, 1]} : vector<688x32xf32> to vector<632x32xf32>
    %19 = vector.extract_strided_slice %8 {offsets = [28, 0], sizes = [632, 32], strides = [1, 1]} : vector<688x32xf32> to vector<632x32xf32>
    %20 = tpu.concatenate %17, %18, %19 in 1 : vector<632x32xf32>, vector<632x32xf32>, vector<632x32xf32> -> vector<632x96xf32>
    %21 = arith.truncf %20 : vector<632x96xf32> to vector<632x96xbf16>
    %c1 = arith.constant 1 : index
    %c0_11 = arith.constant 0 : index
    %c0_12 = arith.constant 0 : index
    %22 = vector.load %arg4[%c1, %c0_11, %c0_12] : memref<3x96x64xbf16, #tpu.memory_space<vmem>>, vector<1x96x64xbf16>
    %23 = vector.shape_cast %22 : vector<1x96x64xbf16> to vector<96x64xbf16>
    %cst_13 = arith.constant dense<0.000000e+00> : vector<632x64xf32>
    %24 = tpu.matmul %21, %23, %cst_13 {dimension_numbers = #tpu.dot_dimension_numbers<[1], [0], [0], [1], [0, 0, 1, 1], [], []>} : vector<632x96xbf16>, vector<96x64xbf16>, vector<632x64xf32> -> vector<632x64xf32>
    %25 = arith.addf %16, %24 : vector<632x64xf32>
    %26 = vector.extract_strided_slice %8 {offsets = [52, 0], sizes = [632, 32], strides = [1, 1]} : vector<688x32xf32> to vector<632x32xf32>
    %27 = vector.extract_strided_slice %8 {offsets = [53, 0], sizes = [632, 32], strides = [1, 1]} : vector<688x32xf32> to vector<632x32xf32>
    %28 = vector.extract_strided_slice %8 {offsets = [54, 0], sizes = [632, 32], strides = [1, 1]} : vector<688x32xf32> to vector<632x32xf32>
    %29 = tpu.concatenate %26, %27, %28 in 1 : vector<632x32xf32>, vector<632x32xf32>, vector<632x32xf32> -> vector<632x96xf32>
    %30 = arith.truncf %29 : vector<632x96xf32> to vector<632x96xbf16>
    %c2 = arith.constant 2 : index
    %c0_14 = arith.constant 0 : index
    %c0_15 = arith.constant 0 : index
    %31 = vector.load %arg4[%c2, %c0_14, %c0_15] : memref<3x96x64xbf16, #tpu.memory_space<vmem>>, vector<1x96x64xbf16>
    %32 = vector.shape_cast %31 : vector<1x96x64xbf16> to vector<96x64xbf16>
    %cst_16 = arith.constant dense<0.000000e+00> : vector<632x64xf32>
    %33 = tpu.matmul %30, %32, %cst_16 {dimension_numbers = #tpu.dot_dimension_numbers<[1], [0], [0], [1], [0, 0, 1, 1], [], []>} : vector<632x96xbf16>, vector<96x64xbf16>, vector<632x64xf32> -> vector<632x64xf32>
    %34 = arith.addf %25, %33 : vector<632x64xf32>
    %c0_17 = arith.constant 0 : index
    %c0_18 = arith.constant 0 : index
    %35 = vector.load %arg5[%c0_17, %c0_18] : memref<1x64xf32, #tpu.memory_space<vmem>>, vector<1x64xf32>
    %36 = vector.broadcast %35 : vector<1x64xf32> to vector<632x64xf32>
    %37 = arith.addf %34, %36 : vector<632x64xf32>
    %cst_19 = arith.constant 0.000000e+00 : f32
    %38 = vector.broadcast %cst_19 : f32 to vector<632x64xf32>
    %39 = arith.maximumf %37, %38 : vector<632x64xf32>
    %40 = vector.extract_strided_slice %39 {offsets = [0, 0], sizes = [576, 64], strides = [1, 1]} : vector<632x64xf32> to vector<576x64xf32>
    %41 = vector.extract_strided_slice %39 {offsets = [1, 0], sizes = [576, 64], strides = [1, 1]} : vector<632x64xf32> to vector<576x64xf32>
    %42 = vector.extract_strided_slice %39 {offsets = [2, 0], sizes = [576, 64], strides = [1, 1]} : vector<632x64xf32> to vector<576x64xf32>
    %43 = tpu.concatenate %40, %41, %42 in 1 : vector<576x64xf32>, vector<576x64xf32>, vector<576x64xf32> -> vector<576x192xf32>
    %44 = arith.truncf %43 : vector<576x192xf32> to vector<576x192xbf16>
    %c0_20 = arith.constant 0 : index
    %c0_21 = arith.constant 0 : index
    %c0_22 = arith.constant 0 : index
    %45 = vector.load %arg6[%c0_20, %c0_21, %c0_22] : memref<3x192x64xbf16, #tpu.memory_space<vmem>>, vector<1x192x64xbf16>
    %46 = vector.shape_cast %45 : vector<1x192x64xbf16> to vector<192x64xbf16>
    %cst_23 = arith.constant dense<0.000000e+00> : vector<576x64xf32>
    %47 = tpu.matmul %44, %46, %cst_23 {dimension_numbers = #tpu.dot_dimension_numbers<[1], [0], [0], [1], [0, 0, 1, 1], [], []>} : vector<576x192xbf16>, vector<192x64xbf16>, vector<576x64xf32> -> vector<576x64xf32>
    %48 = vector.extract_strided_slice %39 {offsets = [26, 0], sizes = [576, 64], strides = [1, 1]} : vector<632x64xf32> to vector<576x64xf32>
    %49 = vector.extract_strided_slice %39 {offsets = [27, 0], sizes = [576, 64], strides = [1, 1]} : vector<632x64xf32> to vector<576x64xf32>
    %50 = vector.extract_strided_slice %39 {offsets = [28, 0], sizes = [576, 64], strides = [1, 1]} : vector<632x64xf32> to vector<576x64xf32>
    %51 = tpu.concatenate %48, %49, %50 in 1 : vector<576x64xf32>, vector<576x64xf32>, vector<576x64xf32> -> vector<576x192xf32>
    %52 = arith.truncf %51 : vector<576x192xf32> to vector<576x192xbf16>
    %c1_24 = arith.constant 1 : index
    %c0_25 = arith.constant 0 : index
    %c0_26 = arith.constant 0 : index
    %53 = vector.load %arg6[%c1_24, %c0_25, %c0_26] : memref<3x192x64xbf16, #tpu.memory_space<vmem>>, vector<1x192x64xbf16>
    %54 = vector.shape_cast %53 : vector<1x192x64xbf16> to vector<192x64xbf16>
    %cst_27 = arith.constant dense<0.000000e+00> : vector<576x64xf32>
    %55 = tpu.matmul %52, %54, %cst_27 {dimension_numbers = #tpu.dot_dimension_numbers<[1], [0], [0], [1], [0, 0, 1, 1], [], []>} : vector<576x192xbf16>, vector<192x64xbf16>, vector<576x64xf32> -> vector<576x64xf32>
    %56 = arith.addf %47, %55 : vector<576x64xf32>
    %57 = vector.extract_strided_slice %39 {offsets = [52, 0], sizes = [576, 64], strides = [1, 1]} : vector<632x64xf32> to vector<576x64xf32>
    %58 = vector.extract_strided_slice %39 {offsets = [53, 0], sizes = [576, 64], strides = [1, 1]} : vector<632x64xf32> to vector<576x64xf32>
    %59 = vector.extract_strided_slice %39 {offsets = [54, 0], sizes = [576, 64], strides = [1, 1]} : vector<632x64xf32> to vector<576x64xf32>
    %60 = tpu.concatenate %57, %58, %59 in 1 : vector<576x64xf32>, vector<576x64xf32>, vector<576x64xf32> -> vector<576x192xf32>
    %61 = arith.truncf %60 : vector<576x192xf32> to vector<576x192xbf16>
    %c2_28 = arith.constant 2 : index
    %c0_29 = arith.constant 0 : index
    %c0_30 = arith.constant 0 : index
    %62 = vector.load %arg6[%c2_28, %c0_29, %c0_30] : memref<3x192x64xbf16, #tpu.memory_space<vmem>>, vector<1x192x64xbf16>
    %63 = vector.shape_cast %62 : vector<1x192x64xbf16> to vector<192x64xbf16>
    %cst_31 = arith.constant dense<0.000000e+00> : vector<576x64xf32>
    %64 = tpu.matmul %61, %63, %cst_31 {dimension_numbers = #tpu.dot_dimension_numbers<[1], [0], [0], [1], [0, 0, 1, 1], [], []>} : vector<576x192xbf16>, vector<192x64xbf16>, vector<576x64xf32> -> vector<576x64xf32>
    %65 = arith.addf %56, %64 : vector<576x64xf32>
    %c0_32 = arith.constant 0 : index
    %c0_33 = arith.constant 0 : index
    %66 = vector.load %arg7[%c0_32, %c0_33] : memref<1x64xf32, #tpu.memory_space<vmem>>, vector<1x64xf32>
    %67 = vector.broadcast %66 : vector<1x64xf32> to vector<576x64xf32>
    %68 = arith.addf %65, %67 : vector<576x64xf32>
    %cst_34 = arith.constant 0.000000e+00 : f32
    %69 = vector.broadcast %cst_34 : f32 to vector<576x64xf32>
    %70 = arith.maximumf %68, %69 : vector<576x64xf32>
    %c0_35 = arith.constant 0 : index
    %c0_36 = arith.constant 0 : index
    %c0_37 = arith.constant 0 : index
    %71 = vector.load %arg8[%c0_35, %c0_36, %c0_37] : memref<10x576x64xf32, #tpu.memory_space<vmem>>, vector<10x576x64xf32>
    %72 = vector.shape_cast %70 : vector<576x64xf32> to vector<1x576x64xf32>
    %73 = vector.broadcast %72 : vector<1x576x64xf32> to vector<10x576x64xf32>
    %74 = arith.mulf %71, %73 : vector<10x576x64xf32>
    %cst_38 = arith.constant dense<0.000000e+00> : vector<10x64xf32>
    %75 = vector.multi_reduction <add>, %74, %cst_38 [1] : vector<10x576x64xf32> to vector<10x64xf32>
    %cst_39 = arith.constant dense<0.000000e+00> : vector<10xf32>
    %76 = vector.multi_reduction <add>, %75, %cst_39 [1] : vector<10x64xf32> to vector<10xf32>
    %77 = vector.shape_cast %76 : vector<10xf32> to vector<1x10xf32>
    %c0_40 = arith.constant 0 : index
    %c0_41 = arith.constant 0 : index
    %78 = vector.load %arg9[%c0_40, %c0_41] : memref<1x10xf32, #tpu.memory_space<vmem>>, vector<1x10xf32>
    %79 = arith.addf %77, %78 : vector<1x10xf32>
    %c0_42 = arith.constant 0 : index
    %c0_43 = arith.constant 0 : index
    %c0_44 = arith.constant 0 : index
    %80 = vector.load %arg10[%c0_42, %c0_43, %c0_44] : memref<1x1x10xf32, #tpu.memory_space<vmem>>, vector<1x1x10xf32>
    %81 = vector.shape_cast %80 : vector<1x1x10xf32> to vector<1x10xf32>
    %82 = vector.shape_cast %79 : vector<1x10xf32> to vector<1x1x10xf32>
    tpu.vector_store %arg10[%c0_42, %c0_43, %c0_44], %82 {strides = array<i32>} : memref<1x1x10xf32, #tpu.memory_space<vmem>>, vector<1x1x10xf32>,
    return
  }
  func.func @transform_0(%arg0: i32) -> (i32, i32, i32) {
    %c0_i32 = arith.constant 0 : i32
    %c0_i32_0 = arith.constant 0 : i32
    %c0_i32_1 = arith.constant 0 : i32
    return %arg0, %c0_i32, %c0_i32_0 : i32, i32, i32
  }
  func.func @transform_1(%arg0: i32) -> (i32, i32) {
    %c0_i32 = arith.constant 0 : i32
    %c0_i32_0 = arith.constant 0 : i32
    %c0_i32_1 = arith.constant 0 : i32
    return %c0_i32, %c0_i32_0 : i32, i32
  }
  func.func @transform_2(%arg0: i32) -> (i32, i32) {
    %c0_i32 = arith.constant 0 : i32
    %c0_i32_0 = arith.constant 0 : i32
    %c0_i32_1 = arith.constant 0 : i32
    return %c0_i32, %c0_i32_0 : i32, i32
  }
  func.func @transform_3(%arg0: i32) -> (i32, i32, i32) {
    %c0_i32 = arith.constant 0 : i32
    %c0_i32_0 = arith.constant 0 : i32
    %c0_i32_1 = arith.constant 0 : i32
    %c0_i32_2 = arith.constant 0 : i32
    return %c0_i32, %c0_i32_0, %c0_i32_1 : i32, i32, i32
  }
  func.func @transform_4(%arg0: i32) -> (i32, i32) {
    %c0_i32 = arith.constant 0 : i32
    %c0_i32_0 = arith.constant 0 : i32
    %c0_i32_1 = arith.constant 0 : i32
    return %c0_i32, %c0_i32_0 : i32, i32
  }
  func.func @transform_5(%arg0: i32) -> (i32, i32, i32) {
    %c0_i32 = arith.constant 0 : i32
    %c0_i32_0 = arith.constant 0 : i32
    %c0_i32_1 = arith.constant 0 : i32
    %c0_i32_2 = arith.constant 0 : i32
    return %c0_i32, %c0_i32_0, %c0_i32_1 : i32, i32, i32
  }
  func.func @transform_6(%arg0: i32) -> (i32, i32) {
    %c0_i32 = arith.constant 0 : i32
    %c0_i32_0 = arith.constant 0 : i32
    %c0_i32_1 = arith.constant 0 : i32
    return %c0_i32, %c0_i32_0 : i32, i32
  }
  func.func @transform_7(%arg0: i32) -> (i32, i32, i32) {
    %c0_i32 = arith.constant 0 : i32
    %c0_i32_0 = arith.constant 0 : i32
    %c0_i32_1 = arith.constant 0 : i32
    %c0_i32_2 = arith.constant 0 : i32
    return %c0_i32, %c0_i32_0, %c0_i32_1 : i32, i32, i32
  }
  func.func @transform_8(%arg0: i32) -> (i32, i32) {
    %c0_i32 = arith.constant 0 : i32
    %c0_i32_0 = arith.constant 0 : i32
    %c0_i32_1 = arith.constant 0 : i32
    return %c0_i32, %c0_i32_0 : i32, i32
  }
  func.func @transform_9(%arg0: i32) -> (i32, i32, i32) {
    %c0_i32 = arith.constant 0 : i32
    %c0_i32_0 = arith.constant 0 : i32
    %c0_i32_1 = arith.constant 0 : i32
    return %arg0, %c0_i32, %c0_i32_0 : i32, i32, i32
  }
}

</mosaic_0001>

<llo_original>
// kernel: image_classifier_forward_impl.1
$region0: #{image_classifier_forward_impl.1}
  #allocation0 [shape = 'u32[]', space=smem, size = 0x4, offset = 0x4, fixed_abs, tag = 'smem constant byte address 0x4 - core index']
  #allocation1 [shape = 'u32[72,128]{1,0:T(1,128)}', space=vmem, size = 0x9000, scoped, tag = 'internal scratch']
  %s0 = inlined_call_operand.vmem [shape: bf16[2,688,16], index: 0, kind: input, shape index: {}]
  %s1 = inlined_call_operand.vmem [shape: bf16[16,32], index: 1, kind: input, shape index: {}]
  %s2 = inlined_call_operand.vmem [shape: f32[1,32], index: 2, kind: input, shape index: {}]
  %s3 = inlined_call_operand.vmem [shape: bf16[3,96,64], index: 3, kind: input, shape index: {}]
  %s4 = inlined_call_operand.vmem [shape: f32[1,64], index: 4, kind: input, shape index: {}]
  %s5 = inlined_call_operand.vmem [shape: bf16[3,192,64], index: 5, kind: input, shape index: {}]
  %s6 = inlined_call_operand.vmem [shape: f32[1,64], index: 6, kind: input, shape index: {}]
  %s7 = inlined_call_operand.vmem [shape: f32[10,576,64], index: 7, kind: input, shape index: {}]
  %s8 = inlined_call_operand.vmem [shape: f32[1,10], index: 8, kind: input, shape index: {}]
  %s9 = inlined_call_operand.hbm [shape: f32[2,1,10], index: 9, kind: output, shape index: {}]
  %s10 = sld [smem:[#allocation0]]
  $region69: #{image_classifier_forward_impl.1} parent=0
    _
  %s12 = ssub.s32 1, %s10
  %s13 = scalar_select 0, %s12, %s10
  $region1: #{image_classifier_forward_impl.1} parent=0
    #allocation2 [shape = 'u8[1024]{0}', space=vmem, size = 0x400, scoped, tag = 'output window, operand 0']
    #allocation3 [shape = 's32[2]{0}', space=sflag, size = 0x8, scoped, tag = 'scoped memory for image_classifier_forward_impl.1']
    %14 = vsyncpa [#allocation3], 0
    %s15 = scalar_lea.sflag [#allocation3], 1
    %16 = vsyncpa %s15, 0
    loop: start=0, step=1, limit=4
    $region2: #{image_classifier_forward_impl.1} parent=1 // loop_pre_header
      _
    $region3: #{image_classifier_forward_impl.1} parent=1 // loop_header
      %s18 = sphi 0, %s22
      %p19 = scmp.ge.s32.totalorder %s18, 4
      %s28 = sphi 0, %s30
      %s31 = sphi 0, %s28
      %s32 = sphi 0, %s31
      %s48 = sphi 0, %s32
      %s52 = sphi 0, %s52
      %s54 = sphi 0, %s52
      %s55 = sphi 0, %s54
      %s69 = sphi 0, %s55
      %s73 = sphi 0, %s73
      %s75 = sphi 0, %s73
      %s76 = sphi 0, %s75
      %s90 = sphi 0, %s76
      %s94 = sphi 0, %s94
      %s96 = sphi 0, %s94
      %s97 = sphi 0, %s96
      %s111 = sphi 0, %s97
      %s115 = sphi 0, %s115
      %s117 = sphi 0, %s115
      %s118 = sphi 0, %s117
      %s132 = sphi 0, %s118
      %s136 = sphi 0, %s136
      %s138 = sphi 0, %s136
      %s139 = sphi 0, %s138
      %s153 = sphi 0, %s139
      %s157 = sphi 0, %s157
      %s159 = sphi 0, %s157
      %s160 = sphi 0, %s159
      %s174 = sphi 0, %s160
      %s178 = sphi 0, %s178
      %s180 = sphi 0, %s178
      %s181 = sphi 0, %s180
      %s195 = sphi 0, %s181
      %s199 = sphi 0, %s199
      %s201 = sphi 0, %s199
      %s202 = sphi 0, %s201
      %s216 = sphi 0, %s202
      %s222 = sphi 0, %s224
      %s225 = sphi 0, %s222
      %s226 = sphi 0, %s225
      %s242 = sphi 0, %s226
    $region4: #{image_classifier_forward_impl.1} parent=1 // loop_header_branch
      %21 = sbr.rel (%p19) target = $region8
    $region5: #{image_classifier_forward_impl.1} parent=1 // loop_body
      %s23 = ssub.s32 %s18, 1
      %s24 = ssub.s32 %s18, 2
      %s25 = sadd.s32 %s18, 1
      %s26 = ssub.s32 %s18, %s25
      %p27 = scmp.eq.s32.totalorder %s26, 0
      %s29 = sadd.s32 %s28, 1
      %s30 = scalar_select %p27, %s28, %s29
      %p33 = pneg %p27
      %p34 = scmp.eq.s32.totalorder %s18, 1
      %p35 = por %p33, %p34
      %p36 = scmp.ne.s32.totalorder %s28, %s31
      %p37 = scmp.eq.s32.totalorder %s18, 0
      %p38 = por %p36, %p37
      %p39 = scmp.ne.s32.totalorder %s28, %s31
      %p40 = scmp.eq.s32.totalorder %s23, 1
      %p41 = por %p39, %p40
      %p42 = scmp.ne.s32.totalorder %s31, %s32
      %p43 = scmp.eq.s32.totalorder %s23, 0
      %p44 = por %p42, %p43
      %p45 = scmp.ne.s32.totalorder %s31, %s32
      %p46 = scmp.eq.s32.totalorder %s24, 1
      %p47 = por %p45, %p46
      %p49 = scmp.ne.s32.totalorder %s32, %s48
      %p50 = scmp.eq.s32.totalorder %s24, 0
      %p51 = por %p49, %p50
      %s53 = sadd.s32 %s52, 1
      %p56 = scmp.eq.s32.totalorder %s18, 1
      %p57 = scmp.ne.s32.totalorder %s52, %s54
      %p58 = scmp.eq.s32.totalorder %s18, 0
      %p59 = por %p57, %p58
      %p60 = scmp.ne.s32.totalorder %s52, %s54
      %p61 = scmp.eq.s32.totalorder %s23, 1
      %p62 = por %p60, %p61
      %p63 = scmp.ne.s32.totalorder %s54, %s55
      %p64 = scmp.eq.s32.totalorder %s23, 0
      %p65 = por %p63, %p64
      %p66 = scmp.ne.s32.totalorder %s54, %s55
      %p67 = scmp.eq.s32.totalorder %s24, 1
      %p68 = por %p66, %p67
      %p70 = scmp.ne.s32.totalorder %s55, %s69
      %p71 = scmp.eq.s32.totalorder %s24, 0
      %p72 = por %p70, %p71
      %s74 = sadd.s32 %s73, 1
      %p77 = scmp.eq.s32.totalorder %s18, 1
      %p78 = scmp.ne.s32.totalorder %s73, %s75
      %p79 = scmp.eq.s32.totalorder %s18, 0
      %p80 = por %p78, %p79
      %p81 = scmp.ne.s32.totalorder %s73, %s75
      %p82 = scmp.eq.s32.totalorder %s23, 1
      %p83 = por %p81, %p82
      %p84 = scmp.ne.s32.totalorder %s75, %s76
      %p85 = scmp.eq.s32.totalorder %s23, 0
      %p86 = por %p84, %p85
      %p87 = scmp.ne.s32.totalorder %s75, %s76
      %p88 = scmp.eq.s32.totalorder %s24, 1
      %p89 = por %p87, %p88
      %p91 = scmp.ne.s32.totalorder %s76, %s90
      %p92 = scmp.eq.s32.totalorder %s24, 0
      %p93 = por %p91, %p92
      %s95 = sadd.s32 %s94, 1
      %p98 = scmp.eq.s32.totalorder %s18, 1
      %p99 = scmp.ne.s32.totalorder %s94, %s96
      %p100 = scmp.eq.s32.totalorder %s18, 0
      %p101 = por %p99, %p100
      %p102 = scmp.ne.s32.totalorder %s94, %s96
      %p103 = scmp.eq.s32.totalorder %s23, 1
      %p104 = por %p102, %p103
      %p105 = scmp.ne.s32.totalorder %s96, %s97
      %p106 = scmp.eq.s32.totalorder %s23, 0
      %p107 = por %p105, %p106
      %p108 = scmp.ne.s32.totalorder %s96, %s97
      %p109 = scmp.eq.s32.totalorder %s24, 1
      %p110 = por %p108, %p109
      %p112 = scmp.ne.s32.totalorder %s97, %s111
      %p113 = scmp.eq.s32.totalorder %s24, 0
      %p114 = por %p112, %p113
      %s116 = sadd.s32 %s115, 1
      %p119 = scmp.eq.s32.totalorder %s18, 1
      %p120 = scmp.ne.s32.totalorder %s115, %s117
      %p121 = scmp.eq.s32.totalorder %s18, 0
      %p122 = por %p120, %p121
      %p123 = scmp.ne.s32.totalorder %s115, %s117
      %p124 = scmp.eq.s32.totalorder %s23, 1
      %p125 = por %p123, %p124
      %p126 = scmp.ne.s32.totalorder %s117, %s118
      %p127 = scmp.eq.s32.totalorder %s23, 0
      %p128 = por %p126, %p127
      %p129 = scmp.ne.s32.totalorder %s117, %s118
      %p130 = scmp.eq.s32.totalorder %s24, 1
      %p131 = por %p129, %p130
      %p133 = scmp.ne.s32.totalorder %s118, %s132
      %p134 = scmp.eq.s32.totalorder %s24, 0
      %p135 = por %p133, %p134
      %s137 = sadd.s32 %s136, 1
      %p140 = scmp.eq.s32.totalorder %s18, 1
      %p141 = scmp.ne.s32.totalorder %s136, %s138
      %p142 = scmp.eq.s32.totalorder %s18, 0
      %p143 = por %p141, %p142
      %p144 = scmp.ne.s32.totalorder %s136, %s138
      %p145 = scmp.eq.s32.totalorder %s23, 1
      %p146 = por %p144, %p145
      %p147 = scmp.ne.s32.totalorder %s138, %s139
      %p148 = scmp.eq.s32.totalorder %s23, 0
      %p149 = por %p147, %p148
      %p150 = scmp.ne.s32.totalorder %s138, %s139
      %p151 = scmp.eq.s32.totalorder %s24, 1
      %p152 = por %p150, %p151
      %p154 = scmp.ne.s32.totalorder %s139, %s153
      %p155 = scmp.eq.s32.totalorder %s24, 0
      %p156 = por %p154, %p155
      %s158 = sadd.s32 %s157, 1
      %p161 = scmp.eq.s32.totalorder %s18, 1
      %p162 = scmp.ne.s32.totalorder %s157, %s159
      %p163 = scmp.eq.s32.totalorder %s18, 0
      %p164 = por %p162, %p163
      %p165 = scmp.ne.s32.totalorder %s157, %s159
      %p166 = scmp.eq.s32.totalorder %s23, 1
      %p167 = por %p165, %p166
      %p168 = scmp.ne.s32.totalorder %s159, %s160
      %p169 = scmp.eq.s32.totalorder %s23, 0
      %p170 = por %p168, %p169
      %p171 = scmp.ne.s32.totalorder %s159, %s160
      %p172 = scmp.eq.s32.totalorder %s24, 1
      %p173 = por %p171, %p172
      %p175 = scmp.ne.s32.totalorder %s160, %s174
      %p176 = scmp.eq.s32.totalorder %s24, 0
      %p177 = por %p175, %p176
      %s179 = sadd.s32 %s178, 1
      %p182 = scmp.eq.s32.totalorder %s18, 1
      %p183 = scmp.ne.s32.totalorder %s178, %s180
      %p184 = scmp.eq.s32.totalorder %s18, 0
      %p185 = por %p183, %p184
      %p186 = scmp.ne.s32.totalorder %s178, %s180
      %p187 = scmp.eq.s32.totalorder %s23, 1
      %p188 = por %p186, %p187
      %p189 = scmp.ne.s32.totalorder %s180, %s181
      %p190 = scmp.eq.s32.totalorder %s23, 0
      %p191 = por %p189, %p190
      %p192 = scmp.ne.s32.totalorder %s180, %s181
      %p193 = scmp.eq.s32.totalorder %s24, 1
      %p194 = por %p192, %p193
      %p196 = scmp.ne.s32.totalorder %s181, %s195
      %p197 = scmp.eq.s32.totalorder %s24, 0
      %p198 = por %p196, %p197
      %s200 = sadd.s32 %s199, 1
      %p203 = scmp.eq.s32.totalorder %s18, 1
      %p204 = scmp.ne.s32.totalorder %s199, %s201
      %p205 = scmp.eq.s32.totalorder %s18, 0
      %p206 = por %p204, %p205
      %p207 = scmp.ne.s32.totalorder %s199, %s201
      %p208 = scmp.eq.s32.totalorder %s23, 1
      %p209 = por %p207, %p208
      %p210 = scmp.ne.s32.totalorder %s201, %s202
      %p211 = scmp.eq.s32.totalorder %s23, 0
      %p212 = por %p210, %p211
      %p213 = scmp.ne.s32.totalorder %s201, %s202
      %p214 = scmp.eq.s32.totalorder %s24, 1
      %p215 = por %p213, %p214
      %p217 = scmp.ne.s32.totalorder %s202, %s216
      %p218 = scmp.eq.s32.totalorder %s24, 0
      %p219 = por %p217, %p218
      %s220 = ssub.s32 %s18, %s25
      %p221 = scmp.eq.s32.totalorder %s220, 0
      %s223 = sadd.s32 %s222, 1
      %s224 = scalar_select %p221, %s222, %s223
      %p227 = pneg %p221
      %p228 = scmp.eq.s32.totalorder %s18, 1
      %p229 = por %p227, %p228
      %p230 = scmp.ne.s32.totalorder %s222, %s225
      %p231 = scmp.eq.s32.totalorder %s18, 0
      %p232 = por %p230, %p231
      %p233 = scmp.ne.s32.totalorder %s222, %s225
      %p234 = scmp.eq.s32.totalorder %s23, 1
      %p235 = por %p233, %p234
      %p236 = scmp.ne.s32.totalorder %s225, %s226
      %p237 = scmp.eq.s32.totalorder %s23, 0
      %p238 = por %p236, %p237
      %p239 = scmp.ne.s32.totalorder %s225, %s226
      %p240 = scmp.eq.s32.totalorder %s24, 1
      %p241 = por %p239, %p240
      %p243 = scmp.ne.s32.totalorder %s226, %s242
      %p244 = scmp.eq.s32.totalorder %s24, 0
      %p245 = por %p243, %p244
      %p246 = scmp.le.s32.totalorder 1, %s18
      %p247 = scmp.lt.s32.totalorder %s18, 3
      %p248 = pnand %p246, %p247
      %p249 = pneg %p248
      // Predicated region
      $region9: #{image_classifier_forward_impl.1} parent=5 // pred_check
        _
      $region10: #{image_classifier_forward_impl.1} parent=5 // pred_check_branch
        %251 = sbr.rel (%p248) target = $region12
      $region11: #{image_classifier_forward_impl.1} parent=5 // pred_region
        %s252 = ssub.s32 %s18, 1
        // Predicated region
        $region13: #{image_classifier_forward_impl.1} parent=11 // pred_check
          %p253 = pneg %p65
        $region14: #{image_classifier_forward_impl.1} parent=11 // pred_check_branch
          %255 = sbr.rel (%p253) target = $region16
        $region15: #{image_classifier_forward_impl.1} parent=11 // pred_region
          _
        $region16: #{image_classifier_forward_impl.1} parent=11 // pred_fallthru
          _
        // Predicated region
        $region17: #{image_classifier_forward_impl.1} parent=11 // pred_check
          %p256 = pneg %p86
        $region18: #{image_classifier_forward_impl.1} parent=11 // pred_check_branch
          %258 = sbr.rel (%p256) target = $region20
        $region19: #{image_classifier_forward_impl.1} parent=11 // pred_region
          _
        $region20: #{image_classifier_forward_impl.1} parent=11 // pred_fallthru
          _
        // Predicated region
        $region21: #{image_classifier_forward_impl.1} parent=11 // pred_check
          %p259 = pneg %p107
        $region22: #{image_classifier_forward_impl.1} parent=11 // pred_check_branch
          %261 = sbr.rel (%p259) target = $region24
        $region23: #{image_classifier_forward_impl.1} parent=11 // pred_region
          _
        $region24: #{image_classifier_forward_impl.1} parent=11 // pred_fallthru
          _
        // Predicated region
        $region25: #{image_classifier_forward_impl.1} parent=11 // pred_check
          %p262 = pneg %p128
        $region26: #{image_classifier_forward_impl.1} parent=11 // pred_check_branch
          %264 = sbr.rel (%p262) target = $region28
        $region27: #{image_classifier_forward_impl.1} parent=11 // pred_region
          _
        $region28: #{image_classifier_forward_impl.1} parent=11 // pred_fallthru
          _
        // Predicated region
        $region29: #{image_classifier_forward_impl.1} parent=11 // pred_check
          %p265 = pneg %p149
        $region30: #{image_classifier_forward_impl.1} parent=11 // pred_check_branch
          %267 = sbr.rel (%p265) target = $region32
        $region31: #{image_classifier_forward_impl.1} parent=11 // pred_region
          _
        $region32: #{image_classifier_forward_impl.1} parent=11 // pred_fallthru
          _
        // Predicated region
        $region33: #{image_classifier_forward_impl.1} parent=11 // pred_check
          %p268 = pneg %p170
        $region34: #{image_classifier_forward_impl.1} parent=11 // pred_check_branch
          %270 = sbr.rel (%p268) target = $region36
        $region35: #{image_classifier_forward_impl.1} parent=11 // pred_region
          _
        $region36: #{image_classifier_forward_impl.1} parent=11 // pred_fallthru
          _
        // Predicated region
        $region37: #{image_classifier_forward_impl.1} parent=11 // pred_check
          %p271 = pneg %p191
        $region38: #{image_classifier_forward_impl.1} parent=11 // pred_check_branch
          %273 = sbr.rel (%p271) target = $region40
        $region39: #{image_classifier_forward_impl.1} parent=11 // pred_region
          _
        $region40: #{image_classifier_forward_impl.1} parent=11 // pred_fallthru
          _
        // Predicated region
        $region41: #{image_classifier_forward_impl.1} parent=11 // pred_check
          %p274 = pneg %p212
        $region42: #{image_classifier_forward_impl.1} parent=11 // pred_check_branch
          %276 = sbr.rel (%p274) target = $region44
        $region43: #{image_classifier_forward_impl.1} parent=11 // pred_region
          _
        $region44: #{image_classifier_forward_impl.1} parent=11 // pred_fallthru
          _
      $region12: #{image_classifier_forward_impl.1} parent=5 // pred_fallthru
        _
      %p277 = scmp.lt.s32.totalorder %s18, 2
      // Predicated region
      $region45: #{image_classifier_forward_impl.1} parent=5 // pred_check
        %p278 = pneg %p277
      $region46: #{image_classifier_forward_impl.1} parent=5 // pred_check_branch
        %280 = sbr.rel (%p278) target = $region48
      $region47: #{image_classifier_forward_impl.1} parent=5 // pred_region
        // Predicated region
        $region49: #{image_classifier_forward_impl.1} parent=47 // pred_check
          %p281 = pneg %p38
        $region50: #{image_classifier_forward_impl.1} parent=47 // pred_check_branch
          %283 = sbr.rel (%p281) target = $region52
        $region51: #{image_classifier_forward_impl.1} parent=47 // pred_region
          %p284 = scmp.lt.s32.totalorder %s18, 1
          %s285 = scalar_select %p284, %s18, 1
          %s286 = smul.addr %s285, 86
          %s287 = smul.addr %s286, 4
          %s288 = scalar_lea.vmem %s0, %s287
        $region52: #{image_classifier_forward_impl.1} parent=47 // pred_fallthru
          _
      $region48: #{image_classifier_forward_impl.1} parent=5 // pred_fallthru
        _
      %p289 = scmp.le.s32.totalorder 1, %s18
      %p290 = scmp.lt.s32.totalorder %s18, 3
      %p291 = pnand %p289, %p290
      %p292 = pneg %p291
      // Predicated region
      $region53: #{image_classifier_forward_impl.1} parent=5 // pred_check
        _
      $region54: #{image_classifier_forward_impl.1} parent=5 // pred_check_branch
        %294 = sbr.rel (%p291) target = $region56
      $region55: #{image_classifier_forward_impl.1} parent=5 // pred_region
        %s295 = ssub.s32 %s18, 1
        %p296 = scmp.lt.s32.totalorder %s23, 1
        %s297 = scalar_select %p296, %s23, 1
        %s298 = smul.addr %s297, 86
        %s299 = smul.addr %s298, 4
        %s300 = scalar_lea.vmem %s0, %s299
        %p301 = pneg %p44
        %p302 = pneg %p41
        %p303 = pneg %p65
        %p304 = pneg %p62
        %p305 = pneg %p86
        %p306 = pneg %p83
        %p307 = pneg %p107
        %p308 = pneg %p104
        %p309 = pneg %p128
        %p310 = pneg %p125
        %p311 = pneg %p149
        %p312 = pneg %p146
        %p313 = pneg %p170
        %p314 = pneg %p167
        %p315 = pneg %p191
        %p316 = pneg %p188
        %p317 = pneg %p212
        %p318 = pneg %p209
        %p319 = pneg %p238
        %p320 = pneg %p235
        %s321 = sand.u32 %s225, 1
        %s322 = scalar_lea.sflag [#allocation3], %s321
        %s323 = sand.u32 %s225, 1
        %s324 = scalar_lea.vmem [#allocation2], %s323
        %p325 = scmp.lt.s32.totalorder %s23, 1
        %s326 = scalar_select %p325, %s23, 1
        %s327 = smul.addr %s326, 86
        %s328 = smul.addr %s327, 4
        %s329 = scalar_lea.vmem %s0, %s328
        %v331 = vld [vmem:[%s329] sm:$0xf]
        %v332 = vld [vmem:[%s329 + $0x4] sm:$0xf]
        %v333 = vld [vmem:[%s329 + $0x8] sm:$0xf]
        %v334 = vld [vmem:[%s329 + $0xc] sm:$0xf]
        %v335 = vld [vmem:[%s329 + $0x10] sm:$0xf]
        %v336 = vld [vmem:[%s329 + $0x14] sm:$0xf]
        %v337 = vld [vmem:[%s329 + $0x18] sm:$0xf]
        %v338 = vld [vmem:[%s329 + $0x1c] sm:$0xf]
        %v339 = vld [vmem:[%s329 + $0x20] sm:$0xf]
        %v340 = vld [vmem:[%s329 + $0x24] sm:$0xf]
        %v341 = vld [vmem:[%s329 + $0x28] sm:$0xf]
        %v342 = vld [vmem:[%s329 + $0x2c] sm:$0xf]
        %v343 = vld [vmem:[%s329 + $0x30] sm:$0xf]
        %v344 = vld [vmem:[%s329 + $0x34] sm:$0xf]
        %v345 = vld [vmem:[%s329 + $0x38] sm:$0xf]
        %v346 = vld [vmem:[%s329 + $0x3c] sm:$0xf]
        %v347 = vld [vmem:[%s329 + $0x40] sm:$0xf]
        %v348 = vld [vmem:[%s329 + $0x44] sm:$0xf]
        %v349 = vld [vmem:[%s329 + $0x48] sm:$0xf]
        %v350 = vld [vmem:[%s329 + $0x4c] sm:$0xf]
        %v351 = vld [vmem:[%s329 + $0x50] sm:$0xf]
        %v352 = vld [vmem:[%s329 + $0x54] sm:$0xf]
        %v353 = vld [vmem:[%s329 + $0x58] sm:$0xf]
        %v354 = vld [vmem:[%s329 + $0x5c] sm:$0xf]
        %v355 = vld [vmem:[%s329 + $0x60] sm:$0xf]
        %v356 = vld [vmem:[%s329 + $0x64] sm:$0xf]
        %v357 = vld [vmem:[%s329 + $0x68] sm:$0xf]
        %v358 = vld [vmem:[%s329 + $0x6c] sm:$0xf]
        %v359 = vld [vmem:[%s329 + $0x70] sm:$0xf]
        %v360 = vld [vmem:[%s329 + $0x74] sm:$0xf]
        %v361 = vld [vmem:[%s329 + $0x78] sm:$0xf]
        %v362 = vld [vmem:[%s329 + $0x7c] sm:$0xf]
        %v363 = vld [vmem:[%s329 + $0x80] sm:$0xf]
        %v364 = vld [vmem:[%s329 + $0x84] sm:$0xf]
        %v365 = vld [vmem:[%s329 + $0x88] sm:$0xf]
        %v366 = vld [vmem:[%s329 + $0x8c] sm:$0xf]
        %v367 = vld [vmem:[%s329 + $0x90] sm:$0xf]
        %v368 = vld [vmem:[%s329 + $0x94] sm:$0xf]
        %v369 = vld [vmem:[%s329 + $0x98] sm:$0xf]
        %v370 = vld [vmem:[%s329 + $0x9c] sm:$0xf]
        %v371 = vld [vmem:[%s329 + $0xa0] sm:$0xf]
        %v372 = vld [vmem:[%s329 + $0xa4] sm:$0xf]
        %v373 = vld [vmem:[%s329 + $0xa8] sm:$0xf]
        %v374 = vld [vmem:[%s329 + $0xac] sm:$0xf]
        %v375 = vld [vmem:[%s329 + $0xb0] sm:$0xf]
        %v376 = vld [vmem:[%s329 + $0xb4] sm:$0xf]
        %v377 = vld [vmem:[%s329 + $0xb8] sm:$0xf]
        %v378 = vld [vmem:[%s329 + $0xbc] sm:$0xf]
        %v379 = vld [vmem:[%s329 + $0xc0] sm:$0xf]
        %v380 = vld [vmem:[%s329 + $0xc4] sm:$0xf]
        %v381 = vld [vmem:[%s329 + $0xc8] sm:$0xf]
        %v382 = vld [vmem:[%s329 + $0xcc] sm:$0xf]
        %v383 = vld [vmem:[%s329 + $0xd0] sm:$0xf]
        %v384 = vld [vmem:[%s329 + $0xd4] sm:$0xf]
        %v385 = vld [vmem:[%s329 + $0xd8] sm:$0xf]
        %v386 = vld [vmem:[%s329 + $0xdc] sm:$0xf]
        %v387 = vld [vmem:[%s329 + $0xe0] sm:$0xf]
        %v388 = vld [vmem:[%s329 + $0xe4] sm:$0xf]
        %v389 = vld [vmem:[%s329 + $0xe8] sm:$0xf]
        %v390 = vld [vmem:[%s329 + $0xec] sm:$0xf]
        %v391 = vld [vmem:[%s329 + $0xf0] sm:$0xf]
        %v392 = vld [vmem:[%s329 + $0xf4] sm:$0xf]
        %v393 = vld [vmem:[%s329 + $0xf8] sm:$0xf]
        %v394 = vld [vmem:[%s329 + $0xfc] sm:$0xf]
        %v395 = vld [vmem:[%s329 + $0x100] sm:$0xf]
        %v396 = vld [vmem:[%s329 + $0x104] sm:$0xf]
        %v397 = vld [vmem:[%s329 + $0x108] sm:$0xf]
        %v398 = vld [vmem:[%s329 + $0x10c] sm:$0xf]
        %v399 = vld [vmem:[%s329 + $0x110] sm:$0xf]
        %v400 = vld [vmem:[%s329 + $0x114] sm:$0xf]
        %v401 = vld [vmem:[%s329 + $0x118] sm:$0xf]
        %v402 = vld [vmem:[%s329 + $0x11c] sm:$0xf]
        %v403 = vld [vmem:[%s329 + $0x120] sm:$0xf]
        %v404 = vld [vmem:[%s329 + $0x124] sm:$0xf]
        %v405 = vld [vmem:[%s329 + $0x128] sm:$0xf]
        %v406 = vld [vmem:[%s329 + $0x12c] sm:$0xf]
        %v407 = vld [vmem:[%s329 + $0x130] sm:$0xf]
        %v408 = vld [vmem:[%s329 + $0x134] sm:$0xf]
        %v409 = vld [vmem:[%s329 + $0x138] sm:$0xf]
        %v410 = vld [vmem:[%s329 + $0x13c] sm:$0xf]
        %v411 = vld [vmem:[%s329 + $0x140] sm:$0xf]
        %v412 = vld [vmem:[%s329 + $0x144] sm:$0xf]
        %v413 = vld [vmem:[%s329 + $0x148] sm:$0xf]
        %v414 = vld [vmem:[%s329 + $0x14c] sm:$0xf]
        %v415 = vld [vmem:[%s329 + $0x150] sm:$0xf]
        %v416 = vld [vmem:[%s329 + $0x154] sm:$0xf]
        %v417 = vld [vmem:[%s1] sm:$0xf]
        %v418 = vld [vmem:[%s1 + $0x4] sm:$0xf]
        %v419 = vld [vmem:[%s2] sm:$0x1]
        %v421 = vperm.slane %v419, 0
        %v509 = vunpack.c.l.b16 %v331
        %v510 = vunpack.c.l.b16 %v332
        %v511 = vunpack.c.l.b16 %v333
        %v512 = vunpack.c.l.b16 %v334
        %v513 = vunpack.c.l.b16 %v335
        %v514 = vunpack.c.l.b16 %v336
        %v515 = vunpack.c.l.b16 %v337
        %v516 = vunpack.c.l.b16 %v338
        %v517 = vunpack.c.l.b16 %v339
        %v518 = vunpack.c.l.b16 %v340
        %v519 = vunpack.c.l.b16 %v341
        %v520 = vunpack.c.l.b16 %v342
        %v521 = vunpack.c.l.b16 %v343
        %v522 = vunpack.c.l.b16 %v344
        %v523 = vunpack.c.l.b16 %v345
        %v524 = vunpack.c.l.b16 %v346
        %v525 = vunpack.c.l.b16 %v347
        %v526 = vunpack.c.l.b16 %v348
        %v527 = vunpack.c.l.b16 %v349
        %v528 = vunpack.c.l.b16 %v350
        %v529 = vunpack.c.l.b16 %v351
        %v530 = vunpack.c.l.b16 %v352
        %v531 = vunpack.c.l.b16 %v353
        %v532 = vunpack.c.l.b16 %v354
        %v533 = vunpack.c.l.b16 %v355
        %v534 = vunpack.c.l.b16 %v356
        %v535 = vunpack.c.l.b16 %v357
        %v536 = vunpack.c.l.b16 %v358
        %v537 = vunpack.c.l.b16 %v359
        %v538 = vunpack.c.l.b16 %v360
        %v539 = vunpack.c.l.b16 %v361
        %v540 = vunpack.c.l.b16 %v362
        %v541 = vunpack.c.l.b16 %v363
        %v542 = vunpack.c.l.b16 %v364
        %v543 = vunpack.c.l.b16 %v365
        %v544 = vunpack.c.l.b16 %v366
        %v545 = vunpack.c.l.b16 %v367
        %v546 = vunpack.c.l.b16 %v368
        %v547 = vunpack.c.l.b16 %v369
        %v548 = vunpack.c.l.b16 %v370
        %v549 = vunpack.c.l.b16 %v371
        %v550 = vunpack.c.l.b16 %v372
        %v551 = vunpack.c.l.b16 %v373
        %v552 = vunpack.c.l.b16 %v374
        %v553 = vunpack.c.l.b16 %v375
        %v554 = vunpack.c.l.b16 %v376
        %v555 = vunpack.c.l.b16 %v377
        %v556 = vunpack.c.l.b16 %v378
        %v557 = vunpack.c.l.b16 %v379
        %v558 = vunpack.c.l.b16 %v380
        %v559 = vunpack.c.l.b16 %v381
        %v560 = vunpack.c.l.b16 %v382
        %v561 = vunpack.c.l.b16 %v383
        %v562 = vunpack.c.l.b16 %v384
        %v563 = vunpack.c.l.b16 %v385
        %v564 = vunpack.c.l.b16 %v386
        %v565 = vunpack.c.l.b16 %v387
        %v566 = vunpack.c.l.b16 %v388
        %v567 = vunpack.c.l.b16 %v389
        %v568 = vunpack.c.l.b16 %v390
        %v569 = vunpack.c.l.b16 %v391
        %v570 = vunpack.c.l.b16 %v392
        %v571 = vunpack.c.l.b16 %v393
        %v572 = vunpack.c.l.b16 %v394
        %v573 = vunpack.c.l.b16 %v395
        %v574 = vunpack.c.l.b16 %v396
        %v575 = vunpack.c.l.b16 %v397
        %v576 = vunpack.c.l.b16 %v398
        %v577 = vunpack.c.l.b16 %v399
        %v578 = vunpack.c.l.b16 %v400
        %v579 = vunpack.c.l.b16 %v401
        %v580 = vunpack.c.l.b16 %v402
        %v581 = vunpack.c.l.b16 %v403
        %v582 = vunpack.c.l.b16 %v404
        %v583 = vunpack.c.l.b16 %v405
        %v584 = vunpack.c.l.b16 %v406
        %v585 = vunpack.c.l.b16 %v407
        %v586 = vunpack.c.l.b16 %v408
        %v587 = vunpack.c.l.b16 %v409
        %v588 = vunpack.c.l.b16 %v410
        %v589 = vunpack.c.l.b16 %v411
        %v590 = vunpack.c.l.b16 %v412
        %v591 = vunpack.c.l.b16 %v413
        %v592 = vunpack.c.l.b16 %v414
        %v593 = vunpack.c.l.b16 %v415
        %v594 = vunpack.c.l.b16 %v416
        %v595 = vpack.c.b16 %v510, %v509
        %v596 = vpack.c.b16 %v512, %v511
        %v597 = vpack.c.b16 %v514, %v513
        %v598 = vpack.c.b16 %v516, %v515
        %v599 = vpack.c.b16 %v518, %v517
        %v600 = vpack.c.b16 %v520, %v519
        %v601 = vpack.c.b16 %v522, %v521
        %v602 = vpack.c.b16 %v524, %v523
        %v603 = vpack.c.b16 %v526, %v525
        %v604 = vpack.c.b16 %v528, %v527
        %v605 = vpack.c.b16 %v530, %v529
        %v606 = vpack.c.b16 %v532, %v531
        %v607 = vpack.c.b16 %v534, %v533
        %v608 = vpack.c.b16 %v536, %v535
        %v609 = vpack.c.b16 %v538, %v537
        %v610 = vpack.c.b16 %v540, %v539
        %v611 = vpack.c.b16 %v542, %v541
        %v612 = vpack.c.b16 %v544, %v543
        %v613 = vpack.c.b16 %v546, %v545
        %v614 = vpack.c.b16 %v548, %v547
        %v615 = vpack.c.b16 %v550, %v549
        %v616 = vpack.c.b16 %v552, %v551
        %v617 = vpack.c.b16 %v554, %v553
        %v618 = vpack.c.b16 %v556, %v555
        %v619 = vpack.c.b16 %v558, %v557
        %v620 = vpack.c.b16 %v560, %v559
        %v621 = vpack.c.b16 %v562, %v561
        %v622 = vpack.c.b16 %v564, %v563
        %v623 = vpack.c.b16 %v566, %v565
        %v624 = vpack.c.b16 %v568, %v567
        %v625 = vpack.c.b16 %v570, %v569
        %v626 = vpack.c.b16 %v572, %v571
        %v627 = vpack.c.b16 %v574, %v573
        %v628 = vpack.c.b16 %v576, %v575
        %v629 = vpack.c.b16 %v578, %v577
        %v630 = vpack.c.b16 %v580, %v579
        %v631 = vpack.c.b16 %v582, %v581
        %v632 = vpack.c.b16 %v584, %v583
        %v633 = vpack.c.b16 %v586, %v585
        %v634 = vpack.c.b16 %v588, %v587
        %v635 = vpack.c.b16 %v590, %v589
        %v636 = vpack.c.b16 %v592, %v591
        %v637 = vpack.c.b16 %v594, %v593
        %v640 = vunpack.c.l.b16 %v417
        %v641 = vunpack.c.l.b16 %v418
        %v642 = vpack.c.b16 %v641, %v640
        %vm644 = vcmask 130048
        %v646 = vsel %vm644, %v595, 0
        %v649 = vsel %vm644, %v596, 0
        %v652 = vsel %vm644, %v597, 0
        %v655 = vsel %vm644, %v598, 0
        %v658 = vsel %vm644, %v599, 0
        %v661 = vsel %vm644, %v600, 0
        %v664 = vsel %vm644, %v601, 0
        %v667 = vsel %vm644, %v602, 0
        %v670 = vsel %vm644, %v603, 0
        %v673 = vsel %vm644, %v604, 0
        %v676 = vsel %vm644, %v605, 0
        %v679 = vsel %vm644, %v606, 0
        %v682 = vsel %vm644, %v607, 0
        %v685 = vsel %vm644, %v608, 0
        %v688 = vsel %vm644, %v609, 0
        %v691 = vsel %vm644, %v610, 0
        %v694 = vsel %vm644, %v611, 0
        %v697 = vsel %vm644, %v612, 0
        %v700 = vsel %vm644, %v613, 0
        %v703 = vsel %vm644, %v614, 0
        %v706 = vsel %vm644, %v615, 0
        %v709 = vsel %vm644, %v616, 0
        %v712 = vsel %vm644, %v617, 0
        %v715 = vsel %vm644, %v618, 0
        %v718 = vsel %vm644, %v619, 0
        %v721 = vsel %vm644, %v620, 0
        %v724 = vsel %vm644, %v621, 0
        %v727 = vsel %vm644, %v622, 0
        %v730 = vsel %vm644, %v623, 0
        %v733 = vsel %vm644, %v624, 0
        %v736 = vsel %vm644, %v625, 0
        %v739 = vsel %vm644, %v626, 0
        %v742 = vsel %vm644, %v627, 0
        %v745 = vsel %vm644, %v628, 0
        %v748 = vsel %vm644, %v629, 0
        %v751 = vsel %vm644, %v630, 0
        %v754 = vsel %vm644, %v631, 0
        %v757 = vsel %vm644, %v632, 0
        %v760 = vsel %vm644, %v633, 0
        %v763 = vsel %vm644, %v634, 0
        %v766 = vsel %vm644, %v635, 0
        %v769 = vsel %vm644, %v636, 0
        %v772 = vsel %vm644, %v637, 0
        %774 = vmatpush.bf16.msra.mxu0 0
        %775 = vmatpush.bf16.msra.mxu0 0
        %776 = vmatpush.bf16.msra.mxu0 0
        %777 = vmatpush.bf16.msra.mxu0 0
        %778 = vmatpush.bf16.msra.mxu0 0
        %779 = vmatpush.bf16.msra.mxu0 0
        %780 = vmatpush.bf16.msra.mxu0 0
        %781 = vmatpush.bf16.msra.mxu0 %v642
        %782 = vmatmul.bf16.gmra.mxu0 %v646
        %v783 = vpop.f32.mrf.mxu0
        %v784 = vadd.f32 %v421, %v783
        %v785 = vpop.f32.mrf.mxu0
        %v786 = vadd.f32 %v421, %v785
        %787 = vmatmul.bf16.gmra.mxu0 %v649
        %v788 = vpop.f32.mrf.mxu0
        %v789 = vadd.f32 %v421, %v788
        %v790 = vpop.f32.mrf.mxu0
        %v791 = vadd.f32 %v421, %v790
        %792 = vmatmul.bf16.gmra.mxu0 %v652
        %v793 = vpop.f32.mrf.mxu0
        %v794 = vadd.f32 %v421, %v793
        %v795 = vpop.f32.mrf.mxu0
        %v796 = vadd.f32 %v421, %v795
        %797 = vmatmul.bf16.gmra.mxu0 %v655
        %v798 = vpop.f32.mrf.mxu0
        %v799 = vadd.f32 %v421, %v798
        %v800 = vpop.f32.mrf.mxu0
        %v801 = vadd.f32 %v421, %v800
        %802 = vmatmul.bf16.gmra.mxu0 %v658
        %v803 = vpop.f32.mrf.mxu0
        %v804 = vadd.f32 %v421, %v803
        %v805 = vpop.f32.mrf.mxu0
        %v806 = vadd.f32 %v421, %v805
        %807 = vmatmul.bf16.gmra.mxu0 %v661
        %v808 = vpop.f32.mrf.mxu0
        %v809 = vadd.f32 %v421, %v808
        %v810 = vpop.f32.mrf.mxu0
        %v811 = vadd.f32 %v421, %v810
        %812 = vmatmul.bf16.gmra.mxu0 %v664
        %v813 = vpop.f32.mrf.mxu0
        %v814 = vadd.f32 %v421, %v813
        %v815 = vpop.f32.mrf.mxu0
        %v816 = vadd.f32 %v421, %v815
        %817 = vmatmul.bf16.gmra.mxu0 %v667
        %v818 = vpop.f32.mrf.mxu0
        %v819 = vadd.f32 %v421, %v818
        %v820 = vpop.f32.mrf.mxu0
        %v821 = vadd.f32 %v421, %v820
        %822 = vmatmul.bf16.gmra.mxu0 %v670
        %v823 = vpop.f32.mrf.mxu0
        %v824 = vadd.f32 %v421, %v823
        %v825 = vpop.f32.mrf.mxu0
        %v826 = vadd.f32 %v421, %v825
        %827 = vmatmul.bf16.gmra.mxu0 %v673
        %v828 = vpop.f32.mrf.mxu0
        %v829 = vadd.f32 %v421, %v828
        %v830 = vpop.f32.mrf.mxu0
        %v831 = vadd.f32 %v421, %v830
        %832 = vmatmul.bf16.gmra.mxu0 %v676
        %v833 = vpop.f32.mrf.mxu0
        %v834 = vadd.f32 %v421, %v833
        %v835 = vpop.f32.mrf.mxu0
        %v836 = vadd.f32 %v421, %v835
        %837 = vmatmul.bf16.gmra.mxu0 %v679
        %v838 = vpop.f32.mrf.mxu0
        %v839 = vadd.f32 %v421, %v838
        %v840 = vpop.f32.mrf.mxu0
        %v841 = vadd.f32 %v421, %v840
        %842 = vmatmul.bf16.gmra.mxu0 %v682
        %v843 = vpop.f32.mrf.mxu0
        %v844 = vadd.f32 %v421, %v843
        %v845 = vpop.f32.mrf.mxu0
        %v846 = vadd.f32 %v421, %v845
        %847 = vmatmul.bf16.gmra.mxu0 %v685
        %v848 = vpop.f32.mrf.mxu0
        %v849 = vadd.f32 %v421, %v848
        %v850 = vpop.f32.mrf.mxu0
        %v851 = vadd.f32 %v421, %v850
        %852 = vmatmul.bf16.gmra.mxu0 %v688
        %v853 = vpop.f32.mrf.mxu0
        %v854 = vadd.f32 %v421, %v853
        %v855 = vpop.f32.mrf.mxu0
        %v856 = vadd.f32 %v421, %v855
        %857 = vmatmul.bf16.gmra.mxu0 %v691
        %v858 = vpop.f32.mrf.mxu0
        %v859 = vadd.f32 %v421, %v858
        %v860 = vpop.f32.mrf.mxu0
        %v861 = vadd.f32 %v421, %v860
        %862 = vmatmul.bf16.gmra.mxu0 %v694
        %v863 = vpop.f32.mrf.mxu0
        %v864 = vadd.f32 %v421, %v863
        %v865 = vpop.f32.mrf.mxu0
        %v866 = vadd.f32 %v421, %v865
        %867 = vmatmul.bf16.gmra.mxu0 %v697
        %v868 = vpop.f32.mrf.mxu0
        %v869 = vadd.f32 %v421, %v868
        %v870 = vpop.f32.mrf.mxu0
        %v871 = vadd.f32 %v421, %v870
        %872 = vmatmul.bf16.gmra.mxu0 %v700
        %v873 = vpop.f32.mrf.mxu0
        %v874 = vadd.f32 %v421, %v873
        %v875 = vpop.f32.mrf.mxu0
        %v876 = vadd.f32 %v421, %v875
        %877 = vmatmul.bf16.gmra.mxu0 %v703
        %v878 = vpop.f32.mrf.mxu0
        %v879 = vadd.f32 %v421, %v878
        %v880 = vpop.f32.mrf.mxu0
        %v881 = vadd.f32 %v421, %v880
        %882 = vmatmul.bf16.gmra.mxu0 %v706
        %v883 = vpop.f32.mrf.mxu0
        %v884 = vadd.f32 %v421, %v883
        %v885 = vpop.f32.mrf.mxu0
        %v886 = vadd.f32 %v421, %v885
        %887 = vmatmul.bf16.gmra.mxu0 %v709
        %v888 = vpop.f32.mrf.mxu0
        %v889 = vadd.f32 %v421, %v888
        %v890 = vpop.f32.mrf.mxu0
        %v891 = vadd.f32 %v421, %v890
        %892 = vmatmul.bf16.gmra.mxu0 %v712
        %v893 = vpop.f32.mrf.mxu0
        %v894 = vadd.f32 %v421, %v893
        %v895 = vpop.f32.mrf.mxu0
        %v896 = vadd.f32 %v421, %v895
        %897 = vmatmul.bf16.gmra.mxu0 %v715
        %v898 = vpop.f32.mrf.mxu0
        %v899 = vadd.f32 %v421, %v898
        %v900 = vpop.f32.mrf.mxu0
        %v901 = vadd.f32 %v421, %v900
        %902 = vmatmul.bf16.gmra.mxu0 %v718
        %v903 = vpop.f32.mrf.mxu0
        %v904 = vadd.f32 %v421, %v903
        %v905 = vpop.f32.mrf.mxu0
        %v906 = vadd.f32 %v421, %v905
        %907 = vmatmul.bf16.gmra.mxu0 %v721
        %v908 = vpop.f32.mrf.mxu0
        %v909 = vadd.f32 %v421, %v908
        %v910 = vpop.f32.mrf.mxu0
        %v911 = vadd.f32 %v421, %v910
        %912 = vmatmul.bf16.gmra.mxu0 %v724
        %v913 = vpop.f32.mrf.mxu0
        %v914 = vadd.f32 %v421, %v913
        %v915 = vpop.f32.mrf.mxu0
        %v916 = vadd.f32 %v421, %v915
        %917 = vmatmul.bf16.gmra.mxu0 %v727
        %v918 = vpop.f32.mrf.mxu0
        %v919 = vadd.f32 %v421, %v918
        %v920 = vpop.f32.mrf.mxu0
        %v921 = vadd.f32 %v421, %v920
        %922 = vmatmul.bf16.gmra.mxu0 %v730
        %v923 = vpop.f32.mrf.mxu0
        %v924 = vadd.f32 %v421, %v923
        %v925 = vpop.f32.mrf.mxu0
        %v926 = vadd.f32 %v421, %v925
        %927 = vmatmul.bf16.gmra.mxu0 %v733
        %v928 = vpop.f32.mrf.mxu0
        %v929 = vadd.f32 %v421, %v928
        %v930 = vpop.f32.mrf.mxu0
        %v931 = vadd.f32 %v421, %v930
        %932 = vmatmul.bf16.gmra.mxu0 %v736
        %v933 = vpop.f32.mrf.mxu0
        %v934 = vadd.f32 %v421, %v933
        %v935 = vpop.f32.mrf.mxu0
        %v936 = vadd.f32 %v421, %v935
        %937 = vmatmul.bf16.gmra.mxu0 %v739
        %v938 = vpop.f32.mrf.mxu0
        %v939 = vadd.f32 %v421, %v938
        %v940 = vpop.f32.mrf.mxu0
        %v941 = vadd.f32 %v421, %v940
        %942 = vmatmul.bf16.gmra.mxu0 %v742
        %v943 = vpop.f32.mrf.mxu0
        %v944 = vadd.f32 %v421, %v943
        %v945 = vpop.f32.mrf.mxu0
        %v946 = vadd.f32 %v421, %v945
        %947 = vmatmul.bf16.gmra.mxu0 %v745
        %v948 = vpop.f32.mrf.mxu0
        %v949 = vadd.f32 %v421, %v948
        %v950 = vpop.f32.mrf.mxu0
        %v951 = vadd.f32 %v421, %v950
        %952 = vmatmul.bf16.gmra.mxu0 %v748
        %v953 = vpop.f32.mrf.mxu0
        %v954 = vadd.f32 %v421, %v953
        %v955 = vpop.f32.mrf.mxu0
        %v956 = vadd.f32 %v421, %v955
        %957 = vmatmul.bf16.gmra.mxu0 %v751
        %v958 = vpop.f32.mrf.mxu0
        %v959 = vadd.f32 %v421, %v958
        %v960 = vpop.f32.mrf.mxu0
        %v961 = vadd.f32 %v421, %v960
        %962 = vmatmul.bf16.gmra.mxu0 %v754
        %v963 = vpop.f32.mrf.mxu0
        %v964 = vadd.f32 %v421, %v963
        %v965 = vpop.f32.mrf.mxu0
        %v966 = vadd.f32 %v421, %v965
        %967 = vmatmul.bf16.gmra.mxu0 %v757
        %v968 = vpop.f32.mrf.mxu0
        %v969 = vadd.f32 %v421, %v968
        %v970 = vpop.f32.mrf.mxu0
        %v971 = vadd.f32 %v421, %v970
        %972 = vmatmul.bf16.gmra.mxu0 %v760
        %v973 = vpop.f32.mrf.mxu0
        %v974 = vadd.f32 %v421, %v973
        %v975 = vpop.f32.mrf.mxu0
        %v976 = vadd.f32 %v421, %v975
        %977 = vmatmul.bf16.gmra.mxu0 %v763
        %v978 = vpop.f32.mrf.mxu0
        %v979 = vadd.f32 %v421, %v978
        %v980 = vpop.f32.mrf.mxu0
        %v981 = vadd.f32 %v421, %v980
        %982 = vmatmul.bf16.gmra.mxu0 %v766
        %v983 = vpop.f32.mrf.mxu0
        %v984 = vadd.f32 %v421, %v983
        %v985 = vpop.f32.mrf.mxu0
        %v986 = vadd.f32 %v421, %v985
        %987 = vmatmul.bf16.gmra.mxu0 %v769
        %v988 = vpop.f32.mrf.mxu0
        %v989 = vadd.f32 %v421, %v988
        %v990 = vpop.f32.mrf.mxu0
        %v991 = vadd.f32 %v421, %v990
        %992 = vmatmul.bf16.gmra.mxu0 %v772
        %v993 = vpop.f32.mrf.mxu0
        %v994 = vadd.f32 %v421, %v993
        %v995 = vpop.f32.mrf.mxu0
        %v996 = vadd.f32 %v421, %v995
        %997 = vdwg.mxu0
        %v998 = vmax.f32 %v784, 0.0
        %v999 = vmax.f32 %v786, 0.0
        %v1000 = vmax.f32 %v789, 0.0
        %v1001 = vmax.f32 %v791, 0.0
        %v1002 = vmax.f32 %v794, 0.0
        %v1003 = vmax.f32 %v796, 0.0
        %v1004 = vmax.f32 %v799, 0.0
        %v1005 = vmax.f32 %v801, 0.0
        %v1006 = vmax.f32 %v804, 0.0
        %v1007 = vmax.f32 %v806, 0.0
        %v1008 = vmax.f32 %v809, 0.0
        %v1009 = vmax.f32 %v811, 0.0
        %v1010 = vmax.f32 %v814, 0.0
        %v1011 = vmax.f32 %v816, 0.0
        %v1012 = vmax.f32 %v819, 0.0
        %v1013 = vmax.f32 %v821, 0.0
        %v1014 = vmax.f32 %v824, 0.0
        %v1015 = vmax.f32 %v826, 0.0
        %v1016 = vmax.f32 %v829, 0.0
        %v1017 = vmax.f32 %v831, 0.0
        %v1018 = vmax.f32 %v834, 0.0
        %v1019 = vmax.f32 %v836, 0.0
        %v1020 = vmax.f32 %v839, 0.0
        %v1021 = vmax.f32 %v841, 0.0
        %v1022 = vmax.f32 %v844, 0.0
        %v1023 = vmax.f32 %v846, 0.0
        %v1024 = vmax.f32 %v849, 0.0
        %v1025 = vmax.f32 %v851, 0.0
        %v1026 = vmax.f32 %v854, 0.0
        %v1027 = vmax.f32 %v856, 0.0
        %v1028 = vmax.f32 %v859, 0.0
        %v1029 = vmax.f32 %v861, 0.0
        %v1030 = vmax.f32 %v864, 0.0
        %v1031 = vmax.f32 %v866, 0.0
        %v1032 = vmax.f32 %v869, 0.0
        %v1033 = vmax.f32 %v871, 0.0
        %v1034 = vmax.f32 %v874, 0.0
        %v1035 = vmax.f32 %v876, 0.0
        %v1036 = vmax.f32 %v879, 0.0
        %v1037 = vmax.f32 %v881, 0.0
        %v1038 = vmax.f32 %v884, 0.0
        %v1039 = vmax.f32 %v886, 0.0
        %v1040 = vmax.f32 %v889, 0.0
        %v1041 = vmax.f32 %v891, 0.0
        %v1042 = vmax.f32 %v894, 0.0
        %v1043 = vmax.f32 %v896, 0.0
        %v1044 = vmax.f32 %v899, 0.0
        %v1045 = vmax.f32 %v901, 0.0
        %v1046 = vmax.f32 %v904, 0.0
        %v1047 = vmax.f32 %v906, 0.0
        %v1048 = vmax.f32 %v909, 0.0
        %v1049 = vmax.f32 %v911, 0.0
        %v1050 = vmax.f32 %v914, 0.0
        %v1051 = vmax.f32 %v916, 0.0
        %v1052 = vmax.f32 %v919, 0.0
        %v1053 = vmax.f32 %v921, 0.0
        %v1054 = vmax.f32 %v924, 0.0
        %v1055 = vmax.f32 %v926, 0.0
        %v1056 = vmax.f32 %v929, 0.0
        %v1057 = vmax.f32 %v931, 0.0
        %v1058 = vmax.f32 %v934, 0.0
        %v1059 = vmax.f32 %v936, 0.0
        %v1060 = vmax.f32 %v939, 0.0
        %v1061 = vmax.f32 %v941, 0.0
        %v1062 = vmax.f32 %v944, 0.0
        %v1063 = vmax.f32 %v946, 0.0
        %v1064 = vmax.f32 %v949, 0.0
        %v1065 = vmax.f32 %v951, 0.0
        %v1066 = vmax.f32 %v954, 0.0
        %v1067 = vmax.f32 %v956, 0.0
        %v1068 = vmax.f32 %v959, 0.0
        %v1069 = vmax.f32 %v961, 0.0
        %v1070 = vmax.f32 %v964, 0.0
        %v1071 = vmax.f32 %v966, 0.0
        %v1072 = vmax.f32 %v969, 0.0
        %v1073 = vmax.f32 %v971, 0.0
        %v1074 = vmax.f32 %v974, 0.0
        %v1075 = vmax.f32 %v976, 0.0
        %v1076 = vmax.f32 %v979, 0.0
        %v1077 = vmax.f32 %v981, 0.0
        %v1078 = vmax.f32 %v984, 0.0
        %v1079 = vmax.f32 %v986, 0.0
        %v1080 = vmax.f32 %v989, 0.0
        %v1081 = vmax.f32 %v991, 0.0
        %v1082 = vmax.f32 %v994, 0.0
        %v1083 = vmax.f32 %v996, 0.0
        %vm1164 = vcmask 1046528
        %v1165 = vrot.slane %v998, 1
        %v1166 = vrot.slane %v999, 1
        %v1167 = vsel %vm1164, %v1165, %v1166
        %v1168 = vrot.slane %v1000, 1
        %v1169 = vsel %vm1164, %v1166, %v1168
        %v1170 = vrot.slane %v1001, 1
        %v1171 = vsel %vm1164, %v1168, %v1170
        %v1172 = vrot.slane %v1002, 1
        %v1173 = vsel %vm1164, %v1170, %v1172
        %v1174 = vrot.slane %v1003, 1
        %v1175 = vsel %vm1164, %v1172, %v1174
        %v1176 = vrot.slane %v1004, 1
        %v1177 = vsel %vm1164, %v1174, %v1176
        %v1178 = vrot.slane %v1005, 1
        %v1179 = vsel %vm1164, %v1176, %v1178
        %v1180 = vrot.slane %v1006, 1
        %v1181 = vsel %vm1164, %v1178, %v1180
        %v1182 = vrot.slane %v1007, 1
        %v1183 = vsel %vm1164, %v1180, %v1182
        %v1184 = vrot.slane %v1008, 1
        %v1185 = vsel %vm1164, %v1182, %v1184
        %v1186 = vrot.slane %v1009, 1
        %v1187 = vsel %vm1164, %v1184, %v1186
        %v1188 = vrot.slane %v1010, 1
        %v1189 = vsel %vm1164, %v1186, %v1188
        %v1190 = vrot.slane %v1011, 1
        %v1191 = vsel %vm1164, %v1188, %v1190
        %v1192 = vrot.slane %v1012, 1
        %v1193 = vsel %vm1164, %v1190, %v1192
        %v1194 = vrot.slane %v1013, 1
        %v1195 = vsel %vm1164, %v1192, %v1194
        %v1196 = vrot.slane %v1014, 1
        %v1197 = vsel %vm1164, %v1194, %v1196
        %v1198 = vrot.slane %v1015, 1
        %v1199 = vsel %vm1164, %v1196, %v1198
        %v1200 = vrot.slane %v1016, 1
        %v1201 = vsel %vm1164, %v1198, %v1200
        %v1202 = vrot.slane %v1017, 1
        %v1203 = vsel %vm1164, %v1200, %v1202
        %v1204 = vrot.slane %v1018, 1
        %v1205 = vsel %vm1164, %v1202, %v1204
        %v1206 = vrot.slane %v1019, 1
        %v1207 = vsel %vm1164, %v1204, %v1206
        %v1208 = vrot.slane %v1020, 1
        %v1209 = vsel %vm1164, %v1206, %v1208
        %v1210 = vrot.slane %v1021, 1
        %v1211 = vsel %vm1164, %v1208, %v1210
        %v1212 = vrot.slane %v1022, 1
        %v1213 = vsel %vm1164, %v1210, %v1212
        %v1214 = vrot.slane %v1023, 1
        %v1215 = vsel %vm1164, %v1212, %v1214
        %v1216 = vrot.slane %v1024, 1
        %v1217 = vsel %vm1164, %v1214, %v1216
        %v1218 = vrot.slane %v1025, 1
        %v1219 = vsel %vm1164, %v1216, %v1218
        %v1220 = vrot.slane %v1026, 1
        %v1221 = vsel %vm1164, %v1218, %v1220
        %v1222 = vrot.slane %v1027, 1
        %v1223 = vsel %vm1164, %v1220, %v1222
        %v1224 = vrot.slane %v1028, 1
        %v1225 = vsel %vm1164, %v1222, %v1224
        %v1226 = vrot.slane %v1029, 1
        %v1227 = vsel %vm1164, %v1224, %v1226
        %v1228 = vrot.slane %v1030, 1
        %v1229 = vsel %vm1164, %v1226, %v1228
        %v1230 = vrot.slane %v1031, 1
        %v1231 = vsel %vm1164, %v1228, %v1230
        %v1232 = vrot.slane %v1032, 1
        %v1233 = vsel %vm1164, %v1230, %v1232
        %v1234 = vrot.slane %v1033, 1
        %v1235 = vsel %vm1164, %v1232, %v1234
        %v1236 = vrot.slane %v1034, 1
        %v1237 = vsel %vm1164, %v1234, %v1236
        %v1238 = vrot.slane %v1035, 1
        %v1239 = vsel %vm1164, %v1236, %v1238
        %v1240 = vrot.slane %v1036, 1
        %v1241 = vsel %vm1164, %v1238, %v1240
        %v1242 = vrot.slane %v1037, 1
        %v1243 = vsel %vm1164, %v1240, %v1242
        %v1244 = vrot.slane %v1038, 1
        %v1245 = vsel %vm1164, %v1242, %v1244
        %v1246 = vrot.slane %v1039, 1
        %v1247 = vsel %vm1164, %v1244, %v1246
        %v1248 = vrot.slane %v1040, 1
        %v1249 = vsel %vm1164, %v1246, %v1248
        %v1250 = vrot.slane %v1041, 1
        %v1251 = vsel %vm1164, %v1248, %v1250
        %v1252 = vrot.slane %v1042, 1
        %v1253 = vsel %vm1164, %v1250, %v1252
        %v1254 = vrot.slane %v1043, 1
        %v1255 = vsel %vm1164, %v1252, %v1254
        %v1256 = vrot.slane %v1044, 1
        %v1257 = vsel %vm1164, %v1254, %v1256
        %v1258 = vrot.slane %v1045, 1
        %v1259 = vsel %vm1164, %v1256, %v1258
        %v1260 = vrot.slane %v1046, 1
        %v1261 = vsel %vm1164, %v1258, %v1260
        %v1262 = vrot.slane %v1047, 1
        %v1263 = vsel %vm1164, %v1260, %v1262
        %v1264 = vrot.slane %v1048, 1
        %v1265 = vsel %vm1164, %v1262, %v1264
        %v1266 = vrot.slane %v1049, 1
        %v1267 = vsel %vm1164, %v1264, %v1266
        %v1268 = vrot.slane %v1050, 1
        %v1269 = vsel %vm1164, %v1266, %v1268
        %v1270 = vrot.slane %v1051, 1
        %v1271 = vsel %vm1164, %v1268, %v1270
        %v1272 = vrot.slane %v1052, 1
        %v1273 = vsel %vm1164, %v1270, %v1272
        %v1274 = vrot.slane %v1053, 1
        %v1275 = vsel %vm1164, %v1272, %v1274
        %v1276 = vrot.slane %v1054, 1
        %v1277 = vsel %vm1164, %v1274, %v1276
        %v1278 = vrot.slane %v1055, 1
        %v1279 = vsel %vm1164, %v1276, %v1278
        %v1280 = vrot.slane %v1056, 1
        %v1281 = vsel %vm1164, %v1278, %v1280
        %v1282 = vrot.slane %v1057, 1
        %v1283 = vsel %vm1164, %v1280, %v1282
        %v1284 = vrot.slane %v1058, 1
        %v1285 = vsel %vm1164, %v1282, %v1284
        %v1286 = vrot.slane %v1059, 1
        %v1287 = vsel %vm1164, %v1284, %v1286
        %v1288 = vrot.slane %v1060, 1
        %v1289 = vsel %vm1164, %v1286, %v1288
        %v1290 = vrot.slane %v1061, 1
        %v1291 = vsel %vm1164, %v1288, %v1290
        %v1292 = vrot.slane %v1062, 1
        %v1293 = vsel %vm1164, %v1290, %v1292
        %v1294 = vrot.slane %v1063, 1
        %v1295 = vsel %vm1164, %v1292, %v1294
        %v1296 = vrot.slane %v1064, 1
        %v1297 = vsel %vm1164, %v1294, %v1296
        %v1298 = vrot.slane %v1065, 1
        %v1299 = vsel %vm1164, %v1296, %v1298
        %v1300 = vrot.slane %v1066, 1
        %v1301 = vsel %vm1164, %v1298, %v1300
        %v1302 = vrot.slane %v1067, 1
        %v1303 = vsel %vm1164, %v1300, %v1302
        %v1304 = vrot.slane %v1068, 1
        %v1305 = vsel %vm1164, %v1302, %v1304
        %v1306 = vrot.slane %v1069, 1
        %v1307 = vsel %vm1164, %v1304, %v1306
        %v1308 = vrot.slane %v1070, 1
        %v1309 = vsel %vm1164, %v1306, %v1308
        %v1310 = vrot.slane %v1071, 1
        %v1311 = vsel %vm1164, %v1308, %v1310
        %v1312 = vrot.slane %v1072, 1
        %v1313 = vsel %vm1164, %v1310, %v1312
        %v1314 = vrot.slane %v1073, 1
        %v1315 = vsel %vm1164, %v1312, %v1314
        %v1316 = vrot.slane %v1074, 1
        %v1317 = vsel %vm1164, %v1314, %v1316
        %v1318 = vrot.slane %v1075, 1
        %v1319 = vsel %vm1164, %v1316, %v1318
        %v1320 = vrot.slane %v1076, 1
        %v1321 = vsel %vm1164, %v1318, %v1320
        %v1322 = vrot.slane %v1077, 1
        %v1323 = vsel %vm1164, %v1320, %v1322
        %1324 = vrot.lane.b32.xlu0 %v1167, 32
        %v1325 = vpop.permute.xlu0 %1324
        %1326 = vrot.lane.b32.xlu0 %v1169, 32
        %v1327 = vpop.permute.xlu0 %1326
        %1328 = vrot.lane.b32.xlu0 %v1171, 32
        %v1329 = vpop.permute.xlu0 %1328
        %1330 = vrot.lane.b32.xlu0 %v1173, 32
        %v1331 = vpop.permute.xlu0 %1330
        %1332 = vrot.lane.b32.xlu0 %v1175, 32
        %v1333 = vpop.permute.xlu0 %1332
        %1334 = vrot.lane.b32.xlu0 %v1177, 32
        %v1335 = vpop.permute.xlu0 %1334
        %1336 = vrot.lane.b32.xlu0 %v1179, 32
        %v1337 = vpop.permute.xlu0 %1336
        %1338 = vrot.lane.b32.xlu0 %v1181, 32
        %v1339 = vpop.permute.xlu0 %1338
        %1340 = vrot.lane.b32.xlu0 %v1183, 32
        %v1341 = vpop.permute.xlu0 %1340
        %1342 = vrot.lane.b32.xlu0 %v1185, 32
        %v1343 = vpop.permute.xlu0 %1342
        %1344 = vrot.lane.b32.xlu0 %v1187, 32
        %v1345 = vpop.permute.xlu0 %1344
        %1346 = vrot.lane.b32.xlu0 %v1189, 32
        %v1347 = vpop.permute.xlu0 %1346
        %1348 = vrot.lane.b32.xlu0 %v1191, 32
        %v1349 = vpop.permute.xlu0 %1348
        %1350 = vrot.lane.b32.xlu0 %v1193, 32
        %v1351 = vpop.permute.xlu0 %1350
        %1352 = vrot.lane.b32.xlu0 %v1195, 32
        %v1353 = vpop.permute.xlu0 %1352
        %1354 = vrot.lane.b32.xlu0 %v1197, 32
        %v1355 = vpop.permute.xlu0 %1354
        %1356 = vrot.lane.b32.xlu0 %v1199, 32
        %v1357 = vpop.permute.xlu0 %1356
        %1358 = vrot.lane.b32.xlu0 %v1201, 32
        %v1359 = vpop.permute.xlu0 %1358
        %1360 = vrot.lane.b32.xlu0 %v1203, 32
        %v1361 = vpop.permute.xlu0 %1360
        %1362 = vrot.lane.b32.xlu0 %v1205, 32
        %v1363 = vpop.permute.xlu0 %1362
        %1364 = vrot.lane.b32.xlu0 %v1207, 32
        %v1365 = vpop.permute.xlu0 %1364
        %1366 = vrot.lane.b32.xlu0 %v1209, 32
        %v1367 = vpop.permute.xlu0 %1366
        %1368 = vrot.lane.b32.xlu0 %v1211, 32
        %v1369 = vpop.permute.xlu0 %1368
        %1370 = vrot.lane.b32.xlu0 %v1213, 32
        %v1371 = vpop.permute.xlu0 %1370
        %1372 = vrot.lane.b32.xlu0 %v1215, 32
        %v1373 = vpop.permute.xlu0 %1372
        %1374 = vrot.lane.b32.xlu0 %v1217, 32
        %v1375 = vpop.permute.xlu0 %1374
        %1376 = vrot.lane.b32.xlu0 %v1219, 32
        %v1377 = vpop.permute.xlu0 %1376
        %1378 = vrot.lane.b32.xlu0 %v1221, 32
        %v1379 = vpop.permute.xlu0 %1378
        %1380 = vrot.lane.b32.xlu0 %v1223, 32
        %v1381 = vpop.permute.xlu0 %1380
        %1382 = vrot.lane.b32.xlu0 %v1225, 32
        %v1383 = vpop.permute.xlu0 %1382
        %1384 = vrot.lane.b32.xlu0 %v1227, 32
        %v1385 = vpop.permute.xlu0 %1384
        %1386 = vrot.lane.b32.xlu0 %v1229, 32
        %v1387 = vpop.permute.xlu0 %1386
        %1388 = vrot.lane.b32.xlu0 %v1231, 32
        %v1389 = vpop.permute.xlu0 %1388
        %1390 = vrot.lane.b32.xlu0 %v1233, 32
        %v1391 = vpop.permute.xlu0 %1390
        %1392 = vrot.lane.b32.xlu0 %v1235, 32
        %v1393 = vpop.permute.xlu0 %1392
        %1394 = vrot.lane.b32.xlu0 %v1237, 32
        %v1395 = vpop.permute.xlu0 %1394
        %1396 = vrot.lane.b32.xlu0 %v1239, 32
        %v1397 = vpop.permute.xlu0 %1396
        %1398 = vrot.lane.b32.xlu0 %v1241, 32
        %v1399 = vpop.permute.xlu0 %1398
        %1400 = vrot.lane.b32.xlu0 %v1243, 32
        %v1401 = vpop.permute.xlu0 %1400
        %1402 = vrot.lane.b32.xlu0 %v1245, 32
        %v1403 = vpop.permute.xlu0 %1402
        %1404 = vrot.lane.b32.xlu0 %v1247, 32
        %v1405 = vpop.permute.xlu0 %1404
        %1406 = vrot.lane.b32.xlu0 %v1249, 32
        %v1407 = vpop.permute.xlu0 %1406
        %1408 = vrot.lane.b32.xlu0 %v1251, 32
        %v1409 = vpop.permute.xlu0 %1408
        %1410 = vrot.lane.b32.xlu0 %v1253, 32
        %v1411 = vpop.permute.xlu0 %1410
        %1412 = vrot.lane.b32.xlu0 %v1255, 32
        %v1413 = vpop.permute.xlu0 %1412
        %1414 = vrot.lane.b32.xlu0 %v1257, 32
        %v1415 = vpop.permute.xlu0 %1414
        %1416 = vrot.lane.b32.xlu0 %v1259, 32
        %v1417 = vpop.permute.xlu0 %1416
        %1418 = vrot.lane.b32.xlu0 %v1261, 32
        %v1419 = vpop.permute.xlu0 %1418
        %1420 = vrot.lane.b32.xlu0 %v1263, 32
        %v1421 = vpop.permute.xlu0 %1420
        %1422 = vrot.lane.b32.xlu0 %v1265, 32
        %v1423 = vpop.permute.xlu0 %1422
        %1424 = vrot.lane.b32.xlu0 %v1267, 32
        %v1425 = vpop.permute.xlu0 %1424
        %1426 = vrot.lane.b32.xlu0 %v1269, 32
        %v1427 = vpop.permute.xlu0 %1426
        %1428 = vrot.lane.b32.xlu0 %v1271, 32
        %v1429 = vpop.permute.xlu0 %1428
        %1430 = vrot.lane.b32.xlu0 %v1273, 32
        %v1431 = vpop.permute.xlu0 %1430
        %1432 = vrot.lane.b32.xlu0 %v1275, 32
        %v1433 = vpop.permute.xlu0 %1432
        %1434 = vrot.lane.b32.xlu0 %v1277, 32
        %v1435 = vpop.permute.xlu0 %1434
        %1436 = vrot.lane.b32.xlu0 %v1279, 32
        %v1437 = vpop.permute.xlu0 %1436
        %1438 = vrot.lane.b32.xlu0 %v1281, 32
        %v1439 = vpop.permute.xlu0 %1438
        %1440 = vrot.lane.b32.xlu0 %v1283, 32
        %v1441 = vpop.permute.xlu0 %1440
        %1442 = vrot.lane.b32.xlu0 %v1285, 32
        %v1443 = vpop.permute.xlu0 %1442
        %1444 = vrot.lane.b32.xlu0 %v1287, 32
        %v1445 = vpop.permute.xlu0 %1444
        %1446 = vrot.lane.b32.xlu0 %v1289, 32
        %v1447 = vpop.permute.xlu0 %1446
        %1448 = vrot.lane.b32.xlu0 %v1291, 32
        %v1449 = vpop.permute.xlu0 %1448
        %1450 = vrot.lane.b32.xlu0 %v1293, 32
        %v1451 = vpop.permute.xlu0 %1450
        %1452 = vrot.lane.b32.xlu0 %v1295, 32
        %v1453 = vpop.permute.xlu0 %1452
        %1454 = vrot.lane.b32.xlu0 %v1297, 32
        %v1455 = vpop.permute.xlu0 %1454
        %1456 = vrot.lane.b32.xlu0 %v1299, 32
        %v1457 = vpop.permute.xlu0 %1456
        %1458 = vrot.lane.b32.xlu0 %v1301, 32
        %v1459 = vpop.permute.xlu0 %1458
        %1460 = vrot.lane.b32.xlu0 %v1303, 32
        %v1461 = vpop.permute.xlu0 %1460
        %1462 = vrot.lane.b32.xlu0 %v1305, 32
        %v1463 = vpop.permute.xlu0 %1462
        %1464 = vrot.lane.b32.xlu0 %v1307, 32
        %v1465 = vpop.permute.xlu0 %1464
        %1466 = vrot.lane.b32.xlu0 %v1309, 32
        %v1467 = vpop.permute.xlu0 %1466
        %1468 = vrot.lane.b32.xlu0 %v1311, 32
        %v1469 = vpop.permute.xlu0 %1468
        %1470 = vrot.lane.b32.xlu0 %v1313, 32
        %v1471 = vpop.permute.xlu0 %1470
        %1472 = vrot.lane.b32.xlu0 %v1315, 32
        %v1473 = vpop.permute.xlu0 %1472
        %1474 = vrot.lane.b32.xlu0 %v1317, 32
        %v1475 = vpop.permute.xlu0 %1474
        %1476 = vrot.lane.b32.xlu0 %v1319, 32
        %v1477 = vpop.permute.xlu0 %1476
        %1478 = vrot.lane.b32.xlu0 %v1321, 32
        %v1479 = vpop.permute.xlu0 %1478
        %1480 = vrot.lane.b32.xlu0 %v1323, 32
        %v1481 = vpop.permute.xlu0 %1480
        %vm1561 = vcmask 1045504
        %v1562 = vrot.slane %v998, 2
        %v1563 = vrot.slane %v999, 2
        %v1564 = vsel %vm1561, %v1562, %v1563
        %v1565 = vrot.slane %v1000, 2
        %v1566 = vsel %vm1561, %v1563, %v1565
        %v1567 = vrot.slane %v1001, 2
        %v1568 = vsel %vm1561, %v1565, %v1567
        %v1569 = vrot.slane %v1002, 2
        %v1570 = vsel %vm1561, %v1567, %v1569
        %v1571 = vrot.slane %v1003, 2
        %v1572 = vsel %vm1561, %v1569, %v1571
        %v1573 = vrot.slane %v1004, 2
        %v1574 = vsel %vm1561, %v1571, %v1573
        %v1575 = vrot.slane %v1005, 2
        %v1576 = vsel %vm1561, %v1573, %v1575
        %v1577 = vrot.slane %v1006, 2
        %v1578 = vsel %vm1561, %v1575, %v1577
        %v1579 = vrot.slane %v1007, 2
        %v1580 = vsel %vm1561, %v1577, %v1579
        %v1581 = vrot.slane %v1008, 2
        %v1582 = vsel %vm1561, %v1579, %v1581
        %v1583 = vrot.slane %v1009, 2
        %v1584 = vsel %vm1561, %v1581, %v1583
        %v1585 = vrot.slane %v1010, 2
        %v1586 = vsel %vm1561, %v1583, %v1585
        %v1587 = vrot.slane %v1011, 2
        %v1588 = vsel %vm1561, %v1585, %v1587
        %v1589 = vrot.slane %v1012, 2
        %v1590 = vsel %vm1561, %v1587, %v1589
        %v1591 = vrot.slane %v1013, 2
        %v1592 = vsel %vm1561, %v1589, %v1591
        %v1593 = vrot.slane %v1014, 2
        %v1594 = vsel %vm1561, %v1591, %v1593
        %v1595 = vrot.slane %v1015, 2
        %v1596 = vsel %vm1561, %v1593, %v1595
        %v1597 = vrot.slane %v1016, 2
        %v1598 = vsel %vm1561, %v1595, %v1597
        %v1599 = vrot.slane %v1017, 2
        %v1600 = vsel %vm1561, %v1597, %v1599
        %v1601 = vrot.slane %v1018, 2
        %v1602 = vsel %vm1561, %v1599, %v1601
        %v1603 = vrot.slane %v1019, 2
        %v1604 = vsel %vm1561, %v1601, %v1603
        %v1605 = vrot.slane %v1020, 2
        %v1606 = vsel %vm1561, %v1603, %v1605
        %v1607 = vrot.slane %v1021, 2
        %v1608 = vsel %vm1561, %v1605, %v1607
        %v1609 = vrot.slane %v1022, 2
        %v1610 = vsel %vm1561, %v1607, %v1609
        %v1611 = vrot.slane %v1023, 2
        %v1612 = vsel %vm1561, %v1609, %v1611
        %v1613 = vrot.slane %v1024, 2
        %v1614 = vsel %vm1561, %v1611, %v1613
        %v1615 = vrot.slane %v1025, 2
        %v1616 = vsel %vm1561, %v1613, %v1615
        %v1617 = vrot.slane %v1026, 2
        %v1618 = vsel %vm1561, %v1615, %v1617
        %v1619 = vrot.slane %v1027, 2
        %v1620 = vsel %vm1561, %v1617, %v1619
        %v1621 = vrot.slane %v1028, 2
        %v1622 = vsel %vm1561, %v1619, %v1621
        %v1623 = vrot.slane %v1029, 2
        %v1624 = vsel %vm1561, %v1621, %v1623
        %v1625 = vrot.slane %v1030, 2
        %v1626 = vsel %vm1561, %v1623, %v1625
        %v1627 = vrot.slane %v1031, 2
        %v1628 = vsel %vm1561, %v1625, %v1627
        %v1629 = vrot.slane %v1032, 2
        %v1630 = vsel %vm1561, %v1627, %v1629
        %v1631 = vrot.slane %v1033, 2
        %v1632 = vsel %vm1561, %v1629, %v1631
        %v1633 = vrot.slane %v1034, 2
        %v1634 = vsel %vm1561, %v1631, %v1633
        %v1635 = vrot.slane %v1035, 2
        %v1636 = vsel %vm1561, %v1633, %v1635
        %v1637 = vrot.slane %v1036, 2
        %v1638 = vsel %vm1561, %v1635, %v1637
        %v1639 = vrot.slane %v1037, 2
        %v1640 = vsel %vm1561, %v1637, %v1639
        %v1641 = vrot.slane %v1038, 2
        %v1642 = vsel %vm1561, %v1639, %v1641
        %v1643 = vrot.slane %v1039, 2
        %v1644 = vsel %vm1561, %v1641, %v1643
        %v1645 = vrot.slane %v1040, 2
        %v1646 = vsel %vm1561, %v1643, %v1645
        %v1647 = vrot.slane %v1041, 2
        %v1648 = vsel %vm1561, %v1645, %v1647
        %v1649 = vrot.slane %v1042, 2
        %v1650 = vsel %vm1561, %v1647, %v1649
        %v1651 = vrot.slane %v1043, 2
        %v1652 = vsel %vm1561, %v1649, %v1651
        %v1653 = vrot.slane %v1044, 2
        %v1654 = vsel %vm1561, %v1651, %v1653
        %v1655 = vrot.slane %v1045, 2
        %v1656 = vsel %vm1561, %v1653, %v1655
        %v1657 = vrot.slane %v1046, 2
        %v1658 = vsel %vm1561, %v1655, %v1657
        %v1659 = vrot.slane %v1047, 2
        %v1660 = vsel %vm1561, %v1657, %v1659
        %v1661 = vrot.slane %v1048, 2
        %v1662 = vsel %vm1561, %v1659, %v1661
        %v1663 = vrot.slane %v1049, 2
        %v1664 = vsel %vm1561, %v1661, %v1663
        %v1665 = vrot.slane %v1050, 2
        %v1666 = vsel %vm1561, %v1663, %v1665
        %v1667 = vrot.slane %v1051, 2
        %v1668 = vsel %vm1561, %v1665, %v1667
        %v1669 = vrot.slane %v1052, 2
        %v1670 = vsel %vm1561, %v1667, %v1669
        %v1671 = vrot.slane %v1053, 2
        %v1672 = vsel %vm1561, %v1669, %v1671
        %v1673 = vrot.slane %v1054, 2
        %v1674 = vsel %vm1561, %v1671, %v1673
        %v1675 = vrot.slane %v1055, 2
        %v1676 = vsel %vm1561, %v1673, %v1675
        %v1677 = vrot.slane %v1056, 2
        %v1678 = vsel %vm1561, %v1675, %v1677
        %v1679 = vrot.slane %v1057, 2
        %v1680 = vsel %vm1561, %v1677, %v1679
        %v1681 = vrot.slane %v1058, 2
        %v1682 = vsel %vm1561, %v1679, %v1681
        %v1683 = vrot.slane %v1059, 2
        %v1684 = vsel %vm1561, %v1681, %v1683
        %v1685 = vrot.slane %v1060, 2
        %v1686 = vsel %vm1561, %v1683, %v1685
        %v1687 = vrot.slane %v1061, 2
        %v1688 = vsel %vm1561, %v1685, %v1687
        %v1689 = vrot.slane %v1062, 2
        %v1690 = vsel %vm1561, %v1687, %v1689
        %v1691 = vrot.slane %v1063, 2
        %v1692 = vsel %vm1561, %v1689, %v1691
        %v1693 = vrot.slane %v1064, 2
        %v1694 = vsel %vm1561, %v1691, %v1693
        %v1695 = vrot.slane %v1065, 2
        %v1696 = vsel %vm1561, %v1693, %v1695
        %v1697 = vrot.slane %v1066, 2
        %v1698 = vsel %vm1561, %v1695, %v1697
        %v1699 = vrot.slane %v1067, 2
        %v1700 = vsel %vm1561, %v1697, %v1699
        %v1701 = vrot.slane %v1068, 2
        %v1702 = vsel %vm1561, %v1699, %v1701
        %v1703 = vrot.slane %v1069, 2
        %v1704 = vsel %vm1561, %v1701, %v1703
        %v1705 = vrot.slane %v1070, 2
        %v1706 = vsel %vm1561, %v1703, %v1705
        %v1707 = vrot.slane %v1071, 2
        %v1708 = vsel %vm1561, %v1705, %v1707
        %v1709 = vrot.slane %v1072, 2
        %v1710 = vsel %vm1561, %v1707, %v1709
        %v1711 = vrot.slane %v1073, 2
        %v1712 = vsel %vm1561, %v1709, %v1711
        %v1713 = vrot.slane %v1074, 2
        %v1714 = vsel %vm1561, %v1711, %v1713
        %v1715 = vrot.slane %v1075, 2
        %v1716 = vsel %vm1561, %v1713, %v1715
        %v1717 = vrot.slane %v1076, 2
        %v1718 = vsel %vm1561, %v1715, %v1717
        %v1719 = vrot.slane %v1077, 2
        %v1720 = vsel %vm1561, %v1717, %v1719
        %1721 = vrot.lane.b32.xlu0 %v1564, 64
        %v1722 = vpop.permute.xlu0 %1721
        %1723 = vrot.lane.b32.xlu0 %v1566, 64
        %v1724 = vpop.permute.xlu0 %1723
        %1725 = vrot.lane.b32.xlu0 %v1568, 64
        %v1726 = vpop.permute.xlu0 %1725
        %1727 = vrot.lane.b32.xlu0 %v1570, 64
        %v1728 = vpop.permute.xlu0 %1727
        %1729 = vrot.lane.b32.xlu0 %v1572, 64
        %v1730 = vpop.permute.xlu0 %1729
        %1731 = vrot.lane.b32.xlu0 %v1574, 64
        %v1732 = vpop.permute.xlu0 %1731
        %1733 = vrot.lane.b32.xlu0 %v1576, 64
        %v1734 = vpop.permute.xlu0 %1733
        %1735 = vrot.lane.b32.xlu0 %v1578, 64
        %v1736 = vpop.permute.xlu0 %1735
        %1737 = vrot.lane.b32.xlu0 %v1580, 64
        %v1738 = vpop.permute.xlu0 %1737
        %1739 = vrot.lane.b32.xlu0 %v1582, 64
        %v1740 = vpop.permute.xlu0 %1739
        %1741 = vrot.lane.b32.xlu0 %v1584, 64
        %v1742 = vpop.permute.xlu0 %1741
        %1743 = vrot.lane.b32.xlu0 %v1586, 64
        %v1744 = vpop.permute.xlu0 %1743
        %1745 = vrot.lane.b32.xlu0 %v1588, 64
        %v1746 = vpop.permute.xlu0 %1745
        %1747 = vrot.lane.b32.xlu0 %v1590, 64
        %v1748 = vpop.permute.xlu0 %1747
        %1749 = vrot.lane.b32.xlu0 %v1592, 64
        %v1750 = vpop.permute.xlu0 %1749
        %1751 = vrot.lane.b32.xlu0 %v1594, 64
        %v1752 = vpop.permute.xlu0 %1751
        %1753 = vrot.lane.b32.xlu0 %v1596, 64
        %v1754 = vpop.permute.xlu0 %1753
        %1755 = vrot.lane.b32.xlu0 %v1598, 64
        %v1756 = vpop.permute.xlu0 %1755
        %1757 = vrot.lane.b32.xlu0 %v1600, 64
        %v1758 = vpop.permute.xlu0 %1757
        %1759 = vrot.lane.b32.xlu0 %v1602, 64
        %v1760 = vpop.permute.xlu0 %1759
        %1761 = vrot.lane.b32.xlu0 %v1604, 64
        %v1762 = vpop.permute.xlu0 %1761
        %1763 = vrot.lane.b32.xlu0 %v1606, 64
        %v1764 = vpop.permute.xlu0 %1763
        %1765 = vrot.lane.b32.xlu0 %v1608, 64
        %v1766 = vpop.permute.xlu0 %1765
        %1767 = vrot.lane.b32.xlu0 %v1610, 64
        %v1768 = vpop.permute.xlu0 %1767
        %1769 = vrot.lane.b32.xlu0 %v1612, 64
        %v1770 = vpop.permute.xlu0 %1769
        %1771 = vrot.lane.b32.xlu0 %v1614, 64
        %v1772 = vpop.permute.xlu0 %1771
        %1773 = vrot.lane.b32.xlu0 %v1616, 64
        %v1774 = vpop.permute.xlu0 %1773
        %1775 = vrot.lane.b32.xlu0 %v1618, 64
        %v1776 = vpop.permute.xlu0 %1775
        %1777 = vrot.lane.b32.xlu0 %v1620, 64
        %v1778 = vpop.permute.xlu0 %1777
        %1779 = vrot.lane.b32.xlu0 %v1622, 64
        %v1780 = vpop.permute.xlu0 %1779
        %1781 = vrot.lane.b32.xlu0 %v1624, 64
        %v1782 = vpop.permute.xlu0 %1781
        %1783 = vrot.lane.b32.xlu0 %v1626, 64
        %v1784 = vpop.permute.xlu0 %1783
        %1785 = vrot.lane.b32.xlu0 %v1628, 64
        %v1786 = vpop.permute.xlu0 %1785
        %1787 = vrot.lane.b32.xlu0 %v1630, 64
        %v1788 = vpop.permute.xlu0 %1787
        %1789 = vrot.lane.b32.xlu0 %v1632, 64
        %v1790 = vpop.permute.xlu0 %1789
        %1791 = vrot.lane.b32.xlu0 %v1634, 64
        %v1792 = vpop.permute.xlu0 %1791
        %1793 = vrot.lane.b32.xlu0 %v1636, 64
        %v1794 = vpop.permute.xlu0 %1793
        %1795 = vrot.lane.b32.xlu0 %v1638, 64
        %v1796 = vpop.permute.xlu0 %1795
        %1797 = vrot.lane.b32.xlu0 %v1640, 64
        %v1798 = vpop.permute.xlu0 %1797
        %1799 = vrot.lane.b32.xlu0 %v1642, 64
        %v1800 = vpop.permute.xlu0 %1799
        %1801 = vrot.lane.b32.xlu0 %v1644, 64
        %v1802 = vpop.permute.xlu0 %1801
        %1803 = vrot.lane.b32.xlu0 %v1646, 64
        %v1804 = vpop.permute.xlu0 %1803
        %1805 = vrot.lane.b32.xlu0 %v1648, 64
        %v1806 = vpop.permute.xlu0 %1805
        %1807 = vrot.lane.b32.xlu0 %v1650, 64
        %v1808 = vpop.permute.xlu0 %1807
        %1809 = vrot.lane.b32.xlu0 %v1652, 64
        %v1810 = vpop.permute.xlu0 %1809
        %1811 = vrot.lane.b32.xlu0 %v1654, 64
        %v1812 = vpop.permute.xlu0 %1811
        %1813 = vrot.lane.b32.xlu0 %v1656, 64
        %v1814 = vpop.permute.xlu0 %1813
        %1815 = vrot.lane.b32.xlu0 %v1658, 64
        %v1816 = vpop.permute.xlu0 %1815
        %1817 = vrot.lane.b32.xlu0 %v1660, 64
        %v1818 = vpop.permute.xlu0 %1817
        %1819 = vrot.lane.b32.xlu0 %v1662, 64
        %v1820 = vpop.permute.xlu0 %1819
        %1821 = vrot.lane.b32.xlu0 %v1664, 64
        %v1822 = vpop.permute.xlu0 %1821
        %1823 = vrot.lane.b32.xlu0 %v1666, 64
        %v1824 = vpop.permute.xlu0 %1823
        %1825 = vrot.lane.b32.xlu0 %v1668, 64
        %v1826 = vpop.permute.xlu0 %1825
        %1827 = vrot.lane.b32.xlu0 %v1670, 64
        %v1828 = vpop.permute.xlu0 %1827
        %1829 = vrot.lane.b32.xlu0 %v1672, 64
        %v1830 = vpop.permute.xlu0 %1829
        %1831 = vrot.lane.b32.xlu0 %v1674, 64
        %v1832 = vpop.permute.xlu0 %1831
        %1833 = vrot.lane.b32.xlu0 %v1676, 64
        %v1834 = vpop.permute.xlu0 %1833
        %1835 = vrot.lane.b32.xlu0 %v1678, 64
        %v1836 = vpop.permute.xlu0 %1835
        %1837 = vrot.lane.b32.xlu0 %v1680, 64
        %v1838 = vpop.permute.xlu0 %1837
        %1839 = vrot.lane.b32.xlu0 %v1682, 64
        %v1840 = vpop.permute.xlu0 %1839
        %1841 = vrot.lane.b32.xlu0 %v1684, 64
        %v1842 = vpop.permute.xlu0 %1841
        %1843 = vrot.lane.b32.xlu0 %v1686, 64
        %v1844 = vpop.permute.xlu0 %1843
        %1845 = vrot.lane.b32.xlu0 %v1688, 64
        %v1846 = vpop.permute.xlu0 %1845
        %1847 = vrot.lane.b32.xlu0 %v1690, 64
        %v1848 = vpop.permute.xlu0 %1847
        %1849 = vrot.lane.b32.xlu0 %v1692, 64
        %v1850 = vpop.permute.xlu0 %1849
        %1851 = vrot.lane.b32.xlu0 %v1694, 64
        %v1852 = vpop.permute.xlu0 %1851
        %1853 = vrot.lane.b32.xlu0 %v1696, 64
        %v1854 = vpop.permute.xlu0 %1853
        %1855 = vrot.lane.b32.xlu0 %v1698, 64
        %v1856 = vpop.permute.xlu0 %1855
        %1857 = vrot.lane.b32.xlu0 %v1700, 64
        %v1858 = vpop.permute.xlu0 %1857
        %1859 = vrot.lane.b32.xlu0 %v1702, 64
        %v1860 = vpop.permute.xlu0 %1859
        %1861 = vrot.lane.b32.xlu0 %v1704, 64
        %v1862 = vpop.permute.xlu0 %1861
        %1863 = vrot.lane.b32.xlu0 %v1706, 64
        %v1864 = vpop.permute.xlu0 %1863
        %1865 = vrot.lane.b32.xlu0 %v1708, 64
        %v1866 = vpop.permute.xlu0 %1865
        %1867 = vrot.lane.b32.xlu0 %v1710, 64
        %v1868 = vpop.permute.xlu0 %1867
        %1869 = vrot.lane.b32.xlu0 %v1712, 64
        %v1870 = vpop.permute.xlu0 %1869
        %1871 = vrot.lane.b32.xlu0 %v1714, 64
        %v1872 = vpop.permute.xlu0 %1871
        %1873 = vrot.lane.b32.xlu0 %v1716, 64
        %v1874 = vpop.permute.xlu0 %1873
        %1875 = vrot.lane.b32.xlu0 %v1718, 64
        %v1876 = vpop.permute.xlu0 %1875
        %1877 = vrot.lane.b32.xlu0 %v1720, 64
        %v1878 = vpop.permute.xlu0 %1877
        %vm1958 = vcmask 261120
        %v1959 = vsel %vm1958, %v998, %v1325
        %v1960 = vsel %vm1958, %v999, %v1327
        %v1961 = vsel %vm1958, %v1000, %v1329
        %v1962 = vsel %vm1958, %v1001, %v1331
        %v1963 = vsel %vm1958, %v1002, %v1333
        %v1964 = vsel %vm1958, %v1003, %v1335
        %v1965 = vsel %vm1958, %v1004, %v1337
        %v1966 = vsel %vm1958, %v1005, %v1339
        %v1967 = vsel %vm1958, %v1006, %v1341
        %v1968 = vsel %vm1958, %v1007, %v1343
        %v1969 = vsel %vm1958, %v1008, %v1345
        %v1970 = vsel %vm1958, %v1009, %v1347
        %v1971 = vsel %vm1958, %v1010, %v1349
        %v1972 = vsel %vm1958, %v1011, %v1351
        %v1973 = vsel %vm1958, %v1012, %v1353
        %v1974 = vsel %vm1958, %v1013, %v1355
        %v1975 = vsel %vm1958, %v1014, %v1357
        %v1976 = vsel %vm1958, %v1015, %v1359
        %v1977 = vsel %vm1958, %v1016, %v1361
        %v1978 = vsel %vm1958, %v1017, %v1363
        %v1979 = vsel %vm1958, %v1018, %v1365
        %v1980 = vsel %vm1958, %v1019, %v1367
        %v1981 = vsel %vm1958, %v1020, %v1369
        %v1982 = vsel %vm1958, %v1021, %v1371
        %v1983 = vsel %vm1958, %v1022, %v1373
        %v1984 = vsel %vm1958, %v1023, %v1375
        %v1985 = vsel %vm1958, %v1024, %v1377
        %v1986 = vsel %vm1958, %v1025, %v1379
        %v1987 = vsel %vm1958, %v1026, %v1381
        %v1988 = vsel %vm1958, %v1027, %v1383
        %v1989 = vsel %vm1958, %v1028, %v1385
        %v1990 = vsel %vm1958, %v1029, %v1387
        %v1991 = vsel %vm1958, %v1030, %v1389
        %v1992 = vsel %vm1958, %v1031, %v1391
        %v1993 = vsel %vm1958, %v1032, %v1393
        %v1994 = vsel %vm1958, %v1033, %v1395
        %v1995 = vsel %vm1958, %v1034, %v1397
        %v1996 = vsel %vm1958, %v1035, %v1399
        %v1997 = vsel %vm1958, %v1036, %v1401
        %v1998 = vsel %vm1958, %v1037, %v1403
        %v1999 = vsel %vm1958, %v1038, %v1405
        %v2000 = vsel %vm1958, %v1039, %v1407
        %v2001 = vsel %vm1958, %v1040, %v1409
        %v2002 = vsel %vm1958, %v1041, %v1411
        %v2003 = vsel %vm1958, %v1042, %v1413
        %v2004 = vsel %vm1958, %v1043, %v1415
        %v2005 = vsel %vm1958, %v1044, %v1417
        %v2006 = vsel %vm1958, %v1045, %v1419
        %v2007 = vsel %vm1958, %v1046, %v1421
        %v2008 = vsel %vm1958, %v1047, %v1423
        %v2009 = vsel %vm1958, %v1048, %v1425
        %v2010 = vsel %vm1958, %v1049, %v1427
        %v2011 = vsel %vm1958, %v1050, %v1429
        %v2012 = vsel %vm1958, %v1051, %v1431
        %v2013 = vsel %vm1958, %v1052, %v1433
        %v2014 = vsel %vm1958, %v1053, %v1435
        %v2015 = vsel %vm1958, %v1054, %v1437
        %v2016 = vsel %vm1958, %v1055, %v1439
        %v2017 = vsel %vm1958, %v1056, %v1441
        %v2018 = vsel %vm1958, %v1057, %v1443
        %v2019 = vsel %vm1958, %v1058, %v1445
        %v2020 = vsel %vm1958, %v1059, %v1447
        %v2021 = vsel %vm1958, %v1060, %v1449
        %v2022 = vsel %vm1958, %v1061, %v1451
        %v2023 = vsel %vm1958, %v1062, %v1453
        %v2024 = vsel %vm1958, %v1063, %v1455
        %v2025 = vsel %vm1958, %v1064, %v1457
        %v2026 = vsel %vm1958, %v1065, %v1459
        %v2027 = vsel %vm1958, %v1066, %v1461
        %v2028 = vsel %vm1958, %v1067, %v1463
        %v2029 = vsel %vm1958, %v1068, %v1465
        %v2030 = vsel %vm1958, %v1069, %v1467
        %v2031 = vsel %vm1958, %v1070, %v1469
        %v2032 = vsel %vm1958, %v1071, %v1471
        %v2033 = vsel %vm1958, %v1072, %v1473
        %v2034 = vsel %vm1958, %v1073, %v1475
        %v2035 = vsel %vm1958, %v1074, %v1477
        %v2036 = vsel %vm1958, %v1075, %v1479
        %v2037 = vsel %vm1958, %v1076, %v1481
        %vm2038 = vcmask 523264
        %v2039 = vsel %vm2038, %v1959, %v1722
        %v2040 = vsel %vm2038, %v1960, %v1724
        %v2041 = vsel %vm2038, %v1961, %v1726
        %v2042 = vsel %vm2038, %v1962, %v1728
        %v2043 = vsel %vm2038, %v1963, %v1730
        %v2044 = vsel %vm2038, %v1964, %v1732
        %v2045 = vsel %vm2038, %v1965, %v1734
        %v2046 = vsel %vm2038, %v1966, %v1736
        %v2047 = vsel %vm2038, %v1967, %v1738
        %v2048 = vsel %vm2038, %v1968, %v1740
        %v2049 = vsel %vm2038, %v1969, %v1742
        %v2050 = vsel %vm2038, %v1970, %v1744
        %v2051 = vsel %vm2038, %v1971, %v1746
        %v2052 = vsel %vm2038, %v1972, %v1748
        %v2053 = vsel %vm2038, %v1973, %v1750
        %v2054 = vsel %vm2038, %v1974, %v1752
        %v2055 = vsel %vm2038, %v1975, %v1754
        %v2056 = vsel %vm2038, %v1976, %v1756
        %v2057 = vsel %vm2038, %v1977, %v1758
        %v2058 = vsel %vm2038, %v1978, %v1760
        %v2059 = vsel %vm2038, %v1979, %v1762
        %v2060 = vsel %vm2038, %v1980, %v1764
        %v2061 = vsel %vm2038, %v1981, %v1766
        %v2062 = vsel %vm2038, %v1982, %v1768
        %v2063 = vsel %vm2038, %v1983, %v1770
        %v2064 = vsel %vm2038, %v1984, %v1772
        %v2065 = vsel %vm2038, %v1985, %v1774
        %v2066 = vsel %vm2038, %v1986, %v1776
        %v2067 = vsel %vm2038, %v1987, %v1778
        %v2068 = vsel %vm2038, %v1988, %v1780
        %v2069 = vsel %vm2038, %v1989, %v1782
        %v2070 = vsel %vm2038, %v1990, %v1784
        %v2071 = vsel %vm2038, %v1991, %v1786
        %v2072 = vsel %vm2038, %v1992, %v1788
        %v2073 = vsel %vm2038, %v1993, %v1790
        %v2074 = vsel %vm2038, %v1994, %v1792
        %v2075 = vsel %vm2038, %v1995, %v1794
        %v2076 = vsel %vm2038, %v1996, %v1796
        %v2077 = vsel %vm2038, %v1997, %v1798
        %v2078 = vsel %vm2038, %v1998, %v1800
        %v2079 = vsel %vm2038, %v1999, %v1802
        %v2080 = vsel %vm2038, %v2000, %v1804
        %v2081 = vsel %vm2038, %v2001, %v1806
        %v2082 = vsel %vm2038, %v2002, %v1808
        %v2083 = vsel %vm2038, %v2003, %v1810
        %v2084 = vsel %vm2038, %v2004, %v1812
        %v2085 = vsel %vm2038, %v2005, %v1814
        %v2086 = vsel %vm2038, %v2006, %v1816
        %v2087 = vsel %vm2038, %v2007, %v1818
        %v2088 = vsel %vm2038, %v2008, %v1820
        %v2089 = vsel %vm2038, %v2009, %v1822
        %v2090 = vsel %vm2038, %v2010, %v1824
        %v2091 = vsel %vm2038, %v2011, %v1826
        %v2092 = vsel %vm2038, %v2012, %v1828
        %v2093 = vsel %vm2038, %v2013, %v1830
        %v2094 = vsel %vm2038, %v2014, %v1832
        %v2095 = vsel %vm2038, %v2015, %v1834
        %v2096 = vsel %vm2038, %v2016, %v1836
        %v2097 = vsel %vm2038, %v2017, %v1838
        %v2098 = vsel %vm2038, %v2018, %v1840
        %v2099 = vsel %vm2038, %v2019, %v1842
        %v2100 = vsel %vm2038, %v2020, %v1844
        %v2101 = vsel %vm2038, %v2021, %v1846
        %v2102 = vsel %vm2038, %v2022, %v1848
        %v2103 = vsel %vm2038, %v2023, %v1850
        %v2104 = vsel %vm2038, %v2024, %v1852
        %v2105 = vsel %vm2038, %v2025, %v1854
        %v2106 = vsel %vm2038, %v2026, %v1856
        %v2107 = vsel %vm2038, %v2027, %v1858
        %v2108 = vsel %vm2038, %v2028, %v1860
        %v2109 = vsel %vm2038, %v2029, %v1862
        %v2110 = vsel %vm2038, %v2030, %v1864
        %v2111 = vsel %vm2038, %v2031, %v1866
        %v2112 = vsel %vm2038, %v2032, %v1868
        %v2113 = vsel %vm2038, %v2033, %v1870
        %v2114 = vsel %vm2038, %v2034, %v1872
        %v2115 = vsel %vm2038, %v2035, %v1874
        %v2116 = vsel %vm2038, %v2036, %v1876
        %v2117 = vsel %vm2038, %v2037, %v1878
        %v2118 = vpack.c.bf16 %v2040, %v2039
        %v2119 = vpack.c.bf16 %v2042, %v2041
        %v2120 = vpack.c.bf16 %v2044, %v2043
        %v2121 = vpack.c.bf16 %v2046, %v2045
        %v2122 = vpack.c.bf16 %v2048, %v2047
        %v2123 = vpack.c.bf16 %v2050, %v2049
        %v2124 = vpack.c.bf16 %v2052, %v2051
        %v2125 = vpack.c.bf16 %v2054, %v2053
        %v2126 = vpack.c.bf16 %v2056, %v2055
        %v2127 = vpack.c.bf16 %v2058, %v2057
        %v2128 = vpack.c.bf16 %v2060, %v2059
        %v2129 = vpack.c.bf16 %v2062, %v2061
        %v2130 = vpack.c.bf16 %v2064, %v2063
        %v2131 = vpack.c.bf16 %v2066, %v2065
        %v2132 = vpack.c.bf16 %v2068, %v2067
        %v2133 = vpack.c.bf16 %v2070, %v2069
        %v2134 = vpack.c.bf16 %v2072, %v2071
        %v2135 = vpack.c.bf16 %v2074, %v2073
        %v2136 = vpack.c.bf16 %v2076, %v2075
        %v2137 = vpack.c.bf16 %v2078, %v2077
        %v2138 = vpack.c.bf16 %v2080, %v2079
        %v2139 = vpack.c.bf16 %v2082, %v2081
        %v2140 = vpack.c.bf16 %v2084, %v2083
        %v2141 = vpack.c.bf16 %v2086, %v2085
        %v2142 = vpack.c.bf16 %v2088, %v2087
        %v2143 = vpack.c.bf16 %v2090, %v2089
        %v2144 = vpack.c.bf16 %v2092, %v2091
        %v2145 = vpack.c.bf16 %v2094, %v2093
        %v2146 = vpack.c.bf16 %v2096, %v2095
        %v2147 = vpack.c.bf16 %v2098, %v2097
        %v2148 = vpack.c.bf16 %v2100, %v2099
        %v2149 = vpack.c.bf16 %v2102, %v2101
        %v2150 = vpack.c.bf16 %v2104, %v2103
        %v2151 = vpack.c.bf16 %v2106, %v2105
        %v2152 = vpack.c.bf16 %v2108, %v2107
        %v2153 = vpack.c.bf16 %v2110, %v2109
        %v2154 = vpack.c.bf16 %v2112, %v2111
        %v2155 = vpack.c.bf16 %v2114, %v2113
        %v2156 = vpack.c.bf16 %v2116, %v2115
        %v2157 = vpack.c.bf16 %v2117, %v2117
        %v2158 = vld [vmem:[%s3] sm:$0xf]
        %v2159 = vld [vmem:[%s3 + $0x4] sm:$0xf]
        %v2160 = vld [vmem:[%s3 + $0x8] sm:$0xf]
        %v2161 = vld [vmem:[%s3 + $0xc] sm:$0xf]
        %v2162 = vld [vmem:[%s3 + $0x10] sm:$0xf]
        %v2163 = vld [vmem:[%s3 + $0x14] sm:$0xf]
        %v2164 = vld [vmem:[%s3 + $0x18] sm:$0xf]
        %v2165 = vld [vmem:[%s3 + $0x1c] sm:$0xf]
        %v2166 = vld [vmem:[%s3 + $0x20] sm:$0xf]
        %v2167 = vld [vmem:[%s3 + $0x24] sm:$0xf]
        %v2168 = vld [vmem:[%s3 + $0x28] sm:$0xf]
        %v2169 = vld [vmem:[%s3 + $0x2c] sm:$0xf]
        %v2173 = vrot.slane %v1078, 1
        %v2174 = vsel %vm1164, %v1322, %v2173
        %v2175 = vrot.slane %v1079, 1
        %v2176 = vsel %vm1164, %v2173, %v2175
        %v2177 = vrot.slane %v1080, 1
        %v2178 = vsel %vm1164, %v2175, %v2177
        %2179 = vrot.lane.b32.xlu0 %v2174, 32
        %v2180 = vpop.permute.xlu0 %2179
        %2181 = vrot.lane.b32.xlu0 %v2176, 32
        %v2182 = vpop.permute.xlu0 %2181
        %2183 = vrot.lane.b32.xlu0 %v2178, 32
        %v2184 = vpop.permute.xlu0 %2183
        %2185 = vrot.lane.b32.xlu0 %v2177, 32
        %v2186 = vpop.permute.xlu0 %2185
        %v2191 = vrot.slane %v1078, 2
        %v2192 = vsel %vm1561, %v1719, %v2191
        %v2193 = vrot.slane %v1079, 2
        %v2194 = vsel %vm1561, %v2191, %v2193
        %v2195 = vrot.slane %v1080, 2
        %v2196 = vsel %vm1561, %v2193, %v2195
        %2197 = vrot.lane.b32.xlu0 %v2192, 64
        %v2198 = vpop.permute.xlu0 %2197
        %2199 = vrot.lane.b32.xlu0 %v2194, 64
        %v2200 = vpop.permute.xlu0 %2199
        %2201 = vrot.lane.b32.xlu0 %v2196, 64
        %v2202 = vpop.permute.xlu0 %2201
        %2203 = vrot.lane.b32.xlu0 %v2195, 64
        %v2204 = vpop.permute.xlu0 %2203
        %v2209 = vsel %vm1958, %v1077, %v2180
        %v2210 = vsel %vm1958, %v1078, %v2182
        %v2211 = vsel %vm1958, %v1079, %v2184
        %v2212 = vsel %vm1958, %v1080, %v2186
        %v2213 = vsel %vm2038, %v2209, %v2198
        %v2214 = vsel %vm2038, %v2210, %v2200
        %v2215 = vsel %vm2038, %v2211, %v2202
        %v2216 = vsel %vm2038, %v2212, %v2204
        %v2217 = vpack.c.bf16 %v2043, %v2042
        %v2218 = vpack.c.bf16 %v2045, %v2044
        %v2219 = vpack.c.bf16 %v2047, %v2046
        %v2220 = vpack.c.bf16 %v2049, %v2048
        %v2221 = vpack.c.bf16 %v2051, %v2050
        %v2222 = vpack.c.bf16 %v2053, %v2052
        %v2223 = vpack.c.bf16 %v2055, %v2054
        %v2224 = vpack.c.bf16 %v2057, %v2056
        %v2225 = vpack.c.bf16 %v2059, %v2058
        %v2226 = vpack.c.bf16 %v2061, %v2060
        %v2227 = vpack.c.bf16 %v2063, %v2062
        %v2228 = vpack.c.bf16 %v2065, %v2064
        %v2229 = vpack.c.bf16 %v2067, %v2066
        %v2230 = vpack.c.bf16 %v2069, %v2068
        %v2231 = vpack.c.bf16 %v2071, %v2070
        %v2232 = vpack.c.bf16 %v2073, %v2072
        %v2233 = vpack.c.bf16 %v2075, %v2074
        %v2234 = vpack.c.bf16 %v2077, %v2076
        %v2235 = vpack.c.bf16 %v2079, %v2078
        %v2236 = vpack.c.bf16 %v2081, %v2080
        %v2237 = vpack.c.bf16 %v2083, %v2082
        %v2238 = vpack.c.bf16 %v2085, %v2084
        %v2239 = vpack.c.bf16 %v2087, %v2086
        %v2240 = vpack.c.bf16 %v2089, %v2088
        %v2241 = vpack.c.bf16 %v2091, %v2090
        %v2242 = vpack.c.bf16 %v2093, %v2092
        %v2243 = vpack.c.bf16 %v2095, %v2094
        %v2244 = vpack.c.bf16 %v2097, %v2096
        %v2245 = vpack.c.bf16 %v2099, %v2098
        %v2246 = vpack.c.bf16 %v2101, %v2100
        %v2247 = vpack.c.bf16 %v2103, %v2102
        %v2248 = vpack.c.bf16 %v2105, %v2104
        %v2249 = vpack.c.bf16 %v2107, %v2106
        %v2250 = vpack.c.bf16 %v2109, %v2108
        %v2251 = vpack.c.bf16 %v2111, %v2110
        %v2252 = vpack.c.bf16 %v2113, %v2112
        %v2253 = vpack.c.bf16 %v2115, %v2114
        %v2254 = vpack.c.bf16 %v2117, %v2116
        %v2255 = vpack.c.bf16 %v2214, %v2213
        %v2256 = vpack.c.bf16 %v2216, %v2215
        %s2257 = scalar_lea.vmem %s3, 48
        %v2258 = vld [vmem:[%s2257] sm:$0xf]
        %v2259 = vld [vmem:[%s2257 + $0x4] sm:$0xf]
        %v2260 = vld [vmem:[%s2257 + $0x8] sm:$0xf]
        %v2261 = vld [vmem:[%s2257 + $0xc] sm:$0xf]
        %v2262 = vld [vmem:[%s2257 + $0x10] sm:$0xf]
        %v2263 = vld [vmem:[%s2257 + $0x14] sm:$0xf]
        %v2264 = vld [vmem:[%s2257 + $0x18] sm:$0xf]
        %v2265 = vld [vmem:[%s2257 + $0x1c] sm:$0xf]
        %v2266 = vld [vmem:[%s2257 + $0x20] sm:$0xf]
        %v2267 = vld [vmem:[%s2257 + $0x24] sm:$0xf]
        %v2268 = vld [vmem:[%s2257 + $0x28] sm:$0xf]
        %v2269 = vld [vmem:[%s2257 + $0x2c] sm:$0xf]
        %vm2310 = vcmask 1046528
        %v2311 = vrot.slane %v2217, 1
        %v2312 = vrot.slane %v2218, 1
        %v2313 = vsel %vm2310, %v2311, %v2312
        %v2314 = vrot.slane %v2219, 1
        %v2315 = vsel %vm2310, %v2312, %v2314
        %v2316 = vrot.slane %v2220, 1
        %v2317 = vsel %vm2310, %v2314, %v2316
        %v2318 = vrot.slane %v2221, 1
        %v2319 = vsel %vm2310, %v2316, %v2318
        %v2320 = vrot.slane %v2222, 1
        %v2321 = vsel %vm2310, %v2318, %v2320
        %v2322 = vrot.slane %v2223, 1
        %v2323 = vsel %vm2310, %v2320, %v2322
        %v2324 = vrot.slane %v2224, 1
        %v2325 = vsel %vm2310, %v2322, %v2324
        %v2326 = vrot.slane %v2225, 1
        %v2327 = vsel %vm2310, %v2324, %v2326
        %v2328 = vrot.slane %v2226, 1
        %v2329 = vsel %vm2310, %v2326, %v2328
        %v2330 = vrot.slane %v2227, 1
        %v2331 = vsel %vm2310, %v2328, %v2330
        %v2332 = vrot.slane %v2228, 1
        %v2333 = vsel %vm2310, %v2330, %v2332
        %v2334 = vrot.slane %v2229, 1
        %v2335 = vsel %vm2310, %v2332, %v2334
        %v2336 = vrot.slane %v2230, 1
        %v2337 = vsel %vm2310, %v2334, %v2336
        %v2338 = vrot.slane %v2231, 1
        %v2339 = vsel %vm2310, %v2336, %v2338
        %v2340 = vrot.slane %v2232, 1
        %v2341 = vsel %vm2310, %v2338, %v2340
        %v2342 = vrot.slane %v2233, 1
        %v2343 = vsel %vm2310, %v2340, %v2342
        %v2344 = vrot.slane %v2234, 1
        %v2345 = vsel %vm2310, %v2342, %v2344
        %v2346 = vrot.slane %v2235, 1
        %v2347 = vsel %vm2310, %v2344, %v2346
        %v2348 = vrot.slane %v2236, 1
        %v2349 = vsel %vm2310, %v2346, %v2348
        %v2350 = vrot.slane %v2237, 1
        %v2351 = vsel %vm2310, %v2348, %v2350
        %v2352 = vrot.slane %v2238, 1
        %v2353 = vsel %vm2310, %v2350, %v2352
        %v2354 = vrot.slane %v2239, 1
        %v2355 = vsel %vm2310, %v2352, %v2354
        %v2356 = vrot.slane %v2240, 1
        %v2357 = vsel %vm2310, %v2354, %v2356
        %v2358 = vrot.slane %v2241, 1
        %v2359 = vsel %vm2310, %v2356, %v2358
        %v2360 = vrot.slane %v2242, 1
        %v2361 = vsel %vm2310, %v2358, %v2360
        %v2362 = vrot.slane %v2243, 1
        %v2363 = vsel %vm2310, %v2360, %v2362
        %v2364 = vrot.slane %v2244, 1
        %v2365 = vsel %vm2310, %v2362, %v2364
        %v2366 = vrot.slane %v2245, 1
        %v2367 = vsel %vm2310, %v2364, %v2366
        %v2368 = vrot.slane %v2246, 1
        %v2369 = vsel %vm2310, %v2366, %v2368
        %v2370 = vrot.slane %v2247, 1
        %v2371 = vsel %vm2310, %v2368, %v2370
        %v2372 = vrot.slane %v2248, 1
        %v2373 = vsel %vm2310, %v2370, %v2372
        %v2374 = vrot.slane %v2249, 1
        %v2375 = vsel %vm2310, %v2372, %v2374
        %v2376 = vrot.slane %v2250, 1
        %v2377 = vsel %vm2310, %v2374, %v2376
        %v2378 = vrot.slane %v2251, 1
        %v2379 = vsel %vm2310, %v2376, %v2378
        %v2380 = vrot.slane %v2252, 1
        %v2381 = vsel %vm2310, %v2378, %v2380
        %v2382 = vrot.slane %v2253, 1
        %v2383 = vsel %vm2310, %v2380, %v2382
        %v2384 = vrot.slane %v2254, 1
        %v2385 = vsel %vm2310, %v2382, %v2384
        %v2386 = vrot.slane %v2255, 1
        %v2387 = vsel %vm2310, %v2384, %v2386
        %v2388 = vrot.slane %v2256, 1
        %v2389 = vsel %vm2310, %v2386, %v2388
        %v2402 = vunpack.c.l.b16 %v2258
        %v2403 = vunpack.c.l.b16 %v2259
        %v2404 = vunpack.c.l.b16 %v2260
        %v2405 = vunpack.c.l.b16 %v2261
        %v2406 = vunpack.c.l.b16 %v2262
        %v2407 = vunpack.c.l.b16 %v2263
        %v2408 = vunpack.c.l.b16 %v2264
        %v2409 = vunpack.c.l.b16 %v2265
        %v2410 = vunpack.c.l.b16 %v2266
        %v2411 = vunpack.c.l.b16 %v2267
        %v2412 = vunpack.c.l.b16 %v2268
        %v2413 = vunpack.c.l.b16 %v2269
        %v2414 = vpack.c.b16 %v2403, %v2402
        %v2415 = vpack.c.b16 %v2405, %v2404
        %v2416 = vpack.c.b16 %v2407, %v2406
        %v2417 = vpack.c.b16 %v2409, %v2408
        %v2418 = vpack.c.b16 %v2411, %v2410
        %v2419 = vpack.c.b16 %v2413, %v2412
        %vm2426 = vcmask 785408
        %v2428 = vsel %vm2426, %v2313, 0
        %v2431 = vsel %vm2426, %v2315, 0
        %v2434 = vsel %vm2426, %v2317, 0
        %v2437 = vsel %vm2426, %v2319, 0
        %v2440 = vsel %vm2426, %v2321, 0
        %v2443 = vsel %vm2426, %v2323, 0
        %v2446 = vsel %vm2426, %v2325, 0
        %v2449 = vsel %vm2426, %v2327, 0
        %v2452 = vsel %vm2426, %v2329, 0
        %v2455 = vsel %vm2426, %v2331, 0
        %v2458 = vsel %vm2426, %v2333, 0
        %v2461 = vsel %vm2426, %v2335, 0
        %v2464 = vsel %vm2426, %v2337, 0
        %v2467 = vsel %vm2426, %v2339, 0
        %v2470 = vsel %vm2426, %v2341, 0
        %v2473 = vsel %vm2426, %v2343, 0
        %v2476 = vsel %vm2426, %v2345, 0
        %v2479 = vsel %vm2426, %v2347, 0
        %v2482 = vsel %vm2426, %v2349, 0
        %v2485 = vsel %vm2426, %v2351, 0
        %v2488 = vsel %vm2426, %v2353, 0
        %v2491 = vsel %vm2426, %v2355, 0
        %v2494 = vsel %vm2426, %v2357, 0
        %v2497 = vsel %vm2426, %v2359, 0
        %v2500 = vsel %vm2426, %v2361, 0
        %v2503 = vsel %vm2426, %v2363, 0
        %v2506 = vsel %vm2426, %v2365, 0
        %v2509 = vsel %vm2426, %v2367, 0
        %v2512 = vsel %vm2426, %v2369, 0
        %v2515 = vsel %vm2426, %v2371, 0
        %v2518 = vsel %vm2426, %v2373, 0
        %v2521 = vsel %vm2426, %v2375, 0
        %v2524 = vsel %vm2426, %v2377, 0
        %v2527 = vsel %vm2426, %v2379, 0
        %v2530 = vsel %vm2426, %v2381, 0
        %v2533 = vsel %vm2426, %v2383, 0
        %v2536 = vsel %vm2426, %v2385, 0
        %v2539 = vsel %vm2426, %v2387, 0
        %v2542 = vsel %vm2426, %v2389, 0
        %v2545 = vsel %vm2426, %v2388, 0
        %2547 = vmatpush.bf16.msra.mxu0 0
        %2548 = vmatpush.bf16.msra.mxu0 0
        %2549 = vmatpush.bf16.msra.mxu0 %v2419
        %2550 = vmatpush.bf16.msra.mxu0 %v2418
        %2551 = vmatpush.bf16.msra.mxu0 %v2417
        %2552 = vmatpush.bf16.msra.mxu0 %v2416
        %2553 = vmatpush.bf16.msra.mxu0 %v2415
        %2554 = vmatpush.bf16.msra.mxu0 %v2414
        %2555 = vmatmul.bf16.gmra.mxu0 %v2428
        %v2556 = vpop.f32.mrf.mxu0
        %v2557 = vadd.f32 0.0, %v2556
        %v2558 = vpop.f32.mrf.mxu0
        %v2559 = vadd.f32 0.0, %v2558
        %2560 = vmatmul.bf16.gmra.mxu0 %v2431
        %v2561 = vpop.f32.mrf.mxu0
        %v2562 = vadd.f32 0.0, %v2561
        %v2563 = vpop.f32.mrf.mxu0
        %v2564 = vadd.f32 0.0, %v2563
        %2565 = vmatmul.bf16.gmra.mxu0 %v2434
        %v2566 = vpop.f32.mrf.mxu0
        %v2567 = vadd.f32 0.0, %v2566
        %v2568 = vpop.f32.mrf.mxu0
        %v2569 = vadd.f32 0.0, %v2568
        %2570 = vmatmul.bf16.gmra.mxu0 %v2437
        %v2571 = vpop.f32.mrf.mxu0
        %v2572 = vadd.f32 0.0, %v2571
        %v2573 = vpop.f32.mrf.mxu0
        %v2574 = vadd.f32 0.0, %v2573
        %2575 = vmatmul.bf16.gmra.mxu0 %v2440
        %v2576 = vpop.f32.mrf.mxu0
        %v2577 = vadd.f32 0.0, %v2576
        %v2578 = vpop.f32.mrf.mxu0
        %v2579 = vadd.f32 0.0, %v2578
        %2580 = vmatmul.bf16.gmra.mxu0 %v2443
        %v2581 = vpop.f32.mrf.mxu0
        %v2582 = vadd.f32 0.0, %v2581
        %v2583 = vpop.f32.mrf.mxu0
        %v2584 = vadd.f32 0.0, %v2583
        %2585 = vmatmul.bf16.gmra.mxu0 %v2446
        %v2586 = vpop.f32.mrf.mxu0
        %v2587 = vadd.f32 0.0, %v2586
        %v2588 = vpop.f32.mrf.mxu0
        %v2589 = vadd.f32 0.0, %v2588
        %2590 = vmatmul.bf16.gmra.mxu0 %v2449
        %v2591 = vpop.f32.mrf.mxu0
        %v2592 = vadd.f32 0.0, %v2591
        %v2593 = vpop.f32.mrf.mxu0
        %v2594 = vadd.f32 0.0, %v2593
        %2595 = vmatmul.bf16.gmra.mxu0 %v2452
        %v2596 = vpop.f32.mrf.mxu0
        %v2597 = vadd.f32 0.0, %v2596
        %v2598 = vpop.f32.mrf.mxu0
        %v2599 = vadd.f32 0.0, %v2598
        %2600 = vmatmul.bf16.gmra.mxu0 %v2455
        %v2601 = vpop.f32.mrf.mxu0
        %v2602 = vadd.f32 0.0, %v2601
        %v2603 = vpop.f32.mrf.mxu0
        %v2604 = vadd.f32 0.0, %v2603
        %2605 = vmatmul.bf16.gmra.mxu0 %v2458
        %v2606 = vpop.f32.mrf.mxu0
        %v2607 = vadd.f32 0.0, %v2606
        %v2608 = vpop.f32.mrf.mxu0
        %v2609 = vadd.f32 0.0, %v2608
        %2610 = vmatmul.bf16.gmra.mxu0 %v2461
        %v2611 = vpop.f32.mrf.mxu0
        %v2612 = vadd.f32 0.0, %v2611
        %v2613 = vpop.f32.mrf.mxu0
        %v2614 = vadd.f32 0.0, %v2613
        %2615 = vmatmul.bf16.gmra.mxu0 %v2464
        %v2616 = vpop.f32.mrf.mxu0
        %v2617 = vadd.f32 0.0, %v2616
        %v2618 = vpop.f32.mrf.mxu0
        %v2619 = vadd.f32 0.0, %v2618
        %2620 = vmatmul.bf16.gmra.mxu0 %v2467
        %v2621 = vpop.f32.mrf.mxu0
        %v2622 = vadd.f32 0.0, %v2621
        %v2623 = vpop.f32.mrf.mxu0
        %v2624 = vadd.f32 0.0, %v2623
        %2625 = vmatmul.bf16.gmra.mxu0 %v2470
        %v2626 = vpop.f32.mrf.mxu0
        %v2627 = vadd.f32 0.0, %v2626
        %v2628 = vpop.f32.mrf.mxu0
        %v2629 = vadd.f32 0.0, %v2628
        %2630 = vmatmul.bf16.gmra.mxu0 %v2473
        %v2631 = vpop.f32.mrf.mxu0
        %v2632 = vadd.f32 0.0, %v2631
        %v2633 = vpop.f32.mrf.mxu0
        %v2634 = vadd.f32 0.0, %v2633
        %2635 = vmatmul.bf16.gmra.mxu0 %v2476
        %v2636 = vpop.f32.mrf.mxu0
        %v2637 = vadd.f32 0.0, %v2636
        %v2638 = vpop.f32.mrf.mxu0
        %v2639 = vadd.f32 0.0, %v2638
        %2640 = vmatmul.bf16.gmra.mxu0 %v2479
        %v2641 = vpop.f32.mrf.mxu0
        %v2642 = vadd.f32 0.0, %v2641
        %v2643 = vpop.f32.mrf.mxu0
        %v2644 = vadd.f32 0.0, %v2643
        %2645 = vmatmul.bf16.gmra.mxu0 %v2482
        %v2646 = vpop.f32.mrf.mxu0
        %v2647 = vadd.f32 0.0, %v2646
        %v2648 = vpop.f32.mrf.mxu0
        %v2649 = vadd.f32 0.0, %v2648
        %2650 = vmatmul.bf16.gmra.mxu0 %v2485
        %v2651 = vpop.f32.mrf.mxu0
        %v2652 = vadd.f32 0.0, %v2651
        %v2653 = vpop.f32.mrf.mxu0
        %v2654 = vadd.f32 0.0, %v2653
        %2655 = vmatmul.bf16.gmra.mxu0 %v2488
        %v2656 = vpop.f32.mrf.mxu0
        %v2657 = vadd.f32 0.0, %v2656
        %v2658 = vpop.f32.mrf.mxu0
        %v2659 = vadd.f32 0.0, %v2658
        %2660 = vmatmul.bf16.gmra.mxu0 %v2491
        %v2661 = vpop.f32.mrf.mxu0
        %v2662 = vadd.f32 0.0, %v2661
        %v2663 = vpop.f32.mrf.mxu0
        %v2664 = vadd.f32 0.0, %v2663
        %2665 = vmatmul.bf16.gmra.mxu0 %v2494
        %v2666 = vpop.f32.mrf.mxu0
        %v2667 = vadd.f32 0.0, %v2666
        %v2668 = vpop.f32.mrf.mxu0
        %v2669 = vadd.f32 0.0, %v2668
        %2670 = vmatmul.bf16.gmra.mxu0 %v2497
        %v2671 = vpop.f32.mrf.mxu0
        %v2672 = vadd.f32 0.0, %v2671
        %v2673 = vpop.f32.mrf.mxu0
        %v2674 = vadd.f32 0.0, %v2673
        %2675 = vmatmul.bf16.gmra.mxu0 %v2500
        %v2676 = vpop.f32.mrf.mxu0
        %v2677 = vadd.f32 0.0, %v2676
        %v2678 = vpop.f32.mrf.mxu0
        %v2679 = vadd.f32 0.0, %v2678
        %2680 = vmatmul.bf16.gmra.mxu0 %v2503
        %v2681 = vpop.f32.mrf.mxu0
        %v2682 = vadd.f32 0.0, %v2681
        %v2683 = vpop.f32.mrf.mxu0
        %v2684 = vadd.f32 0.0, %v2683
        %2685 = vmatmul.bf16.gmra.mxu0 %v2506
        %v2686 = vpop.f32.mrf.mxu0
        %v2687 = vadd.f32 0.0, %v2686
        %v2688 = vpop.f32.mrf.mxu0
        %v2689 = vadd.f32 0.0, %v2688
        %2690 = vmatmul.bf16.gmra.mxu0 %v2509
        %v2691 = vpop.f32.mrf.mxu0
        %v2692 = vadd.f32 0.0, %v2691
        %v2693 = vpop.f32.mrf.mxu0
        %v2694 = vadd.f32 0.0, %v2693
        %2695 = vmatmul.bf16.gmra.mxu0 %v2512
        %v2696 = vpop.f32.mrf.mxu0
        %v2697 = vadd.f32 0.0, %v2696
        %v2698 = vpop.f32.mrf.mxu0
        %v2699 = vadd.f32 0.0, %v2698
        %2700 = vmatmul.bf16.gmra.mxu0 %v2515
        %v2701 = vpop.f32.mrf.mxu0
        %v2702 = vadd.f32 0.0, %v2701
        %v2703 = vpop.f32.mrf.mxu0
        %v2704 = vadd.f32 0.0, %v2703
        %2705 = vmatmul.bf16.gmra.mxu0 %v2518
        %v2706 = vpop.f32.mrf.mxu0
        %v2707 = vadd.f32 0.0, %v2706
        %v2708 = vpop.f32.mrf.mxu0
        %v2709 = vadd.f32 0.0, %v2708
        %2710 = vmatmul.bf16.gmra.mxu0 %v2521
        %v2711 = vpop.f32.mrf.mxu0
        %v2712 = vadd.f32 0.0, %v2711
        %v2713 = vpop.f32.mrf.mxu0
        %v2714 = vadd.f32 0.0, %v2713
        %2715 = vmatmul.bf16.gmra.mxu0 %v2524
        %v2716 = vpop.f32.mrf.mxu0
        %v2717 = vadd.f32 0.0, %v2716
        %v2718 = vpop.f32.mrf.mxu0
        %v2719 = vadd.f32 0.0, %v2718
        %2720 = vmatmul.bf16.gmra.mxu0 %v2527
        %v2721 = vpop.f32.mrf.mxu0
        %v2722 = vadd.f32 0.0, %v2721
        %v2723 = vpop.f32.mrf.mxu0
        %v2724 = vadd.f32 0.0, %v2723
        %2725 = vmatmul.bf16.gmra.mxu0 %v2530
        %v2726 = vpop.f32.mrf.mxu0
        %v2727 = vadd.f32 0.0, %v2726
        %v2728 = vpop.f32.mrf.mxu0
        %v2729 = vadd.f32 0.0, %v2728
        %2730 = vmatmul.bf16.gmra.mxu0 %v2533
        %v2731 = vpop.f32.mrf.mxu0
        %v2732 = vadd.f32 0.0, %v2731
        %v2733 = vpop.f32.mrf.mxu0
        %v2734 = vadd.f32 0.0, %v2733
        %2735 = vmatmul.bf16.gmra.mxu0 %v2536
        %v2736 = vpop.f32.mrf.mxu0
        %v2737 = vadd.f32 0.0, %v2736
        %v2738 = vpop.f32.mrf.mxu0
        %v2739 = vadd.f32 0.0, %v2738
        %2740 = vmatmul.bf16.gmra.mxu0 %v2539
        %v2741 = vpop.f32.mrf.mxu0
        %v2742 = vadd.f32 0.0, %v2741
        %v2743 = vpop.f32.mrf.mxu0
        %v2744 = vadd.f32 0.0, %v2743
        %2745 = vmatmul.bf16.gmra.mxu0 %v2542
        %v2746 = vpop.f32.mrf.mxu0
        %v2747 = vadd.f32 0.0, %v2746
        %v2748 = vpop.f32.mrf.mxu0
        %v2749 = vadd.f32 0.0, %v2748
        %2750 = vmatmul.bf16.gmra.mxu0 %v2545
        %v2751 = vpop.f32.mrf.mxu0
        %v2752 = vadd.f32 0.0, %v2751
        %v2753 = vpop.f32.mrf.mxu0
        %2754 = vdwg.mxu0
        %v2767 = vunpack.c.l.b16 %v2158
        %v2768 = vunpack.c.l.b16 %v2159
        %v2769 = vunpack.c.l.b16 %v2160
        %v2770 = vunpack.c.l.b16 %v2161
        %v2771 = vunpack.c.l.b16 %v2162
        %v2772 = vunpack.c.l.b16 %v2163
        %v2773 = vunpack.c.l.b16 %v2164
        %v2774 = vunpack.c.l.b16 %v2165
        %v2775 = vunpack.c.l.b16 %v2166
        %v2776 = vunpack.c.l.b16 %v2167
        %v2777 = vunpack.c.l.b16 %v2168
        %v2778 = vunpack.c.l.b16 %v2169
        %v2779 = vpack.c.b16 %v2768, %v2767
        %v2780 = vpack.c.b16 %v2770, %v2769
        %v2781 = vpack.c.b16 %v2772, %v2771
        %v2782 = vpack.c.b16 %v2774, %v2773
        %v2783 = vpack.c.b16 %v2776, %v2775
        %v2784 = vpack.c.b16 %v2778, %v2777
        %v2792 = vsel %vm2426, %v2118, 0
        %v2795 = vsel %vm2426, %v2119, 0
        %v2798 = vsel %vm2426, %v2120, 0
        %v2801 = vsel %vm2426, %v2121, 0
        %v2804 = vsel %vm2426, %v2122, 0
        %v2807 = vsel %vm2426, %v2123, 0
        %v2810 = vsel %vm2426, %v2124, 0
        %v2813 = vsel %vm2426, %v2125, 0
        %v2816 = vsel %vm2426, %v2126, 0
        %v2819 = vsel %vm2426, %v2127, 0
        %v2822 = vsel %vm2426, %v2128, 0
        %v2825 = vsel %vm2426, %v2129, 0
        %v2828 = vsel %vm2426, %v2130, 0
        %v2831 = vsel %vm2426, %v2131, 0
        %v2834 = vsel %vm2426, %v2132, 0
        %v2837 = vsel %vm2426, %v2133, 0
        %v2840 = vsel %vm2426, %v2134, 0
        %v2843 = vsel %vm2426, %v2135, 0
        %v2846 = vsel %vm2426, %v2136, 0
        %v2849 = vsel %vm2426, %v2137, 0
        %v2852 = vsel %vm2426, %v2138, 0
        %v2855 = vsel %vm2426, %v2139, 0
        %v2858 = vsel %vm2426, %v2140, 0
        %v2861 = vsel %vm2426, %v2141, 0
        %v2864 = vsel %vm2426, %v2142, 0
        %v2867 = vsel %vm2426, %v2143, 0
        %v2870 = vsel %vm2426, %v2144, 0
        %v2873 = vsel %vm2426, %v2145, 0
        %v2876 = vsel %vm2426, %v2146, 0
        %v2879 = vsel %vm2426, %v2147, 0
        %v2882 = vsel %vm2426, %v2148, 0
        %v2885 = vsel %vm2426, %v2149, 0
        %v2888 = vsel %vm2426, %v2150, 0
        %v2891 = vsel %vm2426, %v2151, 0
        %v2894 = vsel %vm2426, %v2152, 0
        %v2897 = vsel %vm2426, %v2153, 0
        %v2900 = vsel %vm2426, %v2154, 0
        %v2903 = vsel %vm2426, %v2155, 0
        %v2906 = vsel %vm2426, %v2156, 0
        %v2909 = vsel %vm2426, %v2157, 0
        %2911 = vmatpush.bf16.msra.mxu0 0
        %2912 = vmatpush.bf16.msra.mxu0 0
        %2913 = vmatpush.bf16.msra.mxu0 %v2784
        %2914 = vmatpush.bf16.msra.mxu0 %v2783
        %2915 = vmatpush.bf16.msra.mxu0 %v2782
        %2916 = vmatpush.bf16.msra.mxu0 %v2781
        %2917 = vmatpush.bf16.msra.mxu0 %v2780
        %2918 = vmatpush.bf16.msra.mxu0 %v2779
        %2919 = vmatmul.bf16.gmra.mxu0 %v2792
        %v2920 = vpop.f32.mrf.mxu0
        %v2921 = vadd.f32 %v2557, %v2920
        %v2922 = vpop.f32.mrf.mxu0
        %v2923 = vadd.f32 %v2559, %v2922
        %2924 = vmatmul.bf16.gmra.mxu0 %v2795
        %v2925 = vpop.f32.mrf.mxu0
        %v2926 = vadd.f32 %v2562, %v2925
        %v2927 = vpop.f32.mrf.mxu0
        %v2928 = vadd.f32 %v2564, %v2927
        %2929 = vmatmul.bf16.gmra.mxu0 %v2798
        %v2930 = vpop.f32.mrf.mxu0
        %v2931 = vadd.f32 %v2567, %v2930
        %v2932 = vpop.f32.mrf.mxu0
        %v2933 = vadd.f32 %v2569, %v2932
        %2934 = vmatmul.bf16.gmra.mxu0 %v2801
        %v2935 = vpop.f32.mrf.mxu0
        %v2936 = vadd.f32 %v2572, %v2935
        %v2937 = vpop.f32.mrf.mxu0
        %v2938 = vadd.f32 %v2574, %v2937
        %2939 = vmatmul.bf16.gmra.mxu0 %v2804
        %v2940 = vpop.f32.mrf.mxu0
        %v2941 = vadd.f32 %v2577, %v2940
        %v2942 = vpop.f32.mrf.mxu0
        %v2943 = vadd.f32 %v2579, %v2942
        %2944 = vmatmul.bf16.gmra.mxu0 %v2807
        %v2945 = vpop.f32.mrf.mxu0
        %v2946 = vadd.f32 %v2582, %v2945
        %v2947 = vpop.f32.mrf.mxu0
        %v2948 = vadd.f32 %v2584, %v2947
        %2949 = vmatmul.bf16.gmra.mxu0 %v2810
        %v2950 = vpop.f32.mrf.mxu0
        %v2951 = vadd.f32 %v2587, %v2950
        %v2952 = vpop.f32.mrf.mxu0
        %v2953 = vadd.f32 %v2589, %v2952
        %2954 = vmatmul.bf16.gmra.mxu0 %v2813
        %v2955 = vpop.f32.mrf.mxu0
        %v2956 = vadd.f32 %v2592, %v2955
        %v2957 = vpop.f32.mrf.mxu0
        %v2958 = vadd.f32 %v2594, %v2957
        %2959 = vmatmul.bf16.gmra.mxu0 %v2816
        %v2960 = vpop.f32.mrf.mxu0
        %v2961 = vadd.f32 %v2597, %v2960
        %v2962 = vpop.f32.mrf.mxu0
        %v2963 = vadd.f32 %v2599, %v2962
        %2964 = vmatmul.bf16.gmra.mxu0 %v2819
        %v2965 = vpop.f32.mrf.mxu0
        %v2966 = vadd.f32 %v2602, %v2965
        %v2967 = vpop.f32.mrf.mxu0
        %v2968 = vadd.f32 %v2604, %v2967
        %2969 = vmatmul.bf16.gmra.mxu0 %v2822
        %v2970 = vpop.f32.mrf.mxu0
        %v2971 = vadd.f32 %v2607, %v2970
        %v2972 = vpop.f32.mrf.mxu0
        %v2973 = vadd.f32 %v2609, %v2972
        %2974 = vmatmul.bf16.gmra.mxu0 %v2825
        %v2975 = vpop.f32.mrf.mxu0
        %v2976 = vadd.f32 %v2612, %v2975
        %v2977 = vpop.f32.mrf.mxu0
        %v2978 = vadd.f32 %v2614, %v2977
        %2979 = vmatmul.bf16.gmra.mxu0 %v2828
        %v2980 = vpop.f32.mrf.mxu0
        %v2981 = vadd.f32 %v2617, %v2980
        %v2982 = vpop.f32.mrf.mxu0
        %v2983 = vadd.f32 %v2619, %v2982
        %2984 = vmatmul.bf16.gmra.mxu0 %v2831
        %v2985 = vpop.f32.mrf.mxu0
        %v2986 = vadd.f32 %v2622, %v2985
        %v2987 = vpop.f32.mrf.mxu0
        %v2988 = vadd.f32 %v2624, %v2987
        %2989 = vmatmul.bf16.gmra.mxu0 %v2834
        %v2990 = vpop.f32.mrf.mxu0
        %v2991 = vadd.f32 %v2627, %v2990
        %v2992 = vpop.f32.mrf.mxu0
        %v2993 = vadd.f32 %v2629, %v2992
        %2994 = vmatmul.bf16.gmra.mxu0 %v2837
        %v2995 = vpop.f32.mrf.mxu0
        %v2996 = vadd.f32 %v2632, %v2995
        %v2997 = vpop.f32.mrf.mxu0
        %v2998 = vadd.f32 %v2634, %v2997
        %2999 = vmatmul.bf16.gmra.mxu0 %v2840
        %v3000 = vpop.f32.mrf.mxu0
        %v3001 = vadd.f32 %v2637, %v3000
        %v3002 = vpop.f32.mrf.mxu0
        %v3003 = vadd.f32 %v2639, %v3002
        %3004 = vmatmul.bf16.gmra.mxu0 %v2843
        %v3005 = vpop.f32.mrf.mxu0
        %v3006 = vadd.f32 %v2642, %v3005
        %v3007 = vpop.f32.mrf.mxu0
        %v3008 = vadd.f32 %v2644, %v3007
        %3009 = vmatmul.bf16.gmra.mxu0 %v2846
        %v3010 = vpop.f32.mrf.mxu0
        %v3011 = vadd.f32 %v2647, %v3010
        %v3012 = vpop.f32.mrf.mxu0
        %v3013 = vadd.f32 %v2649, %v3012
        %3014 = vmatmul.bf16.gmra.mxu0 %v2849
        %v3015 = vpop.f32.mrf.mxu0
        %v3016 = vadd.f32 %v2652, %v3015
        %v3017 = vpop.f32.mrf.mxu0
        %v3018 = vadd.f32 %v2654, %v3017
        %3019 = vmatmul.bf16.gmra.mxu0 %v2852
        %v3020 = vpop.f32.mrf.mxu0
        %v3021 = vadd.f32 %v2657, %v3020
        %v3022 = vpop.f32.mrf.mxu0
        %v3023 = vadd.f32 %v2659, %v3022
        %3024 = vmatmul.bf16.gmra.mxu0 %v2855
        %v3025 = vpop.f32.mrf.mxu0
        %v3026 = vadd.f32 %v2662, %v3025
        %v3027 = vpop.f32.mrf.mxu0
        %v3028 = vadd.f32 %v2664, %v3027
        %3029 = vmatmul.bf16.gmra.mxu0 %v2858
        %v3030 = vpop.f32.mrf.mxu0
        %v3031 = vadd.f32 %v2667, %v3030
        %v3032 = vpop.f32.mrf.mxu0
        %v3033 = vadd.f32 %v2669, %v3032
        %3034 = vmatmul.bf16.gmra.mxu0 %v2861
        %v3035 = vpop.f32.mrf.mxu0
        %v3036 = vadd.f32 %v2672, %v3035
        %v3037 = vpop.f32.mrf.mxu0
        %v3038 = vadd.f32 %v2674, %v3037
        %3039 = vmatmul.bf16.gmra.mxu0 %v2864
        %v3040 = vpop.f32.mrf.mxu0
        %v3041 = vadd.f32 %v2677, %v3040
        %v3042 = vpop.f32.mrf.mxu0
        %v3043 = vadd.f32 %v2679, %v3042
        %3044 = vmatmul.bf16.gmra.mxu0 %v2867
        %v3045 = vpop.f32.mrf.mxu0
        %v3046 = vadd.f32 %v2682, %v3045
        %v3047 = vpop.f32.mrf.mxu0
        %v3048 = vadd.f32 %v2684, %v3047
        %3049 = vmatmul.bf16.gmra.mxu0 %v2870
        %v3050 = vpop.f32.mrf.mxu0
        %v3051 = vadd.f32 %v2687, %v3050
        %v3052 = vpop.f32.mrf.mxu0
        %v3053 = vadd.f32 %v2689, %v3052
        %3054 = vmatmul.bf16.gmra.mxu0 %v2873
        %v3055 = vpop.f32.mrf.mxu0
        %v3056 = vadd.f32 %v2692, %v3055
        %v3057 = vpop.f32.mrf.mxu0
        %v3058 = vadd.f32 %v2694, %v3057
        %3059 = vmatmul.bf16.gmra.mxu0 %v2876
        %v3060 = vpop.f32.mrf.mxu0
        %v3061 = vadd.f32 %v2697, %v3060
        %v3062 = vpop.f32.mrf.mxu0
        %v3063 = vadd.f32 %v2699, %v3062
        %3064 = vmatmul.bf16.gmra.mxu0 %v2879
        %v3065 = vpop.f32.mrf.mxu0
        %v3066 = vadd.f32 %v2702, %v3065
        %v3067 = vpop.f32.mrf.mxu0
        %v3068 = vadd.f32 %v2704, %v3067
        %3069 = vmatmul.bf16.gmra.mxu0 %v2882
        %v3070 = vpop.f32.mrf.mxu0
        %v3071 = vadd.f32 %v2707, %v3070
        %v3072 = vpop.f32.mrf.mxu0
        %v3073 = vadd.f32 %v2709, %v3072
        %3074 = vmatmul.bf16.gmra.mxu0 %v2885
        %v3075 = vpop.f32.mrf.mxu0
        %v3076 = vadd.f32 %v2712, %v3075
        %v3077 = vpop.f32.mrf.mxu0
        %v3078 = vadd.f32 %v2714, %v3077
        %3079 = vmatmul.bf16.gmra.mxu0 %v2888
        %v3080 = vpop.f32.mrf.mxu0
        %v3081 = vadd.f32 %v2717, %v3080
        %v3082 = vpop.f32.mrf.mxu0
        %v3083 = vadd.f32 %v2719, %v3082
        %3084 = vmatmul.bf16.gmra.mxu0 %v2891
        %v3085 = vpop.f32.mrf.mxu0
        %v3086 = vadd.f32 %v2722, %v3085
        %v3087 = vpop.f32.mrf.mxu0
        %v3088 = vadd.f32 %v2724, %v3087
        %3089 = vmatmul.bf16.gmra.mxu0 %v2894
        %v3090 = vpop.f32.mrf.mxu0
        %v3091 = vadd.f32 %v2727, %v3090
        %v3092 = vpop.f32.mrf.mxu0
        %v3093 = vadd.f32 %v2729, %v3092
        %3094 = vmatmul.bf16.gmra.mxu0 %v2897
        %v3095 = vpop.f32.mrf.mxu0
        %v3096 = vadd.f32 %v2732, %v3095
        %v3097 = vpop.f32.mrf.mxu0
        %v3098 = vadd.f32 %v2734, %v3097
        %3099 = vmatmul.bf16.gmra.mxu0 %v2900
        %v3100 = vpop.f32.mrf.mxu0
        %v3101 = vadd.f32 %v2737, %v3100
        %v3102 = vpop.f32.mrf.mxu0
        %v3103 = vadd.f32 %v2739, %v3102
        %3104 = vmatmul.bf16.gmra.mxu0 %v2903
        %v3105 = vpop.f32.mrf.mxu0
        %v3106 = vadd.f32 %v2742, %v3105
        %v3107 = vpop.f32.mrf.mxu0
        %v3108 = vadd.f32 %v2744, %v3107
        %3109 = vmatmul.bf16.gmra.mxu0 %v2906
        %v3110 = vpop.f32.mrf.mxu0
        %v3111 = vadd.f32 %v2747, %v3110
        %v3112 = vpop.f32.mrf.mxu0
        %v3113 = vadd.f32 %v2749, %v3112
        %3114 = vmatmul.bf16.gmra.mxu0 %v2909
        %v3115 = vpop.f32.mrf.mxu0
        %v3116 = vadd.f32 %v2752, %v3115
        %v3117 = vpop.f32.mrf.mxu0
        %3118 = vdwg.mxu0
        %v3122 = vrot.slane %v1081, 1
        %v3123 = vsel %vm1164, %v2177, %v3122
        %v3124 = vrot.slane %v1082, 1
        %v3125 = vsel %vm1164, %v3122, %v3124
        %v3126 = vrot.slane %v1083, 1
        %v3127 = vsel %vm1164, %v3124, %v3126
        %3128 = vrot.lane.b32.xlu0 %v3123, 32
        %v3129 = vpop.permute.xlu0 %3128
        %3130 = vrot.lane.b32.xlu0 %v3125, 32
        %v3131 = vpop.permute.xlu0 %3130
        %3132 = vrot.lane.b32.xlu0 %v3127, 32
        %v3133 = vpop.permute.xlu0 %3132
        %3134 = vrot.lane.b32.xlu0 %v3126, 32
        %v3135 = vpop.permute.xlu0 %3134
        %v3140 = vrot.slane %v1081, 2
        %v3141 = vsel %vm1561, %v2195, %v3140
        %v3142 = vrot.slane %v1082, 2
        %v3143 = vsel %vm1561, %v3140, %v3142
        %v3144 = vrot.slane %v1083, 2
        %v3145 = vsel %vm1561, %v3142, %v3144
        %3146 = vrot.lane.b32.xlu0 %v3141, 64
        %v3147 = vpop.permute.xlu0 %3146
        %3148 = vrot.lane.b32.xlu0 %v3143, 64
        %v3149 = vpop.permute.xlu0 %3148
        %3150 = vrot.lane.b32.xlu0 %v3145, 64
        %v3151 = vpop.permute.xlu0 %3150
        %3152 = vrot.lane.b32.xlu0 %v3144, 64
        %v3153 = vpop.permute.xlu0 %3152
        %v3158 = vsel %vm1958, %v1080, %v3129
        %v3159 = vsel %vm1958, %v1081, %v3131
        %v3160 = vsel %vm1958, %v1082, %v3133
        %v3161 = vsel %vm1958, %v1083, %v3135
        %v3162 = vsel %vm2038, %v3158, %v3147
        %v3163 = vsel %vm2038, %v3159, %v3149
        %v3164 = vsel %vm2038, %v3160, %v3151
        %v3165 = vsel %vm2038, %v3161, %v3153
        %v3166 = vpack.c.bf16 %v2213, %v2117
        %v3167 = vpack.c.bf16 %v2215, %v2214
        %v3168 = vpack.c.bf16 %v3163, %v3162
        %v3169 = vpack.c.bf16 %v3165, %v3164
        %s3170 = scalar_lea.vmem %s3, 96
        %v3171 = vld [vmem:[%s3170] sm:$0xf]
        %v3172 = vld [vmem:[%s3170 + $0x4] sm:$0xf]
        %v3173 = vld [vmem:[%s3170 + $0x8] sm:$0xf]
        %v3174 = vld [vmem:[%s3170 + $0xc] sm:$0xf]
        %v3175 = vld [vmem:[%s3170 + $0x10] sm:$0xf]
        %v3176 = vld [vmem:[%s3170 + $0x14] sm:$0xf]
        %v3177 = vld [vmem:[%s3170 + $0x18] sm:$0xf]
        %v3178 = vld [vmem:[%s3170 + $0x1c] sm:$0xf]
        %v3179 = vld [vmem:[%s3170 + $0x20] sm:$0xf]
        %v3180 = vld [vmem:[%s3170 + $0x24] sm:$0xf]
        %v3181 = vld [vmem:[%s3170 + $0x28] sm:$0xf]
        %v3182 = vld [vmem:[%s3170 + $0x2c] sm:$0xf]
        %vm3223 = vcmask 1045504
        %v3224 = vrot.slane %v2121, 2
        %v3225 = vrot.slane %v2122, 2
        %v3226 = vsel %vm3223, %v3224, %v3225
        %v3227 = vrot.slane %v2123, 2
        %v3228 = vsel %vm3223, %v3225, %v3227
        %v3229 = vrot.slane %v2124, 2
        %v3230 = vsel %vm3223, %v3227, %v3229
        %v3231 = vrot.slane %v2125, 2
        %v3232 = vsel %vm3223, %v3229, %v3231
        %v3233 = vrot.slane %v2126, 2
        %v3234 = vsel %vm3223, %v3231, %v3233
        %v3235 = vrot.slane %v2127, 2
        %v3236 = vsel %vm3223, %v3233, %v3235
        %v3237 = vrot.slane %v2128, 2
        %v3238 = vsel %vm3223, %v3235, %v3237
        %v3239 = vrot.slane %v2129, 2
        %v3240 = vsel %vm3223, %v3237, %v3239
        %v3241 = vrot.slane %v2130, 2
        %v3242 = vsel %vm3223, %v3239, %v3241
        %v3243 = vrot.slane %v2131, 2
        %v3244 = vsel %vm3223, %v3241, %v3243
        %v3245 = vrot.slane %v2132, 2
        %v3246 = vsel %vm3223, %v3243, %v3245
        %v3247 = vrot.slane %v2133, 2
        %v3248 = vsel %vm3223, %v3245, %v3247
        %v3249 = vrot.slane %v2134, 2
        %v3250 = vsel %vm3223, %v3247, %v3249
        %v3251 = vrot.slane %v2135, 2
        %v3252 = vsel %vm3223, %v3249, %v3251
        %v3253 = vrot.slane %v2136, 2
        %v3254 = vsel %vm3223, %v3251, %v3253
        %v3255 = vrot.slane %v2137, 2
        %v3256 = vsel %vm3223, %v3253, %v3255
        %v3257 = vrot.slane %v2138, 2
        %v3258 = vsel %vm3223, %v3255, %v3257
        %v3259 = vrot.slane %v2139, 2
        %v3260 = vsel %vm3223, %v3257, %v3259
        %v3261 = vrot.slane %v2140, 2
        %v3262 = vsel %vm3223, %v3259, %v3261
        %v3263 = vrot.slane %v2141, 2
        %v3264 = vsel %vm3223, %v3261, %v3263
        %v3265 = vrot.slane %v2142, 2
        %v3266 = vsel %vm3223, %v3263, %v3265
        %v3267 = vrot.slane %v2143, 2
        %v3268 = vsel %vm3223, %v3265, %v3267
        %v3269 = vrot.slane %v2144, 2
        %v3270 = vsel %vm3223, %v3267, %v3269
        %v3271 = vrot.slane %v2145, 2
        %v3272 = vsel %vm3223, %v3269, %v3271
        %v3273 = vrot.slane %v2146, 2
        %v3274 = vsel %vm3223, %v3271, %v3273
        %v3275 = vrot.slane %v2147, 2
        %v3276 = vsel %vm3223, %v3273, %v3275
        %v3277 = vrot.slane %v2148, 2
        %v3278 = vsel %vm3223, %v3275, %v3277
        %v3279 = vrot.slane %v2149, 2
        %v3280 = vsel %vm3223, %v3277, %v3279
        %v3281 = vrot.slane %v2150, 2
        %v3282 = vsel %vm3223, %v3279, %v3281
        %v3283 = vrot.slane %v2151, 2
        %v3284 = vsel %vm3223, %v3281, %v3283
        %v3285 = vrot.slane %v2152, 2
        %v3286 = vsel %vm3223, %v3283, %v3285
        %v3287 = vrot.slane %v2153, 2
        %v3288 = vsel %vm3223, %v3285, %v3287
        %v3289 = vrot.slane %v2154, 2
        %v3290 = vsel %vm3223, %v3287, %v3289
        %v3291 = vrot.slane %v2155, 2
        %v3292 = vsel %vm3223, %v3289, %v3291
        %v3293 = vrot.slane %v2156, 2
        %v3294 = vsel %vm3223, %v3291, %v3293
        %v3295 = vrot.slane %v3166, 2
        %v3296 = vsel %vm3223, %v3293, %v3295
        %v3297 = vrot.slane %v3167, 2
        %v3298 = vsel %vm3223, %v3295, %v3297
        %v3299 = vrot.slane %v3168, 2
        %v3300 = vsel %vm3223, %v3297, %v3299
        %v3301 = vrot.slane %v3169, 2
        %v3302 = vsel %vm3223, %v3299, %v3301
        %v3315 = vunpack.c.l.b16 %v3171
        %v3316 = vunpack.c.l.b16 %v3172
        %v3317 = vunpack.c.l.b16 %v3173
        %v3318 = vunpack.c.l.b16 %v3174
        %v3319 = vunpack.c.l.b16 %v3175
        %v3320 = vunpack.c.l.b16 %v3176
        %v3321 = vunpack.c.l.b16 %v3177
        %v3322 = vunpack.c.l.b16 %v3178
        %v3323 = vunpack.c.l.b16 %v3179
        %v3324 = vunpack.c.l.b16 %v3180
        %v3325 = vunpack.c.l.b16 %v3181
        %v3326 = vunpack.c.l.b16 %v3182
        %v3327 = vpack.c.b16 %v3316, %v3315
        %v3328 = vpack.c.b16 %v3318, %v3317
        %v3329 = vpack.c.b16 %v3320, %v3319
        %v3330 = vpack.c.b16 %v3322, %v3321
        %v3331 = vpack.c.b16 %v3324, %v3323
        %v3332 = vpack.c.b16 %v3326, %v3325
        %v3340 = vsel %vm2426, %v3226, 0
        %v3343 = vsel %vm2426, %v3228, 0
        %v3346 = vsel %vm2426, %v3230, 0
        %v3349 = vsel %vm2426, %v3232, 0
        %v3352 = vsel %vm2426, %v3234, 0
        %v3355 = vsel %vm2426, %v3236, 0
        %v3358 = vsel %vm2426, %v3238, 0
        %v3361 = vsel %vm2426, %v3240, 0
        %v3364 = vsel %vm2426, %v3242, 0
        %v3367 = vsel %vm2426, %v3244, 0
        %v3370 = vsel %vm2426, %v3246, 0
        %v3373 = vsel %vm2426, %v3248, 0
        %v3376 = vsel %vm2426, %v3250, 0
        %v3379 = vsel %vm2426, %v3252, 0
        %v3382 = vsel %vm2426, %v3254, 0
        %v3385 = vsel %vm2426, %v3256, 0
        %v3388 = vsel %vm2426, %v3258, 0
        %v3391 = vsel %vm2426, %v3260, 0
        %v3394 = vsel %vm2426, %v3262, 0
        %v3397 = vsel %vm2426, %v3264, 0
        %v3400 = vsel %vm2426, %v3266, 0
        %v3403 = vsel %vm2426, %v3268, 0
        %v3406 = vsel %vm2426, %v3270, 0
        %v3409 = vsel %vm2426, %v3272, 0
        %v3412 = vsel %vm2426, %v3274, 0
        %v3415 = vsel %vm2426, %v3276, 0
        %v3418 = vsel %vm2426, %v3278, 0
        %v3421 = vsel %vm2426, %v3280, 0
        %v3424 = vsel %vm2426, %v3282, 0
        %v3427 = vsel %vm2426, %v3284, 0
        %v3430 = vsel %vm2426, %v3286, 0
        %v3433 = vsel %vm2426, %v3288, 0
        %v3436 = vsel %vm2426, %v3290, 0
        %v3439 = vsel %vm2426, %v3292, 0
        %v3442 = vsel %vm2426, %v3294, 0
        %v3445 = vsel %vm2426, %v3296, 0
        %v3448 = vsel %vm2426, %v3298, 0
        %v3451 = vsel %vm2426, %v3300, 0
        %v3454 = vsel %vm2426, %v3302, 0
        %v3457 = vsel %vm2426, %v3301, 0
        %3459 = vmatpush.bf16.msra.mxu0 0
        %3460 = vmatpush.bf16.msra.mxu0 0
        %3461 = vmatpush.bf16.msra.mxu0 %v3332
        %3462 = vmatpush.bf16.msra.mxu0 %v3331
        %3463 = vmatpush.bf16.msra.mxu0 %v3330
        %3464 = vmatpush.bf16.msra.mxu0 %v3329
        %3465 = vmatpush.bf16.msra.mxu0 %v3328
        %3466 = vmatpush.bf16.msra.mxu0 %v3327
        %3467 = vmatmul.bf16.gmra.mxu0 %v3340
        %v3468 = vpop.f32.mrf.mxu0
        %v3469 = vadd.f32 0.0, %v3468
        %v3470 = vpop.f32.mrf.mxu0
        %v3471 = vadd.f32 0.0, %v3470
        %3472 = vmatmul.bf16.gmra.mxu0 %v3343
        %v3473 = vpop.f32.mrf.mxu0
        %v3474 = vadd.f32 0.0, %v3473
        %v3475 = vpop.f32.mrf.mxu0
        %v3476 = vadd.f32 0.0, %v3475
        %3477 = vmatmul.bf16.gmra.mxu0 %v3346
        %v3478 = vpop.f32.mrf.mxu0
        %v3479 = vadd.f32 0.0, %v3478
        %v3480 = vpop.f32.mrf.mxu0
        %v3481 = vadd.f32 0.0, %v3480
        %3482 = vmatmul.bf16.gmra.mxu0 %v3349
        %v3483 = vpop.f32.mrf.mxu0
        %v3484 = vadd.f32 0.0, %v3483
        %v3485 = vpop.f32.mrf.mxu0
        %v3486 = vadd.f32 0.0, %v3485
        %3487 = vmatmul.bf16.gmra.mxu0 %v3352
        %v3488 = vpop.f32.mrf.mxu0
        %v3489 = vadd.f32 0.0, %v3488
        %v3490 = vpop.f32.mrf.mxu0
        %v3491 = vadd.f32 0.0, %v3490
        %3492 = vmatmul.bf16.gmra.mxu0 %v3355
        %v3493 = vpop.f32.mrf.mxu0
        %v3494 = vadd.f32 0.0, %v3493
        %v3495 = vpop.f32.mrf.mxu0
        %v3496 = vadd.f32 0.0, %v3495
        %3497 = vmatmul.bf16.gmra.mxu0 %v3358
        %v3498 = vpop.f32.mrf.mxu0
        %v3499 = vadd.f32 0.0, %v3498
        %v3500 = vpop.f32.mrf.mxu0
        %v3501 = vadd.f32 0.0, %v3500
        %3502 = vmatmul.bf16.gmra.mxu0 %v3361
        %v3503 = vpop.f32.mrf.mxu0
        %v3504 = vadd.f32 0.0, %v3503
        %v3505 = vpop.f32.mrf.mxu0
        %v3506 = vadd.f32 0.0, %v3505
        %3507 = vmatmul.bf16.gmra.mxu0 %v3364
        %v3508 = vpop.f32.mrf.mxu0
        %v3509 = vadd.f32 0.0, %v3508
        %v3510 = vpop.f32.mrf.mxu0
        %v3511 = vadd.f32 0.0, %v3510
        %3512 = vmatmul.bf16.gmra.mxu0 %v3367
        %v3513 = vpop.f32.mrf.mxu0
        %v3514 = vadd.f32 0.0, %v3513
        %v3515 = vpop.f32.mrf.mxu0
        %v3516 = vadd.f32 0.0, %v3515
        %3517 = vmatmul.bf16.gmra.mxu0 %v3370
        %v3518 = vpop.f32.mrf.mxu0
        %v3519 = vadd.f32 0.0, %v3518
        %v3520 = vpop.f32.mrf.mxu0
        %v3521 = vadd.f32 0.0, %v3520
        %3522 = vmatmul.bf16.gmra.mxu0 %v3373
        %v3523 = vpop.f32.mrf.mxu0
        %v3524 = vadd.f32 0.0, %v3523
        %v3525 = vpop.f32.mrf.mxu0
        %v3526 = vadd.f32 0.0, %v3525
        %3527 = vmatmul.bf16.gmra.mxu0 %v3376
        %v3528 = vpop.f32.mrf.mxu0
        %v3529 = vadd.f32 0.0, %v3528
        %v3530 = vpop.f32.mrf.mxu0
        %v3531 = vadd.f32 0.0, %v3530
        %3532 = vmatmul.bf16.gmra.mxu0 %v3379
        %v3533 = vpop.f32.mrf.mxu0
        %v3534 = vadd.f32 0.0, %v3533
        %v3535 = vpop.f32.mrf.mxu0
        %v3536 = vadd.f32 0.0, %v3535
        %3537 = vmatmul.bf16.gmra.mxu0 %v3382
        %v3538 = vpop.f32.mrf.mxu0
        %v3539 = vadd.f32 0.0, %v3538
        %v3540 = vpop.f32.mrf.mxu0
        %v3541 = vadd.f32 0.0, %v3540
        %3542 = vmatmul.bf16.gmra.mxu0 %v3385
        %v3543 = vpop.f32.mrf.mxu0
        %v3544 = vadd.f32 0.0, %v3543
        %v3545 = vpop.f32.mrf.mxu0
        %v3546 = vadd.f32 0.0, %v3545
        %3547 = vmatmul.bf16.gmra.mxu0 %v3388
        %v3548 = vpop.f32.mrf.mxu0
        %v3549 = vadd.f32 0.0, %v3548
        %v3550 = vpop.f32.mrf.mxu0
        %v3551 = vadd.f32 0.0, %v3550
        %3552 = vmatmul.bf16.gmra.mxu0 %v3391
        %v3553 = vpop.f32.mrf.mxu0
        %v3554 = vadd.f32 0.0, %v3553
        %v3555 = vpop.f32.mrf.mxu0
        %v3556 = vadd.f32 0.0, %v3555
        %3557 = vmatmul.bf16.gmra.mxu0 %v3394
        %v3558 = vpop.f32.mrf.mxu0
        %v3559 = vadd.f32 0.0, %v3558
        %v3560 = vpop.f32.mrf.mxu0
        %v3561 = vadd.f32 0.0, %v3560
        %3562 = vmatmul.bf16.gmra.mxu0 %v3397
        %v3563 = vpop.f32.mrf.mxu0
        %v3564 = vadd.f32 0.0, %v3563
        %v3565 = vpop.f32.mrf.mxu0
        %v3566 = vadd.f32 0.0, %v3565
        %3567 = vmatmul.bf16.gmra.mxu0 %v3400
        %v3568 = vpop.f32.mrf.mxu0
        %v3569 = vadd.f32 0.0, %v3568
        %v3570 = vpop.f32.mrf.mxu0
        %v3571 = vadd.f32 0.0, %v3570
        %3572 = vmatmul.bf16.gmra.mxu0 %v3403
        %v3573 = vpop.f32.mrf.mxu0
        %v3574 = vadd.f32 0.0, %v3573
        %v3575 = vpop.f32.mrf.mxu0
        %v3576 = vadd.f32 0.0, %v3575
        %3577 = vmatmul.bf16.gmra.mxu0 %v3406
        %v3578 = vpop.f32.mrf.mxu0
        %v3579 = vadd.f32 0.0, %v3578
        %v3580 = vpop.f32.mrf.mxu0
        %v3581 = vadd.f32 0.0, %v3580
        %3582 = vmatmul.bf16.gmra.mxu0 %v3409
        %v3583 = vpop.f32.mrf.mxu0
        %v3584 = vadd.f32 0.0, %v3583
        %v3585 = vpop.f32.mrf.mxu0
        %v3586 = vadd.f32 0.0, %v3585
        %3587 = vmatmul.bf16.gmra.mxu0 %v3412
        %v3588 = vpop.f32.mrf.mxu0
        %v3589 = vadd.f32 0.0, %v3588
        %v3590 = vpop.f32.mrf.mxu0
        %v3591 = vadd.f32 0.0, %v3590
        %3592 = vmatmul.bf16.gmra.mxu0 %v3415
        %v3593 = vpop.f32.mrf.mxu0
        %v3594 = vadd.f32 0.0, %v3593
        %v3595 = vpop.f32.mrf.mxu0
        %v3596 = vadd.f32 0.0, %v3595
        %3597 = vmatmul.bf16.gmra.mxu0 %v3418
        %v3598 = vpop.f32.mrf.mxu0
        %v3599 = vadd.f32 0.0, %v3598
        %v3600 = vpop.f32.mrf.mxu0
        %v3601 = vadd.f32 0.0, %v3600
        %3602 = vmatmul.bf16.gmra.mxu0 %v3421
        %v3603 = vpop.f32.mrf.mxu0
        %v3604 = vadd.f32 0.0, %v3603
        %v3605 = vpop.f32.mrf.mxu0
        %v3606 = vadd.f32 0.0, %v3605
        %3607 = vmatmul.bf16.gmra.mxu0 %v3424
        %v3608 = vpop.f32.mrf.mxu0
        %v3609 = vadd.f32 0.0, %v3608
        %v3610 = vpop.f32.mrf.mxu0
        %v3611 = vadd.f32 0.0, %v3610
        %3612 = vmatmul.bf16.gmra.mxu0 %v3427
        %v3613 = vpop.f32.mrf.mxu0
        %v3614 = vadd.f32 0.0, %v3613
        %v3615 = vpop.f32.mrf.mxu0
        %v3616 = vadd.f32 0.0, %v3615
        %3617 = vmatmul.bf16.gmra.mxu0 %v3430
        %v3618 = vpop.f32.mrf.mxu0
        %v3619 = vadd.f32 0.0, %v3618
        %v3620 = vpop.f32.mrf.mxu0
        %v3621 = vadd.f32 0.0, %v3620
        %3622 = vmatmul.bf16.gmra.mxu0 %v3433
        %v3623 = vpop.f32.mrf.mxu0
        %v3624 = vadd.f32 0.0, %v3623
        %v3625 = vpop.f32.mrf.mxu0
        %v3626 = vadd.f32 0.0, %v3625
        %3627 = vmatmul.bf16.gmra.mxu0 %v3436
        %v3628 = vpop.f32.mrf.mxu0
        %v3629 = vadd.f32 0.0, %v3628
        %v3630 = vpop.f32.mrf.mxu0
        %v3631 = vadd.f32 0.0, %v3630
        %3632 = vmatmul.bf16.gmra.mxu0 %v3439
        %v3633 = vpop.f32.mrf.mxu0
        %v3634 = vadd.f32 0.0, %v3633
        %v3635 = vpop.f32.mrf.mxu0
        %v3636 = vadd.f32 0.0, %v3635
        %3637 = vmatmul.bf16.gmra.mxu0 %v3442
        %v3638 = vpop.f32.mrf.mxu0
        %v3639 = vadd.f32 0.0, %v3638
        %v3640 = vpop.f32.mrf.mxu0
        %v3641 = vadd.f32 0.0, %v3640
        %3642 = vmatmul.bf16.gmra.mxu0 %v3445
        %v3643 = vpop.f32.mrf.mxu0
        %v3644 = vadd.f32 0.0, %v3643
        %v3645 = vpop.f32.mrf.mxu0
        %v3646 = vadd.f32 0.0, %v3645
        %3647 = vmatmul.bf16.gmra.mxu0 %v3448
        %v3648 = vpop.f32.mrf.mxu0
        %v3649 = vadd.f32 0.0, %v3648
        %v3650 = vpop.f32.mrf.mxu0
        %v3651 = vadd.f32 0.0, %v3650
        %3652 = vmatmul.bf16.gmra.mxu0 %v3451
        %v3653 = vpop.f32.mrf.mxu0
        %v3654 = vadd.f32 0.0, %v3653
        %v3655 = vpop.f32.mrf.mxu0
        %v3656 = vadd.f32 0.0, %v3655
        %3657 = vmatmul.bf16.gmra.mxu0 %v3454
        %v3658 = vpop.f32.mrf.mxu0
        %v3659 = vadd.f32 0.0, %v3658
        %v3660 = vpop.f32.mrf.mxu0
        %v3661 = vadd.f32 0.0, %v3660
        %3662 = vmatmul.bf16.gmra.mxu0 %v3457
        %v3663 = vpop.f32.mrf.mxu0
        %v3664 = vadd.f32 0.0, %v3663
        %v3665 = vpop.f32.mrf.mxu0
        %3666 = vdwg.mxu0
        %v3667 = vadd.f32 %v2921, %v3469
        %v3668 = vadd.f32 %v2923, %v3471
        %v3669 = vadd.f32 %v2926, %v3474
        %v3670 = vadd.f32 %v2928, %v3476
        %v3671 = vadd.f32 %v2931, %v3479
        %v3672 = vadd.f32 %v2933, %v3481
        %v3673 = vadd.f32 %v2936, %v3484
        %v3674 = vadd.f32 %v2938, %v3486
        %v3675 = vadd.f32 %v2941, %v3489
        %v3676 = vadd.f32 %v2943, %v3491
        %v3677 = vadd.f32 %v2946, %v3494
        %v3678 = vadd.f32 %v2948, %v3496
        %v3679 = vadd.f32 %v2951, %v3499
        %v3680 = vadd.f32 %v2953, %v3501
        %v3681 = vadd.f32 %v2956, %v3504
        %v3682 = vadd.f32 %v2958, %v3506
        %v3683 = vadd.f32 %v2961, %v3509
        %v3684 = vadd.f32 %v2963, %v3511
        %v3685 = vadd.f32 %v2966, %v3514
        %v3686 = vadd.f32 %v2968, %v3516
        %v3687 = vadd.f32 %v2971, %v3519
        %v3688 = vadd.f32 %v2973, %v3521
        %v3689 = vadd.f32 %v2976, %v3524
        %v3690 = vadd.f32 %v2978, %v3526
        %v3691 = vadd.f32 %v2981, %v3529
        %v3692 = vadd.f32 %v2983, %v3531
        %v3693 = vadd.f32 %v2986, %v3534
        %v3694 = vadd.f32 %v2988, %v3536
        %v3695 = vadd.f32 %v2991, %v3539
        %v3696 = vadd.f32 %v2993, %v3541
        %v3697 = vadd.f32 %v2996, %v3544
        %v3698 = vadd.f32 %v2998, %v3546
        %v3699 = vadd.f32 %v3001, %v3549
        %v3700 = vadd.f32 %v3003, %v3551
        %v3701 = vadd.f32 %v3006, %v3554
        %v3702 = vadd.f32 %v3008, %v3556
        %v3703 = vadd.f32 %v3011, %v3559
        %v3704 = vadd.f32 %v3013, %v3561
        %v3705 = vadd.f32 %v3016, %v3564
        %v3706 = vadd.f32 %v3018, %v3566
        %v3707 = vadd.f32 %v3021, %v3569
        %v3708 = vadd.f32 %v3023, %v3571
        %v3709 = vadd.f32 %v3026, %v3574
        %v3710 = vadd.f32 %v3028, %v3576
        %v3711 = vadd.f32 %v3031, %v3579
        %v3712 = vadd.f32 %v3033, %v3581
        %v3713 = vadd.f32 %v3036, %v3584
        %v3714 = vadd.f32 %v3038, %v3586
        %v3715 = vadd.f32 %v3041, %v3589
        %v3716 = vadd.f32 %v3043, %v3591
        %v3717 = vadd.f32 %v3046, %v3594
        %v3718 = vadd.f32 %v3048, %v3596
        %v3719 = vadd.f32 %v3051, %v3599
        %v3720 = vadd.f32 %v3053, %v3601
        %v3721 = vadd.f32 %v3056, %v3604
        %v3722 = vadd.f32 %v3058, %v3606
        %v3723 = vadd.f32 %v3061, %v3609
        %v3724 = vadd.f32 %v3063, %v3611
        %v3725 = vadd.f32 %v3066, %v3614
        %v3726 = vadd.f32 %v3068, %v3616
        %v3727 = vadd.f32 %v3071, %v3619
        %v3728 = vadd.f32 %v3073, %v3621
        %v3729 = vadd.f32 %v3076, %v3624
        %v3730 = vadd.f32 %v3078, %v3626
        %v3731 = vadd.f32 %v3081, %v3629
        %v3732 = vadd.f32 %v3083, %v3631
        %v3733 = vadd.f32 %v3086, %v3634
        %v3734 = vadd.f32 %v3088, %v3636
        %v3735 = vadd.f32 %v3091, %v3639
        %v3736 = vadd.f32 %v3093, %v3641
        %v3737 = vadd.f32 %v3096, %v3644
        %v3738 = vadd.f32 %v3098, %v3646
        %v3739 = vadd.f32 %v3101, %v3649
        %v3740 = vadd.f32 %v3103, %v3651
        %v3741 = vadd.f32 %v3106, %v3654
        %v3742 = vadd.f32 %v3108, %v3656
        %v3743 = vadd.f32 %v3111, %v3659
        %v3744 = vadd.f32 %v3113, %v3661
        %v3745 = vadd.f32 %v3116, %v3664
        %v3746 = vld [vmem:[%s4] sm:$0x1]
        %v3748 = vperm.slane %v3746, 0
        %v3750 = vadd.f32 %v3667, %v3748
        %v3751 = vadd.f32 %v3668, %v3748
        %v3752 = vadd.f32 %v3669, %v3748
        %v3753 = vadd.f32 %v3670, %v3748
        %v3754 = vadd.f32 %v3671, %v3748
        %v3755 = vadd.f32 %v3672, %v3748
        %v3756 = vadd.f32 %v3673, %v3748
        %v3757 = vadd.f32 %v3674, %v3748
        %v3758 = vadd.f32 %v3675, %v3748
        %v3759 = vadd.f32 %v3676, %v3748
        %v3760 = vadd.f32 %v3677, %v3748
        %v3761 = vadd.f32 %v3678, %v3748
        %v3762 = vadd.f32 %v3679, %v3748
        %v3763 = vadd.f32 %v3680, %v3748
        %v3764 = vadd.f32 %v3681, %v3748
        %v3765 = vadd.f32 %v3682, %v3748
        %v3766 = vadd.f32 %v3683, %v3748
        %v3767 = vadd.f32 %v3684, %v3748
        %v3768 = vadd.f32 %v3685, %v3748
        %v3769 = vadd.f32 %v3686, %v3748
        %v3770 = vadd.f32 %v3687, %v3748
        %v3771 = vadd.f32 %v3688, %v3748
        %v3772 = vadd.f32 %v3689, %v3748
        %v3773 = vadd.f32 %v3690, %v3748
        %v3774 = vadd.f32 %v3691, %v3748
        %v3775 = vadd.f32 %v3692, %v3748
        %v3776 = vadd.f32 %v3693, %v3748
        %v3777 = vadd.f32 %v3694, %v3748
        %v3778 = vadd.f32 %v3695, %v3748
        %v3779 = vadd.f32 %v3696, %v3748
        %v3780 = vadd.f32 %v3697, %v3748
        %v3781 = vadd.f32 %v3698, %v3748
        %v3782 = vadd.f32 %v3699, %v3748
        %v3783 = vadd.f32 %v3700, %v3748
        %v3784 = vadd.f32 %v3701, %v3748
        %v3785 = vadd.f32 %v3702, %v3748
        %v3786 = vadd.f32 %v3703, %v3748
        %v3787 = vadd.f32 %v3704, %v3748
        %v3788 = vadd.f32 %v3705, %v3748
        %v3789 = vadd.f32 %v3706, %v3748
        %v3790 = vadd.f32 %v3707, %v3748
        %v3791 = vadd.f32 %v3708, %v3748
        %v3792 = vadd.f32 %v3709, %v3748
        %v3793 = vadd.f32 %v3710, %v3748
        %v3794 = vadd.f32 %v3711, %v3748
        %v3795 = vadd.f32 %v3712, %v3748
        %v3796 = vadd.f32 %v3713, %v3748
        %v3797 = vadd.f32 %v3714, %v3748
        %v3798 = vadd.f32 %v3715, %v3748
        %v3799 = vadd.f32 %v3716, %v3748
        %v3800 = vadd.f32 %v3717, %v3748
        %v3801 = vadd.f32 %v3718, %v3748
        %v3802 = vadd.f32 %v3719, %v3748
        %v3803 = vadd.f32 %v3720, %v3748
        %v3804 = vadd.f32 %v3721, %v3748
        %v3805 = vadd.f32 %v3722, %v3748
        %v3806 = vadd.f32 %v3723, %v3748
        %v3807 = vadd.f32 %v3724, %v3748
        %v3808 = vadd.f32 %v3725, %v3748
        %v3809 = vadd.f32 %v3726, %v3748
        %v3810 = vadd.f32 %v3727, %v3748
        %v3811 = vadd.f32 %v3728, %v3748
        %v3812 = vadd.f32 %v3729, %v3748
        %v3813 = vadd.f32 %v3730, %v3748
        %v3814 = vadd.f32 %v3731, %v3748
        %v3815 = vadd.f32 %v3732, %v3748
        %v3816 = vadd.f32 %v3733, %v3748
        %v3817 = vadd.f32 %v3734, %v3748
        %v3818 = vadd.f32 %v3735, %v3748
        %v3819 = vadd.f32 %v3736, %v3748
        %v3820 = vadd.f32 %v3737, %v3748
        %v3821 = vadd.f32 %v3738, %v3748
        %v3822 = vadd.f32 %v3739, %v3748
        %v3823 = vadd.f32 %v3740, %v3748
        %v3824 = vadd.f32 %v3741, %v3748
        %v3825 = vadd.f32 %v3742, %v3748
        %v3826 = vadd.f32 %v3743, %v3748
        %v3827 = vadd.f32 %v3744, %v3748
        %v3828 = vadd.f32 %v3745, %v3748
        %v3829 = vmax.f32 %v3750, 0.0
        %v3830 = vmax.f32 %v3751, 0.0
        %v3831 = vmax.f32 %v3752, 0.0
        %v3832 = vmax.f32 %v3753, 0.0
        %v3833 = vmax.f32 %v3754, 0.0
        %v3834 = vmax.f32 %v3755, 0.0
        %v3835 = vmax.f32 %v3756, 0.0
        %v3836 = vmax.f32 %v3757, 0.0
        %v3837 = vmax.f32 %v3758, 0.0
        %v3838 = vmax.f32 %v3759, 0.0
        %v3839 = vmax.f32 %v3760, 0.0
        %v3840 = vmax.f32 %v3761, 0.0
        %v3841 = vmax.f32 %v3762, 0.0
        %v3842 = vmax.f32 %v3763, 0.0
        %v3843 = vmax.f32 %v3764, 0.0
        %v3844 = vmax.f32 %v3765, 0.0
        %v3845 = vmax.f32 %v3766, 0.0
        %v3846 = vmax.f32 %v3767, 0.0
        %v3847 = vmax.f32 %v3768, 0.0
        %v3848 = vmax.f32 %v3769, 0.0
        %v3849 = vmax.f32 %v3770, 0.0
        %v3850 = vmax.f32 %v3771, 0.0
        %v3851 = vmax.f32 %v3772, 0.0
        %v3852 = vmax.f32 %v3773, 0.0
        %v3853 = vmax.f32 %v3774, 0.0
        %v3854 = vmax.f32 %v3775, 0.0
        %v3855 = vmax.f32 %v3776, 0.0
        %v3856 = vmax.f32 %v3777, 0.0
        %v3857 = vmax.f32 %v3778, 0.0
        %v3858 = vmax.f32 %v3779, 0.0
        %v3859 = vmax.f32 %v3780, 0.0
        %v3860 = vmax.f32 %v3781, 0.0
        %v3861 = vmax.f32 %v3782, 0.0
        %v3862 = vmax.f32 %v3783, 0.0
        %v3863 = vmax.f32 %v3784, 0.0
        %v3864 = vmax.f32 %v3785, 0.0
        %v3865 = vmax.f32 %v3786, 0.0
        %v3866 = vmax.f32 %v3787, 0.0
        %v3867 = vmax.f32 %v3788, 0.0
        %v3868 = vmax.f32 %v3789, 0.0
        %v3869 = vmax.f32 %v3790, 0.0
        %v3870 = vmax.f32 %v3791, 0.0
        %v3871 = vmax.f32 %v3792, 0.0
        %v3872 = vmax.f32 %v3793, 0.0
        %v3873 = vmax.f32 %v3794, 0.0
        %v3874 = vmax.f32 %v3795, 0.0
        %v3875 = vmax.f32 %v3796, 0.0
        %v3876 = vmax.f32 %v3797, 0.0
        %v3877 = vmax.f32 %v3798, 0.0
        %v3878 = vmax.f32 %v3799, 0.0
        %v3879 = vmax.f32 %v3800, 0.0
        %v3880 = vmax.f32 %v3801, 0.0
        %v3881 = vmax.f32 %v3802, 0.0
        %v3882 = vmax.f32 %v3803, 0.0
        %v3883 = vmax.f32 %v3804, 0.0
        %v3884 = vmax.f32 %v3805, 0.0
        %v3885 = vmax.f32 %v3806, 0.0
        %v3886 = vmax.f32 %v3807, 0.0
        %v3887 = vmax.f32 %v3808, 0.0
        %v3888 = vmax.f32 %v3809, 0.0
        %v3889 = vmax.f32 %v3810, 0.0
        %v3890 = vmax.f32 %v3811, 0.0
        %v3891 = vmax.f32 %v3812, 0.0
        %v3892 = vmax.f32 %v3813, 0.0
        %v3893 = vmax.f32 %v3814, 0.0
        %v3894 = vmax.f32 %v3815, 0.0
        %v3895 = vmax.f32 %v3816, 0.0
        %v3896 = vmax.f32 %v3817, 0.0
        %v3897 = vmax.f32 %v3818, 0.0
        %v3898 = vmax.f32 %v3819, 0.0
        %v3899 = vmax.f32 %v3820, 0.0
        %v3900 = vmax.f32 %v3821, 0.0
        %v3901 = vmax.f32 %v3822, 0.0
        %v3902 = vmax.f32 %v3823, 0.0
        %v3903 = vmax.f32 %v3824, 0.0
        %v3904 = vmax.f32 %v3825, 0.0
        %v3905 = vmax.f32 %v3826, 0.0
        %v3906 = vmax.f32 %v3827, 0.0
        %v3907 = vmax.f32 %v3828, 0.0
        %v3981 = vrot.slane %v3829, 1
        %v3982 = vrot.slane %v3830, 1
        %v3983 = vsel %vm1164, %v3981, %v3982
        %v3984 = vrot.slane %v3831, 1
        %v3985 = vsel %vm1164, %v3982, %v3984
        %v3986 = vrot.slane %v3832, 1
        %v3987 = vsel %vm1164, %v3984, %v3986
        %v3988 = vrot.slane %v3833, 1
        %v3989 = vsel %vm1164, %v3986, %v3988
        %v3990 = vrot.slane %v3834, 1
        %v3991 = vsel %vm1164, %v3988, %v3990
        %v3992 = vrot.slane %v3835, 1
        %v3993 = vsel %vm1164, %v3990, %v3992
        %v3994 = vrot.slane %v3836, 1
        %v3995 = vsel %vm1164, %v3992, %v3994
        %v3996 = vrot.slane %v3837, 1
        %v3997 = vsel %vm1164, %v3994, %v3996
        %v3998 = vrot.slane %v3838, 1
        %v3999 = vsel %vm1164, %v3996, %v3998
        %v4000 = vrot.slane %v3839, 1
        %v4001 = vsel %vm1164, %v3998, %v4000
        %v4002 = vrot.slane %v3840, 1
        %v4003 = vsel %vm1164, %v4000, %v4002
        %v4004 = vrot.slane %v3841, 1
        %v4005 = vsel %vm1164, %v4002, %v4004
        %v4006 = vrot.slane %v3842, 1
        %v4007 = vsel %vm1164, %v4004, %v4006
        %v4008 = vrot.slane %v3843, 1
        %v4009 = vsel %vm1164, %v4006, %v4008
        %v4010 = vrot.slane %v3844, 1
        %v4011 = vsel %vm1164, %v4008, %v4010
        %v4012 = vrot.slane %v3845, 1
        %v4013 = vsel %vm1164, %v4010, %v4012
        %v4014 = vrot.slane %v3846, 1
        %v4015 = vsel %vm1164, %v4012, %v4014
        %v4016 = vrot.slane %v3847, 1
        %v4017 = vsel %vm1164, %v4014, %v4016
        %v4018 = vrot.slane %v3848, 1
        %v4019 = vsel %vm1164, %v4016, %v4018
        %v4020 = vrot.slane %v3849, 1
        %v4021 = vsel %vm1164, %v4018, %v4020
        %v4022 = vrot.slane %v3850, 1
        %v4023 = vsel %vm1164, %v4020, %v4022
        %v4024 = vrot.slane %v3851, 1
        %v4025 = vsel %vm1164, %v4022, %v4024
        %v4026 = vrot.slane %v3852, 1
        %v4027 = vsel %vm1164, %v4024, %v4026
        %v4028 = vrot.slane %v3853, 1
        %v4029 = vsel %vm1164, %v4026, %v4028
        %v4030 = vrot.slane %v3854, 1
        %v4031 = vsel %vm1164, %v4028, %v4030
        %v4032 = vrot.slane %v3855, 1
        %v4033 = vsel %vm1164, %v4030, %v4032
        %v4034 = vrot.slane %v3856, 1
        %v4035 = vsel %vm1164, %v4032, %v4034
        %v4036 = vrot.slane %v3857, 1
        %v4037 = vsel %vm1164, %v4034, %v4036
        %v4038 = vrot.slane %v3858, 1
        %v4039 = vsel %vm1164, %v4036, %v4038
        %v4040 = vrot.slane %v3859, 1
        %v4041 = vsel %vm1164, %v4038, %v4040
        %v4042 = vrot.slane %v3860, 1
        %v4043 = vsel %vm1164, %v4040, %v4042
        %v4044 = vrot.slane %v3861, 1
        %v4045 = vsel %vm1164, %v4042, %v4044
        %v4046 = vrot.slane %v3862, 1
        %v4047 = vsel %vm1164, %v4044, %v4046
        %v4048 = vrot.slane %v3863, 1
        %v4049 = vsel %vm1164, %v4046, %v4048
        %v4050 = vrot.slane %v3864, 1
        %v4051 = vsel %vm1164, %v4048, %v4050
        %v4052 = vrot.slane %v3865, 1
        %v4053 = vsel %vm1164, %v4050, %v4052
        %v4054 = vrot.slane %v3866, 1
        %v4055 = vsel %vm1164, %v4052, %v4054
        %v4056 = vrot.slane %v3867, 1
        %v4057 = vsel %vm1164, %v4054, %v4056
        %v4058 = vrot.slane %v3868, 1
        %v4059 = vsel %vm1164, %v4056, %v4058
        %v4060 = vrot.slane %v3869, 1
        %v4061 = vsel %vm1164, %v4058, %v4060
        %v4062 = vrot.slane %v3870, 1
        %v4063 = vsel %vm1164, %v4060, %v4062
        %v4064 = vrot.slane %v3871, 1
        %v4065 = vsel %vm1164, %v4062, %v4064
        %v4066 = vrot.slane %v3872, 1
        %v4067 = vsel %vm1164, %v4064, %v4066
        %v4068 = vrot.slane %v3873, 1
        %v4069 = vsel %vm1164, %v4066, %v4068
        %v4070 = vrot.slane %v3874, 1
        %v4071 = vsel %vm1164, %v4068, %v4070
        %v4072 = vrot.slane %v3875, 1
        %v4073 = vsel %vm1164, %v4070, %v4072
        %v4074 = vrot.slane %v3876, 1
        %v4075 = vsel %vm1164, %v4072, %v4074
        %v4076 = vrot.slane %v3877, 1
        %v4077 = vsel %vm1164, %v4074, %v4076
        %v4078 = vrot.slane %v3878, 1
        %v4079 = vsel %vm1164, %v4076, %v4078
        %v4080 = vrot.slane %v3879, 1
        %v4081 = vsel %vm1164, %v4078, %v4080
        %v4082 = vrot.slane %v3880, 1
        %v4083 = vsel %vm1164, %v4080, %v4082
        %v4084 = vrot.slane %v3881, 1
        %v4085 = vsel %vm1164, %v4082, %v4084
        %v4086 = vrot.slane %v3882, 1
        %v4087 = vsel %vm1164, %v4084, %v4086
        %v4088 = vrot.slane %v3883, 1
        %v4089 = vsel %vm1164, %v4086, %v4088
        %v4090 = vrot.slane %v3884, 1
        %v4091 = vsel %vm1164, %v4088, %v4090
        %v4092 = vrot.slane %v3885, 1
        %v4093 = vsel %vm1164, %v4090, %v4092
        %v4094 = vrot.slane %v3886, 1
        %v4095 = vsel %vm1164, %v4092, %v4094
        %v4096 = vrot.slane %v3887, 1
        %v4097 = vsel %vm1164, %v4094, %v4096
        %v4098 = vrot.slane %v3888, 1
        %v4099 = vsel %vm1164, %v4096, %v4098
        %v4100 = vrot.slane %v3889, 1
        %v4101 = vsel %vm1164, %v4098, %v4100
        %v4102 = vrot.slane %v3890, 1
        %v4103 = vsel %vm1164, %v4100, %v4102
        %v4104 = vrot.slane %v3891, 1
        %v4105 = vsel %vm1164, %v4102, %v4104
        %v4106 = vrot.slane %v3892, 1
        %v4107 = vsel %vm1164, %v4104, %v4106
        %v4108 = vrot.slane %v3893, 1
        %v4109 = vsel %vm1164, %v4106, %v4108
        %v4110 = vrot.slane %v3894, 1
        %v4111 = vsel %vm1164, %v4108, %v4110
        %v4112 = vrot.slane %v3895, 1
        %v4113 = vsel %vm1164, %v4110, %v4112
        %v4114 = vrot.slane %v3896, 1
        %v4115 = vsel %vm1164, %v4112, %v4114
        %v4116 = vrot.slane %v3897, 1
        %v4117 = vsel %vm1164, %v4114, %v4116
        %v4118 = vrot.slane %v3898, 1
        %v4119 = vsel %vm1164, %v4116, %v4118
        %v4120 = vrot.slane %v3899, 1
        %v4121 = vsel %vm1164, %v4118, %v4120
        %v4122 = vrot.slane %v3900, 1
        %v4123 = vsel %vm1164, %v4120, %v4122
        %v4124 = vrot.slane %v3901, 1
        %v4125 = vsel %vm1164, %v4122, %v4124
        %4126 = vrot.lane.b32.xlu0 %v3983, 64
        %v4127 = vpop.permute.xlu0 %4126
        %4128 = vrot.lane.b32.xlu0 %v3985, 64
        %v4129 = vpop.permute.xlu0 %4128
        %4130 = vrot.lane.b32.xlu0 %v3987, 64
        %v4131 = vpop.permute.xlu0 %4130
        %4132 = vrot.lane.b32.xlu0 %v3989, 64
        %v4133 = vpop.permute.xlu0 %4132
        %4134 = vrot.lane.b32.xlu0 %v3991, 64
        %v4135 = vpop.permute.xlu0 %4134
        %4136 = vrot.lane.b32.xlu0 %v3993, 64
        %v4137 = vpop.permute.xlu0 %4136
        %4138 = vrot.lane.b32.xlu0 %v3995, 64
        %v4139 = vpop.permute.xlu0 %4138
        %4140 = vrot.lane.b32.xlu0 %v3997, 64
        %v4141 = vpop.permute.xlu0 %4140
        %4142 = vrot.lane.b32.xlu0 %v3999, 64
        %v4143 = vpop.permute.xlu0 %4142
        %4144 = vrot.lane.b32.xlu0 %v4001, 64
        %v4145 = vpop.permute.xlu0 %4144
        %4146 = vrot.lane.b32.xlu0 %v4003, 64
        %v4147 = vpop.permute.xlu0 %4146
        %4148 = vrot.lane.b32.xlu0 %v4005, 64
        %v4149 = vpop.permute.xlu0 %4148
        %4150 = vrot.lane.b32.xlu0 %v4007, 64
        %v4151 = vpop.permute.xlu0 %4150
        %4152 = vrot.lane.b32.xlu0 %v4009, 64
        %v4153 = vpop.permute.xlu0 %4152
        %4154 = vrot.lane.b32.xlu0 %v4011, 64
        %v4155 = vpop.permute.xlu0 %4154
        %4156 = vrot.lane.b32.xlu0 %v4013, 64
        %v4157 = vpop.permute.xlu0 %4156
        %4158 = vrot.lane.b32.xlu0 %v4015, 64
        %v4159 = vpop.permute.xlu0 %4158
        %4160 = vrot.lane.b32.xlu0 %v4017, 64
        %v4161 = vpop.permute.xlu0 %4160
        %4162 = vrot.lane.b32.xlu0 %v4019, 64
        %v4163 = vpop.permute.xlu0 %4162
        %4164 = vrot.lane.b32.xlu0 %v4021, 64
        %v4165 = vpop.permute.xlu0 %4164
        %4166 = vrot.lane.b32.xlu0 %v4023, 64
        %v4167 = vpop.permute.xlu0 %4166
        %4168 = vrot.lane.b32.xlu0 %v4025, 64
        %v4169 = vpop.permute.xlu0 %4168
        %4170 = vrot.lane.b32.xlu0 %v4027, 64
        %v4171 = vpop.permute.xlu0 %4170
        %4172 = vrot.lane.b32.xlu0 %v4029, 64
        %v4173 = vpop.permute.xlu0 %4172
        %4174 = vrot.lane.b32.xlu0 %v4031, 64
        %v4175 = vpop.permute.xlu0 %4174
        %4176 = vrot.lane.b32.xlu0 %v4033, 64
        %v4177 = vpop.permute.xlu0 %4176
        %4178 = vrot.lane.b32.xlu0 %v4035, 64
        %v4179 = vpop.permute.xlu0 %4178
        %4180 = vrot.lane.b32.xlu0 %v4037, 64
        %v4181 = vpop.permute.xlu0 %4180
        %4182 = vrot.lane.b32.xlu0 %v4039, 64
        %v4183 = vpop.permute.xlu0 %4182
        %4184 = vrot.lane.b32.xlu0 %v4041, 64
        %v4185 = vpop.permute.xlu0 %4184
        %4186 = vrot.lane.b32.xlu0 %v4043, 64
        %v4187 = vpop.permute.xlu0 %4186
        %4188 = vrot.lane.b32.xlu0 %v4045, 64
        %v4189 = vpop.permute.xlu0 %4188
        %4190 = vrot.lane.b32.xlu0 %v4047, 64
        %v4191 = vpop.permute.xlu0 %4190
        %4192 = vrot.lane.b32.xlu0 %v4049, 64
        %v4193 = vpop.permute.xlu0 %4192
        %4194 = vrot.lane.b32.xlu0 %v4051, 64
        %v4195 = vpop.permute.xlu0 %4194
        %4196 = vrot.lane.b32.xlu0 %v4053, 64
        %v4197 = vpop.permute.xlu0 %4196
        %4198 = vrot.lane.b32.xlu0 %v4055, 64
        %v4199 = vpop.permute.xlu0 %4198
        %4200 = vrot.lane.b32.xlu0 %v4057, 64
        %v4201 = vpop.permute.xlu0 %4200
        %4202 = vrot.lane.b32.xlu0 %v4059, 64
        %v4203 = vpop.permute.xlu0 %4202
        %4204 = vrot.lane.b32.xlu0 %v4061, 64
        %v4205 = vpop.permute.xlu0 %4204
        %4206 = vrot.lane.b32.xlu0 %v4063, 64
        %v4207 = vpop.permute.xlu0 %4206
        %4208 = vrot.lane.b32.xlu0 %v4065, 64
        %v4209 = vpop.permute.xlu0 %4208
        %4210 = vrot.lane.b32.xlu0 %v4067, 64
        %v4211 = vpop.permute.xlu0 %4210
        %4212 = vrot.lane.b32.xlu0 %v4069, 64
        %v4213 = vpop.permute.xlu0 %4212
        %4214 = vrot.lane.b32.xlu0 %v4071, 64
        %v4215 = vpop.permute.xlu0 %4214
        %4216 = vrot.lane.b32.xlu0 %v4073, 64
        %v4217 = vpop.permute.xlu0 %4216
        %4218 = vrot.lane.b32.xlu0 %v4075, 64
        %v4219 = vpop.permute.xlu0 %4218
        %4220 = vrot.lane.b32.xlu0 %v4077, 64
        %v4221 = vpop.permute.xlu0 %4220
        %4222 = vrot.lane.b32.xlu0 %v4079, 64
        %v4223 = vpop.permute.xlu0 %4222
        %4224 = vrot.lane.b32.xlu0 %v4081, 64
        %v4225 = vpop.permute.xlu0 %4224
        %4226 = vrot.lane.b32.xlu0 %v4083, 64
        %v4227 = vpop.permute.xlu0 %4226
        %4228 = vrot.lane.b32.xlu0 %v4085, 64
        %v4229 = vpop.permute.xlu0 %4228
        %4230 = vrot.lane.b32.xlu0 %v4087, 64
        %v4231 = vpop.permute.xlu0 %4230
        %4232 = vrot.lane.b32.xlu0 %v4089, 64
        %v4233 = vpop.permute.xlu0 %4232
        %4234 = vrot.lane.b32.xlu0 %v4091, 64
        %v4235 = vpop.permute.xlu0 %4234
        %4236 = vrot.lane.b32.xlu0 %v4093, 64
        %v4237 = vpop.permute.xlu0 %4236
        %4238 = vrot.lane.b32.xlu0 %v4095, 64
        %v4239 = vpop.permute.xlu0 %4238
        %4240 = vrot.lane.b32.xlu0 %v4097, 64
        %v4241 = vpop.permute.xlu0 %4240
        %4242 = vrot.lane.b32.xlu0 %v4099, 64
        %v4243 = vpop.permute.xlu0 %4242
        %4244 = vrot.lane.b32.xlu0 %v4101, 64
        %v4245 = vpop.permute.xlu0 %4244
        %4246 = vrot.lane.b32.xlu0 %v4103, 64
        %v4247 = vpop.permute.xlu0 %4246
        %4248 = vrot.lane.b32.xlu0 %v4105, 64
        %v4249 = vpop.permute.xlu0 %4248
        %4250 = vrot.lane.b32.xlu0 %v4107, 64
        %v4251 = vpop.permute.xlu0 %4250
        %4252 = vrot.lane.b32.xlu0 %v4109, 64
        %v4253 = vpop.permute.xlu0 %4252
        %4254 = vrot.lane.b32.xlu0 %v4111, 64
        %v4255 = vpop.permute.xlu0 %4254
        %4256 = vrot.lane.b32.xlu0 %v4113, 64
        %v4257 = vpop.permute.xlu0 %4256
        %4258 = vrot.lane.b32.xlu0 %v4115, 64
        %v4259 = vpop.permute.xlu0 %4258
        %4260 = vrot.lane.b32.xlu0 %v4117, 64
        %v4261 = vpop.permute.xlu0 %4260
        %4262 = vrot.lane.b32.xlu0 %v4119, 64
        %v4263 = vpop.permute.xlu0 %4262
        %4264 = vrot.lane.b32.xlu0 %v4121, 64
        %v4265 = vpop.permute.xlu0 %4264
        %4266 = vrot.lane.b32.xlu0 %v4123, 64
        %v4267 = vpop.permute.xlu0 %4266
        %4268 = vrot.lane.b32.xlu0 %v4125, 64
        %v4269 = vpop.permute.xlu0 %4268
        %v4342 = vrot.slane %v3829, 2
        %v4343 = vrot.slane %v3830, 2
        %v4344 = vsel %vm1561, %v4342, %v4343
        %v4345 = vrot.slane %v3831, 2
        %v4346 = vsel %vm1561, %v4343, %v4345
        %v4347 = vrot.slane %v3832, 2
        %v4348 = vsel %vm1561, %v4345, %v4347
        %v4349 = vrot.slane %v3833, 2
        %v4350 = vsel %vm1561, %v4347, %v4349
        %v4351 = vrot.slane %v3834, 2
        %v4352 = vsel %vm1561, %v4349, %v4351
        %v4353 = vrot.slane %v3835, 2
        %v4354 = vsel %vm1561, %v4351, %v4353
        %v4355 = vrot.slane %v3836, 2
        %v4356 = vsel %vm1561, %v4353, %v4355
        %v4357 = vrot.slane %v3837, 2
        %v4358 = vsel %vm1561, %v4355, %v4357
        %v4359 = vrot.slane %v3838, 2
        %v4360 = vsel %vm1561, %v4357, %v4359
        %v4361 = vrot.slane %v3839, 2
        %v4362 = vsel %vm1561, %v4359, %v4361
        %v4363 = vrot.slane %v3840, 2
        %v4364 = vsel %vm1561, %v4361, %v4363
        %v4365 = vrot.slane %v3841, 2
        %v4366 = vsel %vm1561, %v4363, %v4365
        %v4367 = vrot.slane %v3842, 2
        %v4368 = vsel %vm1561, %v4365, %v4367
        %v4369 = vrot.slane %v3843, 2
        %v4370 = vsel %vm1561, %v4367, %v4369
        %v4371 = vrot.slane %v3844, 2
        %v4372 = vsel %vm1561, %v4369, %v4371
        %v4373 = vrot.slane %v3845, 2
        %v4374 = vsel %vm1561, %v4371, %v4373
        %v4375 = vrot.slane %v3846, 2
        %v4376 = vsel %vm1561, %v4373, %v4375
        %v4377 = vrot.slane %v3847, 2
        %v4378 = vsel %vm1561, %v4375, %v4377
        %v4379 = vrot.slane %v3848, 2
        %v4380 = vsel %vm1561, %v4377, %v4379
        %v4381 = vrot.slane %v3849, 2
        %v4382 = vsel %vm1561, %v4379, %v4381
        %v4383 = vrot.slane %v3850, 2
        %v4384 = vsel %vm1561, %v4381, %v4383
        %v4385 = vrot.slane %v3851, 2
        %v4386 = vsel %vm1561, %v4383, %v4385
        %v4387 = vrot.slane %v3852, 2
        %v4388 = vsel %vm1561, %v4385, %v4387
        %v4389 = vrot.slane %v3853, 2
        %v4390 = vsel %vm1561, %v4387, %v4389
        %v4391 = vrot.slane %v3854, 2
        %v4392 = vsel %vm1561, %v4389, %v4391
        %v4393 = vrot.slane %v3855, 2
        %v4394 = vsel %vm1561, %v4391, %v4393
        %v4395 = vrot.slane %v3856, 2
        %v4396 = vsel %vm1561, %v4393, %v4395
        %v4397 = vrot.slane %v3857, 2
        %v4398 = vsel %vm1561, %v4395, %v4397
        %v4399 = vrot.slane %v3858, 2
        %v4400 = vsel %vm1561, %v4397, %v4399
        %v4401 = vrot.slane %v3859, 2
        %v4402 = vsel %vm1561, %v4399, %v4401
        %v4403 = vrot.slane %v3860, 2
        %v4404 = vsel %vm1561, %v4401, %v4403
        %v4405 = vrot.slane %v3861, 2
        %v4406 = vsel %vm1561, %v4403, %v4405
        %v4407 = vrot.slane %v3862, 2
        %v4408 = vsel %vm1561, %v4405, %v4407
        %v4409 = vrot.slane %v3863, 2
        %v4410 = vsel %vm1561, %v4407, %v4409
        %v4411 = vrot.slane %v3864, 2
        %v4412 = vsel %vm1561, %v4409, %v4411
        %v4413 = vrot.slane %v3865, 2
        %v4414 = vsel %vm1561, %v4411, %v4413
        %v4415 = vrot.slane %v3866, 2
        %v4416 = vsel %vm1561, %v4413, %v4415
        %v4417 = vrot.slane %v3867, 2
        %v4418 = vsel %vm1561, %v4415, %v4417
        %v4419 = vrot.slane %v3868, 2
        %v4420 = vsel %vm1561, %v4417, %v4419
        %v4421 = vrot.slane %v3869, 2
        %v4422 = vsel %vm1561, %v4419, %v4421
        %v4423 = vrot.slane %v3870, 2
        %v4424 = vsel %vm1561, %v4421, %v4423
        %v4425 = vrot.slane %v3871, 2
        %v4426 = vsel %vm1561, %v4423, %v4425
        %v4427 = vrot.slane %v3872, 2
        %v4428 = vsel %vm1561, %v4425, %v4427
        %v4429 = vrot.slane %v3873, 2
        %v4430 = vsel %vm1561, %v4427, %v4429
        %v4431 = vrot.slane %v3874, 2
        %v4432 = vsel %vm1561, %v4429, %v4431
        %v4433 = vrot.slane %v3875, 2
        %v4434 = vsel %vm1561, %v4431, %v4433
        %v4435 = vrot.slane %v3876, 2
        %v4436 = vsel %vm1561, %v4433, %v4435
        %v4437 = vrot.slane %v3877, 2
        %v4438 = vsel %vm1561, %v4435, %v4437
        %v4439 = vrot.slane %v3878, 2
        %v4440 = vsel %vm1561, %v4437, %v4439
        %v4441 = vrot.slane %v3879, 2
        %v4442 = vsel %vm1561, %v4439, %v4441
        %v4443 = vrot.slane %v3880, 2
        %v4444 = vsel %vm1561, %v4441, %v4443
        %v4445 = vrot.slane %v3881, 2
        %v4446 = vsel %vm1561, %v4443, %v4445
        %v4447 = vrot.slane %v3882, 2
        %v4448 = vsel %vm1561, %v4445, %v4447
        %v4449 = vrot.slane %v3883, 2
        %v4450 = vsel %vm1561, %v4447, %v4449
        %v4451 = vrot.slane %v3884, 2
        %v4452 = vsel %vm1561, %v4449, %v4451
        %v4453 = vrot.slane %v3885, 2
        %v4454 = vsel %vm1561, %v4451, %v4453
        %v4455 = vrot.slane %v3886, 2
        %v4456 = vsel %vm1561, %v4453, %v4455
        %v4457 = vrot.slane %v3887, 2
        %v4458 = vsel %vm1561, %v4455, %v4457
        %v4459 = vrot.slane %v3888, 2
        %v4460 = vsel %vm1561, %v4457, %v4459
        %v4461 = vrot.slane %v3889, 2
        %v4462 = vsel %vm1561, %v4459, %v4461
        %v4463 = vrot.slane %v3890, 2
        %v4464 = vsel %vm1561, %v4461, %v4463
        %v4465 = vrot.slane %v3891, 2
        %v4466 = vsel %vm1561, %v4463, %v4465
        %v4467 = vrot.slane %v3892, 2
        %v4468 = vsel %vm1561, %v4465, %v4467
        %v4469 = vrot.slane %v3893, 2
        %v4470 = vsel %vm1561, %v4467, %v4469
        %v4471 = vrot.slane %v3894, 2
        %v4472 = vsel %vm1561, %v4469, %v4471
        %v4473 = vrot.slane %v3895, 2
        %v4474 = vsel %vm1561, %v4471, %v4473
        %v4475 = vrot.slane %v3896, 2
        %v4476 = vsel %vm1561, %v4473, %v4475
        %v4477 = vrot.slane %v3897, 2
        %v4478 = vsel %vm1561, %v4475, %v4477
        %v4479 = vrot.slane %v3898, 2
        %v4480 = vsel %vm1561, %v4477, %v4479
        %v4481 = vrot.slane %v3899, 2
        %v4482 = vsel %vm1561, %v4479, %v4481
        %v4483 = vrot.slane %v3900, 2
        %v4484 = vsel %vm1561, %v4481, %v4483
        %v4485 = vrot.slane %v3901, 2
        %v4486 = vsel %vm1561, %v4483, %v4485
        %v4559 = vsel %vm2038, %v3829, %v4127
        %v4560 = vsel %vm2038, %v3830, %v4129
        %v4561 = vsel %vm2038, %v3831, %v4131
        %v4562 = vsel %vm2038, %v3832, %v4133
        %v4563 = vsel %vm2038, %v3833, %v4135
        %v4564 = vsel %vm2038, %v3834, %v4137
        %v4565 = vsel %vm2038, %v3835, %v4139
        %v4566 = vsel %vm2038, %v3836, %v4141
        %v4567 = vsel %vm2038, %v3837, %v4143
        %v4568 = vsel %vm2038, %v3838, %v4145
        %v4569 = vsel %vm2038, %v3839, %v4147
        %v4570 = vsel %vm2038, %v3840, %v4149
        %v4571 = vsel %vm2038, %v3841, %v4151
        %v4572 = vsel %vm2038, %v3842, %v4153
        %v4573 = vsel %vm2038, %v3843, %v4155
        %v4574 = vsel %vm2038, %v3844, %v4157
        %v4575 = vsel %vm2038, %v3845, %v4159
        %v4576 = vsel %vm2038, %v3846, %v4161
        %v4577 = vsel %vm2038, %v3847, %v4163
        %v4578 = vsel %vm2038, %v3848, %v4165
        %v4579 = vsel %vm2038, %v3849, %v4167
        %v4580 = vsel %vm2038, %v3850, %v4169
        %v4581 = vsel %vm2038, %v3851, %v4171
        %v4582 = vsel %vm2038, %v3852, %v4173
        %v4583 = vsel %vm2038, %v3853, %v4175
        %v4584 = vsel %vm2038, %v3854, %v4177
        %v4585 = vsel %vm2038, %v3855, %v4179
        %v4586 = vsel %vm2038, %v3856, %v4181
        %v4587 = vsel %vm2038, %v3857, %v4183
        %v4588 = vsel %vm2038, %v3858, %v4185
        %v4589 = vsel %vm2038, %v3859, %v4187
        %v4590 = vsel %vm2038, %v3860, %v4189
        %v4591 = vsel %vm2038, %v3861, %v4191
        %v4592 = vsel %vm2038, %v3862, %v4193
        %v4593 = vsel %vm2038, %v3863, %v4195
        %v4594 = vsel %vm2038, %v3864, %v4197
        %v4595 = vsel %vm2038, %v3865, %v4199
        %v4596 = vsel %vm2038, %v3866, %v4201
        %v4597 = vsel %vm2038, %v3867, %v4203
        %v4598 = vsel %vm2038, %v3868, %v4205
        %v4599 = vsel %vm2038, %v3869, %v4207
        %v4600 = vsel %vm2038, %v3870, %v4209
        %v4601 = vsel %vm2038, %v3871, %v4211
        %v4602 = vsel %vm2038, %v3872, %v4213
        %v4603 = vsel %vm2038, %v3873, %v4215
        %v4604 = vsel %vm2038, %v3874, %v4217
        %v4605 = vsel %vm2038, %v3875, %v4219
        %v4606 = vsel %vm2038, %v3876, %v4221
        %v4607 = vsel %vm2038, %v3877, %v4223
        %v4608 = vsel %vm2038, %v3878, %v4225
        %v4609 = vsel %vm2038, %v3879, %v4227
        %v4610 = vsel %vm2038, %v3880, %v4229
        %v4611 = vsel %vm2038, %v3881, %v4231
        %v4612 = vsel %vm2038, %v3882, %v4233
        %v4613 = vsel %vm2038, %v3883, %v4235
        %v4614 = vsel %vm2038, %v3884, %v4237
        %v4615 = vsel %vm2038, %v3885, %v4239
        %v4616 = vsel %vm2038, %v3886, %v4241
        %v4617 = vsel %vm2038, %v3887, %v4243
        %v4618 = vsel %vm2038, %v3888, %v4245
        %v4619 = vsel %vm2038, %v3889, %v4247
        %v4620 = vsel %vm2038, %v3890, %v4249
        %v4621 = vsel %vm2038, %v3891, %v4251
        %v4622 = vsel %vm2038, %v3892, %v4253
        %v4623 = vsel %vm2038, %v3893, %v4255
        %v4624 = vsel %vm2038, %v3894, %v4257
        %v4625 = vsel %vm2038, %v3895, %v4259
        %v4626 = vsel %vm2038, %v3896, %v4261
        %v4627 = vsel %vm2038, %v3897, %v4263
        %v4628 = vsel %vm2038, %v3898, %v4265
        %v4629 = vsel %vm2038, %v3899, %v4267
        %v4630 = vsel %vm2038, %v3900, %v4269
        %v4631 = vpack.c.bf16 %v4560, %v4559
        %v4632 = vpack.c.bf16 %v4346, %v4344
        %v4633 = vpack.c.bf16 %v4562, %v4561
        %v4634 = vpack.c.bf16 %v4350, %v4348
        %v4635 = vpack.c.bf16 %v4564, %v4563
        %v4636 = vpack.c.bf16 %v4354, %v4352
        %v4637 = vpack.c.bf16 %v4566, %v4565
        %v4638 = vpack.c.bf16 %v4358, %v4356
        %v4639 = vpack.c.bf16 %v4568, %v4567
        %v4640 = vpack.c.bf16 %v4362, %v4360
        %v4641 = vpack.c.bf16 %v4570, %v4569
        %v4642 = vpack.c.bf16 %v4366, %v4364
        %v4643 = vpack.c.bf16 %v4572, %v4571
        %v4644 = vpack.c.bf16 %v4370, %v4368
        %v4645 = vpack.c.bf16 %v4574, %v4573
        %v4646 = vpack.c.bf16 %v4374, %v4372
        %v4647 = vpack.c.bf16 %v4576, %v4575
        %v4648 = vpack.c.bf16 %v4378, %v4376
        %v4649 = vpack.c.bf16 %v4578, %v4577
        %v4650 = vpack.c.bf16 %v4382, %v4380
        %v4651 = vpack.c.bf16 %v4580, %v4579
        %v4652 = vpack.c.bf16 %v4386, %v4384
        %v4653 = vpack.c.bf16 %v4582, %v4581
        %v4654 = vpack.c.bf16 %v4390, %v4388
        %v4655 = vpack.c.bf16 %v4584, %v4583
        %v4656 = vpack.c.bf16 %v4394, %v4392
        %v4657 = vpack.c.bf16 %v4586, %v4585
        %v4658 = vpack.c.bf16 %v4398, %v4396
        %v4659 = vpack.c.bf16 %v4588, %v4587
        %v4660 = vpack.c.bf16 %v4402, %v4400
        %v4661 = vpack.c.bf16 %v4590, %v4589
        %v4662 = vpack.c.bf16 %v4406, %v4404
        %v4663 = vpack.c.bf16 %v4592, %v4591
        %v4664 = vpack.c.bf16 %v4410, %v4408
        %v4665 = vpack.c.bf16 %v4594, %v4593
        %v4666 = vpack.c.bf16 %v4414, %v4412
        %v4667 = vpack.c.bf16 %v4596, %v4595
        %v4668 = vpack.c.bf16 %v4418, %v4416
        %v4669 = vpack.c.bf16 %v4598, %v4597
        %v4670 = vpack.c.bf16 %v4422, %v4420
        %v4671 = vpack.c.bf16 %v4600, %v4599
        %v4672 = vpack.c.bf16 %v4426, %v4424
        %v4673 = vpack.c.bf16 %v4602, %v4601
        %v4674 = vpack.c.bf16 %v4430, %v4428
        %v4675 = vpack.c.bf16 %v4604, %v4603
        %v4676 = vpack.c.bf16 %v4434, %v4432
        %v4677 = vpack.c.bf16 %v4606, %v4605
        %v4678 = vpack.c.bf16 %v4438, %v4436
        %v4679 = vpack.c.bf16 %v4608, %v4607
        %v4680 = vpack.c.bf16 %v4442, %v4440
        %v4681 = vpack.c.bf16 %v4610, %v4609
        %v4682 = vpack.c.bf16 %v4446, %v4444
        %v4683 = vpack.c.bf16 %v4612, %v4611
        %v4684 = vpack.c.bf16 %v4450, %v4448
        %v4685 = vpack.c.bf16 %v4614, %v4613
        %v4686 = vpack.c.bf16 %v4454, %v4452
        %v4687 = vpack.c.bf16 %v4616, %v4615
        %v4688 = vpack.c.bf16 %v4458, %v4456
        %v4689 = vpack.c.bf16 %v4618, %v4617
        %v4690 = vpack.c.bf16 %v4462, %v4460
        %v4691 = vpack.c.bf16 %v4620, %v4619
        %v4692 = vpack.c.bf16 %v4466, %v4464
        %v4693 = vpack.c.bf16 %v4622, %v4621
        %v4694 = vpack.c.bf16 %v4470, %v4468
        %v4695 = vpack.c.bf16 %v4624, %v4623
        %v4696 = vpack.c.bf16 %v4474, %v4472
        %v4697 = vpack.c.bf16 %v4626, %v4625
        %v4698 = vpack.c.bf16 %v4478, %v4476
        %v4699 = vpack.c.bf16 %v4628, %v4627
        %v4700 = vpack.c.bf16 %v4482, %v4480
        %v4701 = vpack.c.bf16 %v4630, %v4629
        %v4702 = vpack.c.bf16 %v4486, %v4484
        %v4703 = vld [vmem:[%s5] sm:$0xf]
        %v4704 = vld [vmem:[%s5 + $0x4] sm:$0xf]
        %v4705 = vld [vmem:[%s5 + $0x8] sm:$0xf]
        %v4706 = vld [vmem:[%s5 + $0xc] sm:$0xf]
        %v4707 = vld [vmem:[%s5 + $0x10] sm:$0xf]
        %v4708 = vld [vmem:[%s5 + $0x14] sm:$0xf]
        %v4709 = vld [vmem:[%s5 + $0x18] sm:$0xf]
        %v4710 = vld [vmem:[%s5 + $0x1c] sm:$0xf]
        %v4711 = vld [vmem:[%s5 + $0x20] sm:$0xf]
        %v4712 = vld [vmem:[%s5 + $0x24] sm:$0xf]
        %v4713 = vld [vmem:[%s5 + $0x28] sm:$0xf]
        %v4714 = vld [vmem:[%s5 + $0x2c] sm:$0xf]
        %v4715 = vld [vmem:[%s5 + $0x30] sm:$0xf]
        %v4716 = vld [vmem:[%s5 + $0x34] sm:$0xf]
        %v4717 = vld [vmem:[%s5 + $0x38] sm:$0xf]
        %v4718 = vld [vmem:[%s5 + $0x3c] sm:$0xf]
        %v4719 = vld [vmem:[%s5 + $0x40] sm:$0xf]
        %v4720 = vld [vmem:[%s5 + $0x44] sm:$0xf]
        %v4721 = vld [vmem:[%s5 + $0x48] sm:$0xf]
        %v4722 = vld [vmem:[%s5 + $0x4c] sm:$0xf]
        %v4723 = vld [vmem:[%s5 + $0x50] sm:$0xf]
        %v4724 = vld [vmem:[%s5 + $0x54] sm:$0xf]
        %v4725 = vld [vmem:[%s5 + $0x58] sm:$0xf]
        %v4726 = vld [vmem:[%s5 + $0x5c] sm:$0xf]
        %v4730 = vrot.slane %v3902, 1
        %v4731 = vsel %vm1164, %v4124, %v4730
        %v4732 = vrot.slane %v3903, 1
        %v4733 = vsel %vm1164, %v4730, %v4732
        %v4734 = vrot.slane %v3904, 1
        %v4735 = vsel %vm1164, %v4732, %v4734
        %4736 = vrot.lane.b32.xlu0 %v4731, 64
        %v4737 = vpop.permute.xlu0 %4736
        %4738 = vrot.lane.b32.xlu0 %v4733, 64
        %v4739 = vpop.permute.xlu0 %4738
        %4740 = vrot.lane.b32.xlu0 %v4735, 64
        %v4741 = vpop.permute.xlu0 %4740
        %4742 = vrot.lane.b32.xlu0 %v4734, 64
        %v4743 = vpop.permute.xlu0 %4742
        %v4748 = vrot.slane %v3902, 2
        %v4749 = vsel %vm1561, %v4485, %v4748
        %v4750 = vrot.slane %v3903, 2
        %v4751 = vsel %vm1561, %v4748, %v4750
        %v4752 = vrot.slane %v3904, 2
        %v4753 = vsel %vm1561, %v4750, %v4752
        %v4758 = vsel %vm2038, %v3901, %v4737
        %v4759 = vsel %vm2038, %v3902, %v4739
        %v4760 = vsel %vm2038, %v3903, %v4741
        %v4761 = vsel %vm2038, %v3904, %v4743
        %v4762 = vpack.c.bf16 %v4563, %v4562
        %v4763 = vpack.c.bf16 %v4352, %v4350
        %v4764 = vpack.c.bf16 %v4565, %v4564
        %v4765 = vpack.c.bf16 %v4356, %v4354
        %v4766 = vpack.c.bf16 %v4567, %v4566
        %v4767 = vpack.c.bf16 %v4360, %v4358
        %v4768 = vpack.c.bf16 %v4569, %v4568
        %v4769 = vpack.c.bf16 %v4364, %v4362
        %v4770 = vpack.c.bf16 %v4571, %v4570
        %v4771 = vpack.c.bf16 %v4368, %v4366
        %v4772 = vpack.c.bf16 %v4573, %v4572
        %v4773 = vpack.c.bf16 %v4372, %v4370
        %v4774 = vpack.c.bf16 %v4575, %v4574
        %v4775 = vpack.c.bf16 %v4376, %v4374
        %v4776 = vpack.c.bf16 %v4577, %v4576
        %v4777 = vpack.c.bf16 %v4380, %v4378
        %v4778 = vpack.c.bf16 %v4579, %v4578
        %v4779 = vpack.c.bf16 %v4384, %v4382
        %v4780 = vpack.c.bf16 %v4581, %v4580
        %v4781 = vpack.c.bf16 %v4388, %v4386
        %v4782 = vpack.c.bf16 %v4583, %v4582
        %v4783 = vpack.c.bf16 %v4392, %v4390
        %v4784 = vpack.c.bf16 %v4585, %v4584
        %v4785 = vpack.c.bf16 %v4396, %v4394
        %v4786 = vpack.c.bf16 %v4587, %v4586
        %v4787 = vpack.c.bf16 %v4400, %v4398
        %v4788 = vpack.c.bf16 %v4589, %v4588
        %v4789 = vpack.c.bf16 %v4404, %v4402
        %v4790 = vpack.c.bf16 %v4591, %v4590
        %v4791 = vpack.c.bf16 %v4408, %v4406
        %v4792 = vpack.c.bf16 %v4593, %v4592
        %v4793 = vpack.c.bf16 %v4412, %v4410
        %v4794 = vpack.c.bf16 %v4595, %v4594
        %v4795 = vpack.c.bf16 %v4416, %v4414
        %v4796 = vpack.c.bf16 %v4597, %v4596
        %v4797 = vpack.c.bf16 %v4420, %v4418
        %v4798 = vpack.c.bf16 %v4599, %v4598
        %v4799 = vpack.c.bf16 %v4424, %v4422
        %v4800 = vpack.c.bf16 %v4601, %v4600
        %v4801 = vpack.c.bf16 %v4428, %v4426
        %v4802 = vpack.c.bf16 %v4603, %v4602
        %v4803 = vpack.c.bf16 %v4432, %v4430
        %v4804 = vpack.c.bf16 %v4605, %v4604
        %v4805 = vpack.c.bf16 %v4436, %v4434
        %v4806 = vpack.c.bf16 %v4607, %v4606
        %v4807 = vpack.c.bf16 %v4440, %v4438
        %v4808 = vpack.c.bf16 %v4609, %v4608
        %v4809 = vpack.c.bf16 %v4444, %v4442
        %v4810 = vpack.c.bf16 %v4611, %v4610
        %v4811 = vpack.c.bf16 %v4448, %v4446
        %v4812 = vpack.c.bf16 %v4613, %v4612
        %v4813 = vpack.c.bf16 %v4452, %v4450
        %v4814 = vpack.c.bf16 %v4615, %v4614
        %v4815 = vpack.c.bf16 %v4456, %v4454
        %v4816 = vpack.c.bf16 %v4617, %v4616
        %v4817 = vpack.c.bf16 %v4460, %v4458
        %v4818 = vpack.c.bf16 %v4619, %v4618
        %v4819 = vpack.c.bf16 %v4464, %v4462
        %v4820 = vpack.c.bf16 %v4621, %v4620
        %v4821 = vpack.c.bf16 %v4468, %v4466
        %v4822 = vpack.c.bf16 %v4623, %v4622
        %v4823 = vpack.c.bf16 %v4472, %v4470
        %v4824 = vpack.c.bf16 %v4625, %v4624
        %v4825 = vpack.c.bf16 %v4476, %v4474
        %v4826 = vpack.c.bf16 %v4627, %v4626
        %v4827 = vpack.c.bf16 %v4480, %v4478
        %v4828 = vpack.c.bf16 %v4629, %v4628
        %v4829 = vpack.c.bf16 %v4484, %v4482
        %v4830 = vpack.c.bf16 %v4758, %v4630
        %v4831 = vpack.c.bf16 %v4749, %v4486
        %v4832 = vpack.c.bf16 %v4760, %v4759
        %v4833 = vpack.c.bf16 %v4753, %v4751
        %v4834 = vpack.c.bf16 %v4761, %v4761
        %v4835 = vpack.c.bf16 %v4752, %v4752
        %s4836 = scalar_lea.vmem %s5, 96
        %v4837 = vld [vmem:[%s4836] sm:$0xf]
        %v4838 = vld [vmem:[%s4836 + $0x4] sm:$0xf]
        %v4839 = vld [vmem:[%s4836 + $0x8] sm:$0xf]
        %v4840 = vld [vmem:[%s4836 + $0xc] sm:$0xf]
        %v4841 = vld [vmem:[%s4836 + $0x10] sm:$0xf]
        %v4842 = vld [vmem:[%s4836 + $0x14] sm:$0xf]
        %v4843 = vld [vmem:[%s4836 + $0x18] sm:$0xf]
        %v4844 = vld [vmem:[%s4836 + $0x1c] sm:$0xf]
        %v4845 = vld [vmem:[%s4836 + $0x20] sm:$0xf]
        %v4846 = vld [vmem:[%s4836 + $0x24] sm:$0xf]
        %v4847 = vld [vmem:[%s4836 + $0x28] sm:$0xf]
        %v4848 = vld [vmem:[%s4836 + $0x2c] sm:$0xf]
        %v4849 = vld [vmem:[%s4836 + $0x30] sm:$0xf]
        %v4850 = vld [vmem:[%s4836 + $0x34] sm:$0xf]
        %v4851 = vld [vmem:[%s4836 + $0x38] sm:$0xf]
        %v4852 = vld [vmem:[%s4836 + $0x3c] sm:$0xf]
        %v4853 = vld [vmem:[%s4836 + $0x40] sm:$0xf]
        %v4854 = vld [vmem:[%s4836 + $0x44] sm:$0xf]
        %v4855 = vld [vmem:[%s4836 + $0x48] sm:$0xf]
        %v4856 = vld [vmem:[%s4836 + $0x4c] sm:$0xf]
        %v4857 = vld [vmem:[%s4836 + $0x50] sm:$0xf]
        %v4858 = vld [vmem:[%s4836 + $0x54] sm:$0xf]
        %v4859 = vld [vmem:[%s4836 + $0x58] sm:$0xf]
        %v4860 = vld [vmem:[%s4836 + $0x5c] sm:$0xf]
        %v4935 = vrot.slane %v4762, 1
        %v4936 = vrot.slane %v4764, 1
        %v4937 = vsel %vm2310, %v4935, %v4936
        %v4938 = vrot.slane %v4763, 1
        %v4939 = vrot.slane %v4765, 1
        %v4940 = vsel %vm2310, %v4938, %v4939
        %v4941 = vrot.slane %v4766, 1
        %v4942 = vsel %vm2310, %v4936, %v4941
        %v4943 = vrot.slane %v4767, 1
        %v4944 = vsel %vm2310, %v4939, %v4943
        %v4945 = vrot.slane %v4768, 1
        %v4946 = vsel %vm2310, %v4941, %v4945
        %v4947 = vrot.slane %v4769, 1
        %v4948 = vsel %vm2310, %v4943, %v4947
        %v4949 = vrot.slane %v4770, 1
        %v4950 = vsel %vm2310, %v4945, %v4949
        %v4951 = vrot.slane %v4771, 1
        %v4952 = vsel %vm2310, %v4947, %v4951
        %v4953 = vrot.slane %v4772, 1
        %v4954 = vsel %vm2310, %v4949, %v4953
        %v4955 = vrot.slane %v4773, 1
        %v4956 = vsel %vm2310, %v4951, %v4955
        %v4957 = vrot.slane %v4774, 1
        %v4958 = vsel %vm2310, %v4953, %v4957
        %v4959 = vrot.slane %v4775, 1
        %v4960 = vsel %vm2310, %v4955, %v4959
        %v4961 = vrot.slane %v4776, 1
        %v4962 = vsel %vm2310, %v4957, %v4961
        %v4963 = vrot.slane %v4777, 1
        %v4964 = vsel %vm2310, %v4959, %v4963
        %v4965 = vrot.slane %v4778, 1
        %v4966 = vsel %vm2310, %v4961, %v4965
        %v4967 = vrot.slane %v4779, 1
        %v4968 = vsel %vm2310, %v4963, %v4967
        %v4969 = vrot.slane %v4780, 1
        %v4970 = vsel %vm2310, %v4965, %v4969
        %v4971 = vrot.slane %v4781, 1
        %v4972 = vsel %vm2310, %v4967, %v4971
        %v4973 = vrot.slane %v4782, 1
        %v4974 = vsel %vm2310, %v4969, %v4973
        %v4975 = vrot.slane %v4783, 1
        %v4976 = vsel %vm2310, %v4971, %v4975
        %v4977 = vrot.slane %v4784, 1
        %v4978 = vsel %vm2310, %v4973, %v4977
        %v4979 = vrot.slane %v4785, 1
        %v4980 = vsel %vm2310, %v4975, %v4979
        %v4981 = vrot.slane %v4786, 1
        %v4982 = vsel %vm2310, %v4977, %v4981
        %v4983 = vrot.slane %v4787, 1
        %v4984 = vsel %vm2310, %v4979, %v4983
        %v4985 = vrot.slane %v4788, 1
        %v4986 = vsel %vm2310, %v4981, %v4985
        %v4987 = vrot.slane %v4789, 1
        %v4988 = vsel %vm2310, %v4983, %v4987
        %v4989 = vrot.slane %v4790, 1
        %v4990 = vsel %vm2310, %v4985, %v4989
        %v4991 = vrot.slane %v4791, 1
        %v4992 = vsel %vm2310, %v4987, %v4991
        %v4993 = vrot.slane %v4792, 1
        %v4994 = vsel %vm2310, %v4989, %v4993
        %v4995 = vrot.slane %v4793, 1
        %v4996 = vsel %vm2310, %v4991, %v4995
        %v4997 = vrot.slane %v4794, 1
        %v4998 = vsel %vm2310, %v4993, %v4997
        %v4999 = vrot.slane %v4795, 1
        %v5000 = vsel %vm2310, %v4995, %v4999
        %v5001 = vrot.slane %v4796, 1
        %v5002 = vsel %vm2310, %v4997, %v5001
        %v5003 = vrot.slane %v4797, 1
        %v5004 = vsel %vm2310, %v4999, %v5003
        %v5005 = vrot.slane %v4798, 1
        %v5006 = vsel %vm2310, %v5001, %v5005
        %v5007 = vrot.slane %v4799, 1
        %v5008 = vsel %vm2310, %v5003, %v5007
        %v5009 = vrot.slane %v4800, 1
        %v5010 = vsel %vm2310, %v5005, %v5009
        %v5011 = vrot.slane %v4801, 1
        %v5012 = vsel %vm2310, %v5007, %v5011
        %v5013 = vrot.slane %v4802, 1
        %v5014 = vsel %vm2310, %v5009, %v5013
        %v5015 = vrot.slane %v4803, 1
        %v5016 = vsel %vm2310, %v5011, %v5015
        %v5017 = vrot.slane %v4804, 1
        %v5018 = vsel %vm2310, %v5013, %v5017
        %v5019 = vrot.slane %v4805, 1
        %v5020 = vsel %vm2310, %v5015, %v5019
        %v5021 = vrot.slane %v4806, 1
        %v5022 = vsel %vm2310, %v5017, %v5021
        %v5023 = vrot.slane %v4807, 1
        %v5024 = vsel %vm2310, %v5019, %v5023
        %v5025 = vrot.slane %v4808, 1
        %v5026 = vsel %vm2310, %v5021, %v5025
        %v5027 = vrot.slane %v4809, 1
        %v5028 = vsel %vm2310, %v5023, %v5027
        %v5029 = vrot.slane %v4810, 1
        %v5030 = vsel %vm2310, %v5025, %v5029
        %v5031 = vrot.slane %v4811, 1
        %v5032 = vsel %vm2310, %v5027, %v5031
        %v5033 = vrot.slane %v4812, 1
        %v5034 = vsel %vm2310, %v5029, %v5033
        %v5035 = vrot.slane %v4813, 1
        %v5036 = vsel %vm2310, %v5031, %v5035
        %v5037 = vrot.slane %v4814, 1
        %v5038 = vsel %vm2310, %v5033, %v5037
        %v5039 = vrot.slane %v4815, 1
        %v5040 = vsel %vm2310, %v5035, %v5039
        %v5041 = vrot.slane %v4816, 1
        %v5042 = vsel %vm2310, %v5037, %v5041
        %v5043 = vrot.slane %v4817, 1
        %v5044 = vsel %vm2310, %v5039, %v5043
        %v5045 = vrot.slane %v4818, 1
        %v5046 = vsel %vm2310, %v5041, %v5045
        %v5047 = vrot.slane %v4819, 1
        %v5048 = vsel %vm2310, %v5043, %v5047
        %v5049 = vrot.slane %v4820, 1
        %v5050 = vsel %vm2310, %v5045, %v5049
        %v5051 = vrot.slane %v4821, 1
        %v5052 = vsel %vm2310, %v5047, %v5051
        %v5053 = vrot.slane %v4822, 1
        %v5054 = vsel %vm2310, %v5049, %v5053
        %v5055 = vrot.slane %v4823, 1
        %v5056 = vsel %vm2310, %v5051, %v5055
        %v5057 = vrot.slane %v4824, 1
        %v5058 = vsel %vm2310, %v5053, %v5057
        %v5059 = vrot.slane %v4825, 1
        %v5060 = vsel %vm2310, %v5055, %v5059
        %v5061 = vrot.slane %v4826, 1
        %v5062 = vsel %vm2310, %v5057, %v5061
        %v5063 = vrot.slane %v4827, 1
        %v5064 = vsel %vm2310, %v5059, %v5063
        %v5065 = vrot.slane %v4828, 1
        %v5066 = vsel %vm2310, %v5061, %v5065
        %v5067 = vrot.slane %v4829, 1
        %v5068 = vsel %vm2310, %v5063, %v5067
        %v5069 = vrot.slane %v4830, 1
        %v5070 = vsel %vm2310, %v5065, %v5069
        %v5071 = vrot.slane %v4831, 1
        %v5072 = vsel %vm2310, %v5067, %v5071
        %v5073 = vrot.slane %v4832, 1
        %v5074 = vsel %vm2310, %v5069, %v5073
        %v5075 = vrot.slane %v4833, 1
        %v5076 = vsel %vm2310, %v5071, %v5075
        %v5077 = vrot.slane %v4834, 1
        %v5078 = vsel %vm2310, %v5073, %v5077
        %v5079 = vrot.slane %v4835, 1
        %v5080 = vsel %vm2310, %v5075, %v5079
        %v5141 = vunpack.c.l.b16 %v4837
        %v5142 = vunpack.c.l.b16 %v4838
        %v5143 = vunpack.c.l.b16 %v4839
        %v5144 = vunpack.c.l.b16 %v4840
        %v5145 = vunpack.c.l.b16 %v4841
        %v5146 = vunpack.c.l.b16 %v4842
        %v5147 = vunpack.c.l.b16 %v4843
        %v5148 = vunpack.c.l.b16 %v4844
        %v5149 = vunpack.c.l.b16 %v4845
        %v5150 = vunpack.c.l.b16 %v4846
        %v5151 = vunpack.c.l.b16 %v4847
        %v5152 = vunpack.c.l.b16 %v4848
        %v5153 = vunpack.c.l.b16 %v4849
        %v5154 = vunpack.c.l.b16 %v4850
        %v5155 = vunpack.c.l.b16 %v4851
        %v5156 = vunpack.c.l.b16 %v4852
        %v5157 = vunpack.c.l.b16 %v4853
        %v5158 = vunpack.c.l.b16 %v4854
        %v5159 = vunpack.c.l.b16 %v4855
        %v5160 = vunpack.c.l.b16 %v4856
        %v5161 = vunpack.c.l.b16 %v4857
        %v5162 = vunpack.c.l.b16 %v4858
        %v5163 = vunpack.c.l.b16 %v4859
        %v5164 = vunpack.c.l.b16 %v4860
        %v5165 = vpack.c.b16 %v5142, %v5141
        %v5166 = vpack.c.b16 %v5144, %v5143
        %v5167 = vpack.c.b16 %v5146, %v5145
        %v5168 = vpack.c.b16 %v5148, %v5147
        %v5169 = vpack.c.b16 %v5150, %v5149
        %v5170 = vpack.c.b16 %v5152, %v5151
        %v5171 = vpack.c.b16 %v5154, %v5153
        %v5172 = vpack.c.b16 %v5156, %v5155
        %v5173 = vpack.c.b16 %v5158, %v5157
        %v5174 = vpack.c.b16 %v5160, %v5159
        %v5175 = vpack.c.b16 %v5162, %v5161
        %v5176 = vpack.c.b16 %v5164, %v5163
        %v5190 = vsel %vm2038, %v4940, 0
        %v5193 = vsel %vm2038, %v4944, 0
        %v5196 = vsel %vm2038, %v4948, 0
        %v5199 = vsel %vm2038, %v4952, 0
        %v5202 = vsel %vm2038, %v4956, 0
        %v5205 = vsel %vm2038, %v4960, 0
        %v5208 = vsel %vm2038, %v4964, 0
        %v5211 = vsel %vm2038, %v4968, 0
        %v5214 = vsel %vm2038, %v4972, 0
        %v5217 = vsel %vm2038, %v4976, 0
        %v5220 = vsel %vm2038, %v4980, 0
        %v5223 = vsel %vm2038, %v4984, 0
        %v5226 = vsel %vm2038, %v4988, 0
        %v5229 = vsel %vm2038, %v4992, 0
        %v5232 = vsel %vm2038, %v4996, 0
        %v5235 = vsel %vm2038, %v5000, 0
        %v5238 = vsel %vm2038, %v5004, 0
        %v5241 = vsel %vm2038, %v5008, 0
        %v5244 = vsel %vm2038, %v5012, 0
        %v5247 = vsel %vm2038, %v5016, 0
        %v5250 = vsel %vm2038, %v5020, 0
        %v5253 = vsel %vm2038, %v5024, 0
        %v5256 = vsel %vm2038, %v5028, 0
        %v5259 = vsel %vm2038, %v5032, 0
        %v5262 = vsel %vm2038, %v5036, 0
        %v5265 = vsel %vm2038, %v5040, 0
        %v5268 = vsel %vm2038, %v5044, 0
        %v5271 = vsel %vm2038, %v5048, 0
        %v5274 = vsel %vm2038, %v5052, 0
        %v5277 = vsel %vm2038, %v5056, 0
        %v5280 = vsel %vm2038, %v5060, 0
        %v5283 = vsel %vm2038, %v5064, 0
        %v5286 = vsel %vm2038, %v5068, 0
        %v5289 = vsel %vm2038, %v5072, 0
        %v5292 = vsel %vm2038, %v5076, 0
        %v5295 = vsel %vm2038, %v5080, 0
        %5297 = vmatpush.bf16.msra.mxu0 %v5172
        %5298 = vmatpush.bf16.msra.mxu0 %v5171
        %5299 = vmatpush.bf16.msra.mxu0 %v5170
        %5300 = vmatpush.bf16.msra.mxu0 %v5169
        %5301 = vmatpush.bf16.msra.mxu0 %v5168
        %5302 = vmatpush.bf16.msra.mxu0 %v5167
        %5303 = vmatpush.bf16.msra.mxu0 %v5166
        %5304 = vmatpush.bf16.msra.mxu0 %v5165
        %5305 = vmatmul.bf16.gmra.mxu0 %v4937
        %v5306 = vpop.f32.mrf.mxu0
        %v5307 = vadd.f32 0.0, %v5306
        %v5308 = vpop.f32.mrf.mxu0
        %v5309 = vadd.f32 0.0, %v5308
        %5310 = vmatmul.bf16.gmra.mxu0 %v4942
        %v5311 = vpop.f32.mrf.mxu0
        %v5312 = vadd.f32 0.0, %v5311
        %v5313 = vpop.f32.mrf.mxu0
        %v5314 = vadd.f32 0.0, %v5313
        %5315 = vmatmul.bf16.gmra.mxu0 %v4946
        %v5316 = vpop.f32.mrf.mxu0
        %v5317 = vadd.f32 0.0, %v5316
        %v5318 = vpop.f32.mrf.mxu0
        %v5319 = vadd.f32 0.0, %v5318
        %5320 = vmatmul.bf16.gmra.mxu0 %v4950
        %v5321 = vpop.f32.mrf.mxu0
        %v5322 = vadd.f32 0.0, %v5321
        %v5323 = vpop.f32.mrf.mxu0
        %v5324 = vadd.f32 0.0, %v5323
        %5325 = vmatmul.bf16.gmra.mxu0 %v4954
        %v5326 = vpop.f32.mrf.mxu0
        %v5327 = vadd.f32 0.0, %v5326
        %v5328 = vpop.f32.mrf.mxu0
        %v5329 = vadd.f32 0.0, %v5328
        %5330 = vmatmul.bf16.gmra.mxu0 %v4958
        %v5331 = vpop.f32.mrf.mxu0
        %v5332 = vadd.f32 0.0, %v5331
        %v5333 = vpop.f32.mrf.mxu0
        %v5334 = vadd.f32 0.0, %v5333
        %5335 = vmatmul.bf16.gmra.mxu0 %v4962
        %v5336 = vpop.f32.mrf.mxu0
        %v5337 = vadd.f32 0.0, %v5336
        %v5338 = vpop.f32.mrf.mxu0
        %v5339 = vadd.f32 0.0, %v5338
        %5340 = vmatmul.bf16.gmra.mxu0 %v4966
        %v5341 = vpop.f32.mrf.mxu0
        %v5342 = vadd.f32 0.0, %v5341
        %v5343 = vpop.f32.mrf.mxu0
        %v5344 = vadd.f32 0.0, %v5343
        %5345 = vmatmul.bf16.gmra.mxu0 %v4970
        %v5346 = vpop.f32.mrf.mxu0
        %v5347 = vadd.f32 0.0, %v5346
        %v5348 = vpop.f32.mrf.mxu0
        %v5349 = vadd.f32 0.0, %v5348
        %5350 = vmatmul.bf16.gmra.mxu0 %v4974
        %v5351 = vpop.f32.mrf.mxu0
        %v5352 = vadd.f32 0.0, %v5351
        %v5353 = vpop.f32.mrf.mxu0
        %v5354 = vadd.f32 0.0, %v5353
        %5355 = vmatmul.bf16.gmra.mxu0 %v4978
        %v5356 = vpop.f32.mrf.mxu0
        %v5357 = vadd.f32 0.0, %v5356
        %v5358 = vpop.f32.mrf.mxu0
        %v5359 = vadd.f32 0.0, %v5358
        %5360 = vmatmul.bf16.gmra.mxu0 %v4982
        %v5361 = vpop.f32.mrf.mxu0
        %v5362 = vadd.f32 0.0, %v5361
        %v5363 = vpop.f32.mrf.mxu0
        %v5364 = vadd.f32 0.0, %v5363
        %5365 = vmatmul.bf16.gmra.mxu0 %v4986
        %v5366 = vpop.f32.mrf.mxu0
        %v5367 = vadd.f32 0.0, %v5366
        %v5368 = vpop.f32.mrf.mxu0
        %v5369 = vadd.f32 0.0, %v5368
        %5370 = vmatmul.bf16.gmra.mxu0 %v4990
        %v5371 = vpop.f32.mrf.mxu0
        %v5372 = vadd.f32 0.0, %v5371
        %v5373 = vpop.f32.mrf.mxu0
        %v5374 = vadd.f32 0.0, %v5373
        %5375 = vmatmul.bf16.gmra.mxu0 %v4994
        %v5376 = vpop.f32.mrf.mxu0
        %v5377 = vadd.f32 0.0, %v5376
        %v5378 = vpop.f32.mrf.mxu0
        %v5379 = vadd.f32 0.0, %v5378
        %5380 = vmatmul.bf16.gmra.mxu0 %v4998
        %v5381 = vpop.f32.mrf.mxu0
        %v5382 = vadd.f32 0.0, %v5381
        %v5383 = vpop.f32.mrf.mxu0
        %v5384 = vadd.f32 0.0, %v5383
        %5385 = vmatmul.bf16.gmra.mxu0 %v5002
        %v5386 = vpop.f32.mrf.mxu0
        %v5387 = vadd.f32 0.0, %v5386
        %v5388 = vpop.f32.mrf.mxu0
        %v5389 = vadd.f32 0.0, %v5388
        %5390 = vmatmul.bf16.gmra.mxu0 %v5006
        %v5391 = vpop.f32.mrf.mxu0
        %v5392 = vadd.f32 0.0, %v5391
        %v5393 = vpop.f32.mrf.mxu0
        %v5394 = vadd.f32 0.0, %v5393
        %5395 = vmatmul.bf16.gmra.mxu0 %v5010
        %v5396 = vpop.f32.mrf.mxu0
        %v5397 = vadd.f32 0.0, %v5396
        %v5398 = vpop.f32.mrf.mxu0
        %v5399 = vadd.f32 0.0, %v5398
        %5400 = vmatmul.bf16.gmra.mxu0 %v5014
        %v5401 = vpop.f32.mrf.mxu0
        %v5402 = vadd.f32 0.0, %v5401
        %v5403 = vpop.f32.mrf.mxu0
        %v5404 = vadd.f32 0.0, %v5403
        %5405 = vmatmul.bf16.gmra.mxu0 %v5018
        %v5406 = vpop.f32.mrf.mxu0
        %v5407 = vadd.f32 0.0, %v5406
        %v5408 = vpop.f32.mrf.mxu0
        %v5409 = vadd.f32 0.0, %v5408
        %5410 = vmatmul.bf16.gmra.mxu0 %v5022
        %v5411 = vpop.f32.mrf.mxu0
        %v5412 = vadd.f32 0.0, %v5411
        %v5413 = vpop.f32.mrf.mxu0
        %v5414 = vadd.f32 0.0, %v5413
        %5415 = vmatmul.bf16.gmra.mxu0 %v5026
        %v5416 = vpop.f32.mrf.mxu0
        %v5417 = vadd.f32 0.0, %v5416
        %v5418 = vpop.f32.mrf.mxu0
        %v5419 = vadd.f32 0.0, %v5418
        %5420 = vmatmul.bf16.gmra.mxu0 %v5030
        %v5421 = vpop.f32.mrf.mxu0
        %v5422 = vadd.f32 0.0, %v5421
        %v5423 = vpop.f32.mrf.mxu0
        %v5424 = vadd.f32 0.0, %v5423
        %5425 = vmatmul.bf16.gmra.mxu0 %v5034
        %v5426 = vpop.f32.mrf.mxu0
        %v5427 = vadd.f32 0.0, %v5426
        %v5428 = vpop.f32.mrf.mxu0
        %v5429 = vadd.f32 0.0, %v5428
        %5430 = vmatmul.bf16.gmra.mxu0 %v5038
        %v5431 = vpop.f32.mrf.mxu0
        %v5432 = vadd.f32 0.0, %v5431
        %v5433 = vpop.f32.mrf.mxu0
        %v5434 = vadd.f32 0.0, %v5433
        %5435 = vmatmul.bf16.gmra.mxu0 %v5042
        %v5436 = vpop.f32.mrf.mxu0
        %v5437 = vadd.f32 0.0, %v5436
        %v5438 = vpop.f32.mrf.mxu0
        %v5439 = vadd.f32 0.0, %v5438
        %5440 = vmatmul.bf16.gmra.mxu0 %v5046
        %v5441 = vpop.f32.mrf.mxu0
        %v5442 = vadd.f32 0.0, %v5441
        %v5443 = vpop.f32.mrf.mxu0
        %v5444 = vadd.f32 0.0, %v5443
        %5445 = vmatmul.bf16.gmra.mxu0 %v5050
        %v5446 = vpop.f32.mrf.mxu0
        %v5447 = vadd.f32 0.0, %v5446
        %v5448 = vpop.f32.mrf.mxu0
        %v5449 = vadd.f32 0.0, %v5448
        %5450 = vmatmul.bf16.gmra.mxu0 %v5054
        %v5451 = vpop.f32.mrf.mxu0
        %v5452 = vadd.f32 0.0, %v5451
        %v5453 = vpop.f32.mrf.mxu0
        %v5454 = vadd.f32 0.0, %v5453
        %5455 = vmatmul.bf16.gmra.mxu0 %v5058
        %v5456 = vpop.f32.mrf.mxu0
        %v5457 = vadd.f32 0.0, %v5456
        %v5458 = vpop.f32.mrf.mxu0
        %v5459 = vadd.f32 0.0, %v5458
        %5460 = vmatmul.bf16.gmra.mxu0 %v5062
        %v5461 = vpop.f32.mrf.mxu0
        %v5462 = vadd.f32 0.0, %v5461
        %v5463 = vpop.f32.mrf.mxu0
        %v5464 = vadd.f32 0.0, %v5463
        %5465 = vmatmul.bf16.gmra.mxu0 %v5066
        %v5466 = vpop.f32.mrf.mxu0
        %v5467 = vadd.f32 0.0, %v5466
        %v5468 = vpop.f32.mrf.mxu0
        %v5469 = vadd.f32 0.0, %v5468
        %5470 = vmatmul.bf16.gmra.mxu0 %v5070
        %v5471 = vpop.f32.mrf.mxu0
        %v5472 = vadd.f32 0.0, %v5471
        %v5473 = vpop.f32.mrf.mxu0
        %v5474 = vadd.f32 0.0, %v5473
        %5475 = vmatmul.bf16.gmra.mxu0 %v5074
        %v5476 = vpop.f32.mrf.mxu0
        %v5477 = vadd.f32 0.0, %v5476
        %v5478 = vpop.f32.mrf.mxu0
        %v5479 = vadd.f32 0.0, %v5478
        %5480 = vmatmul.bf16.gmra.mxu0 %v5078
        %v5481 = vpop.f32.mrf.mxu0
        %v5482 = vadd.f32 0.0, %v5481
        %v5483 = vpop.f32.mrf.mxu0
        %v5484 = vadd.f32 0.0, %v5483
        %5485 = vdwg.mxu0
        %5486 = vmatpush.bf16.msra.mxu0 0
        %5487 = vmatpush.bf16.msra.mxu0 0
        %5488 = vmatpush.bf16.msra.mxu0 0
        %5489 = vmatpush.bf16.msra.mxu0 0
        %5490 = vmatpush.bf16.msra.mxu0 %v5176
        %5491 = vmatpush.bf16.msra.mxu0 %v5175
        %5492 = vmatpush.bf16.msra.mxu0 %v5174
        %5493 = vmatpush.bf16.msra.mxu0 %v5173
        %5494 = vmatmul.bf16.gmra.mxu0 %v5190
        %v5495 = vpop.f32.mrf.mxu0
        %v5496 = vadd.f32 %v5307, %v5495
        %v5497 = vpop.f32.mrf.mxu0
        %v5498 = vadd.f32 %v5309, %v5497
        %5499 = vmatmul.bf16.gmra.mxu0 %v5193
        %v5500 = vpop.f32.mrf.mxu0
        %v5501 = vadd.f32 %v5312, %v5500
        %v5502 = vpop.f32.mrf.mxu0
        %v5503 = vadd.f32 %v5314, %v5502
        %5504 = vmatmul.bf16.gmra.mxu0 %v5196
        %v5505 = vpop.f32.mrf.mxu0
        %v5506 = vadd.f32 %v5317, %v5505
        %v5507 = vpop.f32.mrf.mxu0
        %v5508 = vadd.f32 %v5319, %v5507
        %5509 = vmatmul.bf16.gmra.mxu0 %v5199
        %v5510 = vpop.f32.mrf.mxu0
        %v5511 = vadd.f32 %v5322, %v5510
        %v5512 = vpop.f32.mrf.mxu0
        %v5513 = vadd.f32 %v5324, %v5512
        %5514 = vmatmul.bf16.gmra.mxu0 %v5202
        %v5515 = vpop.f32.mrf.mxu0
        %v5516 = vadd.f32 %v5327, %v5515
        %v5517 = vpop.f32.mrf.mxu0
        %v5518 = vadd.f32 %v5329, %v5517
        %5519 = vmatmul.bf16.gmra.mxu0 %v5205
        %v5520 = vpop.f32.mrf.mxu0
        %v5521 = vadd.f32 %v5332, %v5520
        %v5522 = vpop.f32.mrf.mxu0
        %v5523 = vadd.f32 %v5334, %v5522
        %5524 = vmatmul.bf16.gmra.mxu0 %v5208
        %v5525 = vpop.f32.mrf.mxu0
        %v5526 = vadd.f32 %v5337, %v5525
        %v5527 = vpop.f32.mrf.mxu0
        %v5528 = vadd.f32 %v5339, %v5527
        %5529 = vmatmul.bf16.gmra.mxu0 %v5211
        %v5530 = vpop.f32.mrf.mxu0
        %v5531 = vadd.f32 %v5342, %v5530
        %v5532 = vpop.f32.mrf.mxu0
        %v5533 = vadd.f32 %v5344, %v5532
        %5534 = vmatmul.bf16.gmra.mxu0 %v5214
        %v5535 = vpop.f32.mrf.mxu0
        %v5536 = vadd.f32 %v5347, %v5535
        %v5537 = vpop.f32.mrf.mxu0
        %v5538 = vadd.f32 %v5349, %v5537
        %5539 = vmatmul.bf16.gmra.mxu0 %v5217
        %v5540 = vpop.f32.mrf.mxu0
        %v5541 = vadd.f32 %v5352, %v5540
        %v5542 = vpop.f32.mrf.mxu0
        %v5543 = vadd.f32 %v5354, %v5542
        %5544 = vmatmul.bf16.gmra.mxu0 %v5220
        %v5545 = vpop.f32.mrf.mxu0
        %v5546 = vadd.f32 %v5357, %v5545
        %v5547 = vpop.f32.mrf.mxu0
        %v5548 = vadd.f32 %v5359, %v5547
        %5549 = vmatmul.bf16.gmra.mxu0 %v5223
        %v5550 = vpop.f32.mrf.mxu0
        %v5551 = vadd.f32 %v5362, %v5550
        %v5552 = vpop.f32.mrf.mxu0
        %v5553 = vadd.f32 %v5364, %v5552
        %5554 = vmatmul.bf16.gmra.mxu0 %v5226
        %v5555 = vpop.f32.mrf.mxu0
        %v5556 = vadd.f32 %v5367, %v5555
        %v5557 = vpop.f32.mrf.mxu0
        %v5558 = vadd.f32 %v5369, %v5557
        %5559 = vmatmul.bf16.gmra.mxu0 %v5229
        %v5560 = vpop.f32.mrf.mxu0
        %v5561 = vadd.f32 %v5372, %v5560
        %v5562 = vpop.f32.mrf.mxu0
        %v5563 = vadd.f32 %v5374, %v5562
        %5564 = vmatmul.bf16.gmra.mxu0 %v5232
        %v5565 = vpop.f32.mrf.mxu0
        %v5566 = vadd.f32 %v5377, %v5565
        %v5567 = vpop.f32.mrf.mxu0
        %v5568 = vadd.f32 %v5379, %v5567
        %5569 = vmatmul.bf16.gmra.mxu0 %v5235
        %v5570 = vpop.f32.mrf.mxu0
        %v5571 = vadd.f32 %v5382, %v5570
        %v5572 = vpop.f32.mrf.mxu0
        %v5573 = vadd.f32 %v5384, %v5572
        %5574 = vmatmul.bf16.gmra.mxu0 %v5238
        %v5575 = vpop.f32.mrf.mxu0
        %v5576 = vadd.f32 %v5387, %v5575
        %v5577 = vpop.f32.mrf.mxu0
        %v5578 = vadd.f32 %v5389, %v5577
        %5579 = vmatmul.bf16.gmra.mxu0 %v5241
        %v5580 = vpop.f32.mrf.mxu0
        %v5581 = vadd.f32 %v5392, %v5580
        %v5582 = vpop.f32.mrf.mxu0
        %v5583 = vadd.f32 %v5394, %v5582
        %5584 = vmatmul.bf16.gmra.mxu0 %v5244
        %v5585 = vpop.f32.mrf.mxu0
        %v5586 = vadd.f32 %v5397, %v5585
        %v5587 = vpop.f32.mrf.mxu0
        %v5588 = vadd.f32 %v5399, %v5587
        %5589 = vmatmul.bf16.gmra.mxu0 %v5247
        %v5590 = vpop.f32.mrf.mxu0
        %v5591 = vadd.f32 %v5402, %v5590
        %v5592 = vpop.f32.mrf.mxu0
        %v5593 = vadd.f32 %v5404, %v5592
        %5594 = vmatmul.bf16.gmra.mxu0 %v5250
        %v5595 = vpop.f32.mrf.mxu0
        %v5596 = vadd.f32 %v5407, %v5595
        %v5597 = vpop.f32.mrf.mxu0
        %v5598 = vadd.f32 %v5409, %v5597
        %5599 = vmatmul.bf16.gmra.mxu0 %v5253
        %v5600 = vpop.f32.mrf.mxu0
        %v5601 = vadd.f32 %v5412, %v5600
        %v5602 = vpop.f32.mrf.mxu0
        %v5603 = vadd.f32 %v5414, %v5602
        %5604 = vmatmul.bf16.gmra.mxu0 %v5256
        %v5605 = vpop.f32.mrf.mxu0
        %v5606 = vadd.f32 %v5417, %v5605
        %v5607 = vpop.f32.mrf.mxu0
        %v5608 = vadd.f32 %v5419, %v5607
        %5609 = vmatmul.bf16.gmra.mxu0 %v5259
        %v5610 = vpop.f32.mrf.mxu0
        %v5611 = vadd.f32 %v5422, %v5610
        %v5612 = vpop.f32.mrf.mxu0
        %v5613 = vadd.f32 %v5424, %v5612
        %5614 = vmatmul.bf16.gmra.mxu0 %v5262
        %v5615 = vpop.f32.mrf.mxu0
        %v5616 = vadd.f32 %v5427, %v5615
        %v5617 = vpop.f32.mrf.mxu0
        %v5618 = vadd.f32 %v5429, %v5617
        %5619 = vmatmul.bf16.gmra.mxu0 %v5265
        %v5620 = vpop.f32.mrf.mxu0
        %v5621 = vadd.f32 %v5432, %v5620
        %v5622 = vpop.f32.mrf.mxu0
        %v5623 = vadd.f32 %v5434, %v5622
        %5624 = vmatmul.bf16.gmra.mxu0 %v5268
        %v5625 = vpop.f32.mrf.mxu0
        %v5626 = vadd.f32 %v5437, %v5625
        %v5627 = vpop.f32.mrf.mxu0
        %v5628 = vadd.f32 %v5439, %v5627
        %5629 = vmatmul.bf16.gmra.mxu0 %v5271
        %v5630 = vpop.f32.mrf.mxu0
        %v5631 = vadd.f32 %v5442, %v5630
        %v5632 = vpop.f32.mrf.mxu0
        %v5633 = vadd.f32 %v5444, %v5632
        %5634 = vmatmul.bf16.gmra.mxu0 %v5274
        %v5635 = vpop.f32.mrf.mxu0
        %v5636 = vadd.f32 %v5447, %v5635
        %v5637 = vpop.f32.mrf.mxu0
        %v5638 = vadd.f32 %v5449, %v5637
        %5639 = vmatmul.bf16.gmra.mxu0 %v5277
        %v5640 = vpop.f32.mrf.mxu0
        %v5641 = vadd.f32 %v5452, %v5640
        %v5642 = vpop.f32.mrf.mxu0
        %v5643 = vadd.f32 %v5454, %v5642
        %5644 = vmatmul.bf16.gmra.mxu0 %v5280
        %v5645 = vpop.f32.mrf.mxu0
        %v5646 = vadd.f32 %v5457, %v5645
        %v5647 = vpop.f32.mrf.mxu0
        %v5648 = vadd.f32 %v5459, %v5647
        %5649 = vmatmul.bf16.gmra.mxu0 %v5283
        %v5650 = vpop.f32.mrf.mxu0
        %v5651 = vadd.f32 %v5462, %v5650
        %v5652 = vpop.f32.mrf.mxu0
        %v5653 = vadd.f32 %v5464, %v5652
        %5654 = vmatmul.bf16.gmra.mxu0 %v5286
        %v5655 = vpop.f32.mrf.mxu0
        %v5656 = vadd.f32 %v5467, %v5655
        %v5657 = vpop.f32.mrf.mxu0
        %v5658 = vadd.f32 %v5469, %v5657
        %5659 = vmatmul.bf16.gmra.mxu0 %v5289
        %v5660 = vpop.f32.mrf.mxu0
        %v5661 = vadd.f32 %v5472, %v5660
        %v5662 = vpop.f32.mrf.mxu0
        %v5663 = vadd.f32 %v5474, %v5662
        %5664 = vmatmul.bf16.gmra.mxu0 %v5292
        %v5665 = vpop.f32.mrf.mxu0
        %v5666 = vadd.f32 %v5477, %v5665
        %v5667 = vpop.f32.mrf.mxu0
        %v5668 = vadd.f32 %v5479, %v5667
        %5669 = vmatmul.bf16.gmra.mxu0 %v5295
        %v5670 = vpop.f32.mrf.mxu0
        %v5671 = vadd.f32 %v5482, %v5670
        %v5672 = vpop.f32.mrf.mxu0
        %v5673 = vadd.f32 %v5484, %v5672
        %5674 = vdwg.mxu0
        %v5699 = vunpack.c.l.b16 %v4703
        %v5700 = vunpack.c.l.b16 %v4704
        %v5701 = vunpack.c.l.b16 %v4705
        %v5702 = vunpack.c.l.b16 %v4706
        %v5703 = vunpack.c.l.b16 %v4707
        %v5704 = vunpack.c.l.b16 %v4708
        %v5705 = vunpack.c.l.b16 %v4709
        %v5706 = vunpack.c.l.b16 %v4710
        %v5707 = vunpack.c.l.b16 %v4711
        %v5708 = vunpack.c.l.b16 %v4712
        %v5709 = vunpack.c.l.b16 %v4713
        %v5710 = vunpack.c.l.b16 %v4714
        %v5711 = vunpack.c.l.b16 %v4715
        %v5712 = vunpack.c.l.b16 %v4716
        %v5713 = vunpack.c.l.b16 %v4717
        %v5714 = vunpack.c.l.b16 %v4718
        %v5715 = vunpack.c.l.b16 %v4719
        %v5716 = vunpack.c.l.b16 %v4720
        %v5717 = vunpack.c.l.b16 %v4721
        %v5718 = vunpack.c.l.b16 %v4722
        %v5719 = vunpack.c.l.b16 %v4723
        %v5720 = vunpack.c.l.b16 %v4724
        %v5721 = vunpack.c.l.b16 %v4725
        %v5722 = vunpack.c.l.b16 %v4726
        %v5723 = vpack.c.b16 %v5700, %v5699
        %v5724 = vpack.c.b16 %v5702, %v5701
        %v5725 = vpack.c.b16 %v5704, %v5703
        %v5726 = vpack.c.b16 %v5706, %v5705
        %v5727 = vpack.c.b16 %v5708, %v5707
        %v5728 = vpack.c.b16 %v5710, %v5709
        %v5729 = vpack.c.b16 %v5712, %v5711
        %v5730 = vpack.c.b16 %v5714, %v5713
        %v5731 = vpack.c.b16 %v5716, %v5715
        %v5732 = vpack.c.b16 %v5718, %v5717
        %v5733 = vpack.c.b16 %v5720, %v5719
        %v5734 = vpack.c.b16 %v5722, %v5721
        %v5748 = vsel %vm2038, %v4632, 0
        %v5751 = vsel %vm2038, %v4634, 0
        %v5754 = vsel %vm2038, %v4636, 0
        %v5757 = vsel %vm2038, %v4638, 0
        %v5760 = vsel %vm2038, %v4640, 0
        %v5763 = vsel %vm2038, %v4642, 0
        %v5766 = vsel %vm2038, %v4644, 0
        %v5769 = vsel %vm2038, %v4646, 0
        %v5772 = vsel %vm2038, %v4648, 0
        %v5775 = vsel %vm2038, %v4650, 0
        %v5778 = vsel %vm2038, %v4652, 0
        %v5781 = vsel %vm2038, %v4654, 0
        %v5784 = vsel %vm2038, %v4656, 0
        %v5787 = vsel %vm2038, %v4658, 0
        %v5790 = vsel %vm2038, %v4660, 0
        %v5793 = vsel %vm2038, %v4662, 0
        %v5796 = vsel %vm2038, %v4664, 0
        %v5799 = vsel %vm2038, %v4666, 0
        %v5802 = vsel %vm2038, %v4668, 0
        %v5805 = vsel %vm2038, %v4670, 0
        %v5808 = vsel %vm2038, %v4672, 0
        %v5811 = vsel %vm2038, %v4674, 0
        %v5814 = vsel %vm2038, %v4676, 0
        %v5817 = vsel %vm2038, %v4678, 0
        %v5820 = vsel %vm2038, %v4680, 0
        %v5823 = vsel %vm2038, %v4682, 0
        %v5826 = vsel %vm2038, %v4684, 0
        %v5829 = vsel %vm2038, %v4686, 0
        %v5832 = vsel %vm2038, %v4688, 0
        %v5835 = vsel %vm2038, %v4690, 0
        %v5838 = vsel %vm2038, %v4692, 0
        %v5841 = vsel %vm2038, %v4694, 0
        %v5844 = vsel %vm2038, %v4696, 0
        %v5847 = vsel %vm2038, %v4698, 0
        %v5850 = vsel %vm2038, %v4700, 0
        %v5853 = vsel %vm2038, %v4702, 0
        %5855 = vmatpush.bf16.msra.mxu0 %v5730
        %5856 = vmatpush.bf16.msra.mxu0 %v5729
        %5857 = vmatpush.bf16.msra.mxu0 %v5728
        %5858 = vmatpush.bf16.msra.mxu0 %v5727
        %5859 = vmatpush.bf16.msra.mxu0 %v5726
        %5860 = vmatpush.bf16.msra.mxu0 %v5725
        %5861 = vmatpush.bf16.msra.mxu0 %v5724
        %5862 = vmatpush.bf16.msra.mxu0 %v5723
        %5863 = vmatmul.bf16.gmra.mxu0 %v4631
        %v5864 = vpop.f32.mrf.mxu0
        %v5865 = vadd.f32 %v5496, %v5864
        %v5866 = vpop.f32.mrf.mxu0
        %v5867 = vadd.f32 %v5498, %v5866
        %5868 = vmatmul.bf16.gmra.mxu0 %v4633
        %v5869 = vpop.f32.mrf.mxu0
        %v5870 = vadd.f32 %v5501, %v5869
        %v5871 = vpop.f32.mrf.mxu0
        %v5872 = vadd.f32 %v5503, %v5871
        %5873 = vmatmul.bf16.gmra.mxu0 %v4635
        %v5874 = vpop.f32.mrf.mxu0
        %v5875 = vadd.f32 %v5506, %v5874
        %v5876 = vpop.f32.mrf.mxu0
        %v5877 = vadd.f32 %v5508, %v5876
        %5878 = vmatmul.bf16.gmra.mxu0 %v4637
        %v5879 = vpop.f32.mrf.mxu0
        %v5880 = vadd.f32 %v5511, %v5879
        %v5881 = vpop.f32.mrf.mxu0
        %v5882 = vadd.f32 %v5513, %v5881
        %5883 = vmatmul.bf16.gmra.mxu0 %v4639
        %v5884 = vpop.f32.mrf.mxu0
        %v5885 = vadd.f32 %v5516, %v5884
        %v5886 = vpop.f32.mrf.mxu0
        %v5887 = vadd.f32 %v5518, %v5886
        %5888 = vmatmul.bf16.gmra.mxu0 %v4641
        %v5889 = vpop.f32.mrf.mxu0
        %v5890 = vadd.f32 %v5521, %v5889
        %v5891 = vpop.f32.mrf.mxu0
        %v5892 = vadd.f32 %v5523, %v5891
        %5893 = vmatmul.bf16.gmra.mxu0 %v4643
        %v5894 = vpop.f32.mrf.mxu0
        %v5895 = vadd.f32 %v5526, %v5894
        %v5896 = vpop.f32.mrf.mxu0
        %v5897 = vadd.f32 %v5528, %v5896
        %5898 = vmatmul.bf16.gmra.mxu0 %v4645
        %v5899 = vpop.f32.mrf.mxu0
        %v5900 = vadd.f32 %v5531, %v5899
        %v5901 = vpop.f32.mrf.mxu0
        %v5902 = vadd.f32 %v5533, %v5901
        %5903 = vmatmul.bf16.gmra.mxu0 %v4647
        %v5904 = vpop.f32.mrf.mxu0
        %v5905 = vadd.f32 %v5536, %v5904
        %v5906 = vpop.f32.mrf.mxu0
        %v5907 = vadd.f32 %v5538, %v5906
        %5908 = vmatmul.bf16.gmra.mxu0 %v4649
        %v5909 = vpop.f32.mrf.mxu0
        %v5910 = vadd.f32 %v5541, %v5909
        %v5911 = vpop.f32.mrf.mxu0
        %v5912 = vadd.f32 %v5543, %v5911
        %5913 = vmatmul.bf16.gmra.mxu0 %v4651
        %v5914 = vpop.f32.mrf.mxu0
        %v5915 = vadd.f32 %v5546, %v5914
        %v5916 = vpop.f32.mrf.mxu0
        %v5917 = vadd.f32 %v5548, %v5916
        %5918 = vmatmul.bf16.gmra.mxu0 %v4653
        %v5919 = vpop.f32.mrf.mxu0
        %v5920 = vadd.f32 %v5551, %v5919
        %v5921 = vpop.f32.mrf.mxu0
        %v5922 = vadd.f32 %v5553, %v5921
        %5923 = vmatmul.bf16.gmra.mxu0 %v4655
        %v5924 = vpop.f32.mrf.mxu0
        %v5925 = vadd.f32 %v5556, %v5924
        %v5926 = vpop.f32.mrf.mxu0
        %v5927 = vadd.f32 %v5558, %v5926
        %5928 = vmatmul.bf16.gmra.mxu0 %v4657
        %v5929 = vpop.f32.mrf.mxu0
        %v5930 = vadd.f32 %v5561, %v5929
        %v5931 = vpop.f32.mrf.mxu0
        %v5932 = vadd.f32 %v5563, %v5931
        %5933 = vmatmul.bf16.gmra.mxu0 %v4659
        %v5934 = vpop.f32.mrf.mxu0
        %v5935 = vadd.f32 %v5566, %v5934
        %v5936 = vpop.f32.mrf.mxu0
        %v5937 = vadd.f32 %v5568, %v5936
        %5938 = vmatmul.bf16.gmra.mxu0 %v4661
        %v5939 = vpop.f32.mrf.mxu0
        %v5940 = vadd.f32 %v5571, %v5939
        %v5941 = vpop.f32.mrf.mxu0
        %v5942 = vadd.f32 %v5573, %v5941
        %5943 = vmatmul.bf16.gmra.mxu0 %v4663
        %v5944 = vpop.f32.mrf.mxu0
        %v5945 = vadd.f32 %v5576, %v5944
        %v5946 = vpop.f32.mrf.mxu0
        %v5947 = vadd.f32 %v5578, %v5946
        %5948 = vmatmul.bf16.gmra.mxu0 %v4665
        %v5949 = vpop.f32.mrf.mxu0
        %v5950 = vadd.f32 %v5581, %v5949
        %v5951 = vpop.f32.mrf.mxu0
        %v5952 = vadd.f32 %v5583, %v5951
        %5953 = vmatmul.bf16.gmra.mxu0 %v4667
        %v5954 = vpop.f32.mrf.mxu0
        %v5955 = vadd.f32 %v5586, %v5954
        %v5956 = vpop.f32.mrf.mxu0
        %v5957 = vadd.f32 %v5588, %v5956
        %5958 = vmatmul.bf16.gmra.mxu0 %v4669
        %v5959 = vpop.f32.mrf.mxu0
        %v5960 = vadd.f32 %v5591, %v5959
        %v5961 = vpop.f32.mrf.mxu0
        %v5962 = vadd.f32 %v5593, %v5961
        %5963 = vmatmul.bf16.gmra.mxu0 %v4671
        %v5964 = vpop.f32.mrf.mxu0
        %v5965 = vadd.f32 %v5596, %v5964
        %v5966 = vpop.f32.mrf.mxu0
        %v5967 = vadd.f32 %v5598, %v5966
        %5968 = vmatmul.bf16.gmra.mxu0 %v4673
        %v5969 = vpop.f32.mrf.mxu0
        %v5970 = vadd.f32 %v5601, %v5969
        %v5971 = vpop.f32.mrf.mxu0
        %v5972 = vadd.f32 %v5603, %v5971
        %5973 = vmatmul.bf16.gmra.mxu0 %v4675
        %v5974 = vpop.f32.mrf.mxu0
        %v5975 = vadd.f32 %v5606, %v5974
        %v5976 = vpop.f32.mrf.mxu0
        %v5977 = vadd.f32 %v5608, %v5976
        %5978 = vmatmul.bf16.gmra.mxu0 %v4677
        %v5979 = vpop.f32.mrf.mxu0
        %v5980 = vadd.f32 %v5611, %v5979
        %v5981 = vpop.f32.mrf.mxu0
        %v5982 = vadd.f32 %v5613, %v5981
        %5983 = vmatmul.bf16.gmra.mxu0 %v4679
        %v5984 = vpop.f32.mrf.mxu0
        %v5985 = vadd.f32 %v5616, %v5984
        %v5986 = vpop.f32.mrf.mxu0
        %v5987 = vadd.f32 %v5618, %v5986
        %5988 = vmatmul.bf16.gmra.mxu0 %v4681
        %v5989 = vpop.f32.mrf.mxu0
        %v5990 = vadd.f32 %v5621, %v5989
        %v5991 = vpop.f32.mrf.mxu0
        %v5992 = vadd.f32 %v5623, %v5991
        %5993 = vmatmul.bf16.gmra.mxu0 %v4683
        %v5994 = vpop.f32.mrf.mxu0
        %v5995 = vadd.f32 %v5626, %v5994
        %v5996 = vpop.f32.mrf.mxu0
        %v5997 = vadd.f32 %v5628, %v5996
        %5998 = vmatmul.bf16.gmra.mxu0 %v4685
        %v5999 = vpop.f32.mrf.mxu0
        %v6000 = vadd.f32 %v5631, %v5999
        %v6001 = vpop.f32.mrf.mxu0
        %v6002 = vadd.f32 %v5633, %v6001
        %6003 = vmatmul.bf16.gmra.mxu0 %v4687
        %v6004 = vpop.f32.mrf.mxu0
        %v6005 = vadd.f32 %v5636, %v6004
        %v6006 = vpop.f32.mrf.mxu0
        %v6007 = vadd.f32 %v5638, %v6006
        %6008 = vmatmul.bf16.gmra.mxu0 %v4689
        %v6009 = vpop.f32.mrf.mxu0
        %v6010 = vadd.f32 %v5641, %v6009
        %v6011 = vpop.f32.mrf.mxu0
        %v6012 = vadd.f32 %v5643, %v6011
        %6013 = vmatmul.bf16.gmra.mxu0 %v4691
        %v6014 = vpop.f32.mrf.mxu0
        %v6015 = vadd.f32 %v5646, %v6014
        %v6016 = vpop.f32.mrf.mxu0
        %v6017 = vadd.f32 %v5648, %v6016
        %6018 = vmatmul.bf16.gmra.mxu0 %v4693
        %v6019 = vpop.f32.mrf.mxu0
        %v6020 = vadd.f32 %v5651, %v6019
        %v6021 = vpop.f32.mrf.mxu0
        %v6022 = vadd.f32 %v5653, %v6021
        %6023 = vmatmul.bf16.gmra.mxu0 %v4695
        %v6024 = vpop.f32.mrf.mxu0
        %v6025 = vadd.f32 %v5656, %v6024
        %v6026 = vpop.f32.mrf.mxu0
        %v6027 = vadd.f32 %v5658, %v6026
        %6028 = vmatmul.bf16.gmra.mxu0 %v4697
        %v6029 = vpop.f32.mrf.mxu0
        %v6030 = vadd.f32 %v5661, %v6029
        %v6031 = vpop.f32.mrf.mxu0
        %v6032 = vadd.f32 %v5663, %v6031
        %6033 = vmatmul.bf16.gmra.mxu0 %v4699
        %v6034 = vpop.f32.mrf.mxu0
        %v6035 = vadd.f32 %v5666, %v6034
        %v6036 = vpop.f32.mrf.mxu0
        %v6037 = vadd.f32 %v5668, %v6036
        %6038 = vmatmul.bf16.gmra.mxu0 %v4701
        %v6039 = vpop.f32.mrf.mxu0
        %v6040 = vadd.f32 %v5671, %v6039
        %v6041 = vpop.f32.mrf.mxu0
        %v6042 = vadd.f32 %v5673, %v6041
        %6043 = vdwg.mxu0
        %6044 = vmatpush.bf16.msra.mxu0 0
        %6045 = vmatpush.bf16.msra.mxu0 0
        %6046 = vmatpush.bf16.msra.mxu0 0
        %6047 = vmatpush.bf16.msra.mxu0 0
        %6048 = vmatpush.bf16.msra.mxu0 %v5734
        %6049 = vmatpush.bf16.msra.mxu0 %v5733
        %6050 = vmatpush.bf16.msra.mxu0 %v5732
        %6051 = vmatpush.bf16.msra.mxu0 %v5731
        %6052 = vmatmul.bf16.gmra.mxu0 %v5748
        %v6053 = vpop.f32.mrf.mxu0
        %v6054 = vadd.f32 %v5865, %v6053
        %v6055 = vpop.f32.mrf.mxu0
        %v6056 = vadd.f32 %v5867, %v6055
        %6057 = vmatmul.bf16.gmra.mxu0 %v5751
        %v6058 = vpop.f32.mrf.mxu0
        %v6059 = vadd.f32 %v5870, %v6058
        %v6060 = vpop.f32.mrf.mxu0
        %v6061 = vadd.f32 %v5872, %v6060
        %6062 = vmatmul.bf16.gmra.mxu0 %v5754
        %v6063 = vpop.f32.mrf.mxu0
        %v6064 = vadd.f32 %v5875, %v6063
        %v6065 = vpop.f32.mrf.mxu0
        %v6066 = vadd.f32 %v5877, %v6065
        %6067 = vmatmul.bf16.gmra.mxu0 %v5757
        %v6068 = vpop.f32.mrf.mxu0
        %v6069 = vadd.f32 %v5880, %v6068
        %v6070 = vpop.f32.mrf.mxu0
        %v6071 = vadd.f32 %v5882, %v6070
        %6072 = vmatmul.bf16.gmra.mxu0 %v5760
        %v6073 = vpop.f32.mrf.mxu0
        %v6074 = vadd.f32 %v5885, %v6073
        %v6075 = vpop.f32.mrf.mxu0
        %v6076 = vadd.f32 %v5887, %v6075
        %6077 = vmatmul.bf16.gmra.mxu0 %v5763
        %v6078 = vpop.f32.mrf.mxu0
        %v6079 = vadd.f32 %v5890, %v6078
        %v6080 = vpop.f32.mrf.mxu0
        %v6081 = vadd.f32 %v5892, %v6080
        %6082 = vmatmul.bf16.gmra.mxu0 %v5766
        %v6083 = vpop.f32.mrf.mxu0
        %v6084 = vadd.f32 %v5895, %v6083
        %v6085 = vpop.f32.mrf.mxu0
        %v6086 = vadd.f32 %v5897, %v6085
        %6087 = vmatmul.bf16.gmra.mxu0 %v5769
        %v6088 = vpop.f32.mrf.mxu0
        %v6089 = vadd.f32 %v5900, %v6088
        %v6090 = vpop.f32.mrf.mxu0
        %v6091 = vadd.f32 %v5902, %v6090
        %6092 = vmatmul.bf16.gmra.mxu0 %v5772
        %v6093 = vpop.f32.mrf.mxu0
        %v6094 = vadd.f32 %v5905, %v6093
        %v6095 = vpop.f32.mrf.mxu0
        %v6096 = vadd.f32 %v5907, %v6095
        %6097 = vmatmul.bf16.gmra.mxu0 %v5775
        %v6098 = vpop.f32.mrf.mxu0
        %v6099 = vadd.f32 %v5910, %v6098
        %v6100 = vpop.f32.mrf.mxu0
        %v6101 = vadd.f32 %v5912, %v6100
        %6102 = vmatmul.bf16.gmra.mxu0 %v5778
        %v6103 = vpop.f32.mrf.mxu0
        %v6104 = vadd.f32 %v5915, %v6103
        %v6105 = vpop.f32.mrf.mxu0
        %v6106 = vadd.f32 %v5917, %v6105
        %6107 = vmatmul.bf16.gmra.mxu0 %v5781
        %v6108 = vpop.f32.mrf.mxu0
        %v6109 = vadd.f32 %v5920, %v6108
        %v6110 = vpop.f32.mrf.mxu0
        %v6111 = vadd.f32 %v5922, %v6110
        %6112 = vmatmul.bf16.gmra.mxu0 %v5784
        %v6113 = vpop.f32.mrf.mxu0
        %v6114 = vadd.f32 %v5925, %v6113
        %v6115 = vpop.f32.mrf.mxu0
        %v6116 = vadd.f32 %v5927, %v6115
        %6117 = vmatmul.bf16.gmra.mxu0 %v5787
        %v6118 = vpop.f32.mrf.mxu0
        %v6119 = vadd.f32 %v5930, %v6118
        %v6120 = vpop.f32.mrf.mxu0
        %v6121 = vadd.f32 %v5932, %v6120
        %6122 = vmatmul.bf16.gmra.mxu0 %v5790
        %v6123 = vpop.f32.mrf.mxu0
        %v6124 = vadd.f32 %v5935, %v6123
        %v6125 = vpop.f32.mrf.mxu0
        %v6126 = vadd.f32 %v5937, %v6125
        %6127 = vmatmul.bf16.gmra.mxu0 %v5793
        %v6128 = vpop.f32.mrf.mxu0
        %v6129 = vadd.f32 %v5940, %v6128
        %v6130 = vpop.f32.mrf.mxu0
        %v6131 = vadd.f32 %v5942, %v6130
        %6132 = vmatmul.bf16.gmra.mxu0 %v5796
        %v6133 = vpop.f32.mrf.mxu0
        %v6134 = vadd.f32 %v5945, %v6133
        %v6135 = vpop.f32.mrf.mxu0
        %v6136 = vadd.f32 %v5947, %v6135
        %6137 = vmatmul.bf16.gmra.mxu0 %v5799
        %v6138 = vpop.f32.mrf.mxu0
        %v6139 = vadd.f32 %v5950, %v6138
        %v6140 = vpop.f32.mrf.mxu0
        %v6141 = vadd.f32 %v5952, %v6140
        %6142 = vmatmul.bf16.gmra.mxu0 %v5802
        %v6143 = vpop.f32.mrf.mxu0
        %v6144 = vadd.f32 %v5955, %v6143
        %v6145 = vpop.f32.mrf.mxu0
        %v6146 = vadd.f32 %v5957, %v6145
        %6147 = vmatmul.bf16.gmra.mxu0 %v5805
        %v6148 = vpop.f32.mrf.mxu0
        %v6149 = vadd.f32 %v5960, %v6148
        %v6150 = vpop.f32.mrf.mxu0
        %v6151 = vadd.f32 %v5962, %v6150
        %6152 = vmatmul.bf16.gmra.mxu0 %v5808
        %v6153 = vpop.f32.mrf.mxu0
        %v6154 = vadd.f32 %v5965, %v6153
        %v6155 = vpop.f32.mrf.mxu0
        %v6156 = vadd.f32 %v5967, %v6155
        %6157 = vmatmul.bf16.gmra.mxu0 %v5811
        %v6158 = vpop.f32.mrf.mxu0
        %v6159 = vadd.f32 %v5970, %v6158
        %v6160 = vpop.f32.mrf.mxu0
        %v6161 = vadd.f32 %v5972, %v6160
        %6162 = vmatmul.bf16.gmra.mxu0 %v5814
        %v6163 = vpop.f32.mrf.mxu0
        %v6164 = vadd.f32 %v5975, %v6163
        %v6165 = vpop.f32.mrf.mxu0
        %v6166 = vadd.f32 %v5977, %v6165
        %6167 = vmatmul.bf16.gmra.mxu0 %v5817
        %v6168 = vpop.f32.mrf.mxu0
        %v6169 = vadd.f32 %v5980, %v6168
        %v6170 = vpop.f32.mrf.mxu0
        %v6171 = vadd.f32 %v5982, %v6170
        %6172 = vmatmul.bf16.gmra.mxu0 %v5820
        %v6173 = vpop.f32.mrf.mxu0
        %v6174 = vadd.f32 %v5985, %v6173
        %v6175 = vpop.f32.mrf.mxu0
        %v6176 = vadd.f32 %v5987, %v6175
        %6177 = vmatmul.bf16.gmra.mxu0 %v5823
        %v6178 = vpop.f32.mrf.mxu0
        %v6179 = vadd.f32 %v5990, %v6178
        %v6180 = vpop.f32.mrf.mxu0
        %v6181 = vadd.f32 %v5992, %v6180
        %6182 = vmatmul.bf16.gmra.mxu0 %v5826
        %v6183 = vpop.f32.mrf.mxu0
        %v6184 = vadd.f32 %v5995, %v6183
        %v6185 = vpop.f32.mrf.mxu0
        %v6186 = vadd.f32 %v5997, %v6185
        %6187 = vmatmul.bf16.gmra.mxu0 %v5829
        %v6188 = vpop.f32.mrf.mxu0
        %v6189 = vadd.f32 %v6000, %v6188
        %v6190 = vpop.f32.mrf.mxu0
        %v6191 = vadd.f32 %v6002, %v6190
        %6192 = vmatmul.bf16.gmra.mxu0 %v5832
        %v6193 = vpop.f32.mrf.mxu0
        %v6194 = vadd.f32 %v6005, %v6193
        %v6195 = vpop.f32.mrf.mxu0
        %v6196 = vadd.f32 %v6007, %v6195
        %6197 = vmatmul.bf16.gmra.mxu0 %v5835
        %v6198 = vpop.f32.mrf.mxu0
        %v6199 = vadd.f32 %v6010, %v6198
        %v6200 = vpop.f32.mrf.mxu0
        %v6201 = vadd.f32 %v6012, %v6200
        %6202 = vmatmul.bf16.gmra.mxu0 %v5838
        %v6203 = vpop.f32.mrf.mxu0
        %v6204 = vadd.f32 %v6015, %v6203
        %v6205 = vpop.f32.mrf.mxu0
        %v6206 = vadd.f32 %v6017, %v6205
        %6207 = vmatmul.bf16.gmra.mxu0 %v5841
        %v6208 = vpop.f32.mrf.mxu0
        %v6209 = vadd.f32 %v6020, %v6208
        %v6210 = vpop.f32.mrf.mxu0
        %v6211 = vadd.f32 %v6022, %v6210
        %6212 = vmatmul.bf16.gmra.mxu0 %v5844
        %v6213 = vpop.f32.mrf.mxu0
        %v6214 = vadd.f32 %v6025, %v6213
        %v6215 = vpop.f32.mrf.mxu0
        %v6216 = vadd.f32 %v6027, %v6215
        %6217 = vmatmul.bf16.gmra.mxu0 %v5847
        %v6218 = vpop.f32.mrf.mxu0
        %v6219 = vadd.f32 %v6030, %v6218
        %v6220 = vpop.f32.mrf.mxu0
        %v6221 = vadd.f32 %v6032, %v6220
        %6222 = vmatmul.bf16.gmra.mxu0 %v5850
        %v6223 = vpop.f32.mrf.mxu0
        %v6224 = vadd.f32 %v6035, %v6223
        %v6225 = vpop.f32.mrf.mxu0
        %v6226 = vadd.f32 %v6037, %v6225
        %6227 = vmatmul.bf16.gmra.mxu0 %v5853
        %v6228 = vpop.f32.mrf.mxu0
        %v6229 = vadd.f32 %v6040, %v6228
        %v6230 = vpop.f32.mrf.mxu0
        %v6231 = vadd.f32 %v6042, %v6230
        %6232 = vdwg.mxu0
        %v6236 = vrot.slane %v3905, 1
        %v6237 = vsel %vm1164, %v4734, %v6236
        %v6238 = vrot.slane %v3906, 1
        %v6239 = vsel %vm1164, %v6236, %v6238
        %v6240 = vrot.slane %v3907, 1
        %v6241 = vsel %vm1164, %v6238, %v6240
        %6242 = vrot.lane.b32.xlu0 %v6237, 64
        %v6243 = vpop.permute.xlu0 %6242
        %6244 = vrot.lane.b32.xlu0 %v6239, 64
        %v6245 = vpop.permute.xlu0 %6244
        %6246 = vrot.lane.b32.xlu0 %v6241, 64
        %v6247 = vpop.permute.xlu0 %6246
        %6248 = vrot.lane.b32.xlu0 %v6240, 64
        %v6249 = vpop.permute.xlu0 %6248
        %v6254 = vrot.slane %v3905, 2
        %v6255 = vsel %vm1561, %v4752, %v6254
        %v6256 = vrot.slane %v3906, 2
        %v6257 = vsel %vm1561, %v6254, %v6256
        %v6258 = vrot.slane %v3907, 2
        %v6259 = vsel %vm1561, %v6256, %v6258
        %v6264 = vsel %vm2038, %v3904, %v6243
        %v6265 = vsel %vm2038, %v3905, %v6245
        %v6266 = vsel %vm2038, %v3906, %v6247
        %v6267 = vsel %vm2038, %v3907, %v6249
        %v6268 = vpack.c.bf16 %v4759, %v4758
        %v6269 = vpack.c.bf16 %v4751, %v4749
        %v6270 = vpack.c.bf16 %v6264, %v4760
        %v6271 = vpack.c.bf16 %v6255, %v4753
        %v6272 = vpack.c.bf16 %v6266, %v6265
        %v6273 = vpack.c.bf16 %v6259, %v6257
        %v6274 = vpack.c.bf16 %v6267, %v6267
        %v6275 = vpack.c.bf16 %v6258, %v6258
        %s6276 = scalar_lea.vmem %s5, 192
        %v6277 = vld [vmem:[%s6276] sm:$0xf]
        %v6278 = vld [vmem:[%s6276 + $0x4] sm:$0xf]
        %v6279 = vld [vmem:[%s6276 + $0x8] sm:$0xf]
        %v6280 = vld [vmem:[%s6276 + $0xc] sm:$0xf]
        %v6281 = vld [vmem:[%s6276 + $0x10] sm:$0xf]
        %v6282 = vld [vmem:[%s6276 + $0x14] sm:$0xf]
        %v6283 = vld [vmem:[%s6276 + $0x18] sm:$0xf]
        %v6284 = vld [vmem:[%s6276 + $0x1c] sm:$0xf]
        %v6285 = vld [vmem:[%s6276 + $0x20] sm:$0xf]
        %v6286 = vld [vmem:[%s6276 + $0x24] sm:$0xf]
        %v6287 = vld [vmem:[%s6276 + $0x28] sm:$0xf]
        %v6288 = vld [vmem:[%s6276 + $0x2c] sm:$0xf]
        %v6289 = vld [vmem:[%s6276 + $0x30] sm:$0xf]
        %v6290 = vld [vmem:[%s6276 + $0x34] sm:$0xf]
        %v6291 = vld [vmem:[%s6276 + $0x38] sm:$0xf]
        %v6292 = vld [vmem:[%s6276 + $0x3c] sm:$0xf]
        %v6293 = vld [vmem:[%s6276 + $0x40] sm:$0xf]
        %v6294 = vld [vmem:[%s6276 + $0x44] sm:$0xf]
        %v6295 = vld [vmem:[%s6276 + $0x48] sm:$0xf]
        %v6296 = vld [vmem:[%s6276 + $0x4c] sm:$0xf]
        %v6297 = vld [vmem:[%s6276 + $0x50] sm:$0xf]
        %v6298 = vld [vmem:[%s6276 + $0x54] sm:$0xf]
        %v6299 = vld [vmem:[%s6276 + $0x58] sm:$0xf]
        %v6300 = vld [vmem:[%s6276 + $0x5c] sm:$0xf]
        %v6375 = vrot.slane %v4637, 2
        %v6376 = vrot.slane %v4639, 2
        %v6377 = vsel %vm3223, %v6375, %v6376
        %v6378 = vrot.slane %v4638, 2
        %v6379 = vrot.slane %v4640, 2
        %v6380 = vsel %vm3223, %v6378, %v6379
        %v6381 = vrot.slane %v4641, 2
        %v6382 = vsel %vm3223, %v6376, %v6381
        %v6383 = vrot.slane %v4642, 2
        %v6384 = vsel %vm3223, %v6379, %v6383
        %v6385 = vrot.slane %v4643, 2
        %v6386 = vsel %vm3223, %v6381, %v6385
        %v6387 = vrot.slane %v4644, 2
        %v6388 = vsel %vm3223, %v6383, %v6387
        %v6389 = vrot.slane %v4645, 2
        %v6390 = vsel %vm3223, %v6385, %v6389
        %v6391 = vrot.slane %v4646, 2
        %v6392 = vsel %vm3223, %v6387, %v6391
        %v6393 = vrot.slane %v4647, 2
        %v6394 = vsel %vm3223, %v6389, %v6393
        %v6395 = vrot.slane %v4648, 2
        %v6396 = vsel %vm3223, %v6391, %v6395
        %v6397 = vrot.slane %v4649, 2
        %v6398 = vsel %vm3223, %v6393, %v6397
        %v6399 = vrot.slane %v4650, 2
        %v6400 = vsel %vm3223, %v6395, %v6399
        %v6401 = vrot.slane %v4651, 2
        %v6402 = vsel %vm3223, %v6397, %v6401
        %v6403 = vrot.slane %v4652, 2
        %v6404 = vsel %vm3223, %v6399, %v6403
        %v6405 = vrot.slane %v4653, 2
        %v6406 = vsel %vm3223, %v6401, %v6405
        %v6407 = vrot.slane %v4654, 2
        %v6408 = vsel %vm3223, %v6403, %v6407
        %v6409 = vrot.slane %v4655, 2
        %v6410 = vsel %vm3223, %v6405, %v6409
        %v6411 = vrot.slane %v4656, 2
        %v6412 = vsel %vm3223, %v6407, %v6411
        %v6413 = vrot.slane %v4657, 2
        %v6414 = vsel %vm3223, %v6409, %v6413
        %v6415 = vrot.slane %v4658, 2
        %v6416 = vsel %vm3223, %v6411, %v6415
        %v6417 = vrot.slane %v4659, 2
        %v6418 = vsel %vm3223, %v6413, %v6417
        %v6419 = vrot.slane %v4660, 2
        %v6420 = vsel %vm3223, %v6415, %v6419
        %v6421 = vrot.slane %v4661, 2
        %v6422 = vsel %vm3223, %v6417, %v6421
        %v6423 = vrot.slane %v4662, 2
        %v6424 = vsel %vm3223, %v6419, %v6423
        %v6425 = vrot.slane %v4663, 2
        %v6426 = vsel %vm3223, %v6421, %v6425
        %v6427 = vrot.slane %v4664, 2
        %v6428 = vsel %vm3223, %v6423, %v6427
        %v6429 = vrot.slane %v4665, 2
        %v6430 = vsel %vm3223, %v6425, %v6429
        %v6431 = vrot.slane %v4666, 2
        %v6432 = vsel %vm3223, %v6427, %v6431
        %v6433 = vrot.slane %v4667, 2
        %v6434 = vsel %vm3223, %v6429, %v6433
        %v6435 = vrot.slane %v4668, 2
        %v6436 = vsel %vm3223, %v6431, %v6435
        %v6437 = vrot.slane %v4669, 2
        %v6438 = vsel %vm3223, %v6433, %v6437
        %v6439 = vrot.slane %v4670, 2
        %v6440 = vsel %vm3223, %v6435, %v6439
        %v6441 = vrot.slane %v4671, 2
        %v6442 = vsel %vm3223, %v6437, %v6441
        %v6443 = vrot.slane %v4672, 2
        %v6444 = vsel %vm3223, %v6439, %v6443
        %v6445 = vrot.slane %v4673, 2
        %v6446 = vsel %vm3223, %v6441, %v6445
        %v6447 = vrot.slane %v4674, 2
        %v6448 = vsel %vm3223, %v6443, %v6447
        %v6449 = vrot.slane %v4675, 2
        %v6450 = vsel %vm3223, %v6445, %v6449
        %v6451 = vrot.slane %v4676, 2
        %v6452 = vsel %vm3223, %v6447, %v6451
        %v6453 = vrot.slane %v4677, 2
        %v6454 = vsel %vm3223, %v6449, %v6453
        %v6455 = vrot.slane %v4678, 2
        %v6456 = vsel %vm3223, %v6451, %v6455
        %v6457 = vrot.slane %v4679, 2
        %v6458 = vsel %vm3223, %v6453, %v6457
        %v6459 = vrot.slane %v4680, 2
        %v6460 = vsel %vm3223, %v6455, %v6459
        %v6461 = vrot.slane %v4681, 2
        %v6462 = vsel %vm3223, %v6457, %v6461
        %v6463 = vrot.slane %v4682, 2
        %v6464 = vsel %vm3223, %v6459, %v6463
        %v6465 = vrot.slane %v4683, 2
        %v6466 = vsel %vm3223, %v6461, %v6465
        %v6467 = vrot.slane %v4684, 2
        %v6468 = vsel %vm3223, %v6463, %v6467
        %v6469 = vrot.slane %v4685, 2
        %v6470 = vsel %vm3223, %v6465, %v6469
        %v6471 = vrot.slane %v4686, 2
        %v6472 = vsel %vm3223, %v6467, %v6471
        %v6473 = vrot.slane %v4687, 2
        %v6474 = vsel %vm3223, %v6469, %v6473
        %v6475 = vrot.slane %v4688, 2
        %v6476 = vsel %vm3223, %v6471, %v6475
        %v6477 = vrot.slane %v4689, 2
        %v6478 = vsel %vm3223, %v6473, %v6477
        %v6479 = vrot.slane %v4690, 2
        %v6480 = vsel %vm3223, %v6475, %v6479
        %v6481 = vrot.slane %v4691, 2
        %v6482 = vsel %vm3223, %v6477, %v6481
        %v6483 = vrot.slane %v4692, 2
        %v6484 = vsel %vm3223, %v6479, %v6483
        %v6485 = vrot.slane %v4693, 2
        %v6486 = vsel %vm3223, %v6481, %v6485
        %v6487 = vrot.slane %v4694, 2
        %v6488 = vsel %vm3223, %v6483, %v6487
        %v6489 = vrot.slane %v4695, 2
        %v6490 = vsel %vm3223, %v6485, %v6489
        %v6491 = vrot.slane %v4696, 2
        %v6492 = vsel %vm3223, %v6487, %v6491
        %v6493 = vrot.slane %v4697, 2
        %v6494 = vsel %vm3223, %v6489, %v6493
        %v6495 = vrot.slane %v4698, 2
        %v6496 = vsel %vm3223, %v6491, %v6495
        %v6497 = vrot.slane %v4699, 2
        %v6498 = vsel %vm3223, %v6493, %v6497
        %v6499 = vrot.slane %v4700, 2
        %v6500 = vsel %vm3223, %v6495, %v6499
        %v6501 = vrot.slane %v4701, 2
        %v6502 = vsel %vm3223, %v6497, %v6501
        %v6503 = vrot.slane %v4702, 2
        %v6504 = vsel %vm3223, %v6499, %v6503
        %v6505 = vrot.slane %v6268, 2
        %v6506 = vsel %vm3223, %v6501, %v6505
        %v6507 = vrot.slane %v6269, 2
        %v6508 = vsel %vm3223, %v6503, %v6507
        %v6509 = vrot.slane %v6270, 2
        %v6510 = vsel %vm3223, %v6505, %v6509
        %v6511 = vrot.slane %v6271, 2
        %v6512 = vsel %vm3223, %v6507, %v6511
        %v6513 = vrot.slane %v6272, 2
        %v6514 = vsel %vm3223, %v6509, %v6513
        %v6515 = vrot.slane %v6273, 2
        %v6516 = vsel %vm3223, %v6511, %v6515
        %v6517 = vrot.slane %v6274, 2
        %v6518 = vsel %vm3223, %v6513, %v6517
        %v6519 = vrot.slane %v6275, 2
        %v6520 = vsel %vm3223, %v6515, %v6519
        %v6581 = vunpack.c.l.b16 %v6277
        %v6582 = vunpack.c.l.b16 %v6278
        %v6583 = vunpack.c.l.b16 %v6279
        %v6584 = vunpack.c.l.b16 %v6280
        %v6585 = vunpack.c.l.b16 %v6281
        %v6586 = vunpack.c.l.b16 %v6282
        %v6587 = vunpack.c.l.b16 %v6283
        %v6588 = vunpack.c.l.b16 %v6284
        %v6589 = vunpack.c.l.b16 %v6285
        %v6590 = vunpack.c.l.b16 %v6286
        %v6591 = vunpack.c.l.b16 %v6287
        %v6592 = vunpack.c.l.b16 %v6288
        %v6593 = vunpack.c.l.b16 %v6289
        %v6594 = vunpack.c.l.b16 %v6290
        %v6595 = vunpack.c.l.b16 %v6291
        %v6596 = vunpack.c.l.b16 %v6292
        %v6597 = vunpack.c.l.b16 %v6293
        %v6598 = vunpack.c.l.b16 %v6294
        %v6599 = vunpack.c.l.b16 %v6295
        %v6600 = vunpack.c.l.b16 %v6296
        %v6601 = vunpack.c.l.b16 %v6297
        %v6602 = vunpack.c.l.b16 %v6298
        %v6603 = vunpack.c.l.b16 %v6299
        %v6604 = vunpack.c.l.b16 %v6300
        %v6605 = vpack.c.b16 %v6582, %v6581
        %v6606 = vpack.c.b16 %v6584, %v6583
        %v6607 = vpack.c.b16 %v6586, %v6585
        %v6608 = vpack.c.b16 %v6588, %v6587
        %v6609 = vpack.c.b16 %v6590, %v6589
        %v6610 = vpack.c.b16 %v6592, %v6591
        %v6611 = vpack.c.b16 %v6594, %v6593
        %v6612 = vpack.c.b16 %v6596, %v6595
        %v6613 = vpack.c.b16 %v6598, %v6597
        %v6614 = vpack.c.b16 %v6600, %v6599
        %v6615 = vpack.c.b16 %v6602, %v6601
        %v6616 = vpack.c.b16 %v6604, %v6603
        %v6630 = vsel %vm2038, %v6380, 0
        %v6633 = vsel %vm2038, %v6384, 0
        %v6636 = vsel %vm2038, %v6388, 0
        %v6639 = vsel %vm2038, %v6392, 0
        %v6642 = vsel %vm2038, %v6396, 0
        %v6645 = vsel %vm2038, %v6400, 0
        %v6648 = vsel %vm2038, %v6404, 0
        %v6651 = vsel %vm2038, %v6408, 0
        %v6654 = vsel %vm2038, %v6412, 0
        %v6657 = vsel %vm2038, %v6416, 0
        %v6660 = vsel %vm2038, %v6420, 0
        %v6663 = vsel %vm2038, %v6424, 0
        %v6666 = vsel %vm2038, %v6428, 0
        %v6669 = vsel %vm2038, %v6432, 0
        %v6672 = vsel %vm2038, %v6436, 0
        %v6675 = vsel %vm2038, %v6440, 0
        %v6678 = vsel %vm2038, %v6444, 0
        %v6681 = vsel %vm2038, %v6448, 0
        %v6684 = vsel %vm2038, %v6452, 0
        %v6687 = vsel %vm2038, %v6456, 0
        %v6690 = vsel %vm2038, %v6460, 0
        %v6693 = vsel %vm2038, %v6464, 0
        %v6696 = vsel %vm2038, %v6468, 0
        %v6699 = vsel %vm2038, %v6472, 0
        %v6702 = vsel %vm2038, %v6476, 0
        %v6705 = vsel %vm2038, %v6480, 0
        %v6708 = vsel %vm2038, %v6484, 0
        %v6711 = vsel %vm2038, %v6488, 0
        %v6714 = vsel %vm2038, %v6492, 0
        %v6717 = vsel %vm2038, %v6496, 0
        %v6720 = vsel %vm2038, %v6500, 0
        %v6723 = vsel %vm2038, %v6504, 0
        %v6726 = vsel %vm2038, %v6508, 0
        %v6729 = vsel %vm2038, %v6512, 0
        %v6732 = vsel %vm2038, %v6516, 0
        %v6735 = vsel %vm2038, %v6520, 0
        %6737 = vmatpush.bf16.msra.mxu0 %v6612
        %6738 = vmatpush.bf16.msra.mxu0 %v6611
        %6739 = vmatpush.bf16.msra.mxu0 %v6610
        %6740 = vmatpush.bf16.msra.mxu0 %v6609
        %6741 = vmatpush.bf16.msra.mxu0 %v6608
        %6742 = vmatpush.bf16.msra.mxu0 %v6607
        %6743 = vmatpush.bf16.msra.mxu0 %v6606
        %6744 = vmatpush.bf16.msra.mxu0 %v6605
        %6745 = vmatmul.bf16.gmra.mxu0 %v6377
        %v6746 = vpop.f32.mrf.mxu0
        %v6747 = vadd.f32 0.0, %v6746
        %v6748 = vpop.f32.mrf.mxu0
        %v6749 = vadd.f32 0.0, %v6748
        %6750 = vmatmul.bf16.gmra.mxu0 %v6382
        %v6751 = vpop.f32.mrf.mxu0
        %v6752 = vadd.f32 0.0, %v6751
        %v6753 = vpop.f32.mrf.mxu0
        %v6754 = vadd.f32 0.0, %v6753
        %6755 = vmatmul.bf16.gmra.mxu0 %v6386
        %v6756 = vpop.f32.mrf.mxu0
        %v6757 = vadd.f32 0.0, %v6756
        %v6758 = vpop.f32.mrf.mxu0
        %v6759 = vadd.f32 0.0, %v6758
        %6760 = vmatmul.bf16.gmra.mxu0 %v6390
        %v6761 = vpop.f32.mrf.mxu0
        %v6762 = vadd.f32 0.0, %v6761
        %v6763 = vpop.f32.mrf.mxu0
        %v6764 = vadd.f32 0.0, %v6763
        %6765 = vmatmul.bf16.gmra.mxu0 %v6394
        %v6766 = vpop.f32.mrf.mxu0
        %v6767 = vadd.f32 0.0, %v6766
        %v6768 = vpop.f32.mrf.mxu0
        %v6769 = vadd.f32 0.0, %v6768
        %6770 = vmatmul.bf16.gmra.mxu0 %v6398
        %v6771 = vpop.f32.mrf.mxu0
        %v6772 = vadd.f32 0.0, %v6771
        %v6773 = vpop.f32.mrf.mxu0
        %v6774 = vadd.f32 0.0, %v6773
        %6775 = vmatmul.bf16.gmra.mxu0 %v6402
        %v6776 = vpop.f32.mrf.mxu0
        %v6777 = vadd.f32 0.0, %v6776
        %v6778 = vpop.f32.mrf.mxu0
        %v6779 = vadd.f32 0.0, %v6778
        %6780 = vmatmul.bf16.gmra.mxu0 %v6406
        %v6781 = vpop.f32.mrf.mxu0
        %v6782 = vadd.f32 0.0, %v6781
        %v6783 = vpop.f32.mrf.mxu0
        %v6784 = vadd.f32 0.0, %v6783
        %6785 = vmatmul.bf16.gmra.mxu0 %v6410
        %v6786 = vpop.f32.mrf.mxu0
        %v6787 = vadd.f32 0.0, %v6786
        %v6788 = vpop.f32.mrf.mxu0
        %v6789 = vadd.f32 0.0, %v6788
        %6790 = vmatmul.bf16.gmra.mxu0 %v6414
        %v6791 = vpop.f32.mrf.mxu0
        %v6792 = vadd.f32 0.0, %v6791
        %v6793 = vpop.f32.mrf.mxu0
        %v6794 = vadd.f32 0.0, %v6793
        %6795 = vmatmul.bf16.gmra.mxu0 %v6418
        %v6796 = vpop.f32.mrf.mxu0
        %v6797 = vadd.f32 0.0, %v6796
        %v6798 = vpop.f32.mrf.mxu0
        %v6799 = vadd.f32 0.0, %v6798
        %6800 = vmatmul.bf16.gmra.mxu0 %v6422
        %v6801 = vpop.f32.mrf.mxu0
        %v6802 = vadd.f32 0.0, %v6801
        %v6803 = vpop.f32.mrf.mxu0
        %v6804 = vadd.f32 0.0, %v6803
        %6805 = vmatmul.bf16.gmra.mxu0 %v6426
        %v6806 = vpop.f32.mrf.mxu0
        %v6807 = vadd.f32 0.0, %v6806
        %v6808 = vpop.f32.mrf.mxu0
        %v6809 = vadd.f32 0.0, %v6808
        %6810 = vmatmul.bf16.gmra.mxu0 %v6430
        %v6811 = vpop.f32.mrf.mxu0
        %v6812 = vadd.f32 0.0, %v6811
        %v6813 = vpop.f32.mrf.mxu0
        %v6814 = vadd.f32 0.0, %v6813
        %6815 = vmatmul.bf16.gmra.mxu0 %v6434
        %v6816 = vpop.f32.mrf.mxu0
        %v6817 = vadd.f32 0.0, %v6816
        %v6818 = vpop.f32.mrf.mxu0
        %v6819 = vadd.f32 0.0, %v6818
        %6820 = vmatmul.bf16.gmra.mxu0 %v6438
        %v6821 = vpop.f32.mrf.mxu0
        %v6822 = vadd.f32 0.0, %v6821
        %v6823 = vpop.f32.mrf.mxu0
        %v6824 = vadd.f32 0.0, %v6823
        %6825 = vmatmul.bf16.gmra.mxu0 %v6442
        %v6826 = vpop.f32.mrf.mxu0
        %v6827 = vadd.f32 0.0, %v6826
        %v6828 = vpop.f32.mrf.mxu0
        %v6829 = vadd.f32 0.0, %v6828
        %6830 = vmatmul.bf16.gmra.mxu0 %v6446
        %v6831 = vpop.f32.mrf.mxu0
        %v6832 = vadd.f32 0.0, %v6831
        %v6833 = vpop.f32.mrf.mxu0
        %v6834 = vadd.f32 0.0, %v6833
        %6835 = vmatmul.bf16.gmra.mxu0 %v6450
        %v6836 = vpop.f32.mrf.mxu0
        %v6837 = vadd.f32 0.0, %v6836
        %v6838 = vpop.f32.mrf.mxu0
        %v6839 = vadd.f32 0.0, %v6838
        %6840 = vmatmul.bf16.gmra.mxu0 %v6454
        %v6841 = vpop.f32.mrf.mxu0
        %v6842 = vadd.f32 0.0, %v6841
        %v6843 = vpop.f32.mrf.mxu0
        %v6844 = vadd.f32 0.0, %v6843
        %6845 = vmatmul.bf16.gmra.mxu0 %v6458
        %v6846 = vpop.f32.mrf.mxu0
        %v6847 = vadd.f32 0.0, %v6846
        %v6848 = vpop.f32.mrf.mxu0
        %v6849 = vadd.f32 0.0, %v6848
        %6850 = vmatmul.bf16.gmra.mxu0 %v6462
        %v6851 = vpop.f32.mrf.mxu0
        %v6852 = vadd.f32 0.0, %v6851
        %v6853 = vpop.f32.mrf.mxu0
        %v6854 = vadd.f32 0.0, %v6853
        %6855 = vmatmul.bf16.gmra.mxu0 %v6466
        %v6856 = vpop.f32.mrf.mxu0
        %v6857 = vadd.f32 0.0, %v6856
        %v6858 = vpop.f32.mrf.mxu0
        %v6859 = vadd.f32 0.0, %v6858
        %6860 = vmatmul.bf16.gmra.mxu0 %v6470
        %v6861 = vpop.f32.mrf.mxu0
        %v6862 = vadd.f32 0.0, %v6861
        %v6863 = vpop.f32.mrf.mxu0
        %v6864 = vadd.f32 0.0, %v6863
        %6865 = vmatmul.bf16.gmra.mxu0 %v6474
        %v6866 = vpop.f32.mrf.mxu0
        %v6867 = vadd.f32 0.0, %v6866
        %v6868 = vpop.f32.mrf.mxu0
        %v6869 = vadd.f32 0.0, %v6868
        %6870 = vmatmul.bf16.gmra.mxu0 %v6478
        %v6871 = vpop.f32.mrf.mxu0
        %v6872 = vadd.f32 0.0, %v6871
        %v6873 = vpop.f32.mrf.mxu0
        %v6874 = vadd.f32 0.0, %v6873
        %6875 = vmatmul.bf16.gmra.mxu0 %v6482
        %v6876 = vpop.f32.mrf.mxu0
        %v6877 = vadd.f32 0.0, %v6876
        %v6878 = vpop.f32.mrf.mxu0
        %v6879 = vadd.f32 0.0, %v6878
        %6880 = vmatmul.bf16.gmra.mxu0 %v6486
        %v6881 = vpop.f32.mrf.mxu0
        %v6882 = vadd.f32 0.0, %v6881
        %v6883 = vpop.f32.mrf.mxu0
        %v6884 = vadd.f32 0.0, %v6883
        %6885 = vmatmul.bf16.gmra.mxu0 %v6490
        %v6886 = vpop.f32.mrf.mxu0
        %v6887 = vadd.f32 0.0, %v6886
        %v6888 = vpop.f32.mrf.mxu0
        %v6889 = vadd.f32 0.0, %v6888
        %6890 = vmatmul.bf16.gmra.mxu0 %v6494
        %v6891 = vpop.f32.mrf.mxu0
        %v6892 = vadd.f32 0.0, %v6891
        %v6893 = vpop.f32.mrf.mxu0
        %v6894 = vadd.f32 0.0, %v6893
        %6895 = vmatmul.bf16.gmra.mxu0 %v6498
        %v6896 = vpop.f32.mrf.mxu0
        %v6897 = vadd.f32 0.0, %v6896
        %v6898 = vpop.f32.mrf.mxu0
        %v6899 = vadd.f32 0.0, %v6898
        %6900 = vmatmul.bf16.gmra.mxu0 %v6502
        %v6901 = vpop.f32.mrf.mxu0
        %v6902 = vadd.f32 0.0, %v6901
        %v6903 = vpop.f32.mrf.mxu0
        %v6904 = vadd.f32 0.0, %v6903
        %6905 = vmatmul.bf16.gmra.mxu0 %v6506
        %v6906 = vpop.f32.mrf.mxu0
        %v6907 = vadd.f32 0.0, %v6906
        %v6908 = vpop.f32.mrf.mxu0
        %v6909 = vadd.f32 0.0, %v6908
        %6910 = vmatmul.bf16.gmra.mxu0 %v6510
        %v6911 = vpop.f32.mrf.mxu0
        %v6912 = vadd.f32 0.0, %v6911
        %v6913 = vpop.f32.mrf.mxu0
        %v6914 = vadd.f32 0.0, %v6913
        %6915 = vmatmul.bf16.gmra.mxu0 %v6514
        %v6916 = vpop.f32.mrf.mxu0
        %v6917 = vadd.f32 0.0, %v6916
        %v6918 = vpop.f32.mrf.mxu0
        %v6919 = vadd.f32 0.0, %v6918
        %6920 = vmatmul.bf16.gmra.mxu0 %v6518
        %v6921 = vpop.f32.mrf.mxu0
        %v6922 = vadd.f32 0.0, %v6921
        %v6923 = vpop.f32.mrf.mxu0
        %v6924 = vadd.f32 0.0, %v6923
        %6925 = vdwg.mxu0
        %6926 = vmatpush.bf16.msra.mxu0 0
        %6927 = vmatpush.bf16.msra.mxu0 0
        %6928 = vmatpush.bf16.msra.mxu0 0
        %6929 = vmatpush.bf16.msra.mxu0 0
        %6930 = vmatpush.bf16.msra.mxu0 %v6616
        %6931 = vmatpush.bf16.msra.mxu0 %v6615
        %6932 = vmatpush.bf16.msra.mxu0 %v6614
        %6933 = vmatpush.bf16.msra.mxu0 %v6613
        %6934 = vmatmul.bf16.gmra.mxu0 %v6630
        %v6935 = vpop.f32.mrf.mxu0
        %v6936 = vadd.f32 %v6747, %v6935
        %v6937 = vpop.f32.mrf.mxu0
        %v6938 = vadd.f32 %v6749, %v6937
        %6939 = vmatmul.bf16.gmra.mxu0 %v6633
        %v6940 = vpop.f32.mrf.mxu0
        %v6941 = vadd.f32 %v6752, %v6940
        %v6942 = vpop.f32.mrf.mxu0
        %v6943 = vadd.f32 %v6754, %v6942
        %6944 = vmatmul.bf16.gmra.mxu0 %v6636
        %v6945 = vpop.f32.mrf.mxu0
        %v6946 = vadd.f32 %v6757, %v6945
        %v6947 = vpop.f32.mrf.mxu0
        %v6948 = vadd.f32 %v6759, %v6947
        %6949 = vmatmul.bf16.gmra.mxu0 %v6639
        %v6950 = vpop.f32.mrf.mxu0
        %v6951 = vadd.f32 %v6762, %v6950
        %v6952 = vpop.f32.mrf.mxu0
        %v6953 = vadd.f32 %v6764, %v6952
        %6954 = vmatmul.bf16.gmra.mxu0 %v6642
        %v6955 = vpop.f32.mrf.mxu0
        %v6956 = vadd.f32 %v6767, %v6955
        %v6957 = vpop.f32.mrf.mxu0
        %v6958 = vadd.f32 %v6769, %v6957
        %6959 = vmatmul.bf16.gmra.mxu0 %v6645
        %v6960 = vpop.f32.mrf.mxu0
        %v6961 = vadd.f32 %v6772, %v6960
        %v6962 = vpop.f32.mrf.mxu0
        %v6963 = vadd.f32 %v6774, %v6962
        %6964 = vmatmul.bf16.gmra.mxu0 %v6648
        %v6965 = vpop.f32.mrf.mxu0
        %v6966 = vadd.f32 %v6777, %v6965
        %v6967 = vpop.f32.mrf.mxu0
        %v6968 = vadd.f32 %v6779, %v6967
        %6969 = vmatmul.bf16.gmra.mxu0 %v6651
        %v6970 = vpop.f32.mrf.mxu0
        %v6971 = vadd.f32 %v6782, %v6970
        %v6972 = vpop.f32.mrf.mxu0
        %v6973 = vadd.f32 %v6784, %v6972
        %6974 = vmatmul.bf16.gmra.mxu0 %v6654
        %v6975 = vpop.f32.mrf.mxu0
        %v6976 = vadd.f32 %v6787, %v6975
        %v6977 = vpop.f32.mrf.mxu0
        %v6978 = vadd.f32 %v6789, %v6977
        %6979 = vmatmul.bf16.gmra.mxu0 %v6657
        %v6980 = vpop.f32.mrf.mxu0
        %v6981 = vadd.f32 %v6792, %v6980
        %v6982 = vpop.f32.mrf.mxu0
        %v6983 = vadd.f32 %v6794, %v6982
        %6984 = vmatmul.bf16.gmra.mxu0 %v6660
        %v6985 = vpop.f32.mrf.mxu0
        %v6986 = vadd.f32 %v6797, %v6985
        %v6987 = vpop.f32.mrf.mxu0
        %v6988 = vadd.f32 %v6799, %v6987
        %6989 = vmatmul.bf16.gmra.mxu0 %v6663
        %v6990 = vpop.f32.mrf.mxu0
        %v6991 = vadd.f32 %v6802, %v6990
        %v6992 = vpop.f32.mrf.mxu0
        %v6993 = vadd.f32 %v6804, %v6992
        %6994 = vmatmul.bf16.gmra.mxu0 %v6666
        %v6995 = vpop.f32.mrf.mxu0
        %v6996 = vadd.f32 %v6807, %v6995
        %v6997 = vpop.f32.mrf.mxu0
        %v6998 = vadd.f32 %v6809, %v6997
        %6999 = vmatmul.bf16.gmra.mxu0 %v6669
        %v7000 = vpop.f32.mrf.mxu0
        %v7001 = vadd.f32 %v6812, %v7000
        %v7002 = vpop.f32.mrf.mxu0
        %v7003 = vadd.f32 %v6814, %v7002
        %7004 = vmatmul.bf16.gmra.mxu0 %v6672
        %v7005 = vpop.f32.mrf.mxu0
        %v7006 = vadd.f32 %v6817, %v7005
        %v7007 = vpop.f32.mrf.mxu0
        %v7008 = vadd.f32 %v6819, %v7007
        %7009 = vmatmul.bf16.gmra.mxu0 %v6675
        %v7010 = vpop.f32.mrf.mxu0
        %v7011 = vadd.f32 %v6822, %v7010
        %v7012 = vpop.f32.mrf.mxu0
        %v7013 = vadd.f32 %v6824, %v7012
        %7014 = vmatmul.bf16.gmra.mxu0 %v6678
        %v7015 = vpop.f32.mrf.mxu0
        %v7016 = vadd.f32 %v6827, %v7015
        %v7017 = vpop.f32.mrf.mxu0
        %v7018 = vadd.f32 %v6829, %v7017
        %7019 = vmatmul.bf16.gmra.mxu0 %v6681
        %v7020 = vpop.f32.mrf.mxu0
        %v7021 = vadd.f32 %v6832, %v7020
        %v7022 = vpop.f32.mrf.mxu0
        %v7023 = vadd.f32 %v6834, %v7022
        %7024 = vmatmul.bf16.gmra.mxu0 %v6684
        %v7025 = vpop.f32.mrf.mxu0
        %v7026 = vadd.f32 %v6837, %v7025
        %v7027 = vpop.f32.mrf.mxu0
        %v7028 = vadd.f32 %v6839, %v7027
        %7029 = vmatmul.bf16.gmra.mxu0 %v6687
        %v7030 = vpop.f32.mrf.mxu0
        %v7031 = vadd.f32 %v6842, %v7030
        %v7032 = vpop.f32.mrf.mxu0
        %v7033 = vadd.f32 %v6844, %v7032
        %7034 = vmatmul.bf16.gmra.mxu0 %v6690
        %v7035 = vpop.f32.mrf.mxu0
        %v7036 = vadd.f32 %v6847, %v7035
        %v7037 = vpop.f32.mrf.mxu0
        %v7038 = vadd.f32 %v6849, %v7037
        %7039 = vmatmul.bf16.gmra.mxu0 %v6693
        %v7040 = vpop.f32.mrf.mxu0
        %v7041 = vadd.f32 %v6852, %v7040
        %v7042 = vpop.f32.mrf.mxu0
        %v7043 = vadd.f32 %v6854, %v7042
        %7044 = vmatmul.bf16.gmra.mxu0 %v6696
        %v7045 = vpop.f32.mrf.mxu0
        %v7046 = vadd.f32 %v6857, %v7045
        %v7047 = vpop.f32.mrf.mxu0
        %v7048 = vadd.f32 %v6859, %v7047
        %7049 = vmatmul.bf16.gmra.mxu0 %v6699
        %v7050 = vpop.f32.mrf.mxu0
        %v7051 = vadd.f32 %v6862, %v7050
        %v7052 = vpop.f32.mrf.mxu0
        %v7053 = vadd.f32 %v6864, %v7052
        %7054 = vmatmul.bf16.gmra.mxu0 %v6702
        %v7055 = vpop.f32.mrf.mxu0
        %v7056 = vadd.f32 %v6867, %v7055
        %v7057 = vpop.f32.mrf.mxu0
        %v7058 = vadd.f32 %v6869, %v7057
        %7059 = vmatmul.bf16.gmra.mxu0 %v6705
        %v7060 = vpop.f32.mrf.mxu0
        %v7061 = vadd.f32 %v6872, %v7060
        %v7062 = vpop.f32.mrf.mxu0
        %v7063 = vadd.f32 %v6874, %v7062
        %7064 = vmatmul.bf16.gmra.mxu0 %v6708
        %v7065 = vpop.f32.mrf.mxu0
        %v7066 = vadd.f32 %v6877, %v7065
        %v7067 = vpop.f32.mrf.mxu0
        %v7068 = vadd.f32 %v6879, %v7067
        %7069 = vmatmul.bf16.gmra.mxu0 %v6711
        %v7070 = vpop.f32.mrf.mxu0
        %v7071 = vadd.f32 %v6882, %v7070
        %v7072 = vpop.f32.mrf.mxu0
        %v7073 = vadd.f32 %v6884, %v7072
        %7074 = vmatmul.bf16.gmra.mxu0 %v6714
        %v7075 = vpop.f32.mrf.mxu0
        %v7076 = vadd.f32 %v6887, %v7075
        %v7077 = vpop.f32.mrf.mxu0
        %v7078 = vadd.f32 %v6889, %v7077
        %7079 = vmatmul.bf16.gmra.mxu0 %v6717
        %v7080 = vpop.f32.mrf.mxu0
        %v7081 = vadd.f32 %v6892, %v7080
        %v7082 = vpop.f32.mrf.mxu0
        %v7083 = vadd.f32 %v6894, %v7082
        %7084 = vmatmul.bf16.gmra.mxu0 %v6720
        %v7085 = vpop.f32.mrf.mxu0
        %v7086 = vadd.f32 %v6897, %v7085
        %v7087 = vpop.f32.mrf.mxu0
        %v7088 = vadd.f32 %v6899, %v7087
        %7089 = vmatmul.bf16.gmra.mxu0 %v6723
        %v7090 = vpop.f32.mrf.mxu0
        %v7091 = vadd.f32 %v6902, %v7090
        %v7092 = vpop.f32.mrf.mxu0
        %v7093 = vadd.f32 %v6904, %v7092
        %7094 = vmatmul.bf16.gmra.mxu0 %v6726
        %v7095 = vpop.f32.mrf.mxu0
        %v7096 = vadd.f32 %v6907, %v7095
        %v7097 = vpop.f32.mrf.mxu0
        %v7098 = vadd.f32 %v6909, %v7097
        %7099 = vmatmul.bf16.gmra.mxu0 %v6729
        %v7100 = vpop.f32.mrf.mxu0
        %v7101 = vadd.f32 %v6912, %v7100
        %v7102 = vpop.f32.mrf.mxu0
        %v7103 = vadd.f32 %v6914, %v7102
        %7104 = vmatmul.bf16.gmra.mxu0 %v6732
        %v7105 = vpop.f32.mrf.mxu0
        %v7106 = vadd.f32 %v6917, %v7105
        %v7107 = vpop.f32.mrf.mxu0
        %v7108 = vadd.f32 %v6919, %v7107
        %7109 = vmatmul.bf16.gmra.mxu0 %v6735
        %v7110 = vpop.f32.mrf.mxu0
        %v7111 = vadd.f32 %v6922, %v7110
        %v7112 = vpop.f32.mrf.mxu0
        %v7113 = vadd.f32 %v6924, %v7112
        %7114 = vdwg.mxu0
        %v7115 = vadd.f32 %v6054, %v6936
        %v7116 = vadd.f32 %v6056, %v6938
        %v7117 = vadd.f32 %v6059, %v6941
        %v7118 = vadd.f32 %v6061, %v6943
        %v7119 = vadd.f32 %v6064, %v6946
        %v7120 = vadd.f32 %v6066, %v6948
        %v7121 = vadd.f32 %v6069, %v6951
        %v7122 = vadd.f32 %v6071, %v6953
        %v7123 = vadd.f32 %v6074, %v6956
        %v7124 = vadd.f32 %v6076, %v6958
        %v7125 = vadd.f32 %v6079, %v6961
        %v7126 = vadd.f32 %v6081, %v6963
        %v7127 = vadd.f32 %v6084, %v6966
        %v7128 = vadd.f32 %v6086, %v6968
        %v7129 = vadd.f32 %v6089, %v6971
        %v7130 = vadd.f32 %v6091, %v6973
        %v7131 = vadd.f32 %v6094, %v6976
        %v7132 = vadd.f32 %v6096, %v6978
        %v7133 = vadd.f32 %v6099, %v6981
        %v7134 = vadd.f32 %v6101, %v6983
        %v7135 = vadd.f32 %v6104, %v6986
        %v7136 = vadd.f32 %v6106, %v6988
        %v7137 = vadd.f32 %v6109, %v6991
        %v7138 = vadd.f32 %v6111, %v6993
        %v7139 = vadd.f32 %v6114, %v6996
        %v7140 = vadd.f32 %v6116, %v6998
        %v7141 = vadd.f32 %v6119, %v7001
        %v7142 = vadd.f32 %v6121, %v7003
        %v7143 = vadd.f32 %v6124, %v7006
        %v7144 = vadd.f32 %v6126, %v7008
        %v7145 = vadd.f32 %v6129, %v7011
        %v7146 = vadd.f32 %v6131, %v7013
        %v7147 = vadd.f32 %v6134, %v7016
        %v7148 = vadd.f32 %v6136, %v7018
        %v7149 = vadd.f32 %v6139, %v7021
        %v7150 = vadd.f32 %v6141, %v7023
        %v7151 = vadd.f32 %v6144, %v7026
        %v7152 = vadd.f32 %v6146, %v7028
        %v7153 = vadd.f32 %v6149, %v7031
        %v7154 = vadd.f32 %v6151, %v7033
        %v7155 = vadd.f32 %v6154, %v7036
        %v7156 = vadd.f32 %v6156, %v7038
        %v7157 = vadd.f32 %v6159, %v7041
        %v7158 = vadd.f32 %v6161, %v7043
        %v7159 = vadd.f32 %v6164, %v7046
        %v7160 = vadd.f32 %v6166, %v7048
        %v7161 = vadd.f32 %v6169, %v7051
        %v7162 = vadd.f32 %v6171, %v7053
        %v7163 = vadd.f32 %v6174, %v7056
        %v7164 = vadd.f32 %v6176, %v7058
        %v7165 = vadd.f32 %v6179, %v7061
        %v7166 = vadd.f32 %v6181, %v7063
        %v7167 = vadd.f32 %v6184, %v7066
        %v7168 = vadd.f32 %v6186, %v7068
        %v7169 = vadd.f32 %v6189, %v7071
        %v7170 = vadd.f32 %v6191, %v7073
        %v7171 = vadd.f32 %v6194, %v7076
        %v7172 = vadd.f32 %v6196, %v7078
        %v7173 = vadd.f32 %v6199, %v7081
        %v7174 = vadd.f32 %v6201, %v7083
        %v7175 = vadd.f32 %v6204, %v7086
        %v7176 = vadd.f32 %v6206, %v7088
        %v7177 = vadd.f32 %v6209, %v7091
        %v7178 = vadd.f32 %v6211, %v7093
        %v7179 = vadd.f32 %v6214, %v7096
        %v7180 = vadd.f32 %v6216, %v7098
        %v7181 = vadd.f32 %v6219, %v7101
        %v7182 = vadd.f32 %v6221, %v7103
        %v7183 = vadd.f32 %v6224, %v7106
        %v7184 = vadd.f32 %v6226, %v7108
        %v7185 = vadd.f32 %v6229, %v7111
        %v7186 = vadd.f32 %v6231, %v7113
        %v7187 = vld [vmem:[%s6] sm:$0x1]
        %v7189 = vperm.slane %v7187, 0
        %v7191 = vadd.f32 %v7115, %v7189
        %v7192 = vadd.f32 %v7116, %v7189
        %v7193 = vadd.f32 %v7117, %v7189
        %v7194 = vadd.f32 %v7118, %v7189
        %v7195 = vadd.f32 %v7119, %v7189
        %v7196 = vadd.f32 %v7120, %v7189
        %v7197 = vadd.f32 %v7121, %v7189
        %v7198 = vadd.f32 %v7122, %v7189
        %v7199 = vadd.f32 %v7123, %v7189
        %v7200 = vadd.f32 %v7124, %v7189
        %v7201 = vadd.f32 %v7125, %v7189
        %v7202 = vadd.f32 %v7126, %v7189
        %v7203 = vadd.f32 %v7127, %v7189
        %v7204 = vadd.f32 %v7128, %v7189
        %v7205 = vadd.f32 %v7129, %v7189
        %v7206 = vadd.f32 %v7130, %v7189
        %v7207 = vadd.f32 %v7131, %v7189
        %v7208 = vadd.f32 %v7132, %v7189
        %v7209 = vadd.f32 %v7133, %v7189
        %v7210 = vadd.f32 %v7134, %v7189
        %v7211 = vadd.f32 %v7135, %v7189
        %v7212 = vadd.f32 %v7136, %v7189
        %v7213 = vadd.f32 %v7137, %v7189
        %v7214 = vadd.f32 %v7138, %v7189
        %v7215 = vadd.f32 %v7139, %v7189
        %v7216 = vadd.f32 %v7140, %v7189
        %v7217 = vadd.f32 %v7141, %v7189
        %v7218 = vadd.f32 %v7142, %v7189
        %v7219 = vadd.f32 %v7143, %v7189
        %v7220 = vadd.f32 %v7144, %v7189
        %v7221 = vadd.f32 %v7145, %v7189
        %v7222 = vadd.f32 %v7146, %v7189
        %v7223 = vadd.f32 %v7147, %v7189
        %v7224 = vadd.f32 %v7148, %v7189
        %v7225 = vadd.f32 %v7149, %v7189
        %v7226 = vadd.f32 %v7150, %v7189
        %v7227 = vadd.f32 %v7151, %v7189
        %v7228 = vadd.f32 %v7152, %v7189
        %v7229 = vadd.f32 %v7153, %v7189
        %v7230 = vadd.f32 %v7154, %v7189
        %v7231 = vadd.f32 %v7155, %v7189
        %v7232 = vadd.f32 %v7156, %v7189
        %v7233 = vadd.f32 %v7157, %v7189
        %v7234 = vadd.f32 %v7158, %v7189
        %v7235 = vadd.f32 %v7159, %v7189
        %v7236 = vadd.f32 %v7160, %v7189
        %v7237 = vadd.f32 %v7161, %v7189
        %v7238 = vadd.f32 %v7162, %v7189
        %v7239 = vadd.f32 %v7163, %v7189
        %v7240 = vadd.f32 %v7164, %v7189
        %v7241 = vadd.f32 %v7165, %v7189
        %v7242 = vadd.f32 %v7166, %v7189
        %v7243 = vadd.f32 %v7167, %v7189
        %v7244 = vadd.f32 %v7168, %v7189
        %v7245 = vadd.f32 %v7169, %v7189
        %v7246 = vadd.f32 %v7170, %v7189
        %v7247 = vadd.f32 %v7171, %v7189
        %v7248 = vadd.f32 %v7172, %v7189
        %v7249 = vadd.f32 %v7173, %v7189
        %v7250 = vadd.f32 %v7174, %v7189
        %v7251 = vadd.f32 %v7175, %v7189
        %v7252 = vadd.f32 %v7176, %v7189
        %v7253 = vadd.f32 %v7177, %v7189
        %v7254 = vadd.f32 %v7178, %v7189
        %v7255 = vadd.f32 %v7179, %v7189
        %v7256 = vadd.f32 %v7180, %v7189
        %v7257 = vadd.f32 %v7181, %v7189
        %v7258 = vadd.f32 %v7182, %v7189
        %v7259 = vadd.f32 %v7183, %v7189
        %v7260 = vadd.f32 %v7184, %v7189
        %v7261 = vadd.f32 %v7185, %v7189
        %v7262 = vadd.f32 %v7186, %v7189
        %v7263 = vmax.f32 %v7191, 0.0
        %v7264 = vmax.f32 %v7192, 0.0
        %v7265 = vmax.f32 %v7193, 0.0
        %v7266 = vmax.f32 %v7194, 0.0
        %v7267 = vmax.f32 %v7195, 0.0
        %v7268 = vmax.f32 %v7196, 0.0
        %v7269 = vmax.f32 %v7197, 0.0
        %v7270 = vmax.f32 %v7198, 0.0
        %v7271 = vmax.f32 %v7199, 0.0
        %v7272 = vmax.f32 %v7200, 0.0
        %v7273 = vmax.f32 %v7201, 0.0
        %v7274 = vmax.f32 %v7202, 0.0
        %v7275 = vmax.f32 %v7203, 0.0
        %v7276 = vmax.f32 %v7204, 0.0
        %v7277 = vmax.f32 %v7205, 0.0
        %v7278 = vmax.f32 %v7206, 0.0
        %v7279 = vmax.f32 %v7207, 0.0
        %v7280 = vmax.f32 %v7208, 0.0
        %v7281 = vmax.f32 %v7209, 0.0
        %v7282 = vmax.f32 %v7210, 0.0
        %v7283 = vmax.f32 %v7211, 0.0
        %v7284 = vmax.f32 %v7212, 0.0
        %v7285 = vmax.f32 %v7213, 0.0
        %v7286 = vmax.f32 %v7214, 0.0
        %v7287 = vmax.f32 %v7215, 0.0
        %v7288 = vmax.f32 %v7216, 0.0
        %v7289 = vmax.f32 %v7217, 0.0
        %v7290 = vmax.f32 %v7218, 0.0
        %v7291 = vmax.f32 %v7219, 0.0
        %v7292 = vmax.f32 %v7220, 0.0
        %v7293 = vmax.f32 %v7221, 0.0
        %v7294 = vmax.f32 %v7222, 0.0
        %v7295 = vmax.f32 %v7223, 0.0
        %v7296 = vmax.f32 %v7224, 0.0
        %v7297 = vmax.f32 %v7225, 0.0
        %v7298 = vmax.f32 %v7226, 0.0
        %v7299 = vmax.f32 %v7227, 0.0
        %v7300 = vmax.f32 %v7228, 0.0
        %v7301 = vmax.f32 %v7229, 0.0
        %v7302 = vmax.f32 %v7230, 0.0
        %v7303 = vmax.f32 %v7231, 0.0
        %v7304 = vmax.f32 %v7232, 0.0
        %v7305 = vmax.f32 %v7233, 0.0
        %v7306 = vmax.f32 %v7234, 0.0
        %v7307 = vmax.f32 %v7235, 0.0
        %v7308 = vmax.f32 %v7236, 0.0
        %v7309 = vmax.f32 %v7237, 0.0
        %v7310 = vmax.f32 %v7238, 0.0
        %v7311 = vmax.f32 %v7239, 0.0
        %v7312 = vmax.f32 %v7240, 0.0
        %v7313 = vmax.f32 %v7241, 0.0
        %v7314 = vmax.f32 %v7242, 0.0
        %v7315 = vmax.f32 %v7243, 0.0
        %v7316 = vmax.f32 %v7244, 0.0
        %v7317 = vmax.f32 %v7245, 0.0
        %v7318 = vmax.f32 %v7246, 0.0
        %v7319 = vmax.f32 %v7247, 0.0
        %v7320 = vmax.f32 %v7248, 0.0
        %v7321 = vmax.f32 %v7249, 0.0
        %v7322 = vmax.f32 %v7250, 0.0
        %v7323 = vmax.f32 %v7251, 0.0
        %v7324 = vmax.f32 %v7252, 0.0
        %v7325 = vmax.f32 %v7253, 0.0
        %v7326 = vmax.f32 %v7254, 0.0
        %v7327 = vmax.f32 %v7255, 0.0
        %v7328 = vmax.f32 %v7256, 0.0
        %v7329 = vmax.f32 %v7257, 0.0
        %v7330 = vmax.f32 %v7258, 0.0
        %v7331 = vmax.f32 %v7259, 0.0
        %v7332 = vmax.f32 %v7260, 0.0
        %v7333 = vmax.f32 %v7261, 0.0
        %v7334 = vmax.f32 %v7262, 0.0
        %v7335 = vld [vmem:[%s7] sm:$0xff]
        %v7336 = vld [vmem:[%s7 + $0x8] sm:$0xff]
        %v7337 = vld [vmem:[%s7 + $0x10] sm:$0xff]
        %v7338 = vld [vmem:[%s7 + $0x18] sm:$0xff]
        %v7339 = vld [vmem:[%s7 + $0x20] sm:$0xff]
        %v7340 = vld [vmem:[%s7 + $0x28] sm:$0xff]
        %v7341 = vld [vmem:[%s7 + $0x30] sm:$0xff]
        %v7342 = vld [vmem:[%s7 + $0x38] sm:$0xff]
        %v7343 = vld [vmem:[%s7 + $0x40] sm:$0xff]
        %v7344 = vld [vmem:[%s7 + $0x48] sm:$0xff]
        %v7345 = vld [vmem:[%s7 + $0x50] sm:$0xff]
        %v7346 = vld [vmem:[%s7 + $0x58] sm:$0xff]
        %v7347 = vld [vmem:[%s7 + $0x60] sm:$0xff]
        %v7348 = vld [vmem:[%s7 + $0x68] sm:$0xff]
        %v7349 = vld [vmem:[%s7 + $0x70] sm:$0xff]
        %v7350 = vld [vmem:[%s7 + $0x78] sm:$0xff]
        %v7351 = vld [vmem:[%s7 + $0x80] sm:$0xff]
        %v7352 = vld [vmem:[%s7 + $0x88] sm:$0xff]
        %v7353 = vld [vmem:[%s7 + $0x90] sm:$0xff]
        %v7354 = vld [vmem:[%s7 + $0x98] sm:$0xff]
        %v7355 = vld [vmem:[%s7 + $0xa0] sm:$0xff]
        %v7356 = vld [vmem:[%s7 + $0xa8] sm:$0xff]
        %v7357 = vld [vmem:[%s7 + $0xb0] sm:$0xff]
        %v7358 = vld [vmem:[%s7 + $0xb8] sm:$0xff]
        %v7359 = vld [vmem:[%s7 + $0xc0] sm:$0xff]
        %v7360 = vld [vmem:[%s7 + $0xc8] sm:$0xff]
        %v7361 = vld [vmem:[%s7 + $0xd0] sm:$0xff]
        %v7362 = vld [vmem:[%s7 + $0xd8] sm:$0xff]
        %v7363 = vld [vmem:[%s7 + $0xe0] sm:$0xff]
        %v7364 = vld [vmem:[%s7 + $0xe8] sm:$0xff]
        %v7365 = vld [vmem:[%s7 + $0xf0] sm:$0xff]
        %v7366 = vld [vmem:[%s7 + $0xf8] sm:$0xff]
        %v7367 = vld [vmem:[%s7 + $0x100] sm:$0xff]
        %v7368 = vld [vmem:[%s7 + $0x108] sm:$0xff]
        %v7369 = vld [vmem:[%s7 + $0x110] sm:$0xff]
        %v7370 = vld [vmem:[%s7 + $0x118] sm:$0xff]
        %v7371 = vld [vmem:[%s7 + $0x120] sm:$0xff]
        %v7372 = vld [vmem:[%s7 + $0x128] sm:$0xff]
        %v7373 = vld [vmem:[%s7 + $0x130] sm:$0xff]
        %v7374 = vld [vmem:[%s7 + $0x138] sm:$0xff]
        %v7375 = vld [vmem:[%s7 + $0x140] sm:$0xff]
        %v7376 = vld [vmem:[%s7 + $0x148] sm:$0xff]
        %v7377 = vld [vmem:[%s7 + $0x150] sm:$0xff]
        %v7378 = vld [vmem:[%s7 + $0x158] sm:$0xff]
        %v7379 = vld [vmem:[%s7 + $0x160] sm:$0xff]
        %v7380 = vld [vmem:[%s7 + $0x168] sm:$0xff]
        %v7381 = vld [vmem:[%s7 + $0x170] sm:$0xff]
        %v7382 = vld [vmem:[%s7 + $0x178] sm:$0xff]
        %v7383 = vld [vmem:[%s7 + $0x180] sm:$0xff]
        %v7384 = vld [vmem:[%s7 + $0x188] sm:$0xff]
        %v7385 = vld [vmem:[%s7 + $0x190] sm:$0xff]
        %v7386 = vld [vmem:[%s7 + $0x198] sm:$0xff]
        %v7387 = vld [vmem:[%s7 + $0x1a0] sm:$0xff]
        %v7388 = vld [vmem:[%s7 + $0x1a8] sm:$0xff]
        %v7389 = vld [vmem:[%s7 + $0x1b0] sm:$0xff]
        %v7390 = vld [vmem:[%s7 + $0x1b8] sm:$0xff]
        %v7391 = vld [vmem:[%s7 + $0x1c0] sm:$0xff]
        %v7392 = vld [vmem:[%s7 + $0x1c8] sm:$0xff]
        %v7393 = vld [vmem:[%s7 + $0x1d0] sm:$0xff]
        %v7394 = vld [vmem:[%s7 + $0x1d8] sm:$0xff]
        %v7395 = vld [vmem:[%s7 + $0x1e0] sm:$0xff]
        %v7396 = vld [vmem:[%s7 + $0x1e8] sm:$0xff]
        %v7397 = vld [vmem:[%s7 + $0x1f0] sm:$0xff]
        %v7398 = vld [vmem:[%s7 + $0x1f8] sm:$0xff]
        %v7399 = vld [vmem:[%s7 + $0x200] sm:$0xff]
        %v7400 = vld [vmem:[%s7 + $0x208] sm:$0xff]
        %v7401 = vld [vmem:[%s7 + $0x210] sm:$0xff]
        %v7402 = vld [vmem:[%s7 + $0x218] sm:$0xff]
        %v7403 = vld [vmem:[%s7 + $0x220] sm:$0xff]
        %v7404 = vld [vmem:[%s7 + $0x228] sm:$0xff]
        %v7405 = vld [vmem:[%s7 + $0x230] sm:$0xff]
        %v7406 = vld [vmem:[%s7 + $0x238] sm:$0xff]
        %v7407 = vld [vmem:[%s7 + $0x240] sm:$0xff]
        %v7408 = vld [vmem:[%s7 + $0x248] sm:$0xff]
        %v7409 = vld [vmem:[%s7 + $0x250] sm:$0xff]
        %v7410 = vld [vmem:[%s7 + $0x258] sm:$0xff]
        %v7411 = vld [vmem:[%s7 + $0x260] sm:$0xff]
        %v7412 = vld [vmem:[%s7 + $0x268] sm:$0xff]
        %v7413 = vld [vmem:[%s7 + $0x270] sm:$0xff]
        %v7414 = vld [vmem:[%s7 + $0x278] sm:$0xff]
        %v7415 = vld [vmem:[%s7 + $0x280] sm:$0xff]
        %v7416 = vld [vmem:[%s7 + $0x288] sm:$0xff]
        %v7417 = vld [vmem:[%s7 + $0x290] sm:$0xff]
        %v7418 = vld [vmem:[%s7 + $0x298] sm:$0xff]
        %v7419 = vld [vmem:[%s7 + $0x2a0] sm:$0xff]
        %v7420 = vld [vmem:[%s7 + $0x2a8] sm:$0xff]
        %v7421 = vld [vmem:[%s7 + $0x2b0] sm:$0xff]
        %v7422 = vld [vmem:[%s7 + $0x2b8] sm:$0xff]
        %v7423 = vld [vmem:[%s7 + $0x2c0] sm:$0xff]
        %v7424 = vld [vmem:[%s7 + $0x2c8] sm:$0xff]
        %v7425 = vld [vmem:[%s7 + $0x2d0] sm:$0xff]
        %v7426 = vld [vmem:[%s7 + $0x2d8] sm:$0xff]
        %v7427 = vld [vmem:[%s7 + $0x2e0] sm:$0xff]
        %v7428 = vld [vmem:[%s7 + $0x2e8] sm:$0xff]
        %v7429 = vld [vmem:[%s7 + $0x2f0] sm:$0xff]
        %v7430 = vld [vmem:[%s7 + $0x2f8] sm:$0xff]
        %v7431 = vld [vmem:[%s7 + $0x300] sm:$0xff]
        %v7432 = vld [vmem:[%s7 + $0x308] sm:$0xff]
        %v7433 = vld [vmem:[%s7 + $0x310] sm:$0xff]
        %v7434 = vld [vmem:[%s7 + $0x318] sm:$0xff]
        %v7435 = vld [vmem:[%s7 + $0x320] sm:$0xff]
        %v7436 = vld [vmem:[%s7 + $0x328] sm:$0xff]
        %v7437 = vld [vmem:[%s7 + $0x330] sm:$0xff]
        %v7438 = vld [vmem:[%s7 + $0x338] sm:$0xff]
        %v7439 = vld [vmem:[%s7 + $0x340] sm:$0xff]
        %v7440 = vld [vmem:[%s7 + $0x348] sm:$0xff]
        %v7441 = vld [vmem:[%s7 + $0x350] sm:$0xff]
        %v7442 = vld [vmem:[%s7 + $0x358] sm:$0xff]
        %v7443 = vld [vmem:[%s7 + $0x360] sm:$0xff]
        %v7444 = vld [vmem:[%s7 + $0x368] sm:$0xff]
        %v7445 = vld [vmem:[%s7 + $0x370] sm:$0xff]
        %v7446 = vld [vmem:[%s7 + $0x378] sm:$0xff]
        %v7447 = vld [vmem:[%s7 + $0x380] sm:$0xff]
        %v7448 = vld [vmem:[%s7 + $0x388] sm:$0xff]
        %v7449 = vld [vmem:[%s7 + $0x390] sm:$0xff]
        %v7450 = vld [vmem:[%s7 + $0x398] sm:$0xff]
        %v7451 = vld [vmem:[%s7 + $0x3a0] sm:$0xff]
        %v7452 = vld [vmem:[%s7 + $0x3a8] sm:$0xff]
        %v7453 = vld [vmem:[%s7 + $0x3b0] sm:$0xff]
        %v7454 = vld [vmem:[%s7 + $0x3b8] sm:$0xff]
        %v7455 = vld [vmem:[%s7 + $0x3c0] sm:$0xff]
        %v7456 = vld [vmem:[%s7 + $0x3c8] sm:$0xff]
        %v7457 = vld [vmem:[%s7 + $0x3d0] sm:$0xff]
        %v7458 = vld [vmem:[%s7 + $0x3d8] sm:$0xff]
        %v7459 = vld [vmem:[%s7 + $0x3e0] sm:$0xff]
        %v7460 = vld [vmem:[%s7 + $0x3e8] sm:$0xff]
        %v7461 = vld [vmem:[%s7 + $0x3f0] sm:$0xff]
        %v7462 = vld [vmem:[%s7 + $0x3f8] sm:$0xff]
        %v7463 = vld [vmem:[%s7 + $0x400] sm:$0xff]
        %v7464 = vld [vmem:[%s7 + $0x408] sm:$0xff]
        %v7465 = vld [vmem:[%s7 + $0x410] sm:$0xff]
        %v7466 = vld [vmem:[%s7 + $0x418] sm:$0xff]
        %v7467 = vld [vmem:[%s7 + $0x420] sm:$0xff]
        %v7468 = vld [vmem:[%s7 + $0x428] sm:$0xff]
        %v7469 = vld [vmem:[%s7 + $0x430] sm:$0xff]
        %v7470 = vld [vmem:[%s7 + $0x438] sm:$0xff]
        %v7471 = vld [vmem:[%s7 + $0x440] sm:$0xff]
        %v7472 = vld [vmem:[%s7 + $0x448] sm:$0xff]
        %v7473 = vld [vmem:[%s7 + $0x450] sm:$0xff]
        %v7474 = vld [vmem:[%s7 + $0x458] sm:$0xff]
        %v7475 = vld [vmem:[%s7 + $0x460] sm:$0xff]
        %v7476 = vld [vmem:[%s7 + $0x468] sm:$0xff]
        %v7477 = vld [vmem:[%s7 + $0x470] sm:$0xff]
        %v7478 = vld [vmem:[%s7 + $0x478] sm:$0xff]
        %v7479 = vld [vmem:[%s7 + $0x480] sm:$0xff]
        %v7480 = vld [vmem:[%s7 + $0x488] sm:$0xff]
        %v7481 = vld [vmem:[%s7 + $0x490] sm:$0xff]
        %v7482 = vld [vmem:[%s7 + $0x498] sm:$0xff]
        %v7483 = vld [vmem:[%s7 + $0x4a0] sm:$0xff]
        %v7484 = vld [vmem:[%s7 + $0x4a8] sm:$0xff]
        %v7485 = vld [vmem:[%s7 + $0x4b0] sm:$0xff]
        %v7486 = vld [vmem:[%s7 + $0x4b8] sm:$0xff]
        %v7487 = vld [vmem:[%s7 + $0x4c0] sm:$0xff]
        %v7488 = vld [vmem:[%s7 + $0x4c8] sm:$0xff]
        %v7489 = vld [vmem:[%s7 + $0x4d0] sm:$0xff]
        %v7490 = vld [vmem:[%s7 + $0x4d8] sm:$0xff]
        %v7491 = vld [vmem:[%s7 + $0x4e0] sm:$0xff]
        %v7492 = vld [vmem:[%s7 + $0x4e8] sm:$0xff]
        %v7493 = vld [vmem:[%s7 + $0x4f0] sm:$0xff]
        %v7494 = vld [vmem:[%s7 + $0x4f8] sm:$0xff]
        %v7495 = vld [vmem:[%s7 + $0x500] sm:$0xff]
        %v7496 = vld [vmem:[%s7 + $0x508] sm:$0xff]
        %v7497 = vld [vmem:[%s7 + $0x510] sm:$0xff]
        %v7498 = vld [vmem:[%s7 + $0x518] sm:$0xff]
        %v7499 = vld [vmem:[%s7 + $0x520] sm:$0xff]
        %v7500 = vld [vmem:[%s7 + $0x528] sm:$0xff]
        %v7501 = vld [vmem:[%s7 + $0x530] sm:$0xff]
        %v7502 = vld [vmem:[%s7 + $0x538] sm:$0xff]
        %v7503 = vld [vmem:[%s7 + $0x540] sm:$0xff]
        %v7504 = vld [vmem:[%s7 + $0x548] sm:$0xff]
        %v7505 = vld [vmem:[%s7 + $0x550] sm:$0xff]
        %v7506 = vld [vmem:[%s7 + $0x558] sm:$0xff]
        %v7507 = vld [vmem:[%s7 + $0x560] sm:$0xff]
        %v7508 = vld [vmem:[%s7 + $0x568] sm:$0xff]
        %v7509 = vld [vmem:[%s7 + $0x570] sm:$0xff]
        %v7510 = vld [vmem:[%s7 + $0x578] sm:$0xff]
        %v7511 = vld [vmem:[%s7 + $0x580] sm:$0xff]
        %v7512 = vld [vmem:[%s7 + $0x588] sm:$0xff]
        %v7513 = vld [vmem:[%s7 + $0x590] sm:$0xff]
        %v7514 = vld [vmem:[%s7 + $0x598] sm:$0xff]
        %v7515 = vld [vmem:[%s7 + $0x5a0] sm:$0xff]
        %v7516 = vld [vmem:[%s7 + $0x5a8] sm:$0xff]
        %v7517 = vld [vmem:[%s7 + $0x5b0] sm:$0xff]
        %v7518 = vld [vmem:[%s7 + $0x5b8] sm:$0xff]
        %v7519 = vld [vmem:[%s7 + $0x5c0] sm:$0xff]
        %v7520 = vld [vmem:[%s7 + $0x5c8] sm:$0xff]
        %v7521 = vld [vmem:[%s7 + $0x5d0] sm:$0xff]
        %v7522 = vld [vmem:[%s7 + $0x5d8] sm:$0xff]
        %v7523 = vld [vmem:[%s7 + $0x5e0] sm:$0xff]
        %v7524 = vld [vmem:[%s7 + $0x5e8] sm:$0xff]
        %v7525 = vld [vmem:[%s7 + $0x5f0] sm:$0xff]
        %v7526 = vld [vmem:[%s7 + $0x5f8] sm:$0xff]
        %v7527 = vld [vmem:[%s7 + $0x600] sm:$0xff]
        %v7528 = vld [vmem:[%s7 + $0x608] sm:$0xff]
        %v7529 = vld [vmem:[%s7 + $0x610] sm:$0xff]
        %v7530 = vld [vmem:[%s7 + $0x618] sm:$0xff]
        %v7531 = vld [vmem:[%s7 + $0x620] sm:$0xff]
        %v7532 = vld [vmem:[%s7 + $0x628] sm:$0xff]
        %v7533 = vld [vmem:[%s7 + $0x630] sm:$0xff]
        %v7534 = vld [vmem:[%s7 + $0x638] sm:$0xff]
        %v7535 = vld [vmem:[%s7 + $0x640] sm:$0xff]
        %v7536 = vld [vmem:[%s7 + $0x648] sm:$0xff]
        %v7537 = vld [vmem:[%s7 + $0x650] sm:$0xff]
        %v7538 = vld [vmem:[%s7 + $0x658] sm:$0xff]
        %v7539 = vld [vmem:[%s7 + $0x660] sm:$0xff]
        %v7540 = vld [vmem:[%s7 + $0x668] sm:$0xff]
        %v7541 = vld [vmem:[%s7 + $0x670] sm:$0xff]
        %v7542 = vld [vmem:[%s7 + $0x678] sm:$0xff]
        %v7543 = vld [vmem:[%s7 + $0x680] sm:$0xff]
        %v7544 = vld [vmem:[%s7 + $0x688] sm:$0xff]
        %v7545 = vld [vmem:[%s7 + $0x690] sm:$0xff]
        %v7546 = vld [vmem:[%s7 + $0x698] sm:$0xff]
        %v7547 = vld [vmem:[%s7 + $0x6a0] sm:$0xff]
        %v7548 = vld [vmem:[%s7 + $0x6a8] sm:$0xff]
        %v7549 = vld [vmem:[%s7 + $0x6b0] sm:$0xff]
        %v7550 = vld [vmem:[%s7 + $0x6b8] sm:$0xff]
        %v7551 = vld [vmem:[%s7 + $0x6c0] sm:$0xff]
        %v7552 = vld [vmem:[%s7 + $0x6c8] sm:$0xff]
        %v7553 = vld [vmem:[%s7 + $0x6d0] sm:$0xff]
        %v7554 = vld [vmem:[%s7 + $0x6d8] sm:$0xff]
        %v7555 = vld [vmem:[%s7 + $0x6e0] sm:$0xff]
        %v7556 = vld [vmem:[%s7 + $0x6e8] sm:$0xff]
        %v7557 = vld [vmem:[%s7 + $0x6f0] sm:$0xff]
        %v7558 = vld [vmem:[%s7 + $0x6f8] sm:$0xff]
        %v7559 = vld [vmem:[%s7 + $0x700] sm:$0xff]
        %v7560 = vld [vmem:[%s7 + $0x708] sm:$0xff]
        %v7561 = vld [vmem:[%s7 + $0x710] sm:$0xff]
        %v7562 = vld [vmem:[%s7 + $0x718] sm:$0xff]
        %v7563 = vld [vmem:[%s7 + $0x720] sm:$0xff]
        %v7564 = vld [vmem:[%s7 + $0x728] sm:$0xff]
        %v7565 = vld [vmem:[%s7 + $0x730] sm:$0xff]
        %v7566 = vld [vmem:[%s7 + $0x738] sm:$0xff]
        %v7567 = vld [vmem:[%s7 + $0x740] sm:$0xff]
        %v7568 = vld [vmem:[%s7 + $0x748] sm:$0xff]
        %v7569 = vld [vmem:[%s7 + $0x750] sm:$0xff]
        %v7570 = vld [vmem:[%s7 + $0x758] sm:$0xff]
        %v7571 = vld [vmem:[%s7 + $0x760] sm:$0xff]
        %v7572 = vld [vmem:[%s7 + $0x768] sm:$0xff]
        %v7573 = vld [vmem:[%s7 + $0x770] sm:$0xff]
        %v7574 = vld [vmem:[%s7 + $0x778] sm:$0xff]
        %v7575 = vld [vmem:[%s7 + $0x780] sm:$0xff]
        %v7576 = vld [vmem:[%s7 + $0x788] sm:$0xff]
        %v7577 = vld [vmem:[%s7 + $0x790] sm:$0xff]
        %v7578 = vld [vmem:[%s7 + $0x798] sm:$0xff]
        %v7579 = vld [vmem:[%s7 + $0x7a0] sm:$0xff]
        %v7580 = vld [vmem:[%s7 + $0x7a8] sm:$0xff]
        %v7581 = vld [vmem:[%s7 + $0x7b0] sm:$0xff]
        %v7582 = vld [vmem:[%s7 + $0x7b8] sm:$0xff]
        %v7583 = vld [vmem:[%s7 + $0x7c0] sm:$0xff]
        %v7584 = vld [vmem:[%s7 + $0x7c8] sm:$0xff]
        %v7585 = vld [vmem:[%s7 + $0x7d0] sm:$0xff]
        %v7586 = vld [vmem:[%s7 + $0x7d8] sm:$0xff]
        %v7587 = vld [vmem:[%s7 + $0x7e0] sm:$0xff]
        %v7588 = vld [vmem:[%s7 + $0x7e8] sm:$0xff]
        %v7589 = vld [vmem:[%s7 + $0x7f0] sm:$0xff]
        %v7590 = vld [vmem:[%s7 + $0x7f8] sm:$0xff]
        %v7591 = vld [vmem:[%s7 + $0x800] sm:$0xff]
        %v7592 = vld [vmem:[%s7 + $0x808] sm:$0xff]
        %v7593 = vld [vmem:[%s7 + $0x810] sm:$0xff]
        %v7594 = vld [vmem:[%s7 + $0x818] sm:$0xff]
        %v7595 = vld [vmem:[%s7 + $0x820] sm:$0xff]
        %v7596 = vld [vmem:[%s7 + $0x828] sm:$0xff]
        %v7597 = vld [vmem:[%s7 + $0x830] sm:$0xff]
        %v7598 = vld [vmem:[%s7 + $0x838] sm:$0xff]
        %v7599 = vld [vmem:[%s7 + $0x840] sm:$0xff]
        %v7600 = vld [vmem:[%s7 + $0x848] sm:$0xff]
        %v7601 = vld [vmem:[%s7 + $0x850] sm:$0xff]
        %v7602 = vld [vmem:[%s7 + $0x858] sm:$0xff]
        %v7603 = vld [vmem:[%s7 + $0x860] sm:$0xff]
        %v7604 = vld [vmem:[%s7 + $0x868] sm:$0xff]
        %v7605 = vld [vmem:[%s7 + $0x870] sm:$0xff]
        %v7606 = vld [vmem:[%s7 + $0x878] sm:$0xff]
        %v7607 = vld [vmem:[%s7 + $0x880] sm:$0xff]
        %v7608 = vld [vmem:[%s7 + $0x888] sm:$0xff]
        %v7609 = vld [vmem:[%s7 + $0x890] sm:$0xff]
        %v7610 = vld [vmem:[%s7 + $0x898] sm:$0xff]
        %v7611 = vld [vmem:[%s7 + $0x8a0] sm:$0xff]
        %v7612 = vld [vmem:[%s7 + $0x8a8] sm:$0xff]
        %v7613 = vld [vmem:[%s7 + $0x8b0] sm:$0xff]
        %v7614 = vld [vmem:[%s7 + $0x8b8] sm:$0xff]
        %v7615 = vld [vmem:[%s7 + $0x8c0] sm:$0xff]
        %v7616 = vld [vmem:[%s7 + $0x8c8] sm:$0xff]
        %v7617 = vld [vmem:[%s7 + $0x8d0] sm:$0xff]
        %v7618 = vld [vmem:[%s7 + $0x8d8] sm:$0xff]
        %v7619 = vld [vmem:[%s7 + $0x8e0] sm:$0xff]
        %v7620 = vld [vmem:[%s7 + $0x8e8] sm:$0xff]
        %v7621 = vld [vmem:[%s7 + $0x8f0] sm:$0xff]
        %v7622 = vld [vmem:[%s7 + $0x8f8] sm:$0xff]
        %v7623 = vld [vmem:[%s7 + $0x900] sm:$0xff]
        %v7624 = vld [vmem:[%s7 + $0x908] sm:$0xff]
        %v7625 = vld [vmem:[%s7 + $0x910] sm:$0xff]
        %v7626 = vld [vmem:[%s7 + $0x918] sm:$0xff]
        %v7627 = vld [vmem:[%s7 + $0x920] sm:$0xff]
        %v7628 = vld [vmem:[%s7 + $0x928] sm:$0xff]
        %v7629 = vld [vmem:[%s7 + $0x930] sm:$0xff]
        %v7630 = vld [vmem:[%s7 + $0x938] sm:$0xff]
        %v7631 = vld [vmem:[%s7 + $0x940] sm:$0xff]
        %v7632 = vld [vmem:[%s7 + $0x948] sm:$0xff]
        %v7633 = vld [vmem:[%s7 + $0x950] sm:$0xff]
        %v7634 = vld [vmem:[%s7 + $0x958] sm:$0xff]
        %v7635 = vld [vmem:[%s7 + $0x960] sm:$0xff]
        %v7636 = vld [vmem:[%s7 + $0x968] sm:$0xff]
        %v7637 = vld [vmem:[%s7 + $0x970] sm:$0xff]
        %v7638 = vld [vmem:[%s7 + $0x978] sm:$0xff]
        %v7639 = vld [vmem:[%s7 + $0x980] sm:$0xff]
        %v7640 = vld [vmem:[%s7 + $0x988] sm:$0xff]
        %v7641 = vld [vmem:[%s7 + $0x990] sm:$0xff]
        %v7642 = vld [vmem:[%s7 + $0x998] sm:$0xff]
        %v7643 = vld [vmem:[%s7 + $0x9a0] sm:$0xff]
        %v7644 = vld [vmem:[%s7 + $0x9a8] sm:$0xff]
        %v7645 = vld [vmem:[%s7 + $0x9b0] sm:$0xff]
        %v7646 = vld [vmem:[%s7 + $0x9b8] sm:$0xff]
        %v7647 = vld [vmem:[%s7 + $0x9c0] sm:$0xff]
        %v7648 = vld [vmem:[%s7 + $0x9c8] sm:$0xff]
        %v7649 = vld [vmem:[%s7 + $0x9d0] sm:$0xff]
        %v7650 = vld [vmem:[%s7 + $0x9d8] sm:$0xff]
        %v7651 = vld [vmem:[%s7 + $0x9e0] sm:$0xff]
        %v7652 = vld [vmem:[%s7 + $0x9e8] sm:$0xff]
        %v7653 = vld [vmem:[%s7 + $0x9f0] sm:$0xff]
        %v7654 = vld [vmem:[%s7 + $0x9f8] sm:$0xff]
        %v7655 = vld [vmem:[%s7 + $0xa00] sm:$0xff]
        %v7656 = vld [vmem:[%s7 + $0xa08] sm:$0xff]
        %v7657 = vld [vmem:[%s7 + $0xa10] sm:$0xff]
        %v7658 = vld [vmem:[%s7 + $0xa18] sm:$0xff]
        %v7659 = vld [vmem:[%s7 + $0xa20] sm:$0xff]
        %v7660 = vld [vmem:[%s7 + $0xa28] sm:$0xff]
        %v7661 = vld [vmem:[%s7 + $0xa30] sm:$0xff]
        %v7662 = vld [vmem:[%s7 + $0xa38] sm:$0xff]
        %v7663 = vld [vmem:[%s7 + $0xa40] sm:$0xff]
        %v7664 = vld [vmem:[%s7 + $0xa48] sm:$0xff]
        %v7665 = vld [vmem:[%s7 + $0xa50] sm:$0xff]
        %v7666 = vld [vmem:[%s7 + $0xa58] sm:$0xff]
        %v7667 = vld [vmem:[%s7 + $0xa60] sm:$0xff]
        %v7668 = vld [vmem:[%s7 + $0xa68] sm:$0xff]
        %v7669 = vld [vmem:[%s7 + $0xa70] sm:$0xff]
        %v7670 = vld [vmem:[%s7 + $0xa78] sm:$0xff]
        %v7671 = vld [vmem:[%s7 + $0xa80] sm:$0xff]
        %v7672 = vld [vmem:[%s7 + $0xa88] sm:$0xff]
        %v7673 = vld [vmem:[%s7 + $0xa90] sm:$0xff]
        %v7674 = vld [vmem:[%s7 + $0xa98] sm:$0xff]
        %v7675 = vld [vmem:[%s7 + $0xaa0] sm:$0xff]
        %v7676 = vld [vmem:[%s7 + $0xaa8] sm:$0xff]
        %v7677 = vld [vmem:[%s7 + $0xab0] sm:$0xff]
        %v7678 = vld [vmem:[%s7 + $0xab8] sm:$0xff]
        %v7679 = vld [vmem:[%s7 + $0xac0] sm:$0xff]
        %v7680 = vld [vmem:[%s7 + $0xac8] sm:$0xff]
        %v7681 = vld [vmem:[%s7 + $0xad0] sm:$0xff]
        %v7682 = vld [vmem:[%s7 + $0xad8] sm:$0xff]
        %v7683 = vld [vmem:[%s7 + $0xae0] sm:$0xff]
        %v7684 = vld [vmem:[%s7 + $0xae8] sm:$0xff]
        %v7685 = vld [vmem:[%s7 + $0xaf0] sm:$0xff]
        %v7686 = vld [vmem:[%s7 + $0xaf8] sm:$0xff]
        %v7687 = vld [vmem:[%s7 + $0xb00] sm:$0xff]
        %v7688 = vld [vmem:[%s7 + $0xb08] sm:$0xff]
        %v7689 = vld [vmem:[%s7 + $0xb10] sm:$0xff]
        %v7690 = vld [vmem:[%s7 + $0xb18] sm:$0xff]
        %v7691 = vld [vmem:[%s7 + $0xb20] sm:$0xff]
        %v7692 = vld [vmem:[%s7 + $0xb28] sm:$0xff]
        %v7693 = vld [vmem:[%s7 + $0xb30] sm:$0xff]
        %v7694 = vld [vmem:[%s7 + $0xb38] sm:$0xff]
        %v7695 = vld [vmem:[%s7 + $0xb40] sm:$0xff]
        %v7696 = vld [vmem:[%s7 + $0xb48] sm:$0xff]
        %v7697 = vld [vmem:[%s7 + $0xb50] sm:$0xff]
        %v7698 = vld [vmem:[%s7 + $0xb58] sm:$0xff]
        %v7699 = vld [vmem:[%s7 + $0xb60] sm:$0xff]
        %v7700 = vld [vmem:[%s7 + $0xb68] sm:$0xff]
        %v7701 = vld [vmem:[%s7 + $0xb70] sm:$0xff]
        %v7702 = vld [vmem:[%s7 + $0xb78] sm:$0xff]
        %v7703 = vld [vmem:[%s7 + $0xb80] sm:$0xff]
        %v7704 = vld [vmem:[%s7 + $0xb88] sm:$0xff]
        %v7705 = vld [vmem:[%s7 + $0xb90] sm:$0xff]
        %v7706 = vld [vmem:[%s7 + $0xb98] sm:$0xff]
        %v7707 = vld [vmem:[%s7 + $0xba0] sm:$0xff]
        %v7708 = vld [vmem:[%s7 + $0xba8] sm:$0xff]
        %v7709 = vld [vmem:[%s7 + $0xbb0] sm:$0xff]
        %v7710 = vld [vmem:[%s7 + $0xbb8] sm:$0xff]
        %v7711 = vld [vmem:[%s7 + $0xbc0] sm:$0xff]
        %v7712 = vld [vmem:[%s7 + $0xbc8] sm:$0xff]
        %v7713 = vld [vmem:[%s7 + $0xbd0] sm:$0xff]
        %v7714 = vld [vmem:[%s7 + $0xbd8] sm:$0xff]
        %v7715 = vld [vmem:[%s7 + $0xbe0] sm:$0xff]
        %v7716 = vld [vmem:[%s7 + $0xbe8] sm:$0xff]
        %v7717 = vld [vmem:[%s7 + $0xbf0] sm:$0xff]
        %v7718 = vld [vmem:[%s7 + $0xbf8] sm:$0xff]
        %v7719 = vld [vmem:[%s7 + $0xc00] sm:$0xff]
        %v7720 = vld [vmem:[%s7 + $0xc08] sm:$0xff]
        %v7721 = vld [vmem:[%s7 + $0xc10] sm:$0xff]
        %v7722 = vld [vmem:[%s7 + $0xc18] sm:$0xff]
        %v7723 = vld [vmem:[%s7 + $0xc20] sm:$0xff]
        %v7724 = vld [vmem:[%s7 + $0xc28] sm:$0xff]
        %v7725 = vld [vmem:[%s7 + $0xc30] sm:$0xff]
        %v7726 = vld [vmem:[%s7 + $0xc38] sm:$0xff]
        %v7727 = vld [vmem:[%s7 + $0xc40] sm:$0xff]
        %v7728 = vld [vmem:[%s7 + $0xc48] sm:$0xff]
        %v7729 = vld [vmem:[%s7 + $0xc50] sm:$0xff]
        %v7730 = vld [vmem:[%s7 + $0xc58] sm:$0xff]
        %v7731 = vld [vmem:[%s7 + $0xc60] sm:$0xff]
        %v7732 = vld [vmem:[%s7 + $0xc68] sm:$0xff]
        %v7733 = vld [vmem:[%s7 + $0xc70] sm:$0xff]
        %v7734 = vld [vmem:[%s7 + $0xc78] sm:$0xff]
        %v7735 = vld [vmem:[%s7 + $0xc80] sm:$0xff]
        %v7736 = vld [vmem:[%s7 + $0xc88] sm:$0xff]
        %v7737 = vld [vmem:[%s7 + $0xc90] sm:$0xff]
        %v7738 = vld [vmem:[%s7 + $0xc98] sm:$0xff]
        %v7739 = vld [vmem:[%s7 + $0xca0] sm:$0xff]
        %v7740 = vld [vmem:[%s7 + $0xca8] sm:$0xff]
        %v7741 = vld [vmem:[%s7 + $0xcb0] sm:$0xff]
        %v7742 = vld [vmem:[%s7 + $0xcb8] sm:$0xff]
        %v7743 = vld [vmem:[%s7 + $0xcc0] sm:$0xff]
        %v7744 = vld [vmem:[%s7 + $0xcc8] sm:$0xff]
        %v7745 = vld [vmem:[%s7 + $0xcd0] sm:$0xff]
        %v7746 = vld [vmem:[%s7 + $0xcd8] sm:$0xff]
        %v7747 = vld [vmem:[%s7 + $0xce0] sm:$0xff]
        %v7748 = vld [vmem:[%s7 + $0xce8] sm:$0xff]
        %v7749 = vld [vmem:[%s7 + $0xcf0] sm:$0xff]
        %v7750 = vld [vmem:[%s7 + $0xcf8] sm:$0xff]
        %v7751 = vld [vmem:[%s7 + $0xd00] sm:$0xff]
        %v7752 = vld [vmem:[%s7 + $0xd08] sm:$0xff]
        %v7753 = vld [vmem:[%s7 + $0xd10] sm:$0xff]
        %v7754 = vld [vmem:[%s7 + $0xd18] sm:$0xff]
        %v7755 = vld [vmem:[%s7 + $0xd20] sm:$0xff]
        %v7756 = vld [vmem:[%s7 + $0xd28] sm:$0xff]
        %v7757 = vld [vmem:[%s7 + $0xd30] sm:$0xff]
        %v7758 = vld [vmem:[%s7 + $0xd38] sm:$0xff]
        %v7759 = vld [vmem:[%s7 + $0xd40] sm:$0xff]
        %v7760 = vld [vmem:[%s7 + $0xd48] sm:$0xff]
        %v7761 = vld [vmem:[%s7 + $0xd50] sm:$0xff]
        %v7762 = vld [vmem:[%s7 + $0xd58] sm:$0xff]
        %v7763 = vld [vmem:[%s7 + $0xd60] sm:$0xff]
        %v7764 = vld [vmem:[%s7 + $0xd68] sm:$0xff]
        %v7765 = vld [vmem:[%s7 + $0xd70] sm:$0xff]
        %v7766 = vld [vmem:[%s7 + $0xd78] sm:$0xff]
        %v7767 = vld [vmem:[%s7 + $0xd80] sm:$0xff]
        %v7768 = vld [vmem:[%s7 + $0xd88] sm:$0xff]
        %v7769 = vld [vmem:[%s7 + $0xd90] sm:$0xff]
        %v7770 = vld [vmem:[%s7 + $0xd98] sm:$0xff]
        %v7771 = vld [vmem:[%s7 + $0xda0] sm:$0xff]
        %v7772 = vld [vmem:[%s7 + $0xda8] sm:$0xff]
        %v7773 = vld [vmem:[%s7 + $0xdb0] sm:$0xff]
        %v7774 = vld [vmem:[%s7 + $0xdb8] sm:$0xff]
        %v7775 = vld [vmem:[%s7 + $0xdc0] sm:$0xff]
        %v7776 = vld [vmem:[%s7 + $0xdc8] sm:$0xff]
        %v7777 = vld [vmem:[%s7 + $0xdd0] sm:$0xff]
        %v7778 = vld [vmem:[%s7 + $0xdd8] sm:$0xff]
        %v7779 = vld [vmem:[%s7 + $0xde0] sm:$0xff]
        %v7780 = vld [vmem:[%s7 + $0xde8] sm:$0xff]
        %v7781 = vld [vmem:[%s7 + $0xdf0] sm:$0xff]
        %v7782 = vld [vmem:[%s7 + $0xdf8] sm:$0xff]
        %v7783 = vld [vmem:[%s7 + $0xe00] sm:$0xff]
        %v7784 = vld [vmem:[%s7 + $0xe08] sm:$0xff]
        %v7785 = vld [vmem:[%s7 + $0xe10] sm:$0xff]
        %v7786 = vld [vmem:[%s7 + $0xe18] sm:$0xff]
        %v7787 = vld [vmem:[%s7 + $0xe20] sm:$0xff]
        %v7788 = vld [vmem:[%s7 + $0xe28] sm:$0xff]
        %v7789 = vld [vmem:[%s7 + $0xe30] sm:$0xff]
        %v7790 = vld [vmem:[%s7 + $0xe38] sm:$0xff]
        %v7791 = vld [vmem:[%s7 + $0xe40] sm:$0xff]
        %v7792 = vld [vmem:[%s7 + $0xe48] sm:$0xff]
        %v7793 = vld [vmem:[%s7 + $0xe50] sm:$0xff]
        %v7794 = vld [vmem:[%s7 + $0xe58] sm:$0xff]
        %v7795 = vld [vmem:[%s7 + $0xe60] sm:$0xff]
        %v7796 = vld [vmem:[%s7 + $0xe68] sm:$0xff]
        %v7797 = vld [vmem:[%s7 + $0xe70] sm:$0xff]
        %v7798 = vld [vmem:[%s7 + $0xe78] sm:$0xff]
        %v7799 = vld [vmem:[%s7 + $0xe80] sm:$0xff]
        %v7800 = vld [vmem:[%s7 + $0xe88] sm:$0xff]
        %v7801 = vld [vmem:[%s7 + $0xe90] sm:$0xff]
        %v7802 = vld [vmem:[%s7 + $0xe98] sm:$0xff]
        %v7803 = vld [vmem:[%s7 + $0xea0] sm:$0xff]
        %v7804 = vld [vmem:[%s7 + $0xea8] sm:$0xff]
        %v7805 = vld [vmem:[%s7 + $0xeb0] sm:$0xff]
        %v7806 = vld [vmem:[%s7 + $0xeb8] sm:$0xff]
        %v7807 = vld [vmem:[%s7 + $0xec0] sm:$0xff]
        %v7808 = vld [vmem:[%s7 + $0xec8] sm:$0xff]
        %v7809 = vld [vmem:[%s7 + $0xed0] sm:$0xff]
        %v7810 = vld [vmem:[%s7 + $0xed8] sm:$0xff]
        %v7811 = vld [vmem:[%s7 + $0xee0] sm:$0xff]
        %v7812 = vld [vmem:[%s7 + $0xee8] sm:$0xff]
        %v7813 = vld [vmem:[%s7 + $0xef0] sm:$0xff]
        %v7814 = vld [vmem:[%s7 + $0xef8] sm:$0xff]
        %v7815 = vld [vmem:[%s7 + $0xf00] sm:$0xff]
        %v7816 = vld [vmem:[%s7 + $0xf08] sm:$0xff]
        %v7817 = vld [vmem:[%s7 + $0xf10] sm:$0xff]
        %v7818 = vld [vmem:[%s7 + $0xf18] sm:$0xff]
        %v7819 = vld [vmem:[%s7 + $0xf20] sm:$0xff]
        %v7820 = vld [vmem:[%s7 + $0xf28] sm:$0xff]
        %v7821 = vld [vmem:[%s7 + $0xf30] sm:$0xff]
        %v7822 = vld [vmem:[%s7 + $0xf38] sm:$0xff]
        %v7823 = vld [vmem:[%s7 + $0xf40] sm:$0xff]
        %v7824 = vld [vmem:[%s7 + $0xf48] sm:$0xff]
        %v7825 = vld [vmem:[%s7 + $0xf50] sm:$0xff]
        %v7826 = vld [vmem:[%s7 + $0xf58] sm:$0xff]
        %v7827 = vld [vmem:[%s7 + $0xf60] sm:$0xff]
        %v7828 = vld [vmem:[%s7 + $0xf68] sm:$0xff]
        %v7829 = vld [vmem:[%s7 + $0xf70] sm:$0xff]
        %v7830 = vld [vmem:[%s7 + $0xf78] sm:$0xff]
        %v7831 = vld [vmem:[%s7 + $0xf80] sm:$0xff]
        %v7832 = vld [vmem:[%s7 + $0xf88] sm:$0xff]
        %v7833 = vld [vmem:[%s7 + $0xf90] sm:$0xff]
        %v7834 = vld [vmem:[%s7 + $0xf98] sm:$0xff]
        %v7835 = vld [vmem:[%s7 + $0xfa0] sm:$0xff]
        %v7836 = vld [vmem:[%s7 + $0xfa8] sm:$0xff]
        %v7837 = vld [vmem:[%s7 + $0xfb0] sm:$0xff]
        %v7838 = vld [vmem:[%s7 + $0xfb8] sm:$0xff]
        %v7839 = vld [vmem:[%s7 + $0xfc0] sm:$0xff]
        %v7840 = vld [vmem:[%s7 + $0xfc8] sm:$0xff]
        %v7841 = vld [vmem:[%s7 + $0xfd0] sm:$0xff]
        %v7842 = vld [vmem:[%s7 + $0xfd8] sm:$0xff]
        %v7843 = vld [vmem:[%s7 + $0xfe0] sm:$0xff]
        %v7844 = vld [vmem:[%s7 + $0xfe8] sm:$0xff]
        %v7845 = vld [vmem:[%s7 + $0xff0] sm:$0xff]
        %v7846 = vld [vmem:[%s7 + $0xff8] sm:$0xff]
        %v7847 = vld [vmem:[%s7 + $0x1000] sm:$0xff]
        %v7848 = vld [vmem:[%s7 + $0x1008] sm:$0xff]
        %v7849 = vld [vmem:[%s7 + $0x1010] sm:$0xff]
        %v7850 = vld [vmem:[%s7 + $0x1018] sm:$0xff]
        %v7851 = vld [vmem:[%s7 + $0x1020] sm:$0xff]
        %v7852 = vld [vmem:[%s7 + $0x1028] sm:$0xff]
        %v7853 = vld [vmem:[%s7 + $0x1030] sm:$0xff]
        %v7854 = vld [vmem:[%s7 + $0x1038] sm:$0xff]
        %v7855 = vld [vmem:[%s7 + $0x1040] sm:$0xff]
        %v7856 = vld [vmem:[%s7 + $0x1048] sm:$0xff]
        %v7857 = vld [vmem:[%s7 + $0x1050] sm:$0xff]
        %v7858 = vld [vmem:[%s7 + $0x1058] sm:$0xff]
        %v7859 = vld [vmem:[%s7 + $0x1060] sm:$0xff]
        %v7860 = vld [vmem:[%s7 + $0x1068] sm:$0xff]
        %v7861 = vld [vmem:[%s7 + $0x1070] sm:$0xff]
        %v7862 = vld [vmem:[%s7 + $0x1078] sm:$0xff]
        %v7863 = vld [vmem:[%s7 + $0x1080] sm:$0xff]
        %v7864 = vld [vmem:[%s7 + $0x1088] sm:$0xff]
        %v7865 = vld [vmem:[%s7 + $0x1090] sm:$0xff]
        %v7866 = vld [vmem:[%s7 + $0x1098] sm:$0xff]
        %v7867 = vld [vmem:[%s7 + $0x10a0] sm:$0xff]
        %v7868 = vld [vmem:[%s7 + $0x10a8] sm:$0xff]
        %v7869 = vld [vmem:[%s7 + $0x10b0] sm:$0xff]
        %v7870 = vld [vmem:[%s7 + $0x10b8] sm:$0xff]
        %v7871 = vld [vmem:[%s7 + $0x10c0] sm:$0xff]
        %v7872 = vld [vmem:[%s7 + $0x10c8] sm:$0xff]
        %v7873 = vld [vmem:[%s7 + $0x10d0] sm:$0xff]
        %v7874 = vld [vmem:[%s7 + $0x10d8] sm:$0xff]
        %v7875 = vld [vmem:[%s7 + $0x10e0] sm:$0xff]
        %v7876 = vld [vmem:[%s7 + $0x10e8] sm:$0xff]
        %v7877 = vld [vmem:[%s7 + $0x10f0] sm:$0xff]
        %v7878 = vld [vmem:[%s7 + $0x10f8] sm:$0xff]
        %v7879 = vld [vmem:[%s7 + $0x1100] sm:$0xff]
        %v7880 = vld [vmem:[%s7 + $0x1108] sm:$0xff]
        %v7881 = vld [vmem:[%s7 + $0x1110] sm:$0xff]
        %v7882 = vld [vmem:[%s7 + $0x1118] sm:$0xff]
        %v7883 = vld [vmem:[%s7 + $0x1120] sm:$0xff]
        %v7884 = vld [vmem:[%s7 + $0x1128] sm:$0xff]
        %v7885 = vld [vmem:[%s7 + $0x1130] sm:$0xff]
        %v7886 = vld [vmem:[%s7 + $0x1138] sm:$0xff]
        %v7887 = vld [vmem:[%s7 + $0x1140] sm:$0xff]
        %v7888 = vld [vmem:[%s7 + $0x1148] sm:$0xff]
        %v7889 = vld [vmem:[%s7 + $0x1150] sm:$0xff]
        %v7890 = vld [vmem:[%s7 + $0x1158] sm:$0xff]
        %v7891 = vld [vmem:[%s7 + $0x1160] sm:$0xff]
        %v7892 = vld [vmem:[%s7 + $0x1168] sm:$0xff]
        %v7893 = vld [vmem:[%s7 + $0x1170] sm:$0xff]
        %v7894 = vld [vmem:[%s7 + $0x1178] sm:$0xff]
        %v7895 = vld [vmem:[%s7 + $0x1180] sm:$0xff]
        %v7896 = vld [vmem:[%s7 + $0x1188] sm:$0xff]
        %v7897 = vld [vmem:[%s7 + $0x1190] sm:$0xff]
        %v7898 = vld [vmem:[%s7 + $0x1198] sm:$0xff]
        %v7899 = vld [vmem:[%s7 + $0x11a0] sm:$0xff]
        %v7900 = vld [vmem:[%s7 + $0x11a8] sm:$0xff]
        %v7901 = vld [vmem:[%s7 + $0x11b0] sm:$0xff]
        %v7902 = vld [vmem:[%s7 + $0x11b8] sm:$0xff]
        %v7903 = vld [vmem:[%s7 + $0x11c0] sm:$0xff]
        %v7904 = vld [vmem:[%s7 + $0x11c8] sm:$0xff]
        %v7905 = vld [vmem:[%s7 + $0x11d0] sm:$0xff]
        %v7906 = vld [vmem:[%s7 + $0x11d8] sm:$0xff]
        %v7907 = vld [vmem:[%s7 + $0x11e0] sm:$0xff]
        %v7908 = vld [vmem:[%s7 + $0x11e8] sm:$0xff]
        %v7909 = vld [vmem:[%s7 + $0x11f0] sm:$0xff]
        %v7910 = vld [vmem:[%s7 + $0x11f8] sm:$0xff]
        %v7911 = vld [vmem:[%s7 + $0x1200] sm:$0xff]
        %v7912 = vld [vmem:[%s7 + $0x1208] sm:$0xff]
        %v7913 = vld [vmem:[%s7 + $0x1210] sm:$0xff]
        %v7914 = vld [vmem:[%s7 + $0x1218] sm:$0xff]
        %v7915 = vld [vmem:[%s7 + $0x1220] sm:$0xff]
        %v7916 = vld [vmem:[%s7 + $0x1228] sm:$0xff]
        %v7917 = vld [vmem:[%s7 + $0x1230] sm:$0xff]
        %v7918 = vld [vmem:[%s7 + $0x1238] sm:$0xff]
        %v7919 = vld [vmem:[%s7 + $0x1240] sm:$0xff]
        %v7920 = vld [vmem:[%s7 + $0x1248] sm:$0xff]
        %v7921 = vld [vmem:[%s7 + $0x1250] sm:$0xff]
        %v7922 = vld [vmem:[%s7 + $0x1258] sm:$0xff]
        %v7923 = vld [vmem:[%s7 + $0x1260] sm:$0xff]
        %v7924 = vld [vmem:[%s7 + $0x1268] sm:$0xff]
        %v7925 = vld [vmem:[%s7 + $0x1270] sm:$0xff]
        %v7926 = vld [vmem:[%s7 + $0x1278] sm:$0xff]
        %v7927 = vld [vmem:[%s7 + $0x1280] sm:$0xff]
        %v7928 = vld [vmem:[%s7 + $0x1288] sm:$0xff]
        %v7929 = vld [vmem:[%s7 + $0x1290] sm:$0xff]
        %v7930 = vld [vmem:[%s7 + $0x1298] sm:$0xff]
        %v7931 = vld [vmem:[%s7 + $0x12a0] sm:$0xff]
        %v7932 = vld [vmem:[%s7 + $0x12a8] sm:$0xff]
        %v7933 = vld [vmem:[%s7 + $0x12b0] sm:$0xff]
        %v7934 = vld [vmem:[%s7 + $0x12b8] sm:$0xff]
        %v7935 = vld [vmem:[%s7 + $0x12c0] sm:$0xff]
        %v7936 = vld [vmem:[%s7 + $0x12c8] sm:$0xff]
        %v7937 = vld [vmem:[%s7 + $0x12d0] sm:$0xff]
        %v7938 = vld [vmem:[%s7 + $0x12d8] sm:$0xff]
        %v7939 = vld [vmem:[%s7 + $0x12e0] sm:$0xff]
        %v7940 = vld [vmem:[%s7 + $0x12e8] sm:$0xff]
        %v7941 = vld [vmem:[%s7 + $0x12f0] sm:$0xff]
        %v7942 = vld [vmem:[%s7 + $0x12f8] sm:$0xff]
        %v7943 = vld [vmem:[%s7 + $0x1300] sm:$0xff]
        %v7944 = vld [vmem:[%s7 + $0x1308] sm:$0xff]
        %v7945 = vld [vmem:[%s7 + $0x1310] sm:$0xff]
        %v7946 = vld [vmem:[%s7 + $0x1318] sm:$0xff]
        %v7947 = vld [vmem:[%s7 + $0x1320] sm:$0xff]
        %v7948 = vld [vmem:[%s7 + $0x1328] sm:$0xff]
        %v7949 = vld [vmem:[%s7 + $0x1330] sm:$0xff]
        %v7950 = vld [vmem:[%s7 + $0x1338] sm:$0xff]
        %v7951 = vld [vmem:[%s7 + $0x1340] sm:$0xff]
        %v7952 = vld [vmem:[%s7 + $0x1348] sm:$0xff]
        %v7953 = vld [vmem:[%s7 + $0x1350] sm:$0xff]
        %v7954 = vld [vmem:[%s7 + $0x1358] sm:$0xff]
        %v7955 = vld [vmem:[%s7 + $0x1360] sm:$0xff]
        %v7956 = vld [vmem:[%s7 + $0x1368] sm:$0xff]
        %v7957 = vld [vmem:[%s7 + $0x1370] sm:$0xff]
        %v7958 = vld [vmem:[%s7 + $0x1378] sm:$0xff]
        %v7959 = vld [vmem:[%s7 + $0x1380] sm:$0xff]
        %v7960 = vld [vmem:[%s7 + $0x1388] sm:$0xff]
        %v7961 = vld [vmem:[%s7 + $0x1390] sm:$0xff]
        %v7962 = vld [vmem:[%s7 + $0x1398] sm:$0xff]
        %v7963 = vld [vmem:[%s7 + $0x13a0] sm:$0xff]
        %v7964 = vld [vmem:[%s7 + $0x13a8] sm:$0xff]
        %v7965 = vld [vmem:[%s7 + $0x13b0] sm:$0xff]
        %v7966 = vld [vmem:[%s7 + $0x13b8] sm:$0xff]
        %v7967 = vld [vmem:[%s7 + $0x13c0] sm:$0xff]
        %v7968 = vld [vmem:[%s7 + $0x13c8] sm:$0xff]
        %v7969 = vld [vmem:[%s7 + $0x13d0] sm:$0xff]
        %v7970 = vld [vmem:[%s7 + $0x13d8] sm:$0xff]
        %v7971 = vld [vmem:[%s7 + $0x13e0] sm:$0xff]
        %v7972 = vld [vmem:[%s7 + $0x13e8] sm:$0xff]
        %v7973 = vld [vmem:[%s7 + $0x13f0] sm:$0xff]
        %v7974 = vld [vmem:[%s7 + $0x13f8] sm:$0xff]
        %v7975 = vld [vmem:[%s7 + $0x1400] sm:$0xff]
        %v7976 = vld [vmem:[%s7 + $0x1408] sm:$0xff]
        %v7977 = vld [vmem:[%s7 + $0x1410] sm:$0xff]
        %v7978 = vld [vmem:[%s7 + $0x1418] sm:$0xff]
        %v7979 = vld [vmem:[%s7 + $0x1420] sm:$0xff]
        %v7980 = vld [vmem:[%s7 + $0x1428] sm:$0xff]
        %v7981 = vld [vmem:[%s7 + $0x1430] sm:$0xff]
        %v7982 = vld [vmem:[%s7 + $0x1438] sm:$0xff]
        %v7983 = vld [vmem:[%s7 + $0x1440] sm:$0xff]
        %v7984 = vld [vmem:[%s7 + $0x1448] sm:$0xff]
        %v7985 = vld [vmem:[%s7 + $0x1450] sm:$0xff]
        %v7986 = vld [vmem:[%s7 + $0x1458] sm:$0xff]
        %v7987 = vld [vmem:[%s7 + $0x1460] sm:$0xff]
        %v7988 = vld [vmem:[%s7 + $0x1468] sm:$0xff]
        %v7989 = vld [vmem:[%s7 + $0x1470] sm:$0xff]
        %v7990 = vld [vmem:[%s7 + $0x1478] sm:$0xff]
        %v7991 = vld [vmem:[%s7 + $0x1480] sm:$0xff]
        %v7992 = vld [vmem:[%s7 + $0x1488] sm:$0xff]
        %v7993 = vld [vmem:[%s7 + $0x1490] sm:$0xff]
        %v7994 = vld [vmem:[%s7 + $0x1498] sm:$0xff]
        %v7995 = vld [vmem:[%s7 + $0x14a0] sm:$0xff]
        %v7996 = vld [vmem:[%s7 + $0x14a8] sm:$0xff]
        %v7997 = vld [vmem:[%s7 + $0x14b0] sm:$0xff]
        %v7998 = vld [vmem:[%s7 + $0x14b8] sm:$0xff]
        %v7999 = vld [vmem:[%s7 + $0x14c0] sm:$0xff]
        %v8000 = vld [vmem:[%s7 + $0x14c8] sm:$0xff]
        %v8001 = vld [vmem:[%s7 + $0x14d0] sm:$0xff]
        %v8002 = vld [vmem:[%s7 + $0x14d8] sm:$0xff]
        %v8003 = vld [vmem:[%s7 + $0x14e0] sm:$0xff]
        %v8004 = vld [vmem:[%s7 + $0x14e8] sm:$0xff]
        %v8005 = vld [vmem:[%s7 + $0x14f0] sm:$0xff]
        %v8006 = vld [vmem:[%s7 + $0x14f8] sm:$0xff]
        %v8007 = vld [vmem:[%s7 + $0x1500] sm:$0xff]
        %v8008 = vld [vmem:[%s7 + $0x1508] sm:$0xff]
        %v8009 = vld [vmem:[%s7 + $0x1510] sm:$0xff]
        %v8010 = vld [vmem:[%s7 + $0x1518] sm:$0xff]
        %v8011 = vld [vmem:[%s7 + $0x1520] sm:$0xff]
        %v8012 = vld [vmem:[%s7 + $0x1528] sm:$0xff]
        %v8013 = vld [vmem:[%s7 + $0x1530] sm:$0xff]
        %v8014 = vld [vmem:[%s7 + $0x1538] sm:$0xff]
        %v8015 = vld [vmem:[%s7 + $0x1540] sm:$0xff]
        %v8016 = vld [vmem:[%s7 + $0x1548] sm:$0xff]
        %v8017 = vld [vmem:[%s7 + $0x1550] sm:$0xff]
        %v8018 = vld [vmem:[%s7 + $0x1558] sm:$0xff]
        %v8019 = vld [vmem:[%s7 + $0x1560] sm:$0xff]
        %v8020 = vld [vmem:[%s7 + $0x1568] sm:$0xff]
        %v8021 = vld [vmem:[%s7 + $0x1570] sm:$0xff]
        %v8022 = vld [vmem:[%s7 + $0x1578] sm:$0xff]
        %v8023 = vld [vmem:[%s7 + $0x1580] sm:$0xff]
        %v8024 = vld [vmem:[%s7 + $0x1588] sm:$0xff]
        %v8025 = vld [vmem:[%s7 + $0x1590] sm:$0xff]
        %v8026 = vld [vmem:[%s7 + $0x1598] sm:$0xff]
        %v8027 = vld [vmem:[%s7 + $0x15a0] sm:$0xff]
        %v8028 = vld [vmem:[%s7 + $0x15a8] sm:$0xff]
        %v8029 = vld [vmem:[%s7 + $0x15b0] sm:$0xff]
        %v8030 = vld [vmem:[%s7 + $0x15b8] sm:$0xff]
        %v8031 = vld [vmem:[%s7 + $0x15c0] sm:$0xff]
        %v8032 = vld [vmem:[%s7 + $0x15c8] sm:$0xff]
        %v8033 = vld [vmem:[%s7 + $0x15d0] sm:$0xff]
        %v8034 = vld [vmem:[%s7 + $0x15d8] sm:$0xff]
        %v8035 = vld [vmem:[%s7 + $0x15e0] sm:$0xff]
        %v8036 = vld [vmem:[%s7 + $0x15e8] sm:$0xff]
        %v8037 = vld [vmem:[%s7 + $0x15f0] sm:$0xff]
        %v8038 = vld [vmem:[%s7 + $0x15f8] sm:$0xff]
        %v8039 = vld [vmem:[%s7 + $0x1600] sm:$0xff]
        %v8040 = vld [vmem:[%s7 + $0x1608] sm:$0xff]
        %v8041 = vld [vmem:[%s7 + $0x1610] sm:$0xff]
        %v8042 = vld [vmem:[%s7 + $0x1618] sm:$0xff]
        %v8043 = vld [vmem:[%s7 + $0x1620] sm:$0xff]
        %v8044 = vld [vmem:[%s7 + $0x1628] sm:$0xff]
        %v8045 = vld [vmem:[%s7 + $0x1630] sm:$0xff]
        %v8046 = vld [vmem:[%s7 + $0x1638] sm:$0xff]
        %v8047 = vld [vmem:[%s7 + $0x1640] sm:$0xff]
        %v8048 = vld [vmem:[%s7 + $0x1648] sm:$0xff]
        %v8049 = vld [vmem:[%s7 + $0x1650] sm:$0xff]
        %v8050 = vld [vmem:[%s7 + $0x1658] sm:$0xff]
        %v8051 = vld [vmem:[%s7 + $0x1660] sm:$0xff]
        %v8052 = vld [vmem:[%s7 + $0x1668] sm:$0xff]
        %v8053 = vld [vmem:[%s7 + $0x1670] sm:$0xff]
        %v8054 = vld [vmem:[%s7 + $0x1678] sm:$0xff]
        %v8055 = vmul.f32 %v7335, %v7263
        %v8056 = vmul.f32 %v7336, %v7264
        %v8057 = vmul.f32 %v7337, %v7265
        %v8058 = vmul.f32 %v7338, %v7266
        %v8059 = vmul.f32 %v7339, %v7267
        %v8060 = vmul.f32 %v7340, %v7268
        %v8061 = vmul.f32 %v7341, %v7269
        %v8062 = vmul.f32 %v7342, %v7270
        %v8063 = vmul.f32 %v7343, %v7271
        %v8064 = vmul.f32 %v7344, %v7272
        %v8065 = vmul.f32 %v7345, %v7273
        %v8066 = vmul.f32 %v7346, %v7274
        %v8067 = vmul.f32 %v7347, %v7275
        %v8068 = vmul.f32 %v7348, %v7276
        %v8069 = vmul.f32 %v7349, %v7277
        %v8070 = vmul.f32 %v7350, %v7278
        %v8071 = vmul.f32 %v7351, %v7279
        %v8072 = vmul.f32 %v7352, %v7280
        %v8073 = vmul.f32 %v7353, %v7281
        %v8074 = vmul.f32 %v7354, %v7282
        %v8075 = vmul.f32 %v7355, %v7283
        %v8076 = vmul.f32 %v7356, %v7284
        %v8077 = vmul.f32 %v7357, %v7285
        %v8078 = vmul.f32 %v7358, %v7286
        %v8079 = vmul.f32 %v7359, %v7287
        %v8080 = vmul.f32 %v7360, %v7288
        %v8081 = vmul.f32 %v7361, %v7289
        %v8082 = vmul.f32 %v7362, %v7290
        %v8083 = vmul.f32 %v7363, %v7291
        %v8084 = vmul.f32 %v7364, %v7292
        %v8085 = vmul.f32 %v7365, %v7293
        %v8086 = vmul.f32 %v7366, %v7294
        %v8087 = vmul.f32 %v7367, %v7295
        %v8088 = vmul.f32 %v7368, %v7296
        %v8089 = vmul.f32 %v7369, %v7297
        %v8090 = vmul.f32 %v7370, %v7298
        %v8091 = vmul.f32 %v7371, %v7299
        %v8092 = vmul.f32 %v7372, %v7300
        %v8093 = vmul.f32 %v7373, %v7301
        %v8094 = vmul.f32 %v7374, %v7302
        %v8095 = vmul.f32 %v7375, %v7303
        %v8096 = vmul.f32 %v7376, %v7304
        %v8097 = vmul.f32 %v7377, %v7305
        %v8098 = vmul.f32 %v7378, %v7306
        %v8099 = vmul.f32 %v7379, %v7307
        %v8100 = vmul.f32 %v7380, %v7308
        %v8101 = vmul.f32 %v7381, %v7309
        %v8102 = vmul.f32 %v7382, %v7310
        %v8103 = vmul.f32 %v7383, %v7311
        %v8104 = vmul.f32 %v7384, %v7312
        %v8105 = vmul.f32 %v7385, %v7313
        %v8106 = vmul.f32 %v7386, %v7314
        %v8107 = vmul.f32 %v7387, %v7315
        %v8108 = vmul.f32 %v7388, %v7316
        %v8109 = vmul.f32 %v7389, %v7317
        %v8110 = vmul.f32 %v7390, %v7318
        %v8111 = vmul.f32 %v7391, %v7319
        %v8112 = vmul.f32 %v7392, %v7320
        %v8113 = vmul.f32 %v7393, %v7321
        %v8114 = vmul.f32 %v7394, %v7322
        %v8115 = vmul.f32 %v7395, %v7323
        %v8116 = vmul.f32 %v7396, %v7324
        %v8117 = vmul.f32 %v7397, %v7325
        %v8118 = vmul.f32 %v7398, %v7326
        %v8119 = vmul.f32 %v7399, %v7327
        %v8120 = vmul.f32 %v7400, %v7328
        %v8121 = vmul.f32 %v7401, %v7329
        %v8122 = vmul.f32 %v7402, %v7330
        %v8123 = vmul.f32 %v7403, %v7331
        %v8124 = vmul.f32 %v7404, %v7332
        %v8125 = vmul.f32 %v7405, %v7333
        %v8126 = vmul.f32 %v7406, %v7334
        %v8127 = vmul.f32 %v7407, %v7263
        %v8128 = vmul.f32 %v7408, %v7264
        %v8129 = vmul.f32 %v7409, %v7265
        %v8130 = vmul.f32 %v7410, %v7266
        %v8131 = vmul.f32 %v7411, %v7267
        %v8132 = vmul.f32 %v7412, %v7268
        %v8133 = vmul.f32 %v7413, %v7269
        %v8134 = vmul.f32 %v7414, %v7270
        %v8135 = vmul.f32 %v7415, %v7271
        %v8136 = vmul.f32 %v7416, %v7272
        %v8137 = vmul.f32 %v7417, %v7273
        %v8138 = vmul.f32 %v7418, %v7274
        %v8139 = vmul.f32 %v7419, %v7275
        %v8140 = vmul.f32 %v7420, %v7276
        %v8141 = vmul.f32 %v7421, %v7277
        %v8142 = vmul.f32 %v7422, %v7278
        %v8143 = vmul.f32 %v7423, %v7279
        %v8144 = vmul.f32 %v7424, %v7280
        %v8145 = vmul.f32 %v7425, %v7281
        %v8146 = vmul.f32 %v7426, %v7282
        %v8147 = vmul.f32 %v7427, %v7283
        %v8148 = vmul.f32 %v7428, %v7284
        %v8149 = vmul.f32 %v7429, %v7285
        %v8150 = vmul.f32 %v7430, %v7286
        %v8151 = vmul.f32 %v7431, %v7287
        %v8152 = vmul.f32 %v7432, %v7288
        %v8153 = vmul.f32 %v7433, %v7289
        %v8154 = vmul.f32 %v7434, %v7290
        %v8155 = vmul.f32 %v7435, %v7291
        %v8156 = vmul.f32 %v7436, %v7292
        %v8157 = vmul.f32 %v7437, %v7293
        %v8158 = vmul.f32 %v7438, %v7294
        %v8159 = vmul.f32 %v7439, %v7295
        %v8160 = vmul.f32 %v7440, %v7296
        %v8161 = vmul.f32 %v7441, %v7297
        %v8162 = vmul.f32 %v7442, %v7298
        %v8163 = vmul.f32 %v7443, %v7299
        %v8164 = vmul.f32 %v7444, %v7300
        %v8165 = vmul.f32 %v7445, %v7301
        %v8166 = vmul.f32 %v7446, %v7302
        %v8167 = vmul.f32 %v7447, %v7303
        %v8168 = vmul.f32 %v7448, %v7304
        %v8169 = vmul.f32 %v7449, %v7305
        %v8170 = vmul.f32 %v7450, %v7306
        %v8171 = vmul.f32 %v7451, %v7307
        %v8172 = vmul.f32 %v7452, %v7308
        %v8173 = vmul.f32 %v7453, %v7309
        %v8174 = vmul.f32 %v7454, %v7310
        %v8175 = vmul.f32 %v7455, %v7311
        %v8176 = vmul.f32 %v7456, %v7312
        %v8177 = vmul.f32 %v7457, %v7313
        %v8178 = vmul.f32 %v7458, %v7314
        %v8179 = vmul.f32 %v7459, %v7315
        %v8180 = vmul.f32 %v7460, %v7316
        %v8181 = vmul.f32 %v7461, %v7317
        %v8182 = vmul.f32 %v7462, %v7318
        %v8183 = vmul.f32 %v7463, %v7319
        %v8184 = vmul.f32 %v7464, %v7320
        %v8185 = vmul.f32 %v7465, %v7321
        %v8186 = vmul.f32 %v7466, %v7322
        %v8187 = vmul.f32 %v7467, %v7323
        %v8188 = vmul.f32 %v7468, %v7324
        %v8189 = vmul.f32 %v7469, %v7325
        %v8190 = vmul.f32 %v7470, %v7326
        %v8191 = vmul.f32 %v7471, %v7327
        %v8192 = vmul.f32 %v7472, %v7328
        %v8193 = vmul.f32 %v7473, %v7329
        %v8194 = vmul.f32 %v7474, %v7330
        %v8195 = vmul.f32 %v7475, %v7331
        %v8196 = vmul.f32 %v7476, %v7332
        %v8197 = vmul.f32 %v7477, %v7333
        %v8198 = vmul.f32 %v7478, %v7334
        %v8199 = vmul.f32 %v7479, %v7263
        %v8200 = vmul.f32 %v7480, %v7264
        %v8201 = vmul.f32 %v7481, %v7265
        %v8202 = vmul.f32 %v7482, %v7266
        %v8203 = vmul.f32 %v7483, %v7267
        %v8204 = vmul.f32 %v7484, %v7268
        %v8205 = vmul.f32 %v7485, %v7269
        %v8206 = vmul.f32 %v7486, %v7270
        %v8207 = vmul.f32 %v7487, %v7271
        %v8208 = vmul.f32 %v7488, %v7272
        %v8209 = vmul.f32 %v7489, %v7273
        %v8210 = vmul.f32 %v7490, %v7274
        %v8211 = vmul.f32 %v7491, %v7275
        %v8212 = vmul.f32 %v7492, %v7276
        %v8213 = vmul.f32 %v7493, %v7277
        %v8214 = vmul.f32 %v7494, %v7278
        %v8215 = vmul.f32 %v7495, %v7279
        %v8216 = vmul.f32 %v7496, %v7280
        %v8217 = vmul.f32 %v7497, %v7281
        %v8218 = vmul.f32 %v7498, %v7282
        %v8219 = vmul.f32 %v7499, %v7283
        %v8220 = vmul.f32 %v7500, %v7284
        %v8221 = vmul.f32 %v7501, %v7285
        %v8222 = vmul.f32 %v7502, %v7286
        %v8223 = vmul.f32 %v7503, %v7287
        %v8224 = vmul.f32 %v7504, %v7288
        %v8225 = vmul.f32 %v7505, %v7289
        %v8226 = vmul.f32 %v7506, %v7290
        %v8227 = vmul.f32 %v7507, %v7291
        %v8228 = vmul.f32 %v7508, %v7292
        %v8229 = vmul.f32 %v7509, %v7293
        %v8230 = vmul.f32 %v7510, %v7294
        %v8231 = vmul.f32 %v7511, %v7295
        %v8232 = vmul.f32 %v7512, %v7296
        %v8233 = vmul.f32 %v7513, %v7297
        %v8234 = vmul.f32 %v7514, %v7298
        %v8235 = vmul.f32 %v7515, %v7299
        %v8236 = vmul.f32 %v7516, %v7300
        %v8237 = vmul.f32 %v7517, %v7301
        %v8238 = vmul.f32 %v7518, %v7302
        %v8239 = vmul.f32 %v7519, %v7303
        %v8240 = vmul.f32 %v7520, %v7304
        %v8241 = vmul.f32 %v7521, %v7305
        %v8242 = vmul.f32 %v7522, %v7306
        %v8243 = vmul.f32 %v7523, %v7307
        %v8244 = vmul.f32 %v7524, %v7308
        %v8245 = vmul.f32 %v7525, %v7309
        %v8246 = vmul.f32 %v7526, %v7310
        %v8247 = vmul.f32 %v7527, %v7311
        %v8248 = vmul.f32 %v7528, %v7312
        %v8249 = vmul.f32 %v7529, %v7313
        %v8250 = vmul.f32 %v7530, %v7314
        %v8251 = vmul.f32 %v7531, %v7315
        %v8252 = vmul.f32 %v7532, %v7316
        %v8253 = vmul.f32 %v7533, %v7317
        %v8254 = vmul.f32 %v7534, %v7318
        %v8255 = vmul.f32 %v7535, %v7319
        %v8256 = vmul.f32 %v7536, %v7320
        %v8257 = vmul.f32 %v7537, %v7321
        %v8258 = vmul.f32 %v7538, %v7322
        %v8259 = vmul.f32 %v7539, %v7323
        %v8260 = vmul.f32 %v7540, %v7324
        %v8261 = vmul.f32 %v7541, %v7325
        %v8262 = vmul.f32 %v7542, %v7326
        %v8263 = vmul.f32 %v7543, %v7327
        %v8264 = vmul.f32 %v7544, %v7328
        %v8265 = vmul.f32 %v7545, %v7329
        %v8266 = vmul.f32 %v7546, %v7330
        %v8267 = vmul.f32 %v7547, %v7331
        %v8268 = vmul.f32 %v7548, %v7332
        %v8269 = vmul.f32 %v7549, %v7333
        %v8270 = vmul.f32 %v7550, %v7334
        %v8271 = vmul.f32 %v7551, %v7263
        %v8272 = vmul.f32 %v7552, %v7264
        %v8273 = vmul.f32 %v7553, %v7265
        %v8274 = vmul.f32 %v7554, %v7266
        %v8275 = vmul.f32 %v7555, %v7267
        %v8276 = vmul.f32 %v7556, %v7268
        %v8277 = vmul.f32 %v7557, %v7269
        %v8278 = vmul.f32 %v7558, %v7270
        %v8279 = vmul.f32 %v7559, %v7271
        %v8280 = vmul.f32 %v7560, %v7272
        %v8281 = vmul.f32 %v7561, %v7273
        %v8282 = vmul.f32 %v7562, %v7274
        %v8283 = vmul.f32 %v7563, %v7275
        %v8284 = vmul.f32 %v7564, %v7276
        %v8285 = vmul.f32 %v7565, %v7277
        %v8286 = vmul.f32 %v7566, %v7278
        %v8287 = vmul.f32 %v7567, %v7279
        %v8288 = vmul.f32 %v7568, %v7280
        %v8289 = vmul.f32 %v7569, %v7281
        %v8290 = vmul.f32 %v7570, %v7282
        %v8291 = vmul.f32 %v7571, %v7283
        %v8292 = vmul.f32 %v7572, %v7284
        %v8293 = vmul.f32 %v7573, %v7285
        %v8294 = vmul.f32 %v7574, %v7286
        %v8295 = vmul.f32 %v7575, %v7287
        %v8296 = vmul.f32 %v7576, %v7288
        %v8297 = vmul.f32 %v7577, %v7289
        %v8298 = vmul.f32 %v7578, %v7290
        %v8299 = vmul.f32 %v7579, %v7291
        %v8300 = vmul.f32 %v7580, %v7292
        %v8301 = vmul.f32 %v7581, %v7293
        %v8302 = vmul.f32 %v7582, %v7294
        %v8303 = vmul.f32 %v7583, %v7295
        %v8304 = vmul.f32 %v7584, %v7296
        %v8305 = vmul.f32 %v7585, %v7297
        %v8306 = vmul.f32 %v7586, %v7298
        %v8307 = vmul.f32 %v7587, %v7299
        %v8308 = vmul.f32 %v7588, %v7300
        %v8309 = vmul.f32 %v7589, %v7301
        %v8310 = vmul.f32 %v7590, %v7302
        %v8311 = vmul.f32 %v7591, %v7303
        %v8312 = vmul.f32 %v7592, %v7304
        %v8313 = vmul.f32 %v7593, %v7305
        %v8314 = vmul.f32 %v7594, %v7306
        %v8315 = vmul.f32 %v7595, %v7307
        %v8316 = vmul.f32 %v7596, %v7308
        %v8317 = vmul.f32 %v7597, %v7309
        %v8318 = vmul.f32 %v7598, %v7310
        %v8319 = vmul.f32 %v7599, %v7311
        %v8320 = vmul.f32 %v7600, %v7312
        %v8321 = vmul.f32 %v7601, %v7313
        %v8322 = vmul.f32 %v7602, %v7314
        %v8323 = vmul.f32 %v7603, %v7315
        %v8324 = vmul.f32 %v7604, %v7316
        %v8325 = vmul.f32 %v7605, %v7317
        %v8326 = vmul.f32 %v7606, %v7318
        %v8327 = vmul.f32 %v7607, %v7319
        %v8328 = vmul.f32 %v7608, %v7320
        %v8329 = vmul.f32 %v7609, %v7321
        %v8330 = vmul.f32 %v7610, %v7322
        %v8331 = vmul.f32 %v7611, %v7323
        %v8332 = vmul.f32 %v7612, %v7324
        %v8333 = vmul.f32 %v7613, %v7325
        %v8334 = vmul.f32 %v7614, %v7326
        %v8335 = vmul.f32 %v7615, %v7327
        %v8336 = vmul.f32 %v7616, %v7328
        %v8337 = vmul.f32 %v7617, %v7329
        %v8338 = vmul.f32 %v7618, %v7330
        %v8339 = vmul.f32 %v7619, %v7331
        %v8340 = vmul.f32 %v7620, %v7332
        %v8341 = vmul.f32 %v7621, %v7333
        %v8342 = vmul.f32 %v7622, %v7334
        %v8343 = vmul.f32 %v7623, %v7263
        %v8344 = vmul.f32 %v7624, %v7264
        %v8345 = vmul.f32 %v7625, %v7265
        %v8346 = vmul.f32 %v7626, %v7266
        %v8347 = vmul.f32 %v7627, %v7267
        %v8348 = vmul.f32 %v7628, %v7268
        %v8349 = vmul.f32 %v7629, %v7269
        %v8350 = vmul.f32 %v7630, %v7270
        %v8351 = vmul.f32 %v7631, %v7271
        %v8352 = vmul.f32 %v7632, %v7272
        %v8353 = vmul.f32 %v7633, %v7273
        %v8354 = vmul.f32 %v7634, %v7274
        %v8355 = vmul.f32 %v7635, %v7275
        %v8356 = vmul.f32 %v7636, %v7276
        %v8357 = vmul.f32 %v7637, %v7277
        %v8358 = vmul.f32 %v7638, %v7278
        %v8359 = vmul.f32 %v7639, %v7279
        %v8360 = vmul.f32 %v7640, %v7280
        %v8361 = vmul.f32 %v7641, %v7281
        %v8362 = vmul.f32 %v7642, %v7282
        %v8363 = vmul.f32 %v7643, %v7283
        %v8364 = vmul.f32 %v7644, %v7284
        %v8365 = vmul.f32 %v7645, %v7285
        %v8366 = vmul.f32 %v7646, %v7286
        %v8367 = vmul.f32 %v7647, %v7287
        %v8368 = vmul.f32 %v7648, %v7288
        %v8369 = vmul.f32 %v7649, %v7289
        %v8370 = vmul.f32 %v7650, %v7290
        %v8371 = vmul.f32 %v7651, %v7291
        %v8372 = vmul.f32 %v7652, %v7292
        %v8373 = vmul.f32 %v7653, %v7293
        %v8374 = vmul.f32 %v7654, %v7294
        %v8375 = vmul.f32 %v7655, %v7295
        %v8376 = vmul.f32 %v7656, %v7296
        %v8377 = vmul.f32 %v7657, %v7297
        %v8378 = vmul.f32 %v7658, %v7298
        %v8379 = vmul.f32 %v7659, %v7299
        %v8380 = vmul.f32 %v7660, %v7300
        %v8381 = vmul.f32 %v7661, %v7301
        %v8382 = vmul.f32 %v7662, %v7302
        %v8383 = vmul.f32 %v7663, %v7303
        %v8384 = vmul.f32 %v7664, %v7304
        %v8385 = vmul.f32 %v7665, %v7305
        %v8386 = vmul.f32 %v7666, %v7306
        %v8387 = vmul.f32 %v7667, %v7307
        %v8388 = vmul.f32 %v7668, %v7308
        %v8389 = vmul.f32 %v7669, %v7309
        %v8390 = vmul.f32 %v7670, %v7310
        %v8391 = vmul.f32 %v7671, %v7311
        %v8392 = vmul.f32 %v7672, %v7312
        %v8393 = vmul.f32 %v7673, %v7313
        %v8394 = vmul.f32 %v7674, %v7314
        %v8395 = vmul.f32 %v7675, %v7315
        %v8396 = vmul.f32 %v7676, %v7316
        %v8397 = vmul.f32 %v7677, %v7317
        %v8398 = vmul.f32 %v7678, %v7318
        %v8399 = vmul.f32 %v7679, %v7319
        %v8400 = vmul.f32 %v7680, %v7320
        %v8401 = vmul.f32 %v7681, %v7321
        %v8402 = vmul.f32 %v7682, %v7322
        %v8403 = vmul.f32 %v7683, %v7323
        %v8404 = vmul.f32 %v7684, %v7324
        %v8405 = vmul.f32 %v7685, %v7325
        %v8406 = vmul.f32 %v7686, %v7326
        %v8407 = vmul.f32 %v7687, %v7327
        %v8408 = vmul.f32 %v7688, %v7328
        %v8409 = vmul.f32 %v7689, %v7329
        %v8410 = vmul.f32 %v7690, %v7330
        %v8411 = vmul.f32 %v7691, %v7331
        %v8412 = vmul.f32 %v7692, %v7332
        %v8413 = vmul.f32 %v7693, %v7333
        %v8414 = vmul.f32 %v7694, %v7334
        %v8415 = vmul.f32 %v7695, %v7263
        %v8416 = vmul.f32 %v7696, %v7264
        %v8417 = vmul.f32 %v7697, %v7265
        %v8418 = vmul.f32 %v7698, %v7266
        %v8419 = vmul.f32 %v7699, %v7267
        %v8420 = vmul.f32 %v7700, %v7268
        %v8421 = vmul.f32 %v7701, %v7269
        %v8422 = vmul.f32 %v7702, %v7270
        %v8423 = vmul.f32 %v7703, %v7271
        %v8424 = vmul.f32 %v7704, %v7272
        %v8425 = vmul.f32 %v7705, %v7273
        %v8426 = vmul.f32 %v7706, %v7274
        %v8427 = vmul.f32 %v7707, %v7275
        %v8428 = vmul.f32 %v7708, %v7276
        %v8429 = vmul.f32 %v7709, %v7277
        %v8430 = vmul.f32 %v7710, %v7278
        %v8431 = vmul.f32 %v7711, %v7279
        %v8432 = vmul.f32 %v7712, %v7280
        %v8433 = vmul.f32 %v7713, %v7281
        %v8434 = vmul.f32 %v7714, %v7282
        %v8435 = vmul.f32 %v7715, %v7283
        %v8436 = vmul.f32 %v7716, %v7284
        %v8437 = vmul.f32 %v7717, %v7285
        %v8438 = vmul.f32 %v7718, %v7286
        %v8439 = vmul.f32 %v7719, %v7287
        %v8440 = vmul.f32 %v7720, %v7288
        %v8441 = vmul.f32 %v7721, %v7289
        %v8442 = vmul.f32 %v7722, %v7290
        %v8443 = vmul.f32 %v7723, %v7291
        %v8444 = vmul.f32 %v7724, %v7292
        %v8445 = vmul.f32 %v7725, %v7293
        %v8446 = vmul.f32 %v7726, %v7294
        %v8447 = vmul.f32 %v7727, %v7295
        %v8448 = vmul.f32 %v7728, %v7296
        %v8449 = vmul.f32 %v7729, %v7297
        %v8450 = vmul.f32 %v7730, %v7298
        %v8451 = vmul.f32 %v7731, %v7299
        %v8452 = vmul.f32 %v7732, %v7300
        %v8453 = vmul.f32 %v7733, %v7301
        %v8454 = vmul.f32 %v7734, %v7302
        %v8455 = vmul.f32 %v7735, %v7303
        %v8456 = vmul.f32 %v7736, %v7304
        %v8457 = vmul.f32 %v7737, %v7305
        %v8458 = vmul.f32 %v7738, %v7306
        %v8459 = vmul.f32 %v7739, %v7307
        %v8460 = vmul.f32 %v7740, %v7308
        %v8461 = vmul.f32 %v7741, %v7309
        %v8462 = vmul.f32 %v7742, %v7310
        %v8463 = vmul.f32 %v7743, %v7311
        %v8464 = vmul.f32 %v7744, %v7312
        %v8465 = vmul.f32 %v7745, %v7313
        %v8466 = vmul.f32 %v7746, %v7314
        %v8467 = vmul.f32 %v7747, %v7315
        %v8468 = vmul.f32 %v7748, %v7316
        %v8469 = vmul.f32 %v7749, %v7317
        %v8470 = vmul.f32 %v7750, %v7318
        %v8471 = vmul.f32 %v7751, %v7319
        %v8472 = vmul.f32 %v7752, %v7320
        %v8473 = vmul.f32 %v7753, %v7321
        %v8474 = vmul.f32 %v7754, %v7322
        %v8475 = vmul.f32 %v7755, %v7323
        %v8476 = vmul.f32 %v7756, %v7324
        %v8477 = vmul.f32 %v7757, %v7325
        %v8478 = vmul.f32 %v7758, %v7326
        %v8479 = vmul.f32 %v7759, %v7327
        %v8480 = vmul.f32 %v7760, %v7328
        %v8481 = vmul.f32 %v7761, %v7329
        %v8482 = vmul.f32 %v7762, %v7330
        %v8483 = vmul.f32 %v7763, %v7331
        %v8484 = vmul.f32 %v7764, %v7332
        %v8485 = vmul.f32 %v7765, %v7333
        %v8486 = vmul.f32 %v7766, %v7334
        %v8487 = vmul.f32 %v7767, %v7263
        %v8488 = vmul.f32 %v7768, %v7264
        %v8489 = vmul.f32 %v7769, %v7265
        %v8490 = vmul.f32 %v7770, %v7266
        %v8491 = vmul.f32 %v7771, %v7267
        %v8492 = vmul.f32 %v7772, %v7268
        %v8493 = vmul.f32 %v7773, %v7269
        %v8494 = vmul.f32 %v7774, %v7270
        %v8495 = vmul.f32 %v7775, %v7271
        %v8496 = vmul.f32 %v7776, %v7272
        %v8497 = vmul.f32 %v7777, %v7273
        %v8498 = vmul.f32 %v7778, %v7274
        %v8499 = vmul.f32 %v7779, %v7275
        %v8500 = vmul.f32 %v7780, %v7276
        %v8501 = vmul.f32 %v7781, %v7277
        %v8502 = vmul.f32 %v7782, %v7278
        %v8503 = vmul.f32 %v7783, %v7279
        %v8504 = vmul.f32 %v7784, %v7280
        %v8505 = vmul.f32 %v7785, %v7281
        %v8506 = vmul.f32 %v7786, %v7282
        %v8507 = vmul.f32 %v7787, %v7283
        %v8508 = vmul.f32 %v7788, %v7284
        %v8509 = vmul.f32 %v7789, %v7285
        %v8510 = vmul.f32 %v7790, %v7286
        %v8511 = vmul.f32 %v7791, %v7287
        %v8512 = vmul.f32 %v7792, %v7288
        %v8513 = vmul.f32 %v7793, %v7289
        %v8514 = vmul.f32 %v7794, %v7290
        %v8515 = vmul.f32 %v7795, %v7291
        %v8516 = vmul.f32 %v7796, %v7292
        %v8517 = vmul.f32 %v7797, %v7293
        %v8518 = vmul.f32 %v7798, %v7294
        %v8519 = vmul.f32 %v7799, %v7295
        %v8520 = vmul.f32 %v7800, %v7296
        %v8521 = vmul.f32 %v7801, %v7297
        %v8522 = vmul.f32 %v7802, %v7298
        %v8523 = vmul.f32 %v7803, %v7299
        %v8524 = vmul.f32 %v7804, %v7300
        %v8525 = vmul.f32 %v7805, %v7301
        %v8526 = vmul.f32 %v7806, %v7302
        %v8527 = vmul.f32 %v7807, %v7303
        %v8528 = vmul.f32 %v7808, %v7304
        %v8529 = vmul.f32 %v7809, %v7305
        %v8530 = vmul.f32 %v7810, %v7306
        %v8531 = vmul.f32 %v7811, %v7307
        %v8532 = vmul.f32 %v7812, %v7308
        %v8533 = vmul.f32 %v7813, %v7309
        %v8534 = vmul.f32 %v7814, %v7310
        %v8535 = vmul.f32 %v7815, %v7311
        %v8536 = vmul.f32 %v7816, %v7312
        %v8537 = vmul.f32 %v7817, %v7313
        %v8538 = vmul.f32 %v7818, %v7314
        %v8539 = vmul.f32 %v7819, %v7315
        %v8540 = vmul.f32 %v7820, %v7316
        %v8541 = vmul.f32 %v7821, %v7317
        %v8542 = vmul.f32 %v7822, %v7318
        %v8543 = vmul.f32 %v7823, %v7319
        %v8544 = vmul.f32 %v7824, %v7320
        %v8545 = vmul.f32 %v7825, %v7321
        %v8546 = vmul.f32 %v7826, %v7322
        %v8547 = vmul.f32 %v7827, %v7323
        %v8548 = vmul.f32 %v7828, %v7324
        %v8549 = vmul.f32 %v7829, %v7325
        %v8550 = vmul.f32 %v7830, %v7326
        %v8551 = vmul.f32 %v7831, %v7327
        %v8552 = vmul.f32 %v7832, %v7328
        %v8553 = vmul.f32 %v7833, %v7329
        %v8554 = vmul.f32 %v7834, %v7330
        %v8555 = vmul.f32 %v7835, %v7331
        %v8556 = vmul.f32 %v7836, %v7332
        %v8557 = vmul.f32 %v7837, %v7333
        %v8558 = vmul.f32 %v7838, %v7334
        %v8559 = vmul.f32 %v7839, %v7263
        %v8560 = vmul.f32 %v7840, %v7264
        %v8561 = vmul.f32 %v7841, %v7265
        %v8562 = vmul.f32 %v7842, %v7266
        %v8563 = vmul.f32 %v7843, %v7267
        %v8564 = vmul.f32 %v7844, %v7268
        %v8565 = vmul.f32 %v7845, %v7269
        %v8566 = vmul.f32 %v7846, %v7270
        %v8567 = vmul.f32 %v7847, %v7271
        %v8568 = vmul.f32 %v7848, %v7272
        %v8569 = vmul.f32 %v7849, %v7273
        %v8570 = vmul.f32 %v7850, %v7274
        %v8571 = vmul.f32 %v7851, %v7275
        %v8572 = vmul.f32 %v7852, %v7276
        %v8573 = vmul.f32 %v7853, %v7277
        %v8574 = vmul.f32 %v7854, %v7278
        %v8575 = vmul.f32 %v7855, %v7279
        %v8576 = vmul.f32 %v7856, %v7280
        %v8577 = vmul.f32 %v7857, %v7281
        %v8578 = vmul.f32 %v7858, %v7282
        %v8579 = vmul.f32 %v7859, %v7283
        %v8580 = vmul.f32 %v7860, %v7284
        %v8581 = vmul.f32 %v7861, %v7285
        %v8582 = vmul.f32 %v7862, %v7286
        %v8583 = vmul.f32 %v7863, %v7287
        %v8584 = vmul.f32 %v7864, %v7288
        %v8585 = vmul.f32 %v7865, %v7289
        %v8586 = vmul.f32 %v7866, %v7290
        %v8587 = vmul.f32 %v7867, %v7291
        %v8588 = vmul.f32 %v7868, %v7292
        %v8589 = vmul.f32 %v7869, %v7293
        %v8590 = vmul.f32 %v7870, %v7294
        %v8591 = vmul.f32 %v7871, %v7295
        %v8592 = vmul.f32 %v7872, %v7296
        %v8593 = vmul.f32 %v7873, %v7297
        %v8594 = vmul.f32 %v7874, %v7298
        %v8595 = vmul.f32 %v7875, %v7299
        %v8596 = vmul.f32 %v7876, %v7300
        %v8597 = vmul.f32 %v7877, %v7301
        %v8598 = vmul.f32 %v7878, %v7302
        %v8599 = vmul.f32 %v7879, %v7303
        %v8600 = vmul.f32 %v7880, %v7304
        %v8601 = vmul.f32 %v7881, %v7305
        %v8602 = vmul.f32 %v7882, %v7306
        %v8603 = vmul.f32 %v7883, %v7307
        %v8604 = vmul.f32 %v7884, %v7308
        %v8605 = vmul.f32 %v7885, %v7309
        %v8606 = vmul.f32 %v7886, %v7310
        %v8607 = vmul.f32 %v7887, %v7311
        %v8608 = vmul.f32 %v7888, %v7312
        %v8609 = vmul.f32 %v7889, %v7313
        %v8610 = vmul.f32 %v7890, %v7314
        %v8611 = vmul.f32 %v7891, %v7315
        %v8612 = vmul.f32 %v7892, %v7316
        %v8613 = vmul.f32 %v7893, %v7317
        %v8614 = vmul.f32 %v7894, %v7318
        %v8615 = vmul.f32 %v7895, %v7319
        %v8616 = vmul.f32 %v7896, %v7320
        %v8617 = vmul.f32 %v7897, %v7321
        %v8618 = vmul.f32 %v7898, %v7322
        %v8619 = vmul.f32 %v7899, %v7323
        %v8620 = vmul.f32 %v7900, %v7324
        %v8621 = vmul.f32 %v7901, %v7325
        %v8622 = vmul.f32 %v7902, %v7326
        %v8623 = vmul.f32 %v7903, %v7327
        %v8624 = vmul.f32 %v7904, %v7328
        %v8625 = vmul.f32 %v7905, %v7329
        %v8626 = vmul.f32 %v7906, %v7330
        %v8627 = vmul.f32 %v7907, %v7331
        %v8628 = vmul.f32 %v7908, %v7332
        %v8629 = vmul.f32 %v7909, %v7333
        %v8630 = vmul.f32 %v7910, %v7334
        %v8631 = vmul.f32 %v7911, %v7263
        %v8632 = vmul.f32 %v7912, %v7264
        %v8633 = vmul.f32 %v7913, %v7265
        %v8634 = vmul.f32 %v7914, %v7266
        %v8635 = vmul.f32 %v7915, %v7267
        %v8636 = vmul.f32 %v7916, %v7268
        %v8637 = vmul.f32 %v7917, %v7269
        %v8638 = vmul.f32 %v7918, %v7270
        %v8639 = vmul.f32 %v7919, %v7271
        %v8640 = vmul.f32 %v7920, %v7272
        %v8641 = vmul.f32 %v7921, %v7273
        %v8642 = vmul.f32 %v7922, %v7274
        %v8643 = vmul.f32 %v7923, %v7275
        %v8644 = vmul.f32 %v7924, %v7276
        %v8645 = vmul.f32 %v7925, %v7277
        %v8646 = vmul.f32 %v7926, %v7278
        %v8647 = vmul.f32 %v7927, %v7279
        %v8648 = vmul.f32 %v7928, %v7280
        %v8649 = vmul.f32 %v7929, %v7281
        %v8650 = vmul.f32 %v7930, %v7282
        %v8651 = vmul.f32 %v7931, %v7283
        %v8652 = vmul.f32 %v7932, %v7284
        %v8653 = vmul.f32 %v7933, %v7285
        %v8654 = vmul.f32 %v7934, %v7286
        %v8655 = vmul.f32 %v7935, %v7287
        %v8656 = vmul.f32 %v7936, %v7288
        %v8657 = vmul.f32 %v7937, %v7289
        %v8658 = vmul.f32 %v7938, %v7290
        %v8659 = vmul.f32 %v7939, %v7291
        %v8660 = vmul.f32 %v7940, %v7292
        %v8661 = vmul.f32 %v7941, %v7293
        %v8662 = vmul.f32 %v7942, %v7294
        %v8663 = vmul.f32 %v7943, %v7295
        %v8664 = vmul.f32 %v7944, %v7296
        %v8665 = vmul.f32 %v7945, %v7297
        %v8666 = vmul.f32 %v7946, %v7298
        %v8667 = vmul.f32 %v7947, %v7299
        %v8668 = vmul.f32 %v7948, %v7300
        %v8669 = vmul.f32 %v7949, %v7301
        %v8670 = vmul.f32 %v7950, %v7302
        %v8671 = vmul.f32 %v7951, %v7303
        %v8672 = vmul.f32 %v7952, %v7304
        %v8673 = vmul.f32 %v7953, %v7305
        %v8674 = vmul.f32 %v7954, %v7306
        %v8675 = vmul.f32 %v7955, %v7307
        %v8676 = vmul.f32 %v7956, %v7308
        %v8677 = vmul.f32 %v7957, %v7309
        %v8678 = vmul.f32 %v7958, %v7310
        %v8679 = vmul.f32 %v7959, %v7311
        %v8680 = vmul.f32 %v7960, %v7312
        %v8681 = vmul.f32 %v7961, %v7313
        %v8682 = vmul.f32 %v7962, %v7314
        %v8683 = vmul.f32 %v7963, %v7315
        %v8684 = vmul.f32 %v7964, %v7316
        %v8685 = vmul.f32 %v7965, %v7317
        %v8686 = vmul.f32 %v7966, %v7318
        %v8687 = vmul.f32 %v7967, %v7319
        %v8688 = vmul.f32 %v7968, %v7320
        %v8689 = vmul.f32 %v7969, %v7321
        %v8690 = vmul.f32 %v7970, %v7322
        %v8691 = vmul.f32 %v7971, %v7323
        %v8692 = vmul.f32 %v7972, %v7324
        %v8693 = vmul.f32 %v7973, %v7325
        %v8694 = vmul.f32 %v7974, %v7326
        %v8695 = vmul.f32 %v7975, %v7327
        %v8696 = vmul.f32 %v7976, %v7328
        %v8697 = vmul.f32 %v7977, %v7329
        %v8698 = vmul.f32 %v7978, %v7330
        %v8699 = vmul.f32 %v7979, %v7331
        %v8700 = vmul.f32 %v7980, %v7332
        %v8701 = vmul.f32 %v7981, %v7333
        %v8702 = vmul.f32 %v7982, %v7334
        %v8703 = vmul.f32 %v7983, %v7263
        %v8704 = vmul.f32 %v7984, %v7264
        %v8705 = vmul.f32 %v7985, %v7265
        %v8706 = vmul.f32 %v7986, %v7266
        %v8707 = vmul.f32 %v7987, %v7267
        %v8708 = vmul.f32 %v7988, %v7268
        %v8709 = vmul.f32 %v7989, %v7269
        %v8710 = vmul.f32 %v7990, %v7270
        %v8711 = vmul.f32 %v7991, %v7271
        %v8712 = vmul.f32 %v7992, %v7272
        %v8713 = vmul.f32 %v7993, %v7273
        %v8714 = vmul.f32 %v7994, %v7274
        %v8715 = vmul.f32 %v7995, %v7275
        %v8716 = vmul.f32 %v7996, %v7276
        %v8717 = vmul.f32 %v7997, %v7277
        %v8718 = vmul.f32 %v7998, %v7278
        %v8719 = vmul.f32 %v7999, %v7279
        %v8720 = vmul.f32 %v8000, %v7280
        %v8721 = vmul.f32 %v8001, %v7281
        %v8722 = vmul.f32 %v8002, %v7282
        %v8723 = vmul.f32 %v8003, %v7283
        %v8724 = vmul.f32 %v8004, %v7284
        %v8725 = vmul.f32 %v8005, %v7285
        %v8726 = vmul.f32 %v8006, %v7286
        %v8727 = vmul.f32 %v8007, %v7287
        %v8728 = vmul.f32 %v8008, %v7288
        %v8729 = vmul.f32 %v8009, %v7289
        %v8730 = vmul.f32 %v8010, %v7290
        %v8731 = vmul.f32 %v8011, %v7291
        %v8732 = vmul.f32 %v8012, %v7292
        %v8733 = vmul.f32 %v8013, %v7293
        %v8734 = vmul.f32 %v8014, %v7294
        %v8735 = vmul.f32 %v8015, %v7295
        %v8736 = vmul.f32 %v8016, %v7296
        %v8737 = vmul.f32 %v8017, %v7297
        %v8738 = vmul.f32 %v8018, %v7298
        %v8739 = vmul.f32 %v8019, %v7299
        %v8740 = vmul.f32 %v8020, %v7300
        %v8741 = vmul.f32 %v8021, %v7301
        %v8742 = vmul.f32 %v8022, %v7302
        %v8743 = vmul.f32 %v8023, %v7303
        %v8744 = vmul.f32 %v8024, %v7304
        %v8745 = vmul.f32 %v8025, %v7305
        %v8746 = vmul.f32 %v8026, %v7306
        %v8747 = vmul.f32 %v8027, %v7307
        %v8748 = vmul.f32 %v8028, %v7308
        %v8749 = vmul.f32 %v8029, %v7309
        %v8750 = vmul.f32 %v8030, %v7310
        %v8751 = vmul.f32 %v8031, %v7311
        %v8752 = vmul.f32 %v8032, %v7312
        %v8753 = vmul.f32 %v8033, %v7313
        %v8754 = vmul.f32 %v8034, %v7314
        %v8755 = vmul.f32 %v8035, %v7315
        %v8756 = vmul.f32 %v8036, %v7316
        %v8757 = vmul.f32 %v8037, %v7317
        %v8758 = vmul.f32 %v8038, %v7318
        %v8759 = vmul.f32 %v8039, %v7319
        %v8760 = vmul.f32 %v8040, %v7320
        %v8761 = vmul.f32 %v8041, %v7321
        %v8762 = vmul.f32 %v8042, %v7322
        %v8763 = vmul.f32 %v8043, %v7323
        %v8764 = vmul.f32 %v8044, %v7324
        %v8765 = vmul.f32 %v8045, %v7325
        %v8766 = vmul.f32 %v8046, %v7326
        %v8767 = vmul.f32 %v8047, %v7327
        %v8768 = vmul.f32 %v8048, %v7328
        %v8769 = vmul.f32 %v8049, %v7329
        %v8770 = vmul.f32 %v8050, %v7330
        %v8771 = vmul.f32 %v8051, %v7331
        %v8772 = vmul.f32 %v8052, %v7332
        %v8773 = vmul.f32 %v8053, %v7333
        %v8774 = vmul.f32 %v8054, %v7334
        %v8775 = vsel %vm2038, %v8055, 0.0
        %v8776 = vsel %vm2038, %v8056, 0.0
        %v8777 = vadd.f32 %v8775, %v8776
        %v8778 = vsel %vm2038, %v8057, 0.0
        %v8779 = vadd.f32 %v8777, %v8778
        %v8780 = vsel %vm2038, %v8058, 0.0
        %v8781 = vadd.f32 %v8779, %v8780
        %v8782 = vsel %vm2038, %v8059, 0.0
        %v8783 = vadd.f32 %v8781, %v8782
        %v8784 = vsel %vm2038, %v8060, 0.0
        %v8785 = vadd.f32 %v8783, %v8784
        %v8786 = vsel %vm2038, %v8061, 0.0
        %v8787 = vadd.f32 %v8785, %v8786
        %v8788 = vsel %vm2038, %v8062, 0.0
        %v8789 = vadd.f32 %v8787, %v8788
        %v8790 = vsel %vm2038, %v8063, 0.0
        %v8791 = vadd.f32 %v8789, %v8790
        %v8792 = vsel %vm2038, %v8064, 0.0
        %v8793 = vadd.f32 %v8791, %v8792
        %v8794 = vsel %vm2038, %v8065, 0.0
        %v8795 = vadd.f32 %v8793, %v8794
        %v8796 = vsel %vm2038, %v8066, 0.0
        %v8797 = vadd.f32 %v8795, %v8796
        %v8798 = vsel %vm2038, %v8067, 0.0
        %v8799 = vadd.f32 %v8797, %v8798
        %v8800 = vsel %vm2038, %v8068, 0.0
        %v8801 = vadd.f32 %v8799, %v8800
        %v8802 = vsel %vm2038, %v8069, 0.0
        %v8803 = vadd.f32 %v8801, %v8802
        %v8804 = vsel %vm2038, %v8070, 0.0
        %v8805 = vadd.f32 %v8803, %v8804
        %v8806 = vsel %vm2038, %v8071, 0.0
        %v8807 = vadd.f32 %v8805, %v8806
        %v8808 = vsel %vm2038, %v8072, 0.0
        %v8809 = vadd.f32 %v8807, %v8808
        %v8810 = vsel %vm2038, %v8073, 0.0
        %v8811 = vadd.f32 %v8809, %v8810
        %v8812 = vsel %vm2038, %v8074, 0.0
        %v8813 = vadd.f32 %v8811, %v8812
        %v8814 = vsel %vm2038, %v8075, 0.0
        %v8815 = vadd.f32 %v8813, %v8814
        %v8816 = vsel %vm2038, %v8076, 0.0
        %v8817 = vadd.f32 %v8815, %v8816
        %v8818 = vsel %vm2038, %v8077, 0.0
        %v8819 = vadd.f32 %v8817, %v8818
        %v8820 = vsel %vm2038, %v8078, 0.0
        %v8821 = vadd.f32 %v8819, %v8820
        %v8822 = vsel %vm2038, %v8079, 0.0
        %v8823 = vadd.f32 %v8821, %v8822
        %v8824 = vsel %vm2038, %v8080, 0.0
        %v8825 = vadd.f32 %v8823, %v8824
        %v8826 = vsel %vm2038, %v8081, 0.0
        %v8827 = vadd.f32 %v8825, %v8826
        %v8828 = vsel %vm2038, %v8082, 0.0
        %v8829 = vadd.f32 %v8827, %v8828
        %v8830 = vsel %vm2038, %v8083, 0.0
        %v8831 = vadd.f32 %v8829, %v8830
        %v8832 = vsel %vm2038, %v8084, 0.0
        %v8833 = vadd.f32 %v8831, %v8832
        %v8834 = vsel %vm2038, %v8085, 0.0
        %v8835 = vadd.f32 %v8833, %v8834
        %v8836 = vsel %vm2038, %v8086, 0.0
        %v8837 = vadd.f32 %v8835, %v8836
        %v8838 = vsel %vm2038, %v8087, 0.0
        %v8839 = vadd.f32 %v8837, %v8838
        %v8840 = vsel %vm2038, %v8088, 0.0
        %v8841 = vadd.f32 %v8839, %v8840
        %v8842 = vsel %vm2038, %v8089, 0.0
        %v8843 = vadd.f32 %v8841, %v8842
        %v8844 = vsel %vm2038, %v8090, 0.0
        %v8845 = vadd.f32 %v8843, %v8844
        %v8846 = vsel %vm2038, %v8091, 0.0
        %v8847 = vadd.f32 %v8845, %v8846
        %v8848 = vsel %vm2038, %v8092, 0.0
        %v8849 = vadd.f32 %v8847, %v8848
        %v8850 = vsel %vm2038, %v8093, 0.0
        %v8851 = vadd.f32 %v8849, %v8850
        %v8852 = vsel %vm2038, %v8094, 0.0
        %v8853 = vadd.f32 %v8851, %v8852
        %v8854 = vsel %vm2038, %v8095, 0.0
        %v8855 = vadd.f32 %v8853, %v8854
        %v8856 = vsel %vm2038, %v8096, 0.0
        %v8857 = vadd.f32 %v8855, %v8856
        %v8858 = vsel %vm2038, %v8097, 0.0
        %v8859 = vadd.f32 %v8857, %v8858
        %v8860 = vsel %vm2038, %v8098, 0.0
        %v8861 = vadd.f32 %v8859, %v8860
        %v8862 = vsel %vm2038, %v8099, 0.0
        %v8863 = vadd.f32 %v8861, %v8862
        %v8864 = vsel %vm2038, %v8100, 0.0
        %v8865 = vadd.f32 %v8863, %v8864
        %v8866 = vsel %vm2038, %v8101, 0.0
        %v8867 = vadd.f32 %v8865, %v8866
        %v8868 = vsel %vm2038, %v8102, 0.0
        %v8869 = vadd.f32 %v8867, %v8868
        %v8870 = vsel %vm2038, %v8103, 0.0
        %v8871 = vadd.f32 %v8869, %v8870
        %v8872 = vsel %vm2038, %v8104, 0.0
        %v8873 = vadd.f32 %v8871, %v8872
        %v8874 = vsel %vm2038, %v8105, 0.0
        %v8875 = vadd.f32 %v8873, %v8874
        %v8876 = vsel %vm2038, %v8106, 0.0
        %v8877 = vadd.f32 %v8875, %v8876
        %v8878 = vsel %vm2038, %v8107, 0.0
        %v8879 = vadd.f32 %v8877, %v8878
        %v8880 = vsel %vm2038, %v8108, 0.0
        %v8881 = vadd.f32 %v8879, %v8880
        %v8882 = vsel %vm2038, %v8109, 0.0
        %v8883 = vadd.f32 %v8881, %v8882
        %v8884 = vsel %vm2038, %v8110, 0.0
        %v8885 = vadd.f32 %v8883, %v8884
        %v8886 = vsel %vm2038, %v8111, 0.0
        %v8887 = vadd.f32 %v8885, %v8886
        %v8888 = vsel %vm2038, %v8112, 0.0
        %v8889 = vadd.f32 %v8887, %v8888
        %v8890 = vsel %vm2038, %v8113, 0.0
        %v8891 = vadd.f32 %v8889, %v8890
        %v8892 = vsel %vm2038, %v8114, 0.0
        %v8893 = vadd.f32 %v8891, %v8892
        %v8894 = vsel %vm2038, %v8115, 0.0
        %v8895 = vadd.f32 %v8893, %v8894
        %v8896 = vsel %vm2038, %v8116, 0.0
        %v8897 = vadd.f32 %v8895, %v8896
        %v8898 = vsel %vm2038, %v8117, 0.0
        %v8899 = vadd.f32 %v8897, %v8898
        %v8900 = vsel %vm2038, %v8118, 0.0
        %v8901 = vadd.f32 %v8899, %v8900
        %v8902 = vsel %vm2038, %v8119, 0.0
        %v8903 = vadd.f32 %v8901, %v8902
        %v8904 = vsel %vm2038, %v8120, 0.0
        %v8905 = vadd.f32 %v8903, %v8904
        %v8906 = vsel %vm2038, %v8121, 0.0
        %v8907 = vadd.f32 %v8905, %v8906
        %v8908 = vsel %vm2038, %v8122, 0.0
        %v8909 = vadd.f32 %v8907, %v8908
        %v8910 = vsel %vm2038, %v8123, 0.0
        %v8911 = vadd.f32 %v8909, %v8910
        %v8912 = vsel %vm2038, %v8124, 0.0
        %v8913 = vadd.f32 %v8911, %v8912
        %v8914 = vsel %vm2038, %v8125, 0.0
        %v8915 = vadd.f32 %v8913, %v8914
        %v8916 = vsel %vm2038, %v8126, 0.0
        %v8917 = vadd.f32 %v8915, %v8916
        %v8918 = vrot.slane %v8917, 4
        %v8919 = vadd.f32 %v8917, %v8918
        %v8920 = vrot.slane %v8919, 2
        %v8921 = vadd.f32 %v8919, %v8920
        %v8922 = vrot.slane %v8921, 1
        %v8923 = vadd.f32 %v8921, %v8922
        %v8924 = vsel %vm2038, %v8127, 0.0
        %v8925 = vsel %vm2038, %v8128, 0.0
        %v8926 = vadd.f32 %v8924, %v8925
        %v8927 = vsel %vm2038, %v8129, 0.0
        %v8928 = vadd.f32 %v8926, %v8927
        %v8929 = vsel %vm2038, %v8130, 0.0
        %v8930 = vadd.f32 %v8928, %v8929
        %v8931 = vsel %vm2038, %v8131, 0.0
        %v8932 = vadd.f32 %v8930, %v8931
        %v8933 = vsel %vm2038, %v8132, 0.0
        %v8934 = vadd.f32 %v8932, %v8933
        %v8935 = vsel %vm2038, %v8133, 0.0
        %v8936 = vadd.f32 %v8934, %v8935
        %v8937 = vsel %vm2038, %v8134, 0.0
        %v8938 = vadd.f32 %v8936, %v8937
        %v8939 = vsel %vm2038, %v8135, 0.0
        %v8940 = vadd.f32 %v8938, %v8939
        %v8941 = vsel %vm2038, %v8136, 0.0
        %v8942 = vadd.f32 %v8940, %v8941
        %v8943 = vsel %vm2038, %v8137, 0.0
        %v8944 = vadd.f32 %v8942, %v8943
        %v8945 = vsel %vm2038, %v8138, 0.0
        %v8946 = vadd.f32 %v8944, %v8945
        %v8947 = vsel %vm2038, %v8139, 0.0
        %v8948 = vadd.f32 %v8946, %v8947
        %v8949 = vsel %vm2038, %v8140, 0.0
        %v8950 = vadd.f32 %v8948, %v8949
        %v8951 = vsel %vm2038, %v8141, 0.0
        %v8952 = vadd.f32 %v8950, %v8951
        %v8953 = vsel %vm2038, %v8142, 0.0
        %v8954 = vadd.f32 %v8952, %v8953
        %v8955 = vsel %vm2038, %v8143, 0.0
        %v8956 = vadd.f32 %v8954, %v8955
        %v8957 = vsel %vm2038, %v8144, 0.0
        %v8958 = vadd.f32 %v8956, %v8957
        %v8959 = vsel %vm2038, %v8145, 0.0
        %v8960 = vadd.f32 %v8958, %v8959
        %v8961 = vsel %vm2038, %v8146, 0.0
        %v8962 = vadd.f32 %v8960, %v8961
        %v8963 = vsel %vm2038, %v8147, 0.0
        %v8964 = vadd.f32 %v8962, %v8963
        %v8965 = vsel %vm2038, %v8148, 0.0
        %v8966 = vadd.f32 %v8964, %v8965
        %v8967 = vsel %vm2038, %v8149, 0.0
        %v8968 = vadd.f32 %v8966, %v8967
        %v8969 = vsel %vm2038, %v8150, 0.0
        %v8970 = vadd.f32 %v8968, %v8969
        %v8971 = vsel %vm2038, %v8151, 0.0
        %v8972 = vadd.f32 %v8970, %v8971
        %v8973 = vsel %vm2038, %v8152, 0.0
        %v8974 = vadd.f32 %v8972, %v8973
        %v8975 = vsel %vm2038, %v8153, 0.0
        %v8976 = vadd.f32 %v8974, %v8975
        %v8977 = vsel %vm2038, %v8154, 0.0
        %v8978 = vadd.f32 %v8976, %v8977
        %v8979 = vsel %vm2038, %v8155, 0.0
        %v8980 = vadd.f32 %v8978, %v8979
        %v8981 = vsel %vm2038, %v8156, 0.0
        %v8982 = vadd.f32 %v8980, %v8981
        %v8983 = vsel %vm2038, %v8157, 0.0
        %v8984 = vadd.f32 %v8982, %v8983
        %v8985 = vsel %vm2038, %v8158, 0.0
        %v8986 = vadd.f32 %v8984, %v8985
        %v8987 = vsel %vm2038, %v8159, 0.0
        %v8988 = vadd.f32 %v8986, %v8987
        %v8989 = vsel %vm2038, %v8160, 0.0
        %v8990 = vadd.f32 %v8988, %v8989
        %v8991 = vsel %vm2038, %v8161, 0.0
        %v8992 = vadd.f32 %v8990, %v8991
        %v8993 = vsel %vm2038, %v8162, 0.0
        %v8994 = vadd.f32 %v8992, %v8993
        %v8995 = vsel %vm2038, %v8163, 0.0
        %v8996 = vadd.f32 %v8994, %v8995
        %v8997 = vsel %vm2038, %v8164, 0.0
        %v8998 = vadd.f32 %v8996, %v8997
        %v8999 = vsel %vm2038, %v8165, 0.0
        %v9000 = vadd.f32 %v8998, %v8999
        %v9001 = vsel %vm2038, %v8166, 0.0
        %v9002 = vadd.f32 %v9000, %v9001
        %v9003 = vsel %vm2038, %v8167, 0.0
        %v9004 = vadd.f32 %v9002, %v9003
        %v9005 = vsel %vm2038, %v8168, 0.0
        %v9006 = vadd.f32 %v9004, %v9005
        %v9007 = vsel %vm2038, %v8169, 0.0
        %v9008 = vadd.f32 %v9006, %v9007
        %v9009 = vsel %vm2038, %v8170, 0.0
        %v9010 = vadd.f32 %v9008, %v9009
        %v9011 = vsel %vm2038, %v8171, 0.0
        %v9012 = vadd.f32 %v9010, %v9011
        %v9013 = vsel %vm2038, %v8172, 0.0
        %v9014 = vadd.f32 %v9012, %v9013
        %v9015 = vsel %vm2038, %v8173, 0.0
        %v9016 = vadd.f32 %v9014, %v9015
        %v9017 = vsel %vm2038, %v8174, 0.0
        %v9018 = vadd.f32 %v9016, %v9017
        %v9019 = vsel %vm2038, %v8175, 0.0
        %v9020 = vadd.f32 %v9018, %v9019
        %v9021 = vsel %vm2038, %v8176, 0.0
        %v9022 = vadd.f32 %v9020, %v9021
        %v9023 = vsel %vm2038, %v8177, 0.0
        %v9024 = vadd.f32 %v9022, %v9023
        %v9025 = vsel %vm2038, %v8178, 0.0
        %v9026 = vadd.f32 %v9024, %v9025
        %v9027 = vsel %vm2038, %v8179, 0.0
        %v9028 = vadd.f32 %v9026, %v9027
        %v9029 = vsel %vm2038, %v8180, 0.0
        %v9030 = vadd.f32 %v9028, %v9029
        %v9031 = vsel %vm2038, %v8181, 0.0
        %v9032 = vadd.f32 %v9030, %v9031
        %v9033 = vsel %vm2038, %v8182, 0.0
        %v9034 = vadd.f32 %v9032, %v9033
        %v9035 = vsel %vm2038, %v8183, 0.0
        %v9036 = vadd.f32 %v9034, %v9035
        %v9037 = vsel %vm2038, %v8184, 0.0
        %v9038 = vadd.f32 %v9036, %v9037
        %v9039 = vsel %vm2038, %v8185, 0.0
        %v9040 = vadd.f32 %v9038, %v9039
        %v9041 = vsel %vm2038, %v8186, 0.0
        %v9042 = vadd.f32 %v9040, %v9041
        %v9043 = vsel %vm2038, %v8187, 0.0
        %v9044 = vadd.f32 %v9042, %v9043
        %v9045 = vsel %vm2038, %v8188, 0.0
        %v9046 = vadd.f32 %v9044, %v9045
        %v9047 = vsel %vm2038, %v8189, 0.0
        %v9048 = vadd.f32 %v9046, %v9047
        %v9049 = vsel %vm2038, %v8190, 0.0
        %v9050 = vadd.f32 %v9048, %v9049
        %v9051 = vsel %vm2038, %v8191, 0.0
        %v9052 = vadd.f32 %v9050, %v9051
        %v9053 = vsel %vm2038, %v8192, 0.0
        %v9054 = vadd.f32 %v9052, %v9053
        %v9055 = vsel %vm2038, %v8193, 0.0
        %v9056 = vadd.f32 %v9054, %v9055
        %v9057 = vsel %vm2038, %v8194, 0.0
        %v9058 = vadd.f32 %v9056, %v9057
        %v9059 = vsel %vm2038, %v8195, 0.0
        %v9060 = vadd.f32 %v9058, %v9059
        %v9061 = vsel %vm2038, %v8196, 0.0
        %v9062 = vadd.f32 %v9060, %v9061
        %v9063 = vsel %vm2038, %v8197, 0.0
        %v9064 = vadd.f32 %v9062, %v9063
        %v9065 = vsel %vm2038, %v8198, 0.0
        %v9066 = vadd.f32 %v9064, %v9065
        %v9067 = vrot.slane %v9066, 4
        %v9068 = vadd.f32 %v9066, %v9067
        %v9069 = vrot.slane %v9068, 2
        %v9070 = vadd.f32 %v9068, %v9069
        %v9071 = vrot.slane %v9070, 1
        %v9072 = vadd.f32 %v9070, %v9071
        %v9073 = vsel %vm2038, %v8199, 0.0
        %v9074 = vsel %vm2038, %v8200, 0.0
        %v9075 = vadd.f32 %v9073, %v9074
        %v9076 = vsel %vm2038, %v8201, 0.0
        %v9077 = vadd.f32 %v9075, %v9076
        %v9078 = vsel %vm2038, %v8202, 0.0
        %v9079 = vadd.f32 %v9077, %v9078
        %v9080 = vsel %vm2038, %v8203, 0.0
        %v9081 = vadd.f32 %v9079, %v9080
        %v9082 = vsel %vm2038, %v8204, 0.0
        %v9083 = vadd.f32 %v9081, %v9082
        %v9084 = vsel %vm2038, %v8205, 0.0
        %v9085 = vadd.f32 %v9083, %v9084
        %v9086 = vsel %vm2038, %v8206, 0.0
        %v9087 = vadd.f32 %v9085, %v9086
        %v9088 = vsel %vm2038, %v8207, 0.0
        %v9089 = vadd.f32 %v9087, %v9088
        %v9090 = vsel %vm2038, %v8208, 0.0
        %v9091 = vadd.f32 %v9089, %v9090
        %v9092 = vsel %vm2038, %v8209, 0.0
        %v9093 = vadd.f32 %v9091, %v9092
        %v9094 = vsel %vm2038, %v8210, 0.0
        %v9095 = vadd.f32 %v9093, %v9094
        %v9096 = vsel %vm2038, %v8211, 0.0
        %v9097 = vadd.f32 %v9095, %v9096
        %v9098 = vsel %vm2038, %v8212, 0.0
        %v9099 = vadd.f32 %v9097, %v9098
        %v9100 = vsel %vm2038, %v8213, 0.0
        %v9101 = vadd.f32 %v9099, %v9100
        %v9102 = vsel %vm2038, %v8214, 0.0
        %v9103 = vadd.f32 %v9101, %v9102
        %v9104 = vsel %vm2038, %v8215, 0.0
        %v9105 = vadd.f32 %v9103, %v9104
        %v9106 = vsel %vm2038, %v8216, 0.0
        %v9107 = vadd.f32 %v9105, %v9106
        %v9108 = vsel %vm2038, %v8217, 0.0
        %v9109 = vadd.f32 %v9107, %v9108
        %v9110 = vsel %vm2038, %v8218, 0.0
        %v9111 = vadd.f32 %v9109, %v9110
        %v9112 = vsel %vm2038, %v8219, 0.0
        %v9113 = vadd.f32 %v9111, %v9112
        %v9114 = vsel %vm2038, %v8220, 0.0
        %v9115 = vadd.f32 %v9113, %v9114
        %v9116 = vsel %vm2038, %v8221, 0.0
        %v9117 = vadd.f32 %v9115, %v9116
        %v9118 = vsel %vm2038, %v8222, 0.0
        %v9119 = vadd.f32 %v9117, %v9118
        %v9120 = vsel %vm2038, %v8223, 0.0
        %v9121 = vadd.f32 %v9119, %v9120
        %v9122 = vsel %vm2038, %v8224, 0.0
        %v9123 = vadd.f32 %v9121, %v9122
        %v9124 = vsel %vm2038, %v8225, 0.0
        %v9125 = vadd.f32 %v9123, %v9124
        %v9126 = vsel %vm2038, %v8226, 0.0
        %v9127 = vadd.f32 %v9125, %v9126
        %v9128 = vsel %vm2038, %v8227, 0.0
        %v9129 = vadd.f32 %v9127, %v9128
        %v9130 = vsel %vm2038, %v8228, 0.0
        %v9131 = vadd.f32 %v9129, %v9130
        %v9132 = vsel %vm2038, %v8229, 0.0
        %v9133 = vadd.f32 %v9131, %v9132
        %v9134 = vsel %vm2038, %v8230, 0.0
        %v9135 = vadd.f32 %v9133, %v9134
        %v9136 = vsel %vm2038, %v8231, 0.0
        %v9137 = vadd.f32 %v9135, %v9136
        %v9138 = vsel %vm2038, %v8232, 0.0
        %v9139 = vadd.f32 %v9137, %v9138
        %v9140 = vsel %vm2038, %v8233, 0.0
        %v9141 = vadd.f32 %v9139, %v9140
        %v9142 = vsel %vm2038, %v8234, 0.0
        %v9143 = vadd.f32 %v9141, %v9142
        %v9144 = vsel %vm2038, %v8235, 0.0
        %v9145 = vadd.f32 %v9143, %v9144
        %v9146 = vsel %vm2038, %v8236, 0.0
        %v9147 = vadd.f32 %v9145, %v9146
        %v9148 = vsel %vm2038, %v8237, 0.0
        %v9149 = vadd.f32 %v9147, %v9148
        %v9150 = vsel %vm2038, %v8238, 0.0
        %v9151 = vadd.f32 %v9149, %v9150
        %v9152 = vsel %vm2038, %v8239, 0.0
        %v9153 = vadd.f32 %v9151, %v9152
        %v9154 = vsel %vm2038, %v8240, 0.0
        %v9155 = vadd.f32 %v9153, %v9154
        %v9156 = vsel %vm2038, %v8241, 0.0
        %v9157 = vadd.f32 %v9155, %v9156
        %v9158 = vsel %vm2038, %v8242, 0.0
        %v9159 = vadd.f32 %v9157, %v9158
        %v9160 = vsel %vm2038, %v8243, 0.0
        %v9161 = vadd.f32 %v9159, %v9160
        %v9162 = vsel %vm2038, %v8244, 0.0
        %v9163 = vadd.f32 %v9161, %v9162
        %v9164 = vsel %vm2038, %v8245, 0.0
        %v9165 = vadd.f32 %v9163, %v9164
        %v9166 = vsel %vm2038, %v8246, 0.0
        %v9167 = vadd.f32 %v9165, %v9166
        %v9168 = vsel %vm2038, %v8247, 0.0
        %v9169 = vadd.f32 %v9167, %v9168
        %v9170 = vsel %vm2038, %v8248, 0.0
        %v9171 = vadd.f32 %v9169, %v9170
        %v9172 = vsel %vm2038, %v8249, 0.0
        %v9173 = vadd.f32 %v9171, %v9172
        %v9174 = vsel %vm2038, %v8250, 0.0
        %v9175 = vadd.f32 %v9173, %v9174
        %v9176 = vsel %vm2038, %v8251, 0.0
        %v9177 = vadd.f32 %v9175, %v9176
        %v9178 = vsel %vm2038, %v8252, 0.0
        %v9179 = vadd.f32 %v9177, %v9178
        %v9180 = vsel %vm2038, %v8253, 0.0
        %v9181 = vadd.f32 %v9179, %v9180
        %v9182 = vsel %vm2038, %v8254, 0.0
        %v9183 = vadd.f32 %v9181, %v9182
        %v9184 = vsel %vm2038, %v8255, 0.0
        %v9185 = vadd.f32 %v9183, %v9184
        %v9186 = vsel %vm2038, %v8256, 0.0
        %v9187 = vadd.f32 %v9185, %v9186
        %v9188 = vsel %vm2038, %v8257, 0.0
        %v9189 = vadd.f32 %v9187, %v9188
        %v9190 = vsel %vm2038, %v8258, 0.0
        %v9191 = vadd.f32 %v9189, %v9190
        %v9192 = vsel %vm2038, %v8259, 0.0
        %v9193 = vadd.f32 %v9191, %v9192
        %v9194 = vsel %vm2038, %v8260, 0.0
        %v9195 = vadd.f32 %v9193, %v9194
        %v9196 = vsel %vm2038, %v8261, 0.0
        %v9197 = vadd.f32 %v9195, %v9196
        %v9198 = vsel %vm2038, %v8262, 0.0
        %v9199 = vadd.f32 %v9197, %v9198
        %v9200 = vsel %vm2038, %v8263, 0.0
        %v9201 = vadd.f32 %v9199, %v9200
        %v9202 = vsel %vm2038, %v8264, 0.0
        %v9203 = vadd.f32 %v9201, %v9202
        %v9204 = vsel %vm2038, %v8265, 0.0
        %v9205 = vadd.f32 %v9203, %v9204
        %v9206 = vsel %vm2038, %v8266, 0.0
        %v9207 = vadd.f32 %v9205, %v9206
        %v9208 = vsel %vm2038, %v8267, 0.0
        %v9209 = vadd.f32 %v9207, %v9208
        %v9210 = vsel %vm2038, %v8268, 0.0
        %v9211 = vadd.f32 %v9209, %v9210
        %v9212 = vsel %vm2038, %v8269, 0.0
        %v9213 = vadd.f32 %v9211, %v9212
        %v9214 = vsel %vm2038, %v8270, 0.0
        %v9215 = vadd.f32 %v9213, %v9214
        %v9216 = vrot.slane %v9215, 4
        %v9217 = vadd.f32 %v9215, %v9216
        %v9218 = vrot.slane %v9217, 2
        %v9219 = vadd.f32 %v9217, %v9218
        %v9220 = vrot.slane %v9219, 1
        %v9221 = vadd.f32 %v9219, %v9220
        %v9222 = vsel %vm2038, %v8271, 0.0
        %v9223 = vsel %vm2038, %v8272, 0.0
        %v9224 = vadd.f32 %v9222, %v9223
        %v9225 = vsel %vm2038, %v8273, 0.0
        %v9226 = vadd.f32 %v9224, %v9225
        %v9227 = vsel %vm2038, %v8274, 0.0
        %v9228 = vadd.f32 %v9226, %v9227
        %v9229 = vsel %vm2038, %v8275, 0.0
        %v9230 = vadd.f32 %v9228, %v9229
        %v9231 = vsel %vm2038, %v8276, 0.0
        %v9232 = vadd.f32 %v9230, %v9231
        %v9233 = vsel %vm2038, %v8277, 0.0
        %v9234 = vadd.f32 %v9232, %v9233
        %v9235 = vsel %vm2038, %v8278, 0.0
        %v9236 = vadd.f32 %v9234, %v9235
        %v9237 = vsel %vm2038, %v8279, 0.0
        %v9238 = vadd.f32 %v9236, %v9237
        %v9239 = vsel %vm2038, %v8280, 0.0
        %v9240 = vadd.f32 %v9238, %v9239
        %v9241 = vsel %vm2038, %v8281, 0.0
        %v9242 = vadd.f32 %v9240, %v9241
        %v9243 = vsel %vm2038, %v8282, 0.0
        %v9244 = vadd.f32 %v9242, %v9243
        %v9245 = vsel %vm2038, %v8283, 0.0
        %v9246 = vadd.f32 %v9244, %v9245
        %v9247 = vsel %vm2038, %v8284, 0.0
        %v9248 = vadd.f32 %v9246, %v9247
        %v9249 = vsel %vm2038, %v8285, 0.0
        %v9250 = vadd.f32 %v9248, %v9249
        %v9251 = vsel %vm2038, %v8286, 0.0
        %v9252 = vadd.f32 %v9250, %v9251
        %v9253 = vsel %vm2038, %v8287, 0.0
        %v9254 = vadd.f32 %v9252, %v9253
        %v9255 = vsel %vm2038, %v8288, 0.0
        %v9256 = vadd.f32 %v9254, %v9255
        %v9257 = vsel %vm2038, %v8289, 0.0
        %v9258 = vadd.f32 %v9256, %v9257
        %v9259 = vsel %vm2038, %v8290, 0.0
        %v9260 = vadd.f32 %v9258, %v9259
        %v9261 = vsel %vm2038, %v8291, 0.0
        %v9262 = vadd.f32 %v9260, %v9261
        %v9263 = vsel %vm2038, %v8292, 0.0
        %v9264 = vadd.f32 %v9262, %v9263
        %v9265 = vsel %vm2038, %v8293, 0.0
        %v9266 = vadd.f32 %v9264, %v9265
        %v9267 = vsel %vm2038, %v8294, 0.0
        %v9268 = vadd.f32 %v9266, %v9267
        %v9269 = vsel %vm2038, %v8295, 0.0
        %v9270 = vadd.f32 %v9268, %v9269
        %v9271 = vsel %vm2038, %v8296, 0.0
        %v9272 = vadd.f32 %v9270, %v9271
        %v9273 = vsel %vm2038, %v8297, 0.0
        %v9274 = vadd.f32 %v9272, %v9273
        %v9275 = vsel %vm2038, %v8298, 0.0
        %v9276 = vadd.f32 %v9274, %v9275
        %v9277 = vsel %vm2038, %v8299, 0.0
        %v9278 = vadd.f32 %v9276, %v9277
        %v9279 = vsel %vm2038, %v8300, 0.0
        %v9280 = vadd.f32 %v9278, %v9279
        %v9281 = vsel %vm2038, %v8301, 0.0
        %v9282 = vadd.f32 %v9280, %v9281
        %v9283 = vsel %vm2038, %v8302, 0.0
        %v9284 = vadd.f32 %v9282, %v9283
        %v9285 = vsel %vm2038, %v8303, 0.0
        %v9286 = vadd.f32 %v9284, %v9285
        %v9287 = vsel %vm2038, %v8304, 0.0
        %v9288 = vadd.f32 %v9286, %v9287
        %v9289 = vsel %vm2038, %v8305, 0.0
        %v9290 = vadd.f32 %v9288, %v9289
        %v9291 = vsel %vm2038, %v8306, 0.0
        %v9292 = vadd.f32 %v9290, %v9291
        %v9293 = vsel %vm2038, %v8307, 0.0
        %v9294 = vadd.f32 %v9292, %v9293
        %v9295 = vsel %vm2038, %v8308, 0.0
        %v9296 = vadd.f32 %v9294, %v9295
        %v9297 = vsel %vm2038, %v8309, 0.0
        %v9298 = vadd.f32 %v9296, %v9297
        %v9299 = vsel %vm2038, %v8310, 0.0
        %v9300 = vadd.f32 %v9298, %v9299
        %v9301 = vsel %vm2038, %v8311, 0.0
        %v9302 = vadd.f32 %v9300, %v9301
        %v9303 = vsel %vm2038, %v8312, 0.0
        %v9304 = vadd.f32 %v9302, %v9303
        %v9305 = vsel %vm2038, %v8313, 0.0
        %v9306 = vadd.f32 %v9304, %v9305
        %v9307 = vsel %vm2038, %v8314, 0.0
        %v9308 = vadd.f32 %v9306, %v9307
        %v9309 = vsel %vm2038, %v8315, 0.0
        %v9310 = vadd.f32 %v9308, %v9309
        %v9311 = vsel %vm2038, %v8316, 0.0
        %v9312 = vadd.f32 %v9310, %v9311
        %v9313 = vsel %vm2038, %v8317, 0.0
        %v9314 = vadd.f32 %v9312, %v9313
        %v9315 = vsel %vm2038, %v8318, 0.0
        %v9316 = vadd.f32 %v9314, %v9315
        %v9317 = vsel %vm2038, %v8319, 0.0
        %v9318 = vadd.f32 %v9316, %v9317
        %v9319 = vsel %vm2038, %v8320, 0.0
        %v9320 = vadd.f32 %v9318, %v9319
        %v9321 = vsel %vm2038, %v8321, 0.0
        %v9322 = vadd.f32 %v9320, %v9321
        %v9323 = vsel %vm2038, %v8322, 0.0
        %v9324 = vadd.f32 %v9322, %v9323
        %v9325 = vsel %vm2038, %v8323, 0.0
        %v9326 = vadd.f32 %v9324, %v9325
        %v9327 = vsel %vm2038, %v8324, 0.0
        %v9328 = vadd.f32 %v9326, %v9327
        %v9329 = vsel %vm2038, %v8325, 0.0
        %v9330 = vadd.f32 %v9328, %v9329
        %v9331 = vsel %vm2038, %v8326, 0.0
        %v9332 = vadd.f32 %v9330, %v9331
        %v9333 = vsel %vm2038, %v8327, 0.0
        %v9334 = vadd.f32 %v9332, %v9333
        %v9335 = vsel %vm2038, %v8328, 0.0
        %v9336 = vadd.f32 %v9334, %v9335
        %v9337 = vsel %vm2038, %v8329, 0.0
        %v9338 = vadd.f32 %v9336, %v9337
        %v9339 = vsel %vm2038, %v8330, 0.0
        %v9340 = vadd.f32 %v9338, %v9339
        %v9341 = vsel %vm2038, %v8331, 0.0
        %v9342 = vadd.f32 %v9340, %v9341
        %v9343 = vsel %vm2038, %v8332, 0.0
        %v9344 = vadd.f32 %v9342, %v9343
        %v9345 = vsel %vm2038, %v8333, 0.0
        %v9346 = vadd.f32 %v9344, %v9345
        %v9347 = vsel %vm2038, %v8334, 0.0
        %v9348 = vadd.f32 %v9346, %v9347
        %v9349 = vsel %vm2038, %v8335, 0.0
        %v9350 = vadd.f32 %v9348, %v9349
        %v9351 = vsel %vm2038, %v8336, 0.0
        %v9352 = vadd.f32 %v9350, %v9351
        %v9353 = vsel %vm2038, %v8337, 0.0
        %v9354 = vadd.f32 %v9352, %v9353
        %v9355 = vsel %vm2038, %v8338, 0.0
        %v9356 = vadd.f32 %v9354, %v9355
        %v9357 = vsel %vm2038, %v8339, 0.0
        %v9358 = vadd.f32 %v9356, %v9357
        %v9359 = vsel %vm2038, %v8340, 0.0
        %v9360 = vadd.f32 %v9358, %v9359
        %v9361 = vsel %vm2038, %v8341, 0.0
        %v9362 = vadd.f32 %v9360, %v9361
        %v9363 = vsel %vm2038, %v8342, 0.0
        %v9364 = vadd.f32 %v9362, %v9363
        %v9365 = vrot.slane %v9364, 4
        %v9366 = vadd.f32 %v9364, %v9365
        %v9367 = vrot.slane %v9366, 2
        %v9368 = vadd.f32 %v9366, %v9367
        %v9369 = vrot.slane %v9368, 1
        %v9370 = vadd.f32 %v9368, %v9369
        %v9371 = vsel %vm2038, %v8343, 0.0
        %v9372 = vsel %vm2038, %v8344, 0.0
        %v9373 = vadd.f32 %v9371, %v9372
        %v9374 = vsel %vm2038, %v8345, 0.0
        %v9375 = vadd.f32 %v9373, %v9374
        %v9376 = vsel %vm2038, %v8346, 0.0
        %v9377 = vadd.f32 %v9375, %v9376
        %v9378 = vsel %vm2038, %v8347, 0.0
        %v9379 = vadd.f32 %v9377, %v9378
        %v9380 = vsel %vm2038, %v8348, 0.0
        %v9381 = vadd.f32 %v9379, %v9380
        %v9382 = vsel %vm2038, %v8349, 0.0
        %v9383 = vadd.f32 %v9381, %v9382
        %v9384 = vsel %vm2038, %v8350, 0.0
        %v9385 = vadd.f32 %v9383, %v9384
        %v9386 = vsel %vm2038, %v8351, 0.0
        %v9387 = vadd.f32 %v9385, %v9386
        %v9388 = vsel %vm2038, %v8352, 0.0
        %v9389 = vadd.f32 %v9387, %v9388
        %v9390 = vsel %vm2038, %v8353, 0.0
        %v9391 = vadd.f32 %v9389, %v9390
        %v9392 = vsel %vm2038, %v8354, 0.0
        %v9393 = vadd.f32 %v9391, %v9392
        %v9394 = vsel %vm2038, %v8355, 0.0
        %v9395 = vadd.f32 %v9393, %v9394
        %v9396 = vsel %vm2038, %v8356, 0.0
        %v9397 = vadd.f32 %v9395, %v9396
        %v9398 = vsel %vm2038, %v8357, 0.0
        %v9399 = vadd.f32 %v9397, %v9398
        %v9400 = vsel %vm2038, %v8358, 0.0
        %v9401 = vadd.f32 %v9399, %v9400
        %v9402 = vsel %vm2038, %v8359, 0.0
        %v9403 = vadd.f32 %v9401, %v9402
        %v9404 = vsel %vm2038, %v8360, 0.0
        %v9405 = vadd.f32 %v9403, %v9404
        %v9406 = vsel %vm2038, %v8361, 0.0
        %v9407 = vadd.f32 %v9405, %v9406
        %v9408 = vsel %vm2038, %v8362, 0.0
        %v9409 = vadd.f32 %v9407, %v9408
        %v9410 = vsel %vm2038, %v8363, 0.0
        %v9411 = vadd.f32 %v9409, %v9410
        %v9412 = vsel %vm2038, %v8364, 0.0
        %v9413 = vadd.f32 %v9411, %v9412
        %v9414 = vsel %vm2038, %v8365, 0.0
        %v9415 = vadd.f32 %v9413, %v9414
        %v9416 = vsel %vm2038, %v8366, 0.0
        %v9417 = vadd.f32 %v9415, %v9416
        %v9418 = vsel %vm2038, %v8367, 0.0
        %v9419 = vadd.f32 %v9417, %v9418
        %v9420 = vsel %vm2038, %v8368, 0.0
        %v9421 = vadd.f32 %v9419, %v9420
        %v9422 = vsel %vm2038, %v8369, 0.0
        %v9423 = vadd.f32 %v9421, %v9422
        %v9424 = vsel %vm2038, %v8370, 0.0
        %v9425 = vadd.f32 %v9423, %v9424
        %v9426 = vsel %vm2038, %v8371, 0.0
        %v9427 = vadd.f32 %v9425, %v9426
        %v9428 = vsel %vm2038, %v8372, 0.0
        %v9429 = vadd.f32 %v9427, %v9428
        %v9430 = vsel %vm2038, %v8373, 0.0
        %v9431 = vadd.f32 %v9429, %v9430
        %v9432 = vsel %vm2038, %v8374, 0.0
        %v9433 = vadd.f32 %v9431, %v9432
        %v9434 = vsel %vm2038, %v8375, 0.0
        %v9435 = vadd.f32 %v9433, %v9434
        %v9436 = vsel %vm2038, %v8376, 0.0
        %v9437 = vadd.f32 %v9435, %v9436
        %v9438 = vsel %vm2038, %v8377, 0.0
        %v9439 = vadd.f32 %v9437, %v9438
        %v9440 = vsel %vm2038, %v8378, 0.0
        %v9441 = vadd.f32 %v9439, %v9440
        %v9442 = vsel %vm2038, %v8379, 0.0
        %v9443 = vadd.f32 %v9441, %v9442
        %v9444 = vsel %vm2038, %v8380, 0.0
        %v9445 = vadd.f32 %v9443, %v9444
        %v9446 = vsel %vm2038, %v8381, 0.0
        %v9447 = vadd.f32 %v9445, %v9446
        %v9448 = vsel %vm2038, %v8382, 0.0
        %v9449 = vadd.f32 %v9447, %v9448
        %v9450 = vsel %vm2038, %v8383, 0.0
        %v9451 = vadd.f32 %v9449, %v9450
        %v9452 = vsel %vm2038, %v8384, 0.0
        %v9453 = vadd.f32 %v9451, %v9452
        %v9454 = vsel %vm2038, %v8385, 0.0
        %v9455 = vadd.f32 %v9453, %v9454
        %v9456 = vsel %vm2038, %v8386, 0.0
        %v9457 = vadd.f32 %v9455, %v9456
        %v9458 = vsel %vm2038, %v8387, 0.0
        %v9459 = vadd.f32 %v9457, %v9458
        %v9460 = vsel %vm2038, %v8388, 0.0
        %v9461 = vadd.f32 %v9459, %v9460
        %v9462 = vsel %vm2038, %v8389, 0.0
        %v9463 = vadd.f32 %v9461, %v9462
        %v9464 = vsel %vm2038, %v8390, 0.0
        %v9465 = vadd.f32 %v9463, %v9464
        %v9466 = vsel %vm2038, %v8391, 0.0
        %v9467 = vadd.f32 %v9465, %v9466
        %v9468 = vsel %vm2038, %v8392, 0.0
        %v9469 = vadd.f32 %v9467, %v9468
        %v9470 = vsel %vm2038, %v8393, 0.0
        %v9471 = vadd.f32 %v9469, %v9470
        %v9472 = vsel %vm2038, %v8394, 0.0
        %v9473 = vadd.f32 %v9471, %v9472
        %v9474 = vsel %vm2038, %v8395, 0.0
        %v9475 = vadd.f32 %v9473, %v9474
        %v9476 = vsel %vm2038, %v8396, 0.0
        %v9477 = vadd.f32 %v9475, %v9476
        %v9478 = vsel %vm2038, %v8397, 0.0
        %v9479 = vadd.f32 %v9477, %v9478
        %v9480 = vsel %vm2038, %v8398, 0.0
        %v9481 = vadd.f32 %v9479, %v9480
        %v9482 = vsel %vm2038, %v8399, 0.0
        %v9483 = vadd.f32 %v9481, %v9482
        %v9484 = vsel %vm2038, %v8400, 0.0
        %v9485 = vadd.f32 %v9483, %v9484
        %v9486 = vsel %vm2038, %v8401, 0.0
        %v9487 = vadd.f32 %v9485, %v9486
        %v9488 = vsel %vm2038, %v8402, 0.0
        %v9489 = vadd.f32 %v9487, %v9488
        %v9490 = vsel %vm2038, %v8403, 0.0
        %v9491 = vadd.f32 %v9489, %v9490
        %v9492 = vsel %vm2038, %v8404, 0.0
        %v9493 = vadd.f32 %v9491, %v9492
        %v9494 = vsel %vm2038, %v8405, 0.0
        %v9495 = vadd.f32 %v9493, %v9494
        %v9496 = vsel %vm2038, %v8406, 0.0
        %v9497 = vadd.f32 %v9495, %v9496
        %v9498 = vsel %vm2038, %v8407, 0.0
        %v9499 = vadd.f32 %v9497, %v9498
        %v9500 = vsel %vm2038, %v8408, 0.0
        %v9501 = vadd.f32 %v9499, %v9500
        %v9502 = vsel %vm2038, %v8409, 0.0
        %v9503 = vadd.f32 %v9501, %v9502
        %v9504 = vsel %vm2038, %v8410, 0.0
        %v9505 = vadd.f32 %v9503, %v9504
        %v9506 = vsel %vm2038, %v8411, 0.0
        %v9507 = vadd.f32 %v9505, %v9506
        %v9508 = vsel %vm2038, %v8412, 0.0
        %v9509 = vadd.f32 %v9507, %v9508
        %v9510 = vsel %vm2038, %v8413, 0.0
        %v9511 = vadd.f32 %v9509, %v9510
        %v9512 = vsel %vm2038, %v8414, 0.0
        %v9513 = vadd.f32 %v9511, %v9512
        %v9514 = vrot.slane %v9513, 4
        %v9515 = vadd.f32 %v9513, %v9514
        %v9516 = vrot.slane %v9515, 2
        %v9517 = vadd.f32 %v9515, %v9516
        %v9518 = vrot.slane %v9517, 1
        %v9519 = vadd.f32 %v9517, %v9518
        %v9520 = vsel %vm2038, %v8415, 0.0
        %v9521 = vsel %vm2038, %v8416, 0.0
        %v9522 = vadd.f32 %v9520, %v9521
        %v9523 = vsel %vm2038, %v8417, 0.0
        %v9524 = vadd.f32 %v9522, %v9523
        %v9525 = vsel %vm2038, %v8418, 0.0
        %v9526 = vadd.f32 %v9524, %v9525
        %v9527 = vsel %vm2038, %v8419, 0.0
        %v9528 = vadd.f32 %v9526, %v9527
        %v9529 = vsel %vm2038, %v8420, 0.0
        %v9530 = vadd.f32 %v9528, %v9529
        %v9531 = vsel %vm2038, %v8421, 0.0
        %v9532 = vadd.f32 %v9530, %v9531
        %v9533 = vsel %vm2038, %v8422, 0.0
        %v9534 = vadd.f32 %v9532, %v9533
        %v9535 = vsel %vm2038, %v8423, 0.0
        %v9536 = vadd.f32 %v9534, %v9535
        %v9537 = vsel %vm2038, %v8424, 0.0
        %v9538 = vadd.f32 %v9536, %v9537
        %v9539 = vsel %vm2038, %v8425, 0.0
        %v9540 = vadd.f32 %v9538, %v9539
        %v9541 = vsel %vm2038, %v8426, 0.0
        %v9542 = vadd.f32 %v9540, %v9541
        %v9543 = vsel %vm2038, %v8427, 0.0
        %v9544 = vadd.f32 %v9542, %v9543
        %v9545 = vsel %vm2038, %v8428, 0.0
        %v9546 = vadd.f32 %v9544, %v9545
        %v9547 = vsel %vm2038, %v8429, 0.0
        %v9548 = vadd.f32 %v9546, %v9547
        %v9549 = vsel %vm2038, %v8430, 0.0
        %v9550 = vadd.f32 %v9548, %v9549
        %v9551 = vsel %vm2038, %v8431, 0.0
        %v9552 = vadd.f32 %v9550, %v9551
        %v9553 = vsel %vm2038, %v8432, 0.0
        %v9554 = vadd.f32 %v9552, %v9553
        %v9555 = vsel %vm2038, %v8433, 0.0
        %v9556 = vadd.f32 %v9554, %v9555
        %v9557 = vsel %vm2038, %v8434, 0.0
        %v9558 = vadd.f32 %v9556, %v9557
        %v9559 = vsel %vm2038, %v8435, 0.0
        %v9560 = vadd.f32 %v9558, %v9559
        %v9561 = vsel %vm2038, %v8436, 0.0
        %v9562 = vadd.f32 %v9560, %v9561
        %v9563 = vsel %vm2038, %v8437, 0.0
        %v9564 = vadd.f32 %v9562, %v9563
        %v9565 = vsel %vm2038, %v8438, 0.0
        %v9566 = vadd.f32 %v9564, %v9565
        %v9567 = vsel %vm2038, %v8439, 0.0
        %v9568 = vadd.f32 %v9566, %v9567
        %v9569 = vsel %vm2038, %v8440, 0.0
        %v9570 = vadd.f32 %v9568, %v9569
        %v9571 = vsel %vm2038, %v8441, 0.0
        %v9572 = vadd.f32 %v9570, %v9571
        %v9573 = vsel %vm2038, %v8442, 0.0
        %v9574 = vadd.f32 %v9572, %v9573
        %v9575 = vsel %vm2038, %v8443, 0.0
        %v9576 = vadd.f32 %v9574, %v9575
        %v9577 = vsel %vm2038, %v8444, 0.0
        %v9578 = vadd.f32 %v9576, %v9577
        %v9579 = vsel %vm2038, %v8445, 0.0
        %v9580 = vadd.f32 %v9578, %v9579
        %v9581 = vsel %vm2038, %v8446, 0.0
        %v9582 = vadd.f32 %v9580, %v9581
        %v9583 = vsel %vm2038, %v8447, 0.0
        %v9584 = vadd.f32 %v9582, %v9583
        %v9585 = vsel %vm2038, %v8448, 0.0
        %v9586 = vadd.f32 %v9584, %v9585
        %v9587 = vsel %vm2038, %v8449, 0.0
        %v9588 = vadd.f32 %v9586, %v9587
        %v9589 = vsel %vm2038, %v8450, 0.0
        %v9590 = vadd.f32 %v9588, %v9589
        %v9591 = vsel %vm2038, %v8451, 0.0
        %v9592 = vadd.f32 %v9590, %v9591
        %v9593 = vsel %vm2038, %v8452, 0.0
        %v9594 = vadd.f32 %v9592, %v9593
        %v9595 = vsel %vm2038, %v8453, 0.0
        %v9596 = vadd.f32 %v9594, %v9595
        %v9597 = vsel %vm2038, %v8454, 0.0
        %v9598 = vadd.f32 %v9596, %v9597
        %v9599 = vsel %vm2038, %v8455, 0.0
        %v9600 = vadd.f32 %v9598, %v9599
        %v9601 = vsel %vm2038, %v8456, 0.0
        %v9602 = vadd.f32 %v9600, %v9601
        %v9603 = vsel %vm2038, %v8457, 0.0
        %v9604 = vadd.f32 %v9602, %v9603
        %v9605 = vsel %vm2038, %v8458, 0.0
        %v9606 = vadd.f32 %v9604, %v9605
        %v9607 = vsel %vm2038, %v8459, 0.0
        %v9608 = vadd.f32 %v9606, %v9607
        %v9609 = vsel %vm2038, %v8460, 0.0
        %v9610 = vadd.f32 %v9608, %v9609
        %v9611 = vsel %vm2038, %v8461, 0.0
        %v9612 = vadd.f32 %v9610, %v9611
        %v9613 = vsel %vm2038, %v8462, 0.0
        %v9614 = vadd.f32 %v9612, %v9613
        %v9615 = vsel %vm2038, %v8463, 0.0
        %v9616 = vadd.f32 %v9614, %v9615
        %v9617 = vsel %vm2038, %v8464, 0.0
        %v9618 = vadd.f32 %v9616, %v9617
        %v9619 = vsel %vm2038, %v8465, 0.0
        %v9620 = vadd.f32 %v9618, %v9619
        %v9621 = vsel %vm2038, %v8466, 0.0
        %v9622 = vadd.f32 %v9620, %v9621
        %v9623 = vsel %vm2038, %v8467, 0.0
        %v9624 = vadd.f32 %v9622, %v9623
        %v9625 = vsel %vm2038, %v8468, 0.0
        %v9626 = vadd.f32 %v9624, %v9625
        %v9627 = vsel %vm2038, %v8469, 0.0
        %v9628 = vadd.f32 %v9626, %v9627
        %v9629 = vsel %vm2038, %v8470, 0.0
        %v9630 = vadd.f32 %v9628, %v9629
        %v9631 = vsel %vm2038, %v8471, 0.0
        %v9632 = vadd.f32 %v9630, %v9631
        %v9633 = vsel %vm2038, %v8472, 0.0
        %v9634 = vadd.f32 %v9632, %v9633
        %v9635 = vsel %vm2038, %v8473, 0.0
        %v9636 = vadd.f32 %v9634, %v9635
        %v9637 = vsel %vm2038, %v8474, 0.0
        %v9638 = vadd.f32 %v9636, %v9637
        %v9639 = vsel %vm2038, %v8475, 0.0
        %v9640 = vadd.f32 %v9638, %v9639
        %v9641 = vsel %vm2038, %v8476, 0.0
        %v9642 = vadd.f32 %v9640, %v9641
        %v9643 = vsel %vm2038, %v8477, 0.0
        %v9644 = vadd.f32 %v9642, %v9643
        %v9645 = vsel %vm2038, %v8478, 0.0
        %v9646 = vadd.f32 %v9644, %v9645
        %v9647 = vsel %vm2038, %v8479, 0.0
        %v9648 = vadd.f32 %v9646, %v9647
        %v9649 = vsel %vm2038, %v8480, 0.0
        %v9650 = vadd.f32 %v9648, %v9649
        %v9651 = vsel %vm2038, %v8481, 0.0
        %v9652 = vadd.f32 %v9650, %v9651
        %v9653 = vsel %vm2038, %v8482, 0.0
        %v9654 = vadd.f32 %v9652, %v9653
        %v9655 = vsel %vm2038, %v8483, 0.0
        %v9656 = vadd.f32 %v9654, %v9655
        %v9657 = vsel %vm2038, %v8484, 0.0
        %v9658 = vadd.f32 %v9656, %v9657
        %v9659 = vsel %vm2038, %v8485, 0.0
        %v9660 = vadd.f32 %v9658, %v9659
        %v9661 = vsel %vm2038, %v8486, 0.0
        %v9662 = vadd.f32 %v9660, %v9661
        %v9663 = vrot.slane %v9662, 4
        %v9664 = vadd.f32 %v9662, %v9663
        %v9665 = vrot.slane %v9664, 2
        %v9666 = vadd.f32 %v9664, %v9665
        %v9667 = vrot.slane %v9666, 1
        %v9668 = vadd.f32 %v9666, %v9667
        %v9669 = vsel %vm2038, %v8487, 0.0
        %v9670 = vsel %vm2038, %v8488, 0.0
        %v9671 = vadd.f32 %v9669, %v9670
        %v9672 = vsel %vm2038, %v8489, 0.0
        %v9673 = vadd.f32 %v9671, %v9672
        %v9674 = vsel %vm2038, %v8490, 0.0
        %v9675 = vadd.f32 %v9673, %v9674
        %v9676 = vsel %vm2038, %v8491, 0.0
        %v9677 = vadd.f32 %v9675, %v9676
        %v9678 = vsel %vm2038, %v8492, 0.0
        %v9679 = vadd.f32 %v9677, %v9678
        %v9680 = vsel %vm2038, %v8493, 0.0
        %v9681 = vadd.f32 %v9679, %v9680
        %v9682 = vsel %vm2038, %v8494, 0.0
        %v9683 = vadd.f32 %v9681, %v9682
        %v9684 = vsel %vm2038, %v8495, 0.0
        %v9685 = vadd.f32 %v9683, %v9684
        %v9686 = vsel %vm2038, %v8496, 0.0
        %v9687 = vadd.f32 %v9685, %v9686
        %v9688 = vsel %vm2038, %v8497, 0.0
        %v9689 = vadd.f32 %v9687, %v9688
        %v9690 = vsel %vm2038, %v8498, 0.0
        %v9691 = vadd.f32 %v9689, %v9690
        %v9692 = vsel %vm2038, %v8499, 0.0
        %v9693 = vadd.f32 %v9691, %v9692
        %v9694 = vsel %vm2038, %v8500, 0.0
        %v9695 = vadd.f32 %v9693, %v9694
        %v9696 = vsel %vm2038, %v8501, 0.0
        %v9697 = vadd.f32 %v9695, %v9696
        %v9698 = vsel %vm2038, %v8502, 0.0
        %v9699 = vadd.f32 %v9697, %v9698
        %v9700 = vsel %vm2038, %v8503, 0.0
        %v9701 = vadd.f32 %v9699, %v9700
        %v9702 = vsel %vm2038, %v8504, 0.0
        %v9703 = vadd.f32 %v9701, %v9702
        %v9704 = vsel %vm2038, %v8505, 0.0
        %v9705 = vadd.f32 %v9703, %v9704
        %v9706 = vsel %vm2038, %v8506, 0.0
        %v9707 = vadd.f32 %v9705, %v9706
        %v9708 = vsel %vm2038, %v8507, 0.0
        %v9709 = vadd.f32 %v9707, %v9708
        %v9710 = vsel %vm2038, %v8508, 0.0
        %v9711 = vadd.f32 %v9709, %v9710
        %v9712 = vsel %vm2038, %v8509, 0.0
        %v9713 = vadd.f32 %v9711, %v9712
        %v9714 = vsel %vm2038, %v8510, 0.0
        %v9715 = vadd.f32 %v9713, %v9714
        %v9716 = vsel %vm2038, %v8511, 0.0
        %v9717 = vadd.f32 %v9715, %v9716
        %v9718 = vsel %vm2038, %v8512, 0.0
        %v9719 = vadd.f32 %v9717, %v9718
        %v9720 = vsel %vm2038, %v8513, 0.0
        %v9721 = vadd.f32 %v9719, %v9720
        %v9722 = vsel %vm2038, %v8514, 0.0
        %v9723 = vadd.f32 %v9721, %v9722
        %v9724 = vsel %vm2038, %v8515, 0.0
        %v9725 = vadd.f32 %v9723, %v9724
        %v9726 = vsel %vm2038, %v8516, 0.0
        %v9727 = vadd.f32 %v9725, %v9726
        %v9728 = vsel %vm2038, %v8517, 0.0
        %v9729 = vadd.f32 %v9727, %v9728
        %v9730 = vsel %vm2038, %v8518, 0.0
        %v9731 = vadd.f32 %v9729, %v9730
        %v9732 = vsel %vm2038, %v8519, 0.0
        %v9733 = vadd.f32 %v9731, %v9732
        %v9734 = vsel %vm2038, %v8520, 0.0
        %v9735 = vadd.f32 %v9733, %v9734
        %v9736 = vsel %vm2038, %v8521, 0.0
        %v9737 = vadd.f32 %v9735, %v9736
        %v9738 = vsel %vm2038, %v8522, 0.0
        %v9739 = vadd.f32 %v9737, %v9738
        %v9740 = vsel %vm2038, %v8523, 0.0
        %v9741 = vadd.f32 %v9739, %v9740
        %v9742 = vsel %vm2038, %v8524, 0.0
        %v9743 = vadd.f32 %v9741, %v9742
        %v9744 = vsel %vm2038, %v8525, 0.0
        %v9745 = vadd.f32 %v9743, %v9744
        %v9746 = vsel %vm2038, %v8526, 0.0
        %v9747 = vadd.f32 %v9745, %v9746
        %v9748 = vsel %vm2038, %v8527, 0.0
        %v9749 = vadd.f32 %v9747, %v9748
        %v9750 = vsel %vm2038, %v8528, 0.0
        %v9751 = vadd.f32 %v9749, %v9750
        %v9752 = vsel %vm2038, %v8529, 0.0
        %v9753 = vadd.f32 %v9751, %v9752
        %v9754 = vsel %vm2038, %v8530, 0.0
        %v9755 = vadd.f32 %v9753, %v9754
        %v9756 = vsel %vm2038, %v8531, 0.0
        %v9757 = vadd.f32 %v9755, %v9756
        %v9758 = vsel %vm2038, %v8532, 0.0
        %v9759 = vadd.f32 %v9757, %v9758
        %v9760 = vsel %vm2038, %v8533, 0.0
        %v9761 = vadd.f32 %v9759, %v9760
        %v9762 = vsel %vm2038, %v8534, 0.0
        %v9763 = vadd.f32 %v9761, %v9762
        %v9764 = vsel %vm2038, %v8535, 0.0
        %v9765 = vadd.f32 %v9763, %v9764
        %v9766 = vsel %vm2038, %v8536, 0.0
        %v9767 = vadd.f32 %v9765, %v9766
        %v9768 = vsel %vm2038, %v8537, 0.0
        %v9769 = vadd.f32 %v9767, %v9768
        %v9770 = vsel %vm2038, %v8538, 0.0
        %v9771 = vadd.f32 %v9769, %v9770
        %v9772 = vsel %vm2038, %v8539, 0.0
        %v9773 = vadd.f32 %v9771, %v9772
        %v9774 = vsel %vm2038, %v8540, 0.0
        %v9775 = vadd.f32 %v9773, %v9774
        %v9776 = vsel %vm2038, %v8541, 0.0
        %v9777 = vadd.f32 %v9775, %v9776
        %v9778 = vsel %vm2038, %v8542, 0.0
        %v9779 = vadd.f32 %v9777, %v9778
        %v9780 = vsel %vm2038, %v8543, 0.0
        %v9781 = vadd.f32 %v9779, %v9780
        %v9782 = vsel %vm2038, %v8544, 0.0
        %v9783 = vadd.f32 %v9781, %v9782
        %v9784 = vsel %vm2038, %v8545, 0.0
        %v9785 = vadd.f32 %v9783, %v9784
        %v9786 = vsel %vm2038, %v8546, 0.0
        %v9787 = vadd.f32 %v9785, %v9786
        %v9788 = vsel %vm2038, %v8547, 0.0
        %v9789 = vadd.f32 %v9787, %v9788
        %v9790 = vsel %vm2038, %v8548, 0.0
        %v9791 = vadd.f32 %v9789, %v9790
        %v9792 = vsel %vm2038, %v8549, 0.0
        %v9793 = vadd.f32 %v9791, %v9792
        %v9794 = vsel %vm2038, %v8550, 0.0
        %v9795 = vadd.f32 %v9793, %v9794
        %v9796 = vsel %vm2038, %v8551, 0.0
        %v9797 = vadd.f32 %v9795, %v9796
        %v9798 = vsel %vm2038, %v8552, 0.0
        %v9799 = vadd.f32 %v9797, %v9798
        %v9800 = vsel %vm2038, %v8553, 0.0
        %v9801 = vadd.f32 %v9799, %v9800
        %v9802 = vsel %vm2038, %v8554, 0.0
        %v9803 = vadd.f32 %v9801, %v9802
        %v9804 = vsel %vm2038, %v8555, 0.0
        %v9805 = vadd.f32 %v9803, %v9804
        %v9806 = vsel %vm2038, %v8556, 0.0
        %v9807 = vadd.f32 %v9805, %v9806
        %v9808 = vsel %vm2038, %v8557, 0.0
        %v9809 = vadd.f32 %v9807, %v9808
        %v9810 = vsel %vm2038, %v8558, 0.0
        %v9811 = vadd.f32 %v9809, %v9810
        %v9812 = vrot.slane %v9811, 4
        %v9813 = vadd.f32 %v9811, %v9812
        %v9814 = vrot.slane %v9813, 2
        %v9815 = vadd.f32 %v9813, %v9814
        %v9816 = vrot.slane %v9815, 1
        %v9817 = vadd.f32 %v9815, %v9816
        %v9818 = vsel %vm2038, %v8559, 0.0
        %v9819 = vsel %vm2038, %v8560, 0.0
        %v9820 = vadd.f32 %v9818, %v9819
        %v9821 = vsel %vm2038, %v8561, 0.0
        %v9822 = vadd.f32 %v9820, %v9821
        %v9823 = vsel %vm2038, %v8562, 0.0
        %v9824 = vadd.f32 %v9822, %v9823
        %v9825 = vsel %vm2038, %v8563, 0.0
        %v9826 = vadd.f32 %v9824, %v9825
        %v9827 = vsel %vm2038, %v8564, 0.0
        %v9828 = vadd.f32 %v9826, %v9827
        %v9829 = vsel %vm2038, %v8565, 0.0
        %v9830 = vadd.f32 %v9828, %v9829
        %v9831 = vsel %vm2038, %v8566, 0.0
        %v9832 = vadd.f32 %v9830, %v9831
        %v9833 = vsel %vm2038, %v8567, 0.0
        %v9834 = vadd.f32 %v9832, %v9833
        %v9835 = vsel %vm2038, %v8568, 0.0
        %v9836 = vadd.f32 %v9834, %v9835
        %v9837 = vsel %vm2038, %v8569, 0.0
        %v9838 = vadd.f32 %v9836, %v9837
        %v9839 = vsel %vm2038, %v8570, 0.0
        %v9840 = vadd.f32 %v9838, %v9839
        %v9841 = vsel %vm2038, %v8571, 0.0
        %v9842 = vadd.f32 %v9840, %v9841
        %v9843 = vsel %vm2038, %v8572, 0.0
        %v9844 = vadd.f32 %v9842, %v9843
        %v9845 = vsel %vm2038, %v8573, 0.0
        %v9846 = vadd.f32 %v9844, %v9845
        %v9847 = vsel %vm2038, %v8574, 0.0
        %v9848 = vadd.f32 %v9846, %v9847
        %v9849 = vsel %vm2038, %v8575, 0.0
        %v9850 = vadd.f32 %v9848, %v9849
        %v9851 = vsel %vm2038, %v8576, 0.0
        %v9852 = vadd.f32 %v9850, %v9851
        %v9853 = vsel %vm2038, %v8577, 0.0
        %v9854 = vadd.f32 %v9852, %v9853
        %v9855 = vsel %vm2038, %v8578, 0.0
        %v9856 = vadd.f32 %v9854, %v9855
        %v9857 = vsel %vm2038, %v8579, 0.0
        %v9858 = vadd.f32 %v9856, %v9857
        %v9859 = vsel %vm2038, %v8580, 0.0
        %v9860 = vadd.f32 %v9858, %v9859
        %v9861 = vsel %vm2038, %v8581, 0.0
        %v9862 = vadd.f32 %v9860, %v9861
        %v9863 = vsel %vm2038, %v8582, 0.0
        %v9864 = vadd.f32 %v9862, %v9863
        %v9865 = vsel %vm2038, %v8583, 0.0
        %v9866 = vadd.f32 %v9864, %v9865
        %v9867 = vsel %vm2038, %v8584, 0.0
        %v9868 = vadd.f32 %v9866, %v9867
        %v9869 = vsel %vm2038, %v8585, 0.0
        %v9870 = vadd.f32 %v9868, %v9869
        %v9871 = vsel %vm2038, %v8586, 0.0
        %v9872 = vadd.f32 %v9870, %v9871
        %v9873 = vsel %vm2038, %v8587, 0.0
        %v9874 = vadd.f32 %v9872, %v9873
        %v9875 = vsel %vm2038, %v8588, 0.0
        %v9876 = vadd.f32 %v9874, %v9875
        %v9877 = vsel %vm2038, %v8589, 0.0
        %v9878 = vadd.f32 %v9876, %v9877
        %v9879 = vsel %vm2038, %v8590, 0.0
        %v9880 = vadd.f32 %v9878, %v9879
        %v9881 = vsel %vm2038, %v8591, 0.0
        %v9882 = vadd.f32 %v9880, %v9881
        %v9883 = vsel %vm2038, %v8592, 0.0
        %v9884 = vadd.f32 %v9882, %v9883
        %v9885 = vsel %vm2038, %v8593, 0.0
        %v9886 = vadd.f32 %v9884, %v9885
        %v9887 = vsel %vm2038, %v8594, 0.0
        %v9888 = vadd.f32 %v9886, %v9887
        %v9889 = vsel %vm2038, %v8595, 0.0
        %v9890 = vadd.f32 %v9888, %v9889
        %v9891 = vsel %vm2038, %v8596, 0.0
        %v9892 = vadd.f32 %v9890, %v9891
        %v9893 = vsel %vm2038, %v8597, 0.0
        %v9894 = vadd.f32 %v9892, %v9893
        %v9895 = vsel %vm2038, %v8598, 0.0
        %v9896 = vadd.f32 %v9894, %v9895
        %v9897 = vsel %vm2038, %v8599, 0.0
        %v9898 = vadd.f32 %v9896, %v9897
        %v9899 = vsel %vm2038, %v8600, 0.0
        %v9900 = vadd.f32 %v9898, %v9899
        %v9901 = vsel %vm2038, %v8601, 0.0
        %v9902 = vadd.f32 %v9900, %v9901
        %v9903 = vsel %vm2038, %v8602, 0.0
        %v9904 = vadd.f32 %v9902, %v9903
        %v9905 = vsel %vm2038, %v8603, 0.0
        %v9906 = vadd.f32 %v9904, %v9905
        %v9907 = vsel %vm2038, %v8604, 0.0
        %v9908 = vadd.f32 %v9906, %v9907
        %v9909 = vsel %vm2038, %v8605, 0.0
        %v9910 = vadd.f32 %v9908, %v9909
        %v9911 = vsel %vm2038, %v8606, 0.0
        %v9912 = vadd.f32 %v9910, %v9911
        %v9913 = vsel %vm2038, %v8607, 0.0
        %v9914 = vadd.f32 %v9912, %v9913
        %v9915 = vsel %vm2038, %v8608, 0.0
        %v9916 = vadd.f32 %v9914, %v9915
        %v9917 = vsel %vm2038, %v8609, 0.0
        %v9918 = vadd.f32 %v9916, %v9917
        %v9919 = vsel %vm2038, %v8610, 0.0
        %v9920 = vadd.f32 %v9918, %v9919
        %v9921 = vsel %vm2038, %v8611, 0.0
        %v9922 = vadd.f32 %v9920, %v9921
        %v9923 = vsel %vm2038, %v8612, 0.0
        %v9924 = vadd.f32 %v9922, %v9923
        %v9925 = vsel %vm2038, %v8613, 0.0
        %v9926 = vadd.f32 %v9924, %v9925
        %v9927 = vsel %vm2038, %v8614, 0.0
        %v9928 = vadd.f32 %v9926, %v9927
        %v9929 = vsel %vm2038, %v8615, 0.0
        %v9930 = vadd.f32 %v9928, %v9929
        %v9931 = vsel %vm2038, %v8616, 0.0
        %v9932 = vadd.f32 %v9930, %v9931
        %v9933 = vsel %vm2038, %v8617, 0.0
        %v9934 = vadd.f32 %v9932, %v9933
        %v9935 = vsel %vm2038, %v8618, 0.0
        %v9936 = vadd.f32 %v9934, %v9935
        %v9937 = vsel %vm2038, %v8619, 0.0
        %v9938 = vadd.f32 %v9936, %v9937
        %v9939 = vsel %vm2038, %v8620, 0.0
        %v9940 = vadd.f32 %v9938, %v9939
        %v9941 = vsel %vm2038, %v8621, 0.0
        %v9942 = vadd.f32 %v9940, %v9941
        %v9943 = vsel %vm2038, %v8622, 0.0
        %v9944 = vadd.f32 %v9942, %v9943
        %v9945 = vsel %vm2038, %v8623, 0.0
        %v9946 = vadd.f32 %v9944, %v9945
        %v9947 = vsel %vm2038, %v8624, 0.0
        %v9948 = vadd.f32 %v9946, %v9947
        %v9949 = vsel %vm2038, %v8625, 0.0
        %v9950 = vadd.f32 %v9948, %v9949
        %v9951 = vsel %vm2038, %v8626, 0.0
        %v9952 = vadd.f32 %v9950, %v9951
        %v9953 = vsel %vm2038, %v8627, 0.0
        %v9954 = vadd.f32 %v9952, %v9953
        %v9955 = vsel %vm2038, %v8628, 0.0
        %v9956 = vadd.f32 %v9954, %v9955
        %v9957 = vsel %vm2038, %v8629, 0.0
        %v9958 = vadd.f32 %v9956, %v9957
        %v9959 = vsel %vm2038, %v8630, 0.0
        %v9960 = vadd.f32 %v9958, %v9959
        %v9961 = vrot.slane %v9960, 4
        %v9962 = vadd.f32 %v9960, %v9961
        %v9963 = vrot.slane %v9962, 2
        %v9964 = vadd.f32 %v9962, %v9963
        %v9965 = vrot.slane %v9964, 1
        %v9966 = vadd.f32 %v9964, %v9965
        %v9967 = vsel %vm2038, %v8631, 0.0
        %v9968 = vsel %vm2038, %v8632, 0.0
        %v9969 = vadd.f32 %v9967, %v9968
        %v9970 = vsel %vm2038, %v8633, 0.0
        %v9971 = vadd.f32 %v9969, %v9970
        %v9972 = vsel %vm2038, %v8634, 0.0
        %v9973 = vadd.f32 %v9971, %v9972
        %v9974 = vsel %vm2038, %v8635, 0.0
        %v9975 = vadd.f32 %v9973, %v9974
        %v9976 = vsel %vm2038, %v8636, 0.0
        %v9977 = vadd.f32 %v9975, %v9976
        %v9978 = vsel %vm2038, %v8637, 0.0
        %v9979 = vadd.f32 %v9977, %v9978
        %v9980 = vsel %vm2038, %v8638, 0.0
        %v9981 = vadd.f32 %v9979, %v9980
        %v9982 = vsel %vm2038, %v8639, 0.0
        %v9983 = vadd.f32 %v9981, %v9982
        %v9984 = vsel %vm2038, %v8640, 0.0
        %v9985 = vadd.f32 %v9983, %v9984
        %v9986 = vsel %vm2038, %v8641, 0.0
        %v9987 = vadd.f32 %v9985, %v9986
        %v9988 = vsel %vm2038, %v8642, 0.0
        %v9989 = vadd.f32 %v9987, %v9988
        %v9990 = vsel %vm2038, %v8643, 0.0
        %v9991 = vadd.f32 %v9989, %v9990
        %v9992 = vsel %vm2038, %v8644, 0.0
        %v9993 = vadd.f32 %v9991, %v9992
        %v9994 = vsel %vm2038, %v8645, 0.0
        %v9995 = vadd.f32 %v9993, %v9994
        %v9996 = vsel %vm2038, %v8646, 0.0
        %v9997 = vadd.f32 %v9995, %v9996
        %v9998 = vsel %vm2038, %v8647, 0.0
        %v9999 = vadd.f32 %v9997, %v9998
        %v10000 = vsel %vm2038, %v8648, 0.0
        %v10001 = vadd.f32 %v9999, %v10000
        %v10002 = vsel %vm2038, %v8649, 0.0
        %v10003 = vadd.f32 %v10001, %v10002
        %v10004 = vsel %vm2038, %v8650, 0.0
        %v10005 = vadd.f32 %v10003, %v10004
        %v10006 = vsel %vm2038, %v8651, 0.0
        %v10007 = vadd.f32 %v10005, %v10006
        %v10008 = vsel %vm2038, %v8652, 0.0
        %v10009 = vadd.f32 %v10007, %v10008
        %v10010 = vsel %vm2038, %v8653, 0.0
        %v10011 = vadd.f32 %v10009, %v10010
        %v10012 = vsel %vm2038, %v8654, 0.0
        %v10013 = vadd.f32 %v10011, %v10012
        %v10014 = vsel %vm2038, %v8655, 0.0
        %v10015 = vadd.f32 %v10013, %v10014
        %v10016 = vsel %vm2038, %v8656, 0.0
        %v10017 = vadd.f32 %v10015, %v10016
        %v10018 = vsel %vm2038, %v8657, 0.0
        %v10019 = vadd.f32 %v10017, %v10018
        %v10020 = vsel %vm2038, %v8658, 0.0
        %v10021 = vadd.f32 %v10019, %v10020
        %v10022 = vsel %vm2038, %v8659, 0.0
        %v10023 = vadd.f32 %v10021, %v10022
        %v10024 = vsel %vm2038, %v8660, 0.0
        %v10025 = vadd.f32 %v10023, %v10024
        %v10026 = vsel %vm2038, %v8661, 0.0
        %v10027 = vadd.f32 %v10025, %v10026
        %v10028 = vsel %vm2038, %v8662, 0.0
        %v10029 = vadd.f32 %v10027, %v10028
        %v10030 = vsel %vm2038, %v8663, 0.0
        %v10031 = vadd.f32 %v10029, %v10030
        %v10032 = vsel %vm2038, %v8664, 0.0
        %v10033 = vadd.f32 %v10031, %v10032
        %v10034 = vsel %vm2038, %v8665, 0.0
        %v10035 = vadd.f32 %v10033, %v10034
        %v10036 = vsel %vm2038, %v8666, 0.0
        %v10037 = vadd.f32 %v10035, %v10036
        %v10038 = vsel %vm2038, %v8667, 0.0
        %v10039 = vadd.f32 %v10037, %v10038
        %v10040 = vsel %vm2038, %v8668, 0.0
        %v10041 = vadd.f32 %v10039, %v10040
        %v10042 = vsel %vm2038, %v8669, 0.0
        %v10043 = vadd.f32 %v10041, %v10042
        %v10044 = vsel %vm2038, %v8670, 0.0
        %v10045 = vadd.f32 %v10043, %v10044
        %v10046 = vsel %vm2038, %v8671, 0.0
        %v10047 = vadd.f32 %v10045, %v10046
        %v10048 = vsel %vm2038, %v8672, 0.0
        %v10049 = vadd.f32 %v10047, %v10048
        %v10050 = vsel %vm2038, %v8673, 0.0
        %v10051 = vadd.f32 %v10049, %v10050
        %v10052 = vsel %vm2038, %v8674, 0.0
        %v10053 = vadd.f32 %v10051, %v10052
        %v10054 = vsel %vm2038, %v8675, 0.0
        %v10055 = vadd.f32 %v10053, %v10054
        %v10056 = vsel %vm2038, %v8676, 0.0
        %v10057 = vadd.f32 %v10055, %v10056
        %v10058 = vsel %vm2038, %v8677, 0.0
        %v10059 = vadd.f32 %v10057, %v10058
        %v10060 = vsel %vm2038, %v8678, 0.0
        %v10061 = vadd.f32 %v10059, %v10060
        %v10062 = vsel %vm2038, %v8679, 0.0
        %v10063 = vadd.f32 %v10061, %v10062
        %v10064 = vsel %vm2038, %v8680, 0.0
        %v10065 = vadd.f32 %v10063, %v10064
        %v10066 = vsel %vm2038, %v8681, 0.0
        %v10067 = vadd.f32 %v10065, %v10066
        %v10068 = vsel %vm2038, %v8682, 0.0
        %v10069 = vadd.f32 %v10067, %v10068
        %v10070 = vsel %vm2038, %v8683, 0.0
        %v10071 = vadd.f32 %v10069, %v10070
        %v10072 = vsel %vm2038, %v8684, 0.0
        %v10073 = vadd.f32 %v10071, %v10072
        %v10074 = vsel %vm2038, %v8685, 0.0
        %v10075 = vadd.f32 %v10073, %v10074
        %v10076 = vsel %vm2038, %v8686, 0.0
        %v10077 = vadd.f32 %v10075, %v10076
        %v10078 = vsel %vm2038, %v8687, 0.0
        %v10079 = vadd.f32 %v10077, %v10078
        %v10080 = vsel %vm2038, %v8688, 0.0
        %v10081 = vadd.f32 %v10079, %v10080
        %v10082 = vsel %vm2038, %v8689, 0.0
        %v10083 = vadd.f32 %v10081, %v10082
        %v10084 = vsel %vm2038, %v8690, 0.0
        %v10085 = vadd.f32 %v10083, %v10084
        %v10086 = vsel %vm2038, %v8691, 0.0
        %v10087 = vadd.f32 %v10085, %v10086
        %v10088 = vsel %vm2038, %v8692, 0.0
        %v10089 = vadd.f32 %v10087, %v10088
        %v10090 = vsel %vm2038, %v8693, 0.0
        %v10091 = vadd.f32 %v10089, %v10090
        %v10092 = vsel %vm2038, %v8694, 0.0
        %v10093 = vadd.f32 %v10091, %v10092
        %v10094 = vsel %vm2038, %v8695, 0.0
        %v10095 = vadd.f32 %v10093, %v10094
        %v10096 = vsel %vm2038, %v8696, 0.0
        %v10097 = vadd.f32 %v10095, %v10096
        %v10098 = vsel %vm2038, %v8697, 0.0
        %v10099 = vadd.f32 %v10097, %v10098
        %v10100 = vsel %vm2038, %v8698, 0.0
        %v10101 = vadd.f32 %v10099, %v10100
        %v10102 = vsel %vm2038, %v8699, 0.0
        %v10103 = vadd.f32 %v10101, %v10102
        %v10104 = vsel %vm2038, %v8700, 0.0
        %v10105 = vadd.f32 %v10103, %v10104
        %v10106 = vsel %vm2038, %v8701, 0.0
        %v10107 = vadd.f32 %v10105, %v10106
        %v10108 = vsel %vm2038, %v8702, 0.0
        %v10109 = vadd.f32 %v10107, %v10108
        %v10110 = vrot.slane %v10109, 4
        %v10111 = vadd.f32 %v10109, %v10110
        %v10112 = vrot.slane %v10111, 2
        %v10113 = vadd.f32 %v10111, %v10112
        %v10114 = vrot.slane %v10113, 1
        %v10115 = vadd.f32 %v10113, %v10114
        %v10116 = vsel %vm2038, %v8703, 0.0
        %v10117 = vsel %vm2038, %v8704, 0.0
        %v10118 = vadd.f32 %v10116, %v10117
        %v10119 = vsel %vm2038, %v8705, 0.0
        %v10120 = vadd.f32 %v10118, %v10119
        %v10121 = vsel %vm2038, %v8706, 0.0
        %v10122 = vadd.f32 %v10120, %v10121
        %v10123 = vsel %vm2038, %v8707, 0.0
        %v10124 = vadd.f32 %v10122, %v10123
        %v10125 = vsel %vm2038, %v8708, 0.0
        %v10126 = vadd.f32 %v10124, %v10125
        %v10127 = vsel %vm2038, %v8709, 0.0
        %v10128 = vadd.f32 %v10126, %v10127
        %v10129 = vsel %vm2038, %v8710, 0.0
        %v10130 = vadd.f32 %v10128, %v10129
        %v10131 = vsel %vm2038, %v8711, 0.0
        %v10132 = vadd.f32 %v10130, %v10131
        %v10133 = vsel %vm2038, %v8712, 0.0
        %v10134 = vadd.f32 %v10132, %v10133
        %v10135 = vsel %vm2038, %v8713, 0.0
        %v10136 = vadd.f32 %v10134, %v10135
        %v10137 = vsel %vm2038, %v8714, 0.0
        %v10138 = vadd.f32 %v10136, %v10137
        %v10139 = vsel %vm2038, %v8715, 0.0
        %v10140 = vadd.f32 %v10138, %v10139
        %v10141 = vsel %vm2038, %v8716, 0.0
        %v10142 = vadd.f32 %v10140, %v10141
        %v10143 = vsel %vm2038, %v8717, 0.0
        %v10144 = vadd.f32 %v10142, %v10143
        %v10145 = vsel %vm2038, %v8718, 0.0
        %v10146 = vadd.f32 %v10144, %v10145
        %v10147 = vsel %vm2038, %v8719, 0.0
        %v10148 = vadd.f32 %v10146, %v10147
        %v10149 = vsel %vm2038, %v8720, 0.0
        %v10150 = vadd.f32 %v10148, %v10149
        %v10151 = vsel %vm2038, %v8721, 0.0
        %v10152 = vadd.f32 %v10150, %v10151
        %v10153 = vsel %vm2038, %v8722, 0.0
        %v10154 = vadd.f32 %v10152, %v10153
        %v10155 = vsel %vm2038, %v8723, 0.0
        %v10156 = vadd.f32 %v10154, %v10155
        %v10157 = vsel %vm2038, %v8724, 0.0
        %v10158 = vadd.f32 %v10156, %v10157
        %v10159 = vsel %vm2038, %v8725, 0.0
        %v10160 = vadd.f32 %v10158, %v10159
        %v10161 = vsel %vm2038, %v8726, 0.0
        %v10162 = vadd.f32 %v10160, %v10161
        %v10163 = vsel %vm2038, %v8727, 0.0
        %v10164 = vadd.f32 %v10162, %v10163
        %v10165 = vsel %vm2038, %v8728, 0.0
        %v10166 = vadd.f32 %v10164, %v10165
        %v10167 = vsel %vm2038, %v8729, 0.0
        %v10168 = vadd.f32 %v10166, %v10167
        %v10169 = vsel %vm2038, %v8730, 0.0
        %v10170 = vadd.f32 %v10168, %v10169
        %v10171 = vsel %vm2038, %v8731, 0.0
        %v10172 = vadd.f32 %v10170, %v10171
        %v10173 = vsel %vm2038, %v8732, 0.0
        %v10174 = vadd.f32 %v10172, %v10173
        %v10175 = vsel %vm2038, %v8733, 0.0
        %v10176 = vadd.f32 %v10174, %v10175
        %v10177 = vsel %vm2038, %v8734, 0.0
        %v10178 = vadd.f32 %v10176, %v10177
        %v10179 = vsel %vm2038, %v8735, 0.0
        %v10180 = vadd.f32 %v10178, %v10179
        %v10181 = vsel %vm2038, %v8736, 0.0
        %v10182 = vadd.f32 %v10180, %v10181
        %v10183 = vsel %vm2038, %v8737, 0.0
        %v10184 = vadd.f32 %v10182, %v10183
        %v10185 = vsel %vm2038, %v8738, 0.0
        %v10186 = vadd.f32 %v10184, %v10185
        %v10187 = vsel %vm2038, %v8739, 0.0
        %v10188 = vadd.f32 %v10186, %v10187
        %v10189 = vsel %vm2038, %v8740, 0.0
        %v10190 = vadd.f32 %v10188, %v10189
        %v10191 = vsel %vm2038, %v8741, 0.0
        %v10192 = vadd.f32 %v10190, %v10191
        %v10193 = vsel %vm2038, %v8742, 0.0
        %v10194 = vadd.f32 %v10192, %v10193
        %v10195 = vsel %vm2038, %v8743, 0.0
        %v10196 = vadd.f32 %v10194, %v10195
        %v10197 = vsel %vm2038, %v8744, 0.0
        %v10198 = vadd.f32 %v10196, %v10197
        %v10199 = vsel %vm2038, %v8745, 0.0
        %v10200 = vadd.f32 %v10198, %v10199
        %v10201 = vsel %vm2038, %v8746, 0.0
        %v10202 = vadd.f32 %v10200, %v10201
        %v10203 = vsel %vm2038, %v8747, 0.0
        %v10204 = vadd.f32 %v10202, %v10203
        %v10205 = vsel %vm2038, %v8748, 0.0
        %v10206 = vadd.f32 %v10204, %v10205
        %v10207 = vsel %vm2038, %v8749, 0.0
        %v10208 = vadd.f32 %v10206, %v10207
        %v10209 = vsel %vm2038, %v8750, 0.0
        %v10210 = vadd.f32 %v10208, %v10209
        %v10211 = vsel %vm2038, %v8751, 0.0
        %v10212 = vadd.f32 %v10210, %v10211
        %v10213 = vsel %vm2038, %v8752, 0.0
        %v10214 = vadd.f32 %v10212, %v10213
        %v10215 = vsel %vm2038, %v8753, 0.0
        %v10216 = vadd.f32 %v10214, %v10215
        %v10217 = vsel %vm2038, %v8754, 0.0
        %v10218 = vadd.f32 %v10216, %v10217
        %v10219 = vsel %vm2038, %v8755, 0.0
        %v10220 = vadd.f32 %v10218, %v10219
        %v10221 = vsel %vm2038, %v8756, 0.0
        %v10222 = vadd.f32 %v10220, %v10221
        %v10223 = vsel %vm2038, %v8757, 0.0
        %v10224 = vadd.f32 %v10222, %v10223
        %v10225 = vsel %vm2038, %v8758, 0.0
        %v10226 = vadd.f32 %v10224, %v10225
        %v10227 = vsel %vm2038, %v8759, 0.0
        %v10228 = vadd.f32 %v10226, %v10227
        %v10229 = vsel %vm2038, %v8760, 0.0
        %v10230 = vadd.f32 %v10228, %v10229
        %v10231 = vsel %vm2038, %v8761, 0.0
        %v10232 = vadd.f32 %v10230, %v10231
        %v10233 = vsel %vm2038, %v8762, 0.0
        %v10234 = vadd.f32 %v10232, %v10233
        %v10235 = vsel %vm2038, %v8763, 0.0
        %v10236 = vadd.f32 %v10234, %v10235
        %v10237 = vsel %vm2038, %v8764, 0.0
        %v10238 = vadd.f32 %v10236, %v10237
        %v10239 = vsel %vm2038, %v8765, 0.0
        %v10240 = vadd.f32 %v10238, %v10239
        %v10241 = vsel %vm2038, %v8766, 0.0
        %v10242 = vadd.f32 %v10240, %v10241
        %v10243 = vsel %vm2038, %v8767, 0.0
        %v10244 = vadd.f32 %v10242, %v10243
        %v10245 = vsel %vm2038, %v8768, 0.0
        %v10246 = vadd.f32 %v10244, %v10245
        %v10247 = vsel %vm2038, %v8769, 0.0
        %v10248 = vadd.f32 %v10246, %v10247
        %v10249 = vsel %vm2038, %v8770, 0.0
        %v10250 = vadd.f32 %v10248, %v10249
        %v10251 = vsel %vm2038, %v8771, 0.0
        %v10252 = vadd.f32 %v10250, %v10251
        %v10253 = vsel %vm2038, %v8772, 0.0
        %v10254 = vadd.f32 %v10252, %v10253
        %v10255 = vsel %vm2038, %v8773, 0.0
        %v10256 = vadd.f32 %v10254, %v10255
        %v10257 = vsel %vm2038, %v8774, 0.0
        %v10258 = vadd.f32 %v10256, %v10257
        %v10259 = vrot.slane %v10258, 4
        %v10260 = vadd.f32 %v10258, %v10259
        %v10261 = vrot.slane %v10260, 2
        %v10262 = vadd.f32 %v10260, %v10261
        %v10263 = vrot.slane %v10262, 1
        %v10264 = vadd.f32 %v10262, %v10263
        %vm10275 = vcmask 1041409
        %v10276 = vsel %vm10275, %v9072, %v8923
        %vm10277 = vcmask 1042434
        %v10278 = vsel %vm10277, %v9221, %v10276
        %vm10279 = vcmask 1043459
        %v10280 = vsel %vm10279, %v9370, %v10278
        %vm10281 = vcmask 1044484
        %v10282 = vsel %vm10281, %v9519, %v10280
        %vm10283 = vcmask 1045509
        %v10284 = vsel %vm10283, %v9668, %v10282
        %vm10285 = vcmask 1046534
        %v10286 = vsel %vm10285, %v9817, %v10284
        %vm10287 = vcmask 1047559
        %v10288 = vsel %vm10287, %v9966, %v10286
        %v10289 = vsel %vm10275, %v10264, %v10115
        %v10292 = vsel %vm2038, %v10288, 0.0
        %10293 = vadd.xlane.f32.xlu0 %v10292
        %v10294 = vpop.xlane.xlu0 %10293
        %vm10295 = vcmask 517120
        %v10296 = vsel %vm10295, %v10289, 0.0
        %10297 = vadd.xlane.f32.xlu0 %v10296
        %v10298 = vpop.xlane.xlu0 %10297
        %v10299 = vld [vmem:[%s8] sm:$0x1]
        %v10301 = vperm.slane %v10299, 0
        %v10302 = vlaneseq
        %v10303 = vshrl.u32 %v10302, 7
        %10305 = vset.pattern.permute.xlu0 %v10303
        %10306 = vperm.xlu0 %10305, %v10301
        %v10307 = vpop.permute.xlu0 %10306
        %v10308 = vlaneseq
        %v10309 = vshrl.u32 %v10308, 7
        %v10310 = vadd.s32 %v10309, 8
        %10311 = vset.pattern.permute.xlu0 %v10310
        %10312 = vperm.xlu0 %10311, %v10301
        %v10313 = vpop.permute.xlu0 %10312
        %v10316 = vadd.f32 %v10294, %v10307
        %v10317 = vadd.f32 %v10298, %v10313
        %10320 = vset.pattern.permute.xlu0 0
        %10321 = vperm.xlu0 %10320, %v10316
        %v10322 = vpop.permute.xlu0 %10321
        %10323 = vset.pattern.permute.xlu0 0
        %10324 = vperm.xlu0 %10323, %v10317
        %v10325 = vpop.permute.xlu0 %10324
        %v10326 = vlaneseq
        %v10327 = vand.u32 %v10326, 127
        %v10328 = vperm.slane %v10322, %v10327
        %v10329 = vadd.s32 %v10327, 4294967288
        %v10330 = vperm.slane %v10325, %v10329
        %vm10331 = vcmask 130112
        %v10332 = vsel %vm10331, %v10330, %v10328
        %vm10334 = vcmask 73728
        %10335 = vst.msk [vmem:[%s324] sm:$0x1] %vm10334, %v10332
        %s10336 = sand.u32 %s225, 1
        %s10337 = scalar_lea.sflag [#allocation3], %s10336
        %s10338 = sand.u32 %s225, 1
        %s10339 = scalar_lea.vmem [#allocation2], %s10338
        // Predicated region
        $region57: #{image_classifier_forward_impl.1} parent=55 // pred_check
          %p10340 = pneg %p235
        $region58: #{image_classifier_forward_impl.1} parent=55 // pred_check_branch
          %10342 = sbr.rel (%p10340) target = $region60
        $region59: #{image_classifier_forward_impl.1} parent=55 // pred_region
          %10344 = vsyncadd %s10337, 0
          %s10345 = scalar_lea.hbm %s9, %s23
          %s10347 = sshll.u32 %s10339, 4
          %s10348 = int_to_ptr.vmem [resolvable:$true] %s10347
          %s10349 = sshll.u32 %s10345, 4
          %s10350 = int_to_ptr.hbm [resolvable:$true] %s10349
          %10352 = dma.vmem_to_hbm [thread:$0]  %s10348, 16, %s10350, %s10337
        $region60: #{image_classifier_forward_impl.1} parent=55 // pred_fallthru
          _
      $region56: #{image_classifier_forward_impl.1} parent=5 // pred_fallthru
        _
      %p10353 = scmp.le.s32.totalorder 2, %s18
      // Predicated region
      $region61: #{image_classifier_forward_impl.1} parent=5 // pred_check
        %p10354 = pneg %p10353
      $region62: #{image_classifier_forward_impl.1} parent=5 // pred_check_branch
        %10356 = sbr.rel (%p10354) target = $region64
      $region63: #{image_classifier_forward_impl.1} parent=5 // pred_region
        %s10357 = ssub.s32 %s18, 2
        // Predicated region
        $region65: #{image_classifier_forward_impl.1} parent=63 // pred_check
          %p10358 = pneg %p241
        $region66: #{image_classifier_forward_impl.1} parent=63 // pred_check_branch
          %10360 = sbr.rel (%p10358) target = $region68
        $region67: #{image_classifier_forward_impl.1} parent=63 // pred_region
          %s10361 = sand.u32 %s226, 1
          %s10362 = scalar_lea.sflag [#allocation3], %s10361
          %s10363 = sand.u32 %s226, 1
          %s10364 = scalar_lea.vmem [#allocation2], %s10363
          %10366 = dma.done %s10362, 16
        $region68: #{image_classifier_forward_impl.1} parent=63 // pred_fallthru
          _
      $region64: #{image_classifier_forward_impl.1} parent=5 // pred_fallthru
        _
    $region6: #{image_classifier_forward_impl.1} parent=1 // loop_footer
      %s22 = sadd.s32 1, %s18
    $region7: #{image_classifier_forward_impl.1} parent=1 // loop_footer_branch
      %17 = sbr.rel target = $region3
    $region8: #{image_classifier_forward_impl.1} parent=1 // loop_exit
      _
    %10367 = vsyncpa [#allocation3], 1
    %s10368 = scalar_lea.sflag [#allocation3], 1
    %10369 = vsyncpa %s10368, 1

</llo_original>
